<compile_context>
chip_gen: v7x
topology: tpu7x:2x2x1
jax: 0.10.0
libtpu: 0.0.40
codegen_flags: <defaults>
</compile_context>

<pallas_src>
import functools
import math

import jax
import jax.numpy as jnp
from jax.experimental import pallas as pl
from jax.experimental.pallas import tpu as pltpu

_CPAD = 128   # lane-dense channel padding used for every layer
_EPS = 1e-5


def _round_up(x, m):
    return (x + m - 1) // m * m


# ---------------------------------------------------------------------------
# Fused Pallas kernel: conv1+ReLU+BN1 -> conv2+ReLU+BN2 -> conv3+ReLU+BN3 -> FC
# ---------------------------------------------------------------------------

def _disc_kernel(a_ref,
                 w1_ref, b1_ref, g1_ref, be1_ref,
                 w2_ref, b2_ref, g2_ref, be2_ref,
                 w3_ref, b3_ref, g3_ref, be3_ref,
                 wl_ref, bl_ref,
                 out_ref, buf_ref,
                 *, batch, h, w, hp, wp, rows, rows_valid, guard, rows_ext,
                 n_valid, cpad, eps):
    """Activations live in a flattened (batch, h_pad, w_pad) bf16 row layout
    with `guard` zero rows on both ends, so each 3x3 tap is a row slice."""

    # One-time guard zeroing; interior rows are fully rewritten every layer.
    buf_ref[pl.ds(0, guard), :] = jnp.zeros((guard, cpad), jnp.bfloat16)
    buf_ref[pl.ds(guard + rows, guard), :] = jnp.zeros((guard, cpad), jnp.bfloat16)

    # Validity mask (1.0 on real, interior spatial rows), built in-kernel.
    # Float div/mod (exact for these small ranges) avoids vector integer div.
    kf = jax.lax.broadcasted_iota(jnp.int32, (rows, 1), 0).astype(jnp.float32)
    q = jnp.floor(kf * (1.0 / wp) + 0.05)            # k // wp
    ww = kf - q * wp                                 # k %  wp
    qq = jnp.floor(q * (1.0 / hp) + 0.05)
    hh = q - qq * hp                                 # (k // wp) % hp
    valid = ((kf < rows_valid)
             & (hh > 0.5) & (hh < h + 0.5)
             & (ww > 0.5) & (ww < w + 0.5))
    mask = valid.astype(jnp.float32)                 # (rows, 1)
    inv_n = 1.0 / float(n_valid)

    def conv_relu_bn(in_ref, wt_ref, bias_ref, gamma_ref, beta_ref):
        # 3x3 conv as 9 shifted matmuls: bf16 MXU operands, f32 accumulate.
        acc = jnp.zeros((rows, cpad), jnp.float32)
        for t in range(9):
            shift = (t // 3 - 1) * wp + (t % 3 - 1)
            a = in_ref[pl.ds(guard + shift, rows), :]          # bf16, no cast
            acc = acc + jnp.dot(a, wt_ref[t],
                                preferred_element_type=jnp.float32)
        # Bias + ReLU (f32); zero out padding / garbage rows.
        acc = jnp.maximum(acc + bias_ref[...], 0.0) * mask
        # BatchNorm (training mode): batch statistics over valid rows only.
        mean = jnp.sum(acc, axis=0, keepdims=True) * inv_n
        d = (acc - mean) * mask
        var = jnp.sum(d * d, axis=0, keepdims=True) * inv_n
        scale = gamma_ref[...] * jax.lax.rsqrt(var + eps)
        return (d * scale + beta_ref[...]) * mask              # (rows, cpad) f32

    # Layer 1 reads the host-prepared bf16 input slab directly.
    y = conv_relu_bn(a_ref, w1_ref, b1_ref, g1_ref, be1_ref)
    buf_ref[pl.ds(guard, rows), :] = y.astype(jnp.bfloat16)    # single bf16 cast
    # Layers 2 / 3 reuse the same scratch slab (y materialized before store).
    y = conv_relu_bn(buf_ref, w2_ref, b2_ref, g2_ref, be2_ref)
    buf_ref[pl.ds(guard, rows), :] = y.astype(jnp.bfloat16)
    y = conv_relu_bn(buf_ref, w3_ref, b3_ref, g3_ref, be3_ref)
    buf_ref[pl.ds(guard, rows), :] = y.astype(jnp.bfloat16)

    # Fused final Linear. The PyTorch (c, h, w) flatten order is matched by the
    # host-side layout of wl_ref: wl_ref[hi*w + wi] is the (cpad, cpad) block
    # for spatial position (hi, wi).
    hpwp = hp * wp
    for bi in range(batch):
        base = guard + bi * hpwp
        acc = jnp.zeros((1, cpad), jnp.float32)
        for hi in range(h):
            for wi in range(w):
                row = buf_ref[pl.ds(base + (hi + 1) * wp + (wi + 1), 1), :]
                acc = acc + jnp.dot(row, wl_ref[hi * w + wi],
                                    preferred_element_type=jnp.float32)
        out_ref[pl.ds(bi, 1), :] = acc + bl_ref[...]
    # TODO(synk): at large batch, gather the per-position rows into (batch, 128)
    # tiles so the linear uses M=batch MXU matmuls instead of M=1 per batch row.


# ---------------------------------------------------------------------------
# Host-side parameter preparation (hoisted: run once per parameter set)
# ---------------------------------------------------------------------------

def _prep_conv(w_oihw, bias):
    o, i, kh, kw = w_oihw.shape
    wt = jnp.transpose(w_oihw, (2, 3, 1, 0)).reshape(kh * kw, i, o)
    wt = jnp.pad(wt, ((0, 0), (0, _CPAD - i), (0, _CPAD - o)))
    bp = jnp.pad(bias, (0, _CPAD - o)).reshape(1, _CPAD).astype(jnp.float32)
    return wt.astype(jnp.bfloat16), bp


def _prep_bn(gamma, beta):
    c = gamma.shape[0]
    g = jnp.pad(gamma, (0, _CPAD - c)).reshape(1, _CPAD).astype(jnp.float32)
    be = jnp.pad(beta, (0, _CPAD - c)).reshape(1, _CPAD).astype(jnp.float32)
    return g, be


def _prep_linear(wgt, bias, c, h, w):
    """Reorder (O, c*h*w) PyTorch-flatten weight to (h*w, c_pad, o_pad) blocks."""
    o = wgt.shape[0]
    wr = jnp.transpose(wgt.reshape(o, c, h, w), (2, 3, 1, 0))   # (h, w, c, o)
    wr = jnp.pad(wr, ((0, 0), (0, 0), (0, _CPAD - c), (0, _CPAD - o)))
    wr = wr.reshape(h * w, _CPAD, _CPAD).astype(jnp.bfloat16)
    bl = jnp.pad(bias, (0, _CPAD - o)).reshape(1, _CPAD).astype(jnp.float32)
    return wr, bl


def prepare_params(params, h, w):
    w1, b1 = _prep_conv(*params["cnn_1"])
    w2, b2 = _prep_conv(*params["cnn_2"])
    w3, b3 = _prep_conv(*params["cnn_3"])
    g1, be1 = _prep_bn(*params["bn_1"])
    g2, be2 = _prep_bn(*params["bn_2"])
    g3, be3 = _prep_bn(*params["bn_3"])
    c3 = params["bn_3"][0].shape[0]
    wl, bl = _prep_linear(*params["linear_1"], c=c3, h=h, w=w)
    return dict(w1=w1, b1=b1, g1=g1, be1=be1,
                w2=w2, b2=b2, g2=g2, be2=be2,
                w3=w3, b3=b3, g3=g3, be3=be3,
                wl=wl, bl=bl)


# ---------------------------------------------------------------------------
# Forward
# ---------------------------------------------------------------------------

def discriminator_forward(prepped, x, *, nb_outputs):
    """Matches Discriminator.forward. x: (B, 128, H, W) NCHW, 16*H*W == 192."""
    batch, cin, h, w = x.shape
    hp, wp = h + 2, w + 2
    rows_valid = batch * hp * wp
    rows = _round_up(rows_valid, 16)          # bf16 sublane packing
    guard = _round_up(wp + 1, 16)             # covers max |tap shift|, aligned
    rows_ext = rows + 2 * guard
    n_valid = batch * h * w

    # Glue: NCHW -> spatially padded NHWC -> flattened zero-guarded bf16 slab.
    x_nhwc = jnp.transpose(x, (0, 2, 3, 1))
    x_pad = jnp.pad(x_nhwc, ((0, 0), (1, 1), (1, 1), (0, 0)))
    a0 = x_pad.reshape(rows_valid, cin)
    a0 = jnp.pad(a0, ((guard, rows_ext - guard - rows_valid),
                      (0, _CPAD - cin))).astype(jnp.bfloat16)   # (rows_ext, 128)

    vmem = pl.BlockSpec(memory_space=pltpu.MemorySpace.VMEM)
    est = (2 * rows_ext * _CPAD * 2            # input slab + activation scratch (bf16)
           + 3 * 9 * _CPAD * _CPAD * 2         # conv weights (bf16)
           + h * w * _CPAD * _CPAD * 2         # linear weight blocks (bf16)
           + 16 * _CPAD * 4)                   # biases / BN params / output (f32)
    vmem_limit = int(max(8 * 1024 * 1024, 2 * est))

    out = pl.pallas_call(
        functools.partial(_disc_kernel, batch=batch, h=h, w=w, hp=hp, wp=wp,
                          rows=rows, rows_valid=rows_valid, guard=guard,
                          rows_ext=rows_ext, n_valid=n_valid, cpad=_CPAD,
                          eps=_EPS),
        out_shape=jax.ShapeDtypeStruct((batch, _CPAD), jnp.float32),
        in_specs=[vmem] * 15,
        out_specs=vmem,
        scratch_shapes=[pltpu.VMEM((rows_ext, _CPAD), jnp.bfloat16)],
        compiler_params=pltpu.CompilerParams(vmem_limit_bytes=vmem_limit),
    )(a0,
      prepped["w1"], prepped["b1"], prepped["g1"], prepped["be1"],
      prepped["w2"], prepped["b2"], prepped["g2"], prepped["be2"],
      prepped["w3"], prepped["b3"], prepped["g3"], prepped["be3"],
      prepped["wl"], prepped["bl"])
    return out[:, :nb_outputs]


# ---------------------------------------------------------------------------
# Parameters (PyTorch-default init, PyTorch-native layouts)
# ---------------------------------------------------------------------------

def init_params(key, nb_outputs):
    def conv_init(k, cout, cin, kh=3, kw=3):
        bound = 1.0 / math.sqrt(cin * kh * kw)
        kw_, kb_ = jax.random.split(k)
        wgt = jax.random.uniform(kw_, (cout, cin, kh, kw), jnp.float32, -bound, bound)
        bias = jax.random.uniform(kb_, (cout,), jnp.float32, -bound, bound)
        return wgt, bias

    def linear_init(k, out_f, in_f):
        bound = 1.0 / math.sqrt(in_f)
        kw_, kb_ = jax.random.split(k)
        wgt = jax.random.uniform(kw_, (out_f, in_f), jnp.float32, -bound, bound)
        bias = jax.random.uniform(kb_, (out_f,), jnp.float32, -bound, bound)
        return wgt, bias

    ks = jax.random.split(key, 4)
    return {
        "cnn_1": conv_init(ks[0], 64, 128),
        "cnn_2": conv_init(ks[1], 32, 64),
        "cnn_3": conv_init(ks[2], 16, 32),
        "bn_1": (jnp.ones((64,), jnp.float32), jnp.zeros((64,), jnp.float32)),
        "bn_2": (jnp.ones((32,), jnp.float32), jnp.zeros((32,), jnp.float32)),
        "bn_3": (jnp.ones((16,), jnp.float32), jnp.zeros((16,), jnp.float32)),
        "linear_1": linear_init(ks[3], nb_outputs, 192),
    }


if __name__ == "__main__":
    key = jax.random.PRNGKey(0)
    kx, kp = jax.random.split(key)
    B, H, W = 2, 4, 3                 # 16 * H * W = 192 = linear_1.in_features
    nb_outputs = 4
    x = jax.random.normal(kx, (B, 128, H, W), jnp.float32)
    params = init_params(kp, nb_outputs)

    prepped = prepare_params(params, H, W)    # hoisted layout/padding prep
    fwd = jax.jit(functools.partial(discriminator_forward, nb_outputs=nb_outputs))

    out = fwd(prepped, x)
    out = jax.block_until_ready(out)
    assert out.shape == (B, nb_outputs), out.shape
    assert bool(jnp.all(jnp.isfinite(out)))
    print("KERNEL_OK")
</pallas_src>

<mosaic_0001>
module attributes {stable_mosaic.version = 11 : i64} {
  func.func @_disc_kernel(%arg0: memref<96x128xbf16, #tpu.memory_space<vmem>>, %arg1: memref<9x128x128xbf16, #tpu.memory_space<vmem>>, %arg2: memref<1x128xf32, #tpu.memory_space<vmem>>, %arg3: memref<1x128xf32, #tpu.memory_space<vmem>>, %arg4: memref<1x128xf32, #tpu.memory_space<vmem>>, %arg5: memref<9x128x128xbf16, #tpu.memory_space<vmem>>, %arg6: memref<1x128xf32, #tpu.memory_space<vmem>>, %arg7: memref<1x128xf32, #tpu.memory_space<vmem>>, %arg8: memref<1x128xf32, #tpu.memory_space<vmem>>, %arg9: memref<9x128x128xbf16, #tpu.memory_space<vmem>>, %arg10: memref<1x128xf32, #tpu.memory_space<vmem>>, %arg11: memref<1x128xf32, #tpu.memory_space<vmem>>, %arg12: memref<1x128xf32, #tpu.memory_space<vmem>>, %arg13: memref<12x128x128xbf16, #tpu.memory_space<vmem>>, %arg14: memref<1x128xf32, #tpu.memory_space<vmem>>, %arg15: memref<2x128xf32, #tpu.memory_space<vmem>>, %arg16: memref<96x128xbf16, #tpu.memory_space<vmem>>) attributes {dimension_semantics = [], scalar_prefetch = 0 : i64, scratch_operands = 1 : i64, tpu.core_type = #tpu.core_type<tc>} {
    %cst = arith.constant 0.000000e+00 : bf16
    %0 = vector.broadcast %cst : bf16 to vector<16x128xbf16>
    %c0 = arith.constant 0 : index
    %c0_0 = arith.constant 0 : index
    %1 = vector.load %arg16[%c0, %c0_0] : memref<96x128xbf16, #tpu.memory_space<vmem>>, vector<16x128xbf16>
    tpu.vector_store %arg16[%c0, %c0_0], %0 {strides = array<i32>} : memref<96x128xbf16, #tpu.memory_space<vmem>>, vector<16x128xbf16>,
    %cst_1 = arith.constant 0.000000e+00 : bf16
    %2 = vector.broadcast %cst_1 : bf16 to vector<16x128xbf16>
    %c80 = arith.constant 80 : index
    %c0_2 = arith.constant 0 : index
    %3 = vector.load %arg16[%c80, %c0_2] : memref<96x128xbf16, #tpu.memory_space<vmem>>, vector<16x128xbf16>
    tpu.vector_store %arg16[%c80, %c0_2], %2 {strides = array<i32>} : memref<96x128xbf16, #tpu.memory_space<vmem>>, vector<16x128xbf16>,
    %4 = tpu.iota {dimensions = array<i32: 0>} : vector<64x1xi32>
    %5 = arith.sitofp %4 : vector<64x1xi32> to vector<64x1xf32>
    %cst_3 = arith.constant 2.000000e-01 : f32
    %6 = vector.broadcast %cst_3 : f32 to vector<64x1xf32>
    %7 = arith.mulf %5, %6 : vector<64x1xf32>
    %cst_4 = arith.constant 5.000000e-02 : f32
    %8 = vector.broadcast %cst_4 : f32 to vector<64x1xf32>
    %9 = arith.addf %7, %8 : vector<64x1xf32>
    %10 = math.floor %9 : vector<64x1xf32>
    %cst_5 = arith.constant 5.000000e+00 : f32
    %11 = vector.broadcast %cst_5 : f32 to vector<64x1xf32>
    %12 = arith.mulf %10, %11 : vector<64x1xf32>
    %13 = arith.subf %5, %12 : vector<64x1xf32>
    %cst_6 = arith.constant 0.166666672 : f32
    %14 = vector.broadcast %cst_6 : f32 to vector<64x1xf32>
    %15 = arith.mulf %10, %14 : vector<64x1xf32>
    %cst_7 = arith.constant 5.000000e-02 : f32
    %16 = vector.broadcast %cst_7 : f32 to vector<64x1xf32>
    %17 = arith.addf %15, %16 : vector<64x1xf32>
    %18 = math.floor %17 : vector<64x1xf32>
    %cst_8 = arith.constant 6.000000e+00 : f32
    %19 = vector.broadcast %cst_8 : f32 to vector<64x1xf32>
    %20 = arith.mulf %18, %19 : vector<64x1xf32>
    %21 = arith.subf %10, %20 : vector<64x1xf32>
    %cst_9 = arith.constant 6.000000e+01 : f32
    %22 = vector.broadcast %cst_9 : f32 to vector<64x1xf32>
    %23 = arith.cmpf olt, %5, %22 : vector<64x1xf32>
    %cst_10 = arith.constant 5.000000e-01 : f32
    %24 = vector.broadcast %cst_10 : f32 to vector<64x1xf32>
    %25 = arith.cmpf ogt, %21, %24 : vector<64x1xf32>
    %26 = arith.andi %23, %25 : vector<64x1xi1>
    %cst_11 = arith.constant 4.500000e+00 : f32
    %27 = vector.broadcast %cst_11 : f32 to vector<64x1xf32>
    %28 = arith.cmpf olt, %21, %27 : vector<64x1xf32>
    %29 = arith.andi %26, %28 : vector<64x1xi1>
    %cst_12 = arith.constant 5.000000e-01 : f32
    %30 = vector.broadcast %cst_12 : f32 to vector<64x1xf32>
    %31 = arith.cmpf ogt, %13, %30 : vector<64x1xf32>
    %32 = arith.andi %29, %31 : vector<64x1xi1>
    %cst_13 = arith.constant 3.500000e+00 : f32
    %33 = vector.broadcast %cst_13 : f32 to vector<64x1xf32>
    %34 = arith.cmpf olt, %13, %33 : vector<64x1xf32>
    %35 = arith.andi %32, %34 : vector<64x1xi1>
    %36 = arith.extui %35 : vector<64x1xi1> to vector<64x1xi32>
    %37 = arith.sitofp %36 : vector<64x1xi32> to vector<64x1xf32>
    %cst_14 = arith.constant 0.000000e+00 : f32
    %38 = vector.broadcast %cst_14 : f32 to vector<64x128xf32>
    %c10 = arith.constant 10 : index
    %c0_15 = arith.constant 0 : index
    %39 = vector.load %arg0[%c10, %c0_15] : memref<96x128xbf16, #tpu.memory_space<vmem>>, vector<64x128xbf16>
    %c0_16 = arith.constant 0 : index
    %c0_17 = arith.constant 0 : index
    %c0_18 = arith.constant 0 : index
    %40 = vector.load %arg1[%c0_16, %c0_17, %c0_18] : memref<9x128x128xbf16, #tpu.memory_space<vmem>>, vector<1x128x128xbf16>
    %41 = vector.shape_cast %40 : vector<1x128x128xbf16> to vector<128x128xbf16>
    %cst_19 = arith.constant dense<0.000000e+00> : vector<64x128xf32>
    %42 = tpu.matmul %39, %41, %cst_19 {dimension_numbers = #tpu.dot_dimension_numbers<[1], [0], [0], [1], [0, 0, 1, 1], [], []>} : vector<64x128xbf16>, vector<128x128xbf16>, vector<64x128xf32> -> vector<64x128xf32>
    %43 = arith.addf %38, %42 : vector<64x128xf32>
    %c11 = arith.constant 11 : index
    %c0_20 = arith.constant 0 : index
    %44 = vector.load %arg0[%c11, %c0_20] : memref<96x128xbf16, #tpu.memory_space<vmem>>, vector<64x128xbf16>
    %c1 = arith.constant 1 : index
    %c0_21 = arith.constant 0 : index
    %c0_22 = arith.constant 0 : index
    %45 = vector.load %arg1[%c1, %c0_21, %c0_22] : memref<9x128x128xbf16, #tpu.memory_space<vmem>>, vector<1x128x128xbf16>
    %46 = vector.shape_cast %45 : vector<1x128x128xbf16> to vector<128x128xbf16>
    %cst_23 = arith.constant dense<0.000000e+00> : vector<64x128xf32>
    %47 = tpu.matmul %44, %46, %cst_23 {dimension_numbers = #tpu.dot_dimension_numbers<[1], [0], [0], [1], [0, 0, 1, 1], [], []>} : vector<64x128xbf16>, vector<128x128xbf16>, vector<64x128xf32> -> vector<64x128xf32>
    %48 = arith.addf %43, %47 : vector<64x128xf32>
    %c12 = arith.constant 12 : index
    %c0_24 = arith.constant 0 : index
    %49 = vector.load %arg0[%c12, %c0_24] : memref<96x128xbf16, #tpu.memory_space<vmem>>, vector<64x128xbf16>
    %c2 = arith.constant 2 : index
    %c0_25 = arith.constant 0 : index
    %c0_26 = arith.constant 0 : index
    %50 = vector.load %arg1[%c2, %c0_25, %c0_26] : memref<9x128x128xbf16, #tpu.memory_space<vmem>>, vector<1x128x128xbf16>
    %51 = vector.shape_cast %50 : vector<1x128x128xbf16> to vector<128x128xbf16>
    %cst_27 = arith.constant dense<0.000000e+00> : vector<64x128xf32>
    %52 = tpu.matmul %49, %51, %cst_27 {dimension_numbers = #tpu.dot_dimension_numbers<[1], [0], [0], [1], [0, 0, 1, 1], [], []>} : vector<64x128xbf16>, vector<128x128xbf16>, vector<64x128xf32> -> vector<64x128xf32>
    %53 = arith.addf %48, %52 : vector<64x128xf32>
    %c15 = arith.constant 15 : index
    %c0_28 = arith.constant 0 : index
    %54 = vector.load %arg0[%c15, %c0_28] : memref<96x128xbf16, #tpu.memory_space<vmem>>, vector<64x128xbf16>
    %c3 = arith.constant 3 : index
    %c0_29 = arith.constant 0 : index
    %c0_30 = arith.constant 0 : index
    %55 = vector.load %arg1[%c3, %c0_29, %c0_30] : memref<9x128x128xbf16, #tpu.memory_space<vmem>>, vector<1x128x128xbf16>
    %56 = vector.shape_cast %55 : vector<1x128x128xbf16> to vector<128x128xbf16>
    %cst_31 = arith.constant dense<0.000000e+00> : vector<64x128xf32>
    %57 = tpu.matmul %54, %56, %cst_31 {dimension_numbers = #tpu.dot_dimension_numbers<[1], [0], [0], [1], [0, 0, 1, 1], [], []>} : vector<64x128xbf16>, vector<128x128xbf16>, vector<64x128xf32> -> vector<64x128xf32>
    %58 = arith.addf %53, %57 : vector<64x128xf32>
    %c16 = arith.constant 16 : index
    %c0_32 = arith.constant 0 : index
    %59 = vector.load %arg0[%c16, %c0_32] : memref<96x128xbf16, #tpu.memory_space<vmem>>, vector<64x128xbf16>
    %c4 = arith.constant 4 : index
    %c0_33 = arith.constant 0 : index
    %c0_34 = arith.constant 0 : index
    %60 = vector.load %arg1[%c4, %c0_33, %c0_34] : memref<9x128x128xbf16, #tpu.memory_space<vmem>>, vector<1x128x128xbf16>
    %61 = vector.shape_cast %60 : vector<1x128x128xbf16> to vector<128x128xbf16>
    %cst_35 = arith.constant dense<0.000000e+00> : vector<64x128xf32>
    %62 = tpu.matmul %59, %61, %cst_35 {dimension_numbers = #tpu.dot_dimension_numbers<[1], [0], [0], [1], [0, 0, 1, 1], [], []>} : vector<64x128xbf16>, vector<128x128xbf16>, vector<64x128xf32> -> vector<64x128xf32>
    %63 = arith.addf %58, %62 : vector<64x128xf32>
    %c17 = arith.constant 17 : index
    %c0_36 = arith.constant 0 : index
    %64 = vector.load %arg0[%c17, %c0_36] : memref<96x128xbf16, #tpu.memory_space<vmem>>, vector<64x128xbf16>
    %c5 = arith.constant 5 : index
    %c0_37 = arith.constant 0 : index
    %c0_38 = arith.constant 0 : index
    %65 = vector.load %arg1[%c5, %c0_37, %c0_38] : memref<9x128x128xbf16, #tpu.memory_space<vmem>>, vector<1x128x128xbf16>
    %66 = vector.shape_cast %65 : vector<1x128x128xbf16> to vector<128x128xbf16>
    %cst_39 = arith.constant dense<0.000000e+00> : vector<64x128xf32>
    %67 = tpu.matmul %64, %66, %cst_39 {dimension_numbers = #tpu.dot_dimension_numbers<[1], [0], [0], [1], [0, 0, 1, 1], [], []>} : vector<64x128xbf16>, vector<128x128xbf16>, vector<64x128xf32> -> vector<64x128xf32>
    %68 = arith.addf %63, %67 : vector<64x128xf32>
    %c20 = arith.constant 20 : index
    %c0_40 = arith.constant 0 : index
    %69 = vector.load %arg0[%c20, %c0_40] : memref<96x128xbf16, #tpu.memory_space<vmem>>, vector<64x128xbf16>
    %c6 = arith.constant 6 : index
    %c0_41 = arith.constant 0 : index
    %c0_42 = arith.constant 0 : index
    %70 = vector.load %arg1[%c6, %c0_41, %c0_42] : memref<9x128x128xbf16, #tpu.memory_space<vmem>>, vector<1x128x128xbf16>
    %71 = vector.shape_cast %70 : vector<1x128x128xbf16> to vector<128x128xbf16>
    %cst_43 = arith.constant dense<0.000000e+00> : vector<64x128xf32>
    %72 = tpu.matmul %69, %71, %cst_43 {dimension_numbers = #tpu.dot_dimension_numbers<[1], [0], [0], [1], [0, 0, 1, 1], [], []>} : vector<64x128xbf16>, vector<128x128xbf16>, vector<64x128xf32> -> vector<64x128xf32>
    %73 = arith.addf %68, %72 : vector<64x128xf32>
    %c21 = arith.constant 21 : index
    %c0_44 = arith.constant 0 : index
    %74 = vector.load %arg0[%c21, %c0_44] : memref<96x128xbf16, #tpu.memory_space<vmem>>, vector<64x128xbf16>
    %c7 = arith.constant 7 : index
    %c0_45 = arith.constant 0 : index
    %c0_46 = arith.constant 0 : index
    %75 = vector.load %arg1[%c7, %c0_45, %c0_46] : memref<9x128x128xbf16, #tpu.memory_space<vmem>>, vector<1x128x128xbf16>
    %76 = vector.shape_cast %75 : vector<1x128x128xbf16> to vector<128x128xbf16>
    %cst_47 = arith.constant dense<0.000000e+00> : vector<64x128xf32>
    %77 = tpu.matmul %74, %76, %cst_47 {dimension_numbers = #tpu.dot_dimension_numbers<[1], [0], [0], [1], [0, 0, 1, 1], [], []>} : vector<64x128xbf16>, vector<128x128xbf16>, vector<64x128xf32> -> vector<64x128xf32>
    %78 = arith.addf %73, %77 : vector<64x128xf32>
    %c22 = arith.constant 22 : index
    %c0_48 = arith.constant 0 : index
    %79 = vector.load %arg0[%c22, %c0_48] : memref<96x128xbf16, #tpu.memory_space<vmem>>, vector<64x128xbf16>
    %c8 = arith.constant 8 : index
    %c0_49 = arith.constant 0 : index
    %c0_50 = arith.constant 0 : index
    %80 = vector.load %arg1[%c8, %c0_49, %c0_50] : memref<9x128x128xbf16, #tpu.memory_space<vmem>>, vector<1x128x128xbf16>
    %81 = vector.shape_cast %80 : vector<1x128x128xbf16> to vector<128x128xbf16>
    %cst_51 = arith.constant dense<0.000000e+00> : vector<64x128xf32>
    %82 = tpu.matmul %79, %81, %cst_51 {dimension_numbers = #tpu.dot_dimension_numbers<[1], [0], [0], [1], [0, 0, 1, 1], [], []>} : vector<64x128xbf16>, vector<128x128xbf16>, vector<64x128xf32> -> vector<64x128xf32>
    %83 = arith.addf %78, %82 : vector<64x128xf32>
    %c0_52 = arith.constant 0 : index
    %c0_53 = arith.constant 0 : index
    %84 = vector.load %arg2[%c0_52, %c0_53] : memref<1x128xf32, #tpu.memory_space<vmem>>, vector<1x128xf32>
    %85 = vector.broadcast %84 : vector<1x128xf32> to vector<64x128xf32>
    %86 = arith.addf %83, %85 : vector<64x128xf32>
    %cst_54 = arith.constant 0.000000e+00 : f32
    %87 = vector.broadcast %cst_54 : f32 to vector<64x128xf32>
    %88 = arith.maximumf %86, %87 : vector<64x128xf32>
    %89 = vector.broadcast %37 : vector<64x1xf32> to vector<64x128xf32>
    %90 = arith.mulf %88, %89 : vector<64x128xf32>
    %cst_55 = arith.constant dense<0.000000e+00> : vector<128xf32>
    %91 = vector.multi_reduction <add>, %90, %cst_55 [0] : vector<64x128xf32> to vector<128xf32>
    %92 = vector.shape_cast %91 : vector<128xf32> to vector<1x128xf32>
    %cst_56 = arith.constant 0.0416666679 : f32
    %93 = vector.broadcast %cst_56 : f32 to vector<1x128xf32>
    %94 = arith.mulf %92, %93 : vector<1x128xf32>
    %95 = vector.broadcast %94 : vector<1x128xf32> to vector<64x128xf32>
    %96 = arith.subf %90, %95 : vector<64x128xf32>
    %97 = vector.broadcast %37 : vector<64x1xf32> to vector<64x128xf32>
    %98 = arith.mulf %96, %97 : vector<64x128xf32>
    %99 = arith.mulf %98, %98 : vector<64x128xf32>
    %cst_57 = arith.constant dense<0.000000e+00> : vector<128xf32>
    %100 = vector.multi_reduction <add>, %99, %cst_57 [0] : vector<64x128xf32> to vector<128xf32>
    %101 = vector.shape_cast %100 : vector<128xf32> to vector<1x128xf32>
    %cst_58 = arith.constant 0.0416666679 : f32
    %102 = vector.broadcast %cst_58 : f32 to vector<1x128xf32>
    %103 = arith.mulf %101, %102 : vector<1x128xf32>
    %c0_59 = arith.constant 0 : index
    %c0_60 = arith.constant 0 : index
    %104 = vector.load %arg3[%c0_59, %c0_60] : memref<1x128xf32, #tpu.memory_space<vmem>>, vector<1x128xf32>
    %cst_61 = arith.constant 9.99999974E-6 : f32
    %105 = vector.broadcast %cst_61 : f32 to vector<1x128xf32>
    %106 = arith.addf %103, %105 : vector<1x128xf32>
    %107 = math.rsqrt %106 : vector<1x128xf32>
    %108 = arith.mulf %104, %107 : vector<1x128xf32>
    %109 = vector.broadcast %108 : vector<1x128xf32> to vector<64x128xf32>
    %110 = arith.mulf %98, %109 : vector<64x128xf32>
    %c0_62 = arith.constant 0 : index
    %c0_63 = arith.constant 0 : index
    %111 = vector.load %arg4[%c0_62, %c0_63] : memref<1x128xf32, #tpu.memory_space<vmem>>, vector<1x128xf32>
    %112 = vector.broadcast %111 : vector<1x128xf32> to vector<64x128xf32>
    %113 = arith.addf %110, %112 : vector<64x128xf32>
    %114 = vector.broadcast %37 : vector<64x1xf32> to vector<64x128xf32>
    %115 = arith.mulf %113, %114 : vector<64x128xf32>
    %116 = arith.truncf %115 : vector<64x128xf32> to vector<64x128xbf16>
    %c16_64 = arith.constant 16 : index
    %c0_65 = arith.constant 0 : index
    %117 = vector.load %arg16[%c16_64, %c0_65] : memref<96x128xbf16, #tpu.memory_space<vmem>>, vector<64x128xbf16>
    tpu.vector_store %arg16[%c16_64, %c0_65], %116 {strides = array<i32>} : memref<96x128xbf16, #tpu.memory_space<vmem>>, vector<64x128xbf16>,
    %cst_66 = arith.constant 0.000000e+00 : f32
    %118 = vector.broadcast %cst_66 : f32 to vector<64x128xf32>
    %c10_67 = arith.constant 10 : index
    %c0_68 = arith.constant 0 : index
    %119 = vector.load %arg16[%c10_67, %c0_68] : memref<96x128xbf16, #tpu.memory_space<vmem>>, vector<64x128xbf16>
    %c0_69 = arith.constant 0 : index
    %c0_70 = arith.constant 0 : index
    %c0_71 = arith.constant 0 : index
    %120 = vector.load %arg5[%c0_69, %c0_70, %c0_71] : memref<9x128x128xbf16, #tpu.memory_space<vmem>>, vector<1x128x128xbf16>
    %121 = vector.shape_cast %120 : vector<1x128x128xbf16> to vector<128x128xbf16>
    %cst_72 = arith.constant dense<0.000000e+00> : vector<64x128xf32>
    %122 = tpu.matmul %119, %121, %cst_72 {dimension_numbers = #tpu.dot_dimension_numbers<[1], [0], [0], [1], [0, 0, 1, 1], [], []>} : vector<64x128xbf16>, vector<128x128xbf16>, vector<64x128xf32> -> vector<64x128xf32>
    %123 = arith.addf %118, %122 : vector<64x128xf32>
    %c11_73 = arith.constant 11 : index
    %c0_74 = arith.constant 0 : index
    %124 = vector.load %arg16[%c11_73, %c0_74] : memref<96x128xbf16, #tpu.memory_space<vmem>>, vector<64x128xbf16>
    %c1_75 = arith.constant 1 : index
    %c0_76 = arith.constant 0 : index
    %c0_77 = arith.constant 0 : index
    %125 = vector.load %arg5[%c1_75, %c0_76, %c0_77] : memref<9x128x128xbf16, #tpu.memory_space<vmem>>, vector<1x128x128xbf16>
    %126 = vector.shape_cast %125 : vector<1x128x128xbf16> to vector<128x128xbf16>
    %cst_78 = arith.constant dense<0.000000e+00> : vector<64x128xf32>
    %127 = tpu.matmul %124, %126, %cst_78 {dimension_numbers = #tpu.dot_dimension_numbers<[1], [0], [0], [1], [0, 0, 1, 1], [], []>} : vector<64x128xbf16>, vector<128x128xbf16>, vector<64x128xf32> -> vector<64x128xf32>
    %128 = arith.addf %123, %127 : vector<64x128xf32>
    %c12_79 = arith.constant 12 : index
    %c0_80 = arith.constant 0 : index
    %129 = vector.load %arg16[%c12_79, %c0_80] : memref<96x128xbf16, #tpu.memory_space<vmem>>, vector<64x128xbf16>
    %c2_81 = arith.constant 2 : index
    %c0_82 = arith.constant 0 : index
    %c0_83 = arith.constant 0 : index
    %130 = vector.load %arg5[%c2_81, %c0_82, %c0_83] : memref<9x128x128xbf16, #tpu.memory_space<vmem>>, vector<1x128x128xbf16>
    %131 = vector.shape_cast %130 : vector<1x128x128xbf16> to vector<128x128xbf16>
    %cst_84 = arith.constant dense<0.000000e+00> : vector<64x128xf32>
    %132 = tpu.matmul %129, %131, %cst_84 {dimension_numbers = #tpu.dot_dimension_numbers<[1], [0], [0], [1], [0, 0, 1, 1], [], []>} : vector<64x128xbf16>, vector<128x128xbf16>, vector<64x128xf32> -> vector<64x128xf32>
    %133 = arith.addf %128, %132 : vector<64x128xf32>
    %c15_85 = arith.constant 15 : index
    %c0_86 = arith.constant 0 : index
    %134 = vector.load %arg16[%c15_85, %c0_86] : memref<96x128xbf16, #tpu.memory_space<vmem>>, vector<64x128xbf16>
    %c3_87 = arith.constant 3 : index
    %c0_88 = arith.constant 0 : index
    %c0_89 = arith.constant 0 : index
    %135 = vector.load %arg5[%c3_87, %c0_88, %c0_89] : memref<9x128x128xbf16, #tpu.memory_space<vmem>>, vector<1x128x128xbf16>
    %136 = vector.shape_cast %135 : vector<1x128x128xbf16> to vector<128x128xbf16>
    %cst_90 = arith.constant dense<0.000000e+00> : vector<64x128xf32>
    %137 = tpu.matmul %134, %136, %cst_90 {dimension_numbers = #tpu.dot_dimension_numbers<[1], [0], [0], [1], [0, 0, 1, 1], [], []>} : vector<64x128xbf16>, vector<128x128xbf16>, vector<64x128xf32> -> vector<64x128xf32>
    %138 = arith.addf %133, %137 : vector<64x128xf32>
    %c16_91 = arith.constant 16 : index
    %c0_92 = arith.constant 0 : index
    %139 = vector.load %arg16[%c16_91, %c0_92] : memref<96x128xbf16, #tpu.memory_space<vmem>>, vector<64x128xbf16>
    %c4_93 = arith.constant 4 : index
    %c0_94 = arith.constant 0 : index
    %c0_95 = arith.constant 0 : index
    %140 = vector.load %arg5[%c4_93, %c0_94, %c0_95] : memref<9x128x128xbf16, #tpu.memory_space<vmem>>, vector<1x128x128xbf16>
    %141 = vector.shape_cast %140 : vector<1x128x128xbf16> to vector<128x128xbf16>
    %cst_96 = arith.constant dense<0.000000e+00> : vector<64x128xf32>
    %142 = tpu.matmul %139, %141, %cst_96 {dimension_numbers = #tpu.dot_dimension_numbers<[1], [0], [0], [1], [0, 0, 1, 1], [], []>} : vector<64x128xbf16>, vector<128x128xbf16>, vector<64x128xf32> -> vector<64x128xf32>
    %143 = arith.addf %138, %142 : vector<64x128xf32>
    %c17_97 = arith.constant 17 : index
    %c0_98 = arith.constant 0 : index
    %144 = vector.load %arg16[%c17_97, %c0_98] : memref<96x128xbf16, #tpu.memory_space<vmem>>, vector<64x128xbf16>
    %c5_99 = arith.constant 5 : index
    %c0_100 = arith.constant 0 : index
    %c0_101 = arith.constant 0 : index
    %145 = vector.load %arg5[%c5_99, %c0_100, %c0_101] : memref<9x128x128xbf16, #tpu.memory_space<vmem>>, vector<1x128x128xbf16>
    %146 = vector.shape_cast %145 : vector<1x128x128xbf16> to vector<128x128xbf16>
    %cst_102 = arith.constant dense<0.000000e+00> : vector<64x128xf32>
    %147 = tpu.matmul %144, %146, %cst_102 {dimension_numbers = #tpu.dot_dimension_numbers<[1], [0], [0], [1], [0, 0, 1, 1], [], []>} : vector<64x128xbf16>, vector<128x128xbf16>, vector<64x128xf32> -> vector<64x128xf32>
    %148 = arith.addf %143, %147 : vector<64x128xf32>
    %c20_103 = arith.constant 20 : index
    %c0_104 = arith.constant 0 : index
    %149 = vector.load %arg16[%c20_103, %c0_104] : memref<96x128xbf16, #tpu.memory_space<vmem>>, vector<64x128xbf16>
    %c6_105 = arith.constant 6 : index
    %c0_106 = arith.constant 0 : index
    %c0_107 = arith.constant 0 : index
    %150 = vector.load %arg5[%c6_105, %c0_106, %c0_107] : memref<9x128x128xbf16, #tpu.memory_space<vmem>>, vector<1x128x128xbf16>
    %151 = vector.shape_cast %150 : vector<1x128x128xbf16> to vector<128x128xbf16>
    %cst_108 = arith.constant dense<0.000000e+00> : vector<64x128xf32>
    %152 = tpu.matmul %149, %151, %cst_108 {dimension_numbers = #tpu.dot_dimension_numbers<[1], [0], [0], [1], [0, 0, 1, 1], [], []>} : vector<64x128xbf16>, vector<128x128xbf16>, vector<64x128xf32> -> vector<64x128xf32>
    %153 = arith.addf %148, %152 : vector<64x128xf32>
    %c21_109 = arith.constant 21 : index
    %c0_110 = arith.constant 0 : index
    %154 = vector.load %arg16[%c21_109, %c0_110] : memref<96x128xbf16, #tpu.memory_space<vmem>>, vector<64x128xbf16>
    %c7_111 = arith.constant 7 : index
    %c0_112 = arith.constant 0 : index
    %c0_113 = arith.constant 0 : index
    %155 = vector.load %arg5[%c7_111, %c0_112, %c0_113] : memref<9x128x128xbf16, #tpu.memory_space<vmem>>, vector<1x128x128xbf16>
    %156 = vector.shape_cast %155 : vector<1x128x128xbf16> to vector<128x128xbf16>
    %cst_114 = arith.constant dense<0.000000e+00> : vector<64x128xf32>
    %157 = tpu.matmul %154, %156, %cst_114 {dimension_numbers = #tpu.dot_dimension_numbers<[1], [0], [0], [1], [0, 0, 1, 1], [], []>} : vector<64x128xbf16>, vector<128x128xbf16>, vector<64x128xf32> -> vector<64x128xf32>
    %158 = arith.addf %153, %157 : vector<64x128xf32>
    %c22_115 = arith.constant 22 : index
    %c0_116 = arith.constant 0 : index
    %159 = vector.load %arg16[%c22_115, %c0_116] : memref<96x128xbf16, #tpu.memory_space<vmem>>, vector<64x128xbf16>
    %c8_117 = arith.constant 8 : index
    %c0_118 = arith.constant 0 : index
    %c0_119 = arith.constant 0 : index
    %160 = vector.load %arg5[%c8_117, %c0_118, %c0_119] : memref<9x128x128xbf16, #tpu.memory_space<vmem>>, vector<1x128x128xbf16>
    %161 = vector.shape_cast %160 : vector<1x128x128xbf16> to vector<128x128xbf16>
    %cst_120 = arith.constant dense<0.000000e+00> : vector<64x128xf32>
    %162 = tpu.matmul %159, %161, %cst_120 {dimension_numbers = #tpu.dot_dimension_numbers<[1], [0], [0], [1], [0, 0, 1, 1], [], []>} : vector<64x128xbf16>, vector<128x128xbf16>, vector<64x128xf32> -> vector<64x128xf32>
    %163 = arith.addf %158, %162 : vector<64x128xf32>
    %c0_121 = arith.constant 0 : index
    %c0_122 = arith.constant 0 : index
    %164 = vector.load %arg6[%c0_121, %c0_122] : memref<1x128xf32, #tpu.memory_space<vmem>>, vector<1x128xf32>
    %165 = vector.broadcast %164 : vector<1x128xf32> to vector<64x128xf32>
    %166 = arith.addf %163, %165 : vector<64x128xf32>
    %cst_123 = arith.constant 0.000000e+00 : f32
    %167 = vector.broadcast %cst_123 : f32 to vector<64x128xf32>
    %168 = arith.maximumf %166, %167 : vector<64x128xf32>
    %169 = vector.broadcast %37 : vector<64x1xf32> to vector<64x128xf32>
    %170 = arith.mulf %168, %169 : vector<64x128xf32>
    %cst_124 = arith.constant dense<0.000000e+00> : vector<128xf32>
    %171 = vector.multi_reduction <add>, %170, %cst_124 [0] : vector<64x128xf32> to vector<128xf32>
    %172 = vector.shape_cast %171 : vector<128xf32> to vector<1x128xf32>
    %cst_125 = arith.constant 0.0416666679 : f32
    %173 = vector.broadcast %cst_125 : f32 to vector<1x128xf32>
    %174 = arith.mulf %172, %173 : vector<1x128xf32>
    %175 = vector.broadcast %174 : vector<1x128xf32> to vector<64x128xf32>
    %176 = arith.subf %170, %175 : vector<64x128xf32>
    %177 = vector.broadcast %37 : vector<64x1xf32> to vector<64x128xf32>
    %178 = arith.mulf %176, %177 : vector<64x128xf32>
    %179 = arith.mulf %178, %178 : vector<64x128xf32>
    %cst_126 = arith.constant dense<0.000000e+00> : vector<128xf32>
    %180 = vector.multi_reduction <add>, %179, %cst_126 [0] : vector<64x128xf32> to vector<128xf32>
    %181 = vector.shape_cast %180 : vector<128xf32> to vector<1x128xf32>
    %cst_127 = arith.constant 0.0416666679 : f32
    %182 = vector.broadcast %cst_127 : f32 to vector<1x128xf32>
    %183 = arith.mulf %181, %182 : vector<1x128xf32>
    %c0_128 = arith.constant 0 : index
    %c0_129 = arith.constant 0 : index
    %184 = vector.load %arg7[%c0_128, %c0_129] : memref<1x128xf32, #tpu.memory_space<vmem>>, vector<1x128xf32>
    %cst_130 = arith.constant 9.99999974E-6 : f32
    %185 = vector.broadcast %cst_130 : f32 to vector<1x128xf32>
    %186 = arith.addf %183, %185 : vector<1x128xf32>
    %187 = math.rsqrt %186 : vector<1x128xf32>
    %188 = arith.mulf %184, %187 : vector<1x128xf32>
    %189 = vector.broadcast %188 : vector<1x128xf32> to vector<64x128xf32>
    %190 = arith.mulf %178, %189 : vector<64x128xf32>
    %c0_131 = arith.constant 0 : index
    %c0_132 = arith.constant 0 : index
    %191 = vector.load %arg8[%c0_131, %c0_132] : memref<1x128xf32, #tpu.memory_space<vmem>>, vector<1x128xf32>
    %192 = vector.broadcast %191 : vector<1x128xf32> to vector<64x128xf32>
    %193 = arith.addf %190, %192 : vector<64x128xf32>
    %194 = vector.broadcast %37 : vector<64x1xf32> to vector<64x128xf32>
    %195 = arith.mulf %193, %194 : vector<64x128xf32>
    %196 = arith.truncf %195 : vector<64x128xf32> to vector<64x128xbf16>
    %c16_133 = arith.constant 16 : index
    %c0_134 = arith.constant 0 : index
    %197 = vector.load %arg16[%c16_133, %c0_134] : memref<96x128xbf16, #tpu.memory_space<vmem>>, vector<64x128xbf16>
    tpu.vector_store %arg16[%c16_133, %c0_134], %196 {strides = array<i32>} : memref<96x128xbf16, #tpu.memory_space<vmem>>, vector<64x128xbf16>,
    %cst_135 = arith.constant 0.000000e+00 : f32
    %198 = vector.broadcast %cst_135 : f32 to vector<64x128xf32>
    %c10_136 = arith.constant 10 : index
    %c0_137 = arith.constant 0 : index
    %199 = vector.load %arg16[%c10_136, %c0_137] : memref<96x128xbf16, #tpu.memory_space<vmem>>, vector<64x128xbf16>
    %c0_138 = arith.constant 0 : index
    %c0_139 = arith.constant 0 : index
    %c0_140 = arith.constant 0 : index
    %200 = vector.load %arg9[%c0_138, %c0_139, %c0_140] : memref<9x128x128xbf16, #tpu.memory_space<vmem>>, vector<1x128x128xbf16>
    %201 = vector.shape_cast %200 : vector<1x128x128xbf16> to vector<128x128xbf16>
    %cst_141 = arith.constant dense<0.000000e+00> : vector<64x128xf32>
    %202 = tpu.matmul %199, %201, %cst_141 {dimension_numbers = #tpu.dot_dimension_numbers<[1], [0], [0], [1], [0, 0, 1, 1], [], []>} : vector<64x128xbf16>, vector<128x128xbf16>, vector<64x128xf32> -> vector<64x128xf32>
    %203 = arith.addf %198, %202 : vector<64x128xf32>
    %c11_142 = arith.constant 11 : index
    %c0_143 = arith.constant 0 : index
    %204 = vector.load %arg16[%c11_142, %c0_143] : memref<96x128xbf16, #tpu.memory_space<vmem>>, vector<64x128xbf16>
    %c1_144 = arith.constant 1 : index
    %c0_145 = arith.constant 0 : index
    %c0_146 = arith.constant 0 : index
    %205 = vector.load %arg9[%c1_144, %c0_145, %c0_146] : memref<9x128x128xbf16, #tpu.memory_space<vmem>>, vector<1x128x128xbf16>
    %206 = vector.shape_cast %205 : vector<1x128x128xbf16> to vector<128x128xbf16>
    %cst_147 = arith.constant dense<0.000000e+00> : vector<64x128xf32>
    %207 = tpu.matmul %204, %206, %cst_147 {dimension_numbers = #tpu.dot_dimension_numbers<[1], [0], [0], [1], [0, 0, 1, 1], [], []>} : vector<64x128xbf16>, vector<128x128xbf16>, vector<64x128xf32> -> vector<64x128xf32>
    %208 = arith.addf %203, %207 : vector<64x128xf32>
    %c12_148 = arith.constant 12 : index
    %c0_149 = arith.constant 0 : index
    %209 = vector.load %arg16[%c12_148, %c0_149] : memref<96x128xbf16, #tpu.memory_space<vmem>>, vector<64x128xbf16>
    %c2_150 = arith.constant 2 : index
    %c0_151 = arith.constant 0 : index
    %c0_152 = arith.constant 0 : index
    %210 = vector.load %arg9[%c2_150, %c0_151, %c0_152] : memref<9x128x128xbf16, #tpu.memory_space<vmem>>, vector<1x128x128xbf16>
    %211 = vector.shape_cast %210 : vector<1x128x128xbf16> to vector<128x128xbf16>
    %cst_153 = arith.constant dense<0.000000e+00> : vector<64x128xf32>
    %212 = tpu.matmul %209, %211, %cst_153 {dimension_numbers = #tpu.dot_dimension_numbers<[1], [0], [0], [1], [0, 0, 1, 1], [], []>} : vector<64x128xbf16>, vector<128x128xbf16>, vector<64x128xf32> -> vector<64x128xf32>
    %213 = arith.addf %208, %212 : vector<64x128xf32>
    %c15_154 = arith.constant 15 : index
    %c0_155 = arith.constant 0 : index
    %214 = vector.load %arg16[%c15_154, %c0_155] : memref<96x128xbf16, #tpu.memory_space<vmem>>, vector<64x128xbf16>
    %c3_156 = arith.constant 3 : index
    %c0_157 = arith.constant 0 : index
    %c0_158 = arith.constant 0 : index
    %215 = vector.load %arg9[%c3_156, %c0_157, %c0_158] : memref<9x128x128xbf16, #tpu.memory_space<vmem>>, vector<1x128x128xbf16>
    %216 = vector.shape_cast %215 : vector<1x128x128xbf16> to vector<128x128xbf16>
    %cst_159 = arith.constant dense<0.000000e+00> : vector<64x128xf32>
    %217 = tpu.matmul %214, %216, %cst_159 {dimension_numbers = #tpu.dot_dimension_numbers<[1], [0], [0], [1], [0, 0, 1, 1], [], []>} : vector<64x128xbf16>, vector<128x128xbf16>, vector<64x128xf32> -> vector<64x128xf32>
    %218 = arith.addf %213, %217 : vector<64x128xf32>
    %c16_160 = arith.constant 16 : index
    %c0_161 = arith.constant 0 : index
    %219 = vector.load %arg16[%c16_160, %c0_161] : memref<96x128xbf16, #tpu.memory_space<vmem>>, vector<64x128xbf16>
    %c4_162 = arith.constant 4 : index
    %c0_163 = arith.constant 0 : index
    %c0_164 = arith.constant 0 : index
    %220 = vector.load %arg9[%c4_162, %c0_163, %c0_164] : memref<9x128x128xbf16, #tpu.memory_space<vmem>>, vector<1x128x128xbf16>
    %221 = vector.shape_cast %220 : vector<1x128x128xbf16> to vector<128x128xbf16>
    %cst_165 = arith.constant dense<0.000000e+00> : vector<64x128xf32>
    %222 = tpu.matmul %219, %221, %cst_165 {dimension_numbers = #tpu.dot_dimension_numbers<[1], [0], [0], [1], [0, 0, 1, 1], [], []>} : vector<64x128xbf16>, vector<128x128xbf16>, vector<64x128xf32> -> vector<64x128xf32>
    %223 = arith.addf %218, %222 : vector<64x128xf32>
    %c17_166 = arith.constant 17 : index
    %c0_167 = arith.constant 0 : index
    %224 = vector.load %arg16[%c17_166, %c0_167] : memref<96x128xbf16, #tpu.memory_space<vmem>>, vector<64x128xbf16>
    %c5_168 = arith.constant 5 : index
    %c0_169 = arith.constant 0 : index
    %c0_170 = arith.constant 0 : index
    %225 = vector.load %arg9[%c5_168, %c0_169, %c0_170] : memref<9x128x128xbf16, #tpu.memory_space<vmem>>, vector<1x128x128xbf16>
    %226 = vector.shape_cast %225 : vector<1x128x128xbf16> to vector<128x128xbf16>
    %cst_171 = arith.constant dense<0.000000e+00> : vector<64x128xf32>
    %227 = tpu.matmul %224, %226, %cst_171 {dimension_numbers = #tpu.dot_dimension_numbers<[1], [0], [0], [1], [0, 0, 1, 1], [], []>} : vector<64x128xbf16>, vector<128x128xbf16>, vector<64x128xf32> -> vector<64x128xf32>
    %228 = arith.addf %223, %227 : vector<64x128xf32>
    %c20_172 = arith.constant 20 : index
    %c0_173 = arith.constant 0 : index
    %229 = vector.load %arg16[%c20_172, %c0_173] : memref<96x128xbf16, #tpu.memory_space<vmem>>, vector<64x128xbf16>
    %c6_174 = arith.constant 6 : index
    %c0_175 = arith.constant 0 : index
    %c0_176 = arith.constant 0 : index
    %230 = vector.load %arg9[%c6_174, %c0_175, %c0_176] : memref<9x128x128xbf16, #tpu.memory_space<vmem>>, vector<1x128x128xbf16>
    %231 = vector.shape_cast %230 : vector<1x128x128xbf16> to vector<128x128xbf16>
    %cst_177 = arith.constant dense<0.000000e+00> : vector<64x128xf32>
    %232 = tpu.matmul %229, %231, %cst_177 {dimension_numbers = #tpu.dot_dimension_numbers<[1], [0], [0], [1], [0, 0, 1, 1], [], []>} : vector<64x128xbf16>, vector<128x128xbf16>, vector<64x128xf32> -> vector<64x128xf32>
    %233 = arith.addf %228, %232 : vector<64x128xf32>
    %c21_178 = arith.constant 21 : index
    %c0_179 = arith.constant 0 : index
    %234 = vector.load %arg16[%c21_178, %c0_179] : memref<96x128xbf16, #tpu.memory_space<vmem>>, vector<64x128xbf16>
    %c7_180 = arith.constant 7 : index
    %c0_181 = arith.constant 0 : index
    %c0_182 = arith.constant 0 : index
    %235 = vector.load %arg9[%c7_180, %c0_181, %c0_182] : memref<9x128x128xbf16, #tpu.memory_space<vmem>>, vector<1x128x128xbf16>
    %236 = vector.shape_cast %235 : vector<1x128x128xbf16> to vector<128x128xbf16>
    %cst_183 = arith.constant dense<0.000000e+00> : vector<64x128xf32>
    %237 = tpu.matmul %234, %236, %cst_183 {dimension_numbers = #tpu.dot_dimension_numbers<[1], [0], [0], [1], [0, 0, 1, 1], [], []>} : vector<64x128xbf16>, vector<128x128xbf16>, vector<64x128xf32> -> vector<64x128xf32>
    %238 = arith.addf %233, %237 : vector<64x128xf32>
    %c22_184 = arith.constant 22 : index
    %c0_185 = arith.constant 0 : index
    %239 = vector.load %arg16[%c22_184, %c0_185] : memref<96x128xbf16, #tpu.memory_space<vmem>>, vector<64x128xbf16>
    %c8_186 = arith.constant 8 : index
    %c0_187 = arith.constant 0 : index
    %c0_188 = arith.constant 0 : index
    %240 = vector.load %arg9[%c8_186, %c0_187, %c0_188] : memref<9x128x128xbf16, #tpu.memory_space<vmem>>, vector<1x128x128xbf16>
    %241 = vector.shape_cast %240 : vector<1x128x128xbf16> to vector<128x128xbf16>
    %cst_189 = arith.constant dense<0.000000e+00> : vector<64x128xf32>
    %242 = tpu.matmul %239, %241, %cst_189 {dimension_numbers = #tpu.dot_dimension_numbers<[1], [0], [0], [1], [0, 0, 1, 1], [], []>} : vector<64x128xbf16>, vector<128x128xbf16>, vector<64x128xf32> -> vector<64x128xf32>
    %243 = arith.addf %238, %242 : vector<64x128xf32>
    %c0_190 = arith.constant 0 : index
    %c0_191 = arith.constant 0 : index
    %244 = vector.load %arg10[%c0_190, %c0_191] : memref<1x128xf32, #tpu.memory_space<vmem>>, vector<1x128xf32>
    %245 = vector.broadcast %244 : vector<1x128xf32> to vector<64x128xf32>
    %246 = arith.addf %243, %245 : vector<64x128xf32>
    %cst_192 = arith.constant 0.000000e+00 : f32
    %247 = vector.broadcast %cst_192 : f32 to vector<64x128xf32>
    %248 = arith.maximumf %246, %247 : vector<64x128xf32>
    %249 = vector.broadcast %37 : vector<64x1xf32> to vector<64x128xf32>
    %250 = arith.mulf %248, %249 : vector<64x128xf32>
    %cst_193 = arith.constant dense<0.000000e+00> : vector<128xf32>
    %251 = vector.multi_reduction <add>, %250, %cst_193 [0] : vector<64x128xf32> to vector<128xf32>
    %252 = vector.shape_cast %251 : vector<128xf32> to vector<1x128xf32>
    %cst_194 = arith.constant 0.0416666679 : f32
    %253 = vector.broadcast %cst_194 : f32 to vector<1x128xf32>
    %254 = arith.mulf %252, %253 : vector<1x128xf32>
    %255 = vector.broadcast %254 : vector<1x128xf32> to vector<64x128xf32>
    %256 = arith.subf %250, %255 : vector<64x128xf32>
    %257 = vector.broadcast %37 : vector<64x1xf32> to vector<64x128xf32>
    %258 = arith.mulf %256, %257 : vector<64x128xf32>
    %259 = arith.mulf %258, %258 : vector<64x128xf32>
    %cst_195 = arith.constant dense<0.000000e+00> : vector<128xf32>
    %260 = vector.multi_reduction <add>, %259, %cst_195 [0] : vector<64x128xf32> to vector<128xf32>
    %261 = vector.shape_cast %260 : vector<128xf32> to vector<1x128xf32>
    %cst_196 = arith.constant 0.0416666679 : f32
    %262 = vector.broadcast %cst_196 : f32 to vector<1x128xf32>
    %263 = arith.mulf %261, %262 : vector<1x128xf32>
    %c0_197 = arith.constant 0 : index
    %c0_198 = arith.constant 0 : index
    %264 = vector.load %arg11[%c0_197, %c0_198] : memref<1x128xf32, #tpu.memory_space<vmem>>, vector<1x128xf32>
    %cst_199 = arith.constant 9.99999974E-6 : f32
    %265 = vector.broadcast %cst_199 : f32 to vector<1x128xf32>
    %266 = arith.addf %263, %265 : vector<1x128xf32>
    %267 = math.rsqrt %266 : vector<1x128xf32>
    %268 = arith.mulf %264, %267 : vector<1x128xf32>
    %269 = vector.broadcast %268 : vector<1x128xf32> to vector<64x128xf32>
    %270 = arith.mulf %258, %269 : vector<64x128xf32>
    %c0_200 = arith.constant 0 : index
    %c0_201 = arith.constant 0 : index
    %271 = vector.load %arg12[%c0_200, %c0_201] : memref<1x128xf32, #tpu.memory_space<vmem>>, vector<1x128xf32>
    %272 = vector.broadcast %271 : vector<1x128xf32> to vector<64x128xf32>
    %273 = arith.addf %270, %272 : vector<64x128xf32>
    %274 = vector.broadcast %37 : vector<64x1xf32> to vector<64x128xf32>
    %275 = arith.mulf %273, %274 : vector<64x128xf32>
    %276 = arith.truncf %275 : vector<64x128xf32> to vector<64x128xbf16>
    %c16_202 = arith.constant 16 : index
    %c0_203 = arith.constant 0 : index
    %277 = vector.load %arg16[%c16_202, %c0_203] : memref<96x128xbf16, #tpu.memory_space<vmem>>, vector<64x128xbf16>
    tpu.vector_store %arg16[%c16_202, %c0_203], %276 {strides = array<i32>} : memref<96x128xbf16, #tpu.memory_space<vmem>>, vector<64x128xbf16>,
    %cst_204 = arith.constant 0.000000e+00 : f32
    %278 = vector.broadcast %cst_204 : f32 to vector<1x128xf32>
    %c22_205 = arith.constant 22 : index
    %c0_206 = arith.constant 0 : index
    %279 = vector.load %arg16[%c22_205, %c0_206] : memref<96x128xbf16, #tpu.memory_space<vmem>>, vector<1x128xbf16>
    %c0_207 = arith.constant 0 : index
    %c0_208 = arith.constant 0 : index
    %c0_209 = arith.constant 0 : index
    %280 = vector.load %arg13[%c0_207, %c0_208, %c0_209] : memref<12x128x128xbf16, #tpu.memory_space<vmem>>, vector<1x128x128xbf16>
    %281 = vector.shape_cast %280 : vector<1x128x128xbf16> to vector<128x128xbf16>
    %cst_210 = arith.constant dense<0.000000e+00> : vector<1x128xf32>
    %282 = tpu.matmul %279, %281, %cst_210 {dimension_numbers = #tpu.dot_dimension_numbers<[1], [0], [0], [1], [0, 0, 1, 1], [], []>} : vector<1x128xbf16>, vector<128x128xbf16>, vector<1x128xf32> -> vector<1x128xf32>
    %283 = arith.addf %278, %282 : vector<1x128xf32>
    %c23 = arith.constant 23 : index
    %c0_211 = arith.constant 0 : index
    %284 = vector.load %arg16[%c23, %c0_211] : memref<96x128xbf16, #tpu.memory_space<vmem>>, vector<1x128xbf16>
    %c1_212 = arith.constant 1 : index
    %c0_213 = arith.constant 0 : index
    %c0_214 = arith.constant 0 : index
    %285 = vector.load %arg13[%c1_212, %c0_213, %c0_214] : memref<12x128x128xbf16, #tpu.memory_space<vmem>>, vector<1x128x128xbf16>
    %286 = vector.shape_cast %285 : vector<1x128x128xbf16> to vector<128x128xbf16>
    %cst_215 = arith.constant dense<0.000000e+00> : vector<1x128xf32>
    %287 = tpu.matmul %284, %286, %cst_215 {dimension_numbers = #tpu.dot_dimension_numbers<[1], [0], [0], [1], [0, 0, 1, 1], [], []>} : vector<1x128xbf16>, vector<128x128xbf16>, vector<1x128xf32> -> vector<1x128xf32>
    %288 = arith.addf %283, %287 : vector<1x128xf32>
    %c24 = arith.constant 24 : index
    %c0_216 = arith.constant 0 : index
    %289 = vector.load %arg16[%c24, %c0_216] : memref<96x128xbf16, #tpu.memory_space<vmem>>, vector<1x128xbf16>
    %c2_217 = arith.constant 2 : index
    %c0_218 = arith.constant 0 : index
    %c0_219 = arith.constant 0 : index
    %290 = vector.load %arg13[%c2_217, %c0_218, %c0_219] : memref<12x128x128xbf16, #tpu.memory_space<vmem>>, vector<1x128x128xbf16>
    %291 = vector.shape_cast %290 : vector<1x128x128xbf16> to vector<128x128xbf16>
    %cst_220 = arith.constant dense<0.000000e+00> : vector<1x128xf32>
    %292 = tpu.matmul %289, %291, %cst_220 {dimension_numbers = #tpu.dot_dimension_numbers<[1], [0], [0], [1], [0, 0, 1, 1], [], []>} : vector<1x128xbf16>, vector<128x128xbf16>, vector<1x128xf32> -> vector<1x128xf32>
    %293 = arith.addf %288, %292 : vector<1x128xf32>
    %c27 = arith.constant 27 : index
    %c0_221 = arith.constant 0 : index
    %294 = vector.load %arg16[%c27, %c0_221] : memref<96x128xbf16, #tpu.memory_space<vmem>>, vector<1x128xbf16>
    %c3_222 = arith.constant 3 : index
    %c0_223 = arith.constant 0 : index
    %c0_224 = arith.constant 0 : index
    %295 = vector.load %arg13[%c3_222, %c0_223, %c0_224] : memref<12x128x128xbf16, #tpu.memory_space<vmem>>, vector<1x128x128xbf16>
    %296 = vector.shape_cast %295 : vector<1x128x128xbf16> to vector<128x128xbf16>
    %cst_225 = arith.constant dense<0.000000e+00> : vector<1x128xf32>
    %297 = tpu.matmul %294, %296, %cst_225 {dimension_numbers = #tpu.dot_dimension_numbers<[1], [0], [0], [1], [0, 0, 1, 1], [], []>} : vector<1x128xbf16>, vector<128x128xbf16>, vector<1x128xf32> -> vector<1x128xf32>
    %298 = arith.addf %293, %297 : vector<1x128xf32>
    %c28 = arith.constant 28 : index
    %c0_226 = arith.constant 0 : index
    %299 = vector.load %arg16[%c28, %c0_226] : memref<96x128xbf16, #tpu.memory_space<vmem>>, vector<1x128xbf16>
    %c4_227 = arith.constant 4 : index
    %c0_228 = arith.constant 0 : index
    %c0_229 = arith.constant 0 : index
    %300 = vector.load %arg13[%c4_227, %c0_228, %c0_229] : memref<12x128x128xbf16, #tpu.memory_space<vmem>>, vector<1x128x128xbf16>
    %301 = vector.shape_cast %300 : vector<1x128x128xbf16> to vector<128x128xbf16>
    %cst_230 = arith.constant dense<0.000000e+00> : vector<1x128xf32>
    %302 = tpu.matmul %299, %301, %cst_230 {dimension_numbers = #tpu.dot_dimension_numbers<[1], [0], [0], [1], [0, 0, 1, 1], [], []>} : vector<1x128xbf16>, vector<128x128xbf16>, vector<1x128xf32> -> vector<1x128xf32>
    %303 = arith.addf %298, %302 : vector<1x128xf32>
    %c29 = arith.constant 29 : index
    %c0_231 = arith.constant 0 : index
    %304 = vector.load %arg16[%c29, %c0_231] : memref<96x128xbf16, #tpu.memory_space<vmem>>, vector<1x128xbf16>
    %c5_232 = arith.constant 5 : index
    %c0_233 = arith.constant 0 : index
    %c0_234 = arith.constant 0 : index
    %305 = vector.load %arg13[%c5_232, %c0_233, %c0_234] : memref<12x128x128xbf16, #tpu.memory_space<vmem>>, vector<1x128x128xbf16>
    %306 = vector.shape_cast %305 : vector<1x128x128xbf16> to vector<128x128xbf16>
    %cst_235 = arith.constant dense<0.000000e+00> : vector<1x128xf32>
    %307 = tpu.matmul %304, %306, %cst_235 {dimension_numbers = #tpu.dot_dimension_numbers<[1], [0], [0], [1], [0, 0, 1, 1], [], []>} : vector<1x128xbf16>, vector<128x128xbf16>, vector<1x128xf32> -> vector<1x128xf32>
    %308 = arith.addf %303, %307 : vector<1x128xf32>
    %c32 = arith.constant 32 : index
    %c0_236 = arith.constant 0 : index
    %309 = vector.load %arg16[%c32, %c0_236] : memref<96x128xbf16, #tpu.memory_space<vmem>>, vector<1x128xbf16>
    %c6_237 = arith.constant 6 : index
    %c0_238 = arith.constant 0 : index
    %c0_239 = arith.constant 0 : index
    %310 = vector.load %arg13[%c6_237, %c0_238, %c0_239] : memref<12x128x128xbf16, #tpu.memory_space<vmem>>, vector<1x128x128xbf16>
    %311 = vector.shape_cast %310 : vector<1x128x128xbf16> to vector<128x128xbf16>
    %cst_240 = arith.constant dense<0.000000e+00> : vector<1x128xf32>
    %312 = tpu.matmul %309, %311, %cst_240 {dimension_numbers = #tpu.dot_dimension_numbers<[1], [0], [0], [1], [0, 0, 1, 1], [], []>} : vector<1x128xbf16>, vector<128x128xbf16>, vector<1x128xf32> -> vector<1x128xf32>
    %313 = arith.addf %308, %312 : vector<1x128xf32>
    %c33 = arith.constant 33 : index
    %c0_241 = arith.constant 0 : index
    %314 = vector.load %arg16[%c33, %c0_241] : memref<96x128xbf16, #tpu.memory_space<vmem>>, vector<1x128xbf16>
    %c7_242 = arith.constant 7 : index
    %c0_243 = arith.constant 0 : index
    %c0_244 = arith.constant 0 : index
    %315 = vector.load %arg13[%c7_242, %c0_243, %c0_244] : memref<12x128x128xbf16, #tpu.memory_space<vmem>>, vector<1x128x128xbf16>
    %316 = vector.shape_cast %315 : vector<1x128x128xbf16> to vector<128x128xbf16>
    %cst_245 = arith.constant dense<0.000000e+00> : vector<1x128xf32>
    %317 = tpu.matmul %314, %316, %cst_245 {dimension_numbers = #tpu.dot_dimension_numbers<[1], [0], [0], [1], [0, 0, 1, 1], [], []>} : vector<1x128xbf16>, vector<128x128xbf16>, vector<1x128xf32> -> vector<1x128xf32>
    %318 = arith.addf %313, %317 : vector<1x128xf32>
    %c34 = arith.constant 34 : index
    %c0_246 = arith.constant 0 : index
    %319 = vector.load %arg16[%c34, %c0_246] : memref<96x128xbf16, #tpu.memory_space<vmem>>, vector<1x128xbf16>
    %c8_247 = arith.constant 8 : index
    %c0_248 = arith.constant 0 : index
    %c0_249 = arith.constant 0 : index
    %320 = vector.load %arg13[%c8_247, %c0_248, %c0_249] : memref<12x128x128xbf16, #tpu.memory_space<vmem>>, vector<1x128x128xbf16>
    %321 = vector.shape_cast %320 : vector<1x128x128xbf16> to vector<128x128xbf16>
    %cst_250 = arith.constant dense<0.000000e+00> : vector<1x128xf32>
    %322 = tpu.matmul %319, %321, %cst_250 {dimension_numbers = #tpu.dot_dimension_numbers<[1], [0], [0], [1], [0, 0, 1, 1], [], []>} : vector<1x128xbf16>, vector<128x128xbf16>, vector<1x128xf32> -> vector<1x128xf32>
    %323 = arith.addf %318, %322 : vector<1x128xf32>
    %c37 = arith.constant 37 : index
    %c0_251 = arith.constant 0 : index
    %324 = vector.load %arg16[%c37, %c0_251] : memref<96x128xbf16, #tpu.memory_space<vmem>>, vector<1x128xbf16>
    %c9 = arith.constant 9 : index
    %c0_252 = arith.constant 0 : index
    %c0_253 = arith.constant 0 : index
    %325 = vector.load %arg13[%c9, %c0_252, %c0_253] : memref<12x128x128xbf16, #tpu.memory_space<vmem>>, vector<1x128x128xbf16>
    %326 = vector.shape_cast %325 : vector<1x128x128xbf16> to vector<128x128xbf16>
    %cst_254 = arith.constant dense<0.000000e+00> : vector<1x128xf32>
    %327 = tpu.matmul %324, %326, %cst_254 {dimension_numbers = #tpu.dot_dimension_numbers<[1], [0], [0], [1], [0, 0, 1, 1], [], []>} : vector<1x128xbf16>, vector<128x128xbf16>, vector<1x128xf32> -> vector<1x128xf32>
    %328 = arith.addf %323, %327 : vector<1x128xf32>
    %c38 = arith.constant 38 : index
    %c0_255 = arith.constant 0 : index
    %329 = vector.load %arg16[%c38, %c0_255] : memref<96x128xbf16, #tpu.memory_space<vmem>>, vector<1x128xbf16>
    %c10_256 = arith.constant 10 : index
    %c0_257 = arith.constant 0 : index
    %c0_258 = arith.constant 0 : index
    %330 = vector.load %arg13[%c10_256, %c0_257, %c0_258] : memref<12x128x128xbf16, #tpu.memory_space<vmem>>, vector<1x128x128xbf16>
    %331 = vector.shape_cast %330 : vector<1x128x128xbf16> to vector<128x128xbf16>
    %cst_259 = arith.constant dense<0.000000e+00> : vector<1x128xf32>
    %332 = tpu.matmul %329, %331, %cst_259 {dimension_numbers = #tpu.dot_dimension_numbers<[1], [0], [0], [1], [0, 0, 1, 1], [], []>} : vector<1x128xbf16>, vector<128x128xbf16>, vector<1x128xf32> -> vector<1x128xf32>
    %333 = arith.addf %328, %332 : vector<1x128xf32>
    %c39 = arith.constant 39 : index
    %c0_260 = arith.constant 0 : index
    %334 = vector.load %arg16[%c39, %c0_260] : memref<96x128xbf16, #tpu.memory_space<vmem>>, vector<1x128xbf16>
    %c11_261 = arith.constant 11 : index
    %c0_262 = arith.constant 0 : index
    %c0_263 = arith.constant 0 : index
    %335 = vector.load %arg13[%c11_261, %c0_262, %c0_263] : memref<12x128x128xbf16, #tpu.memory_space<vmem>>, vector<1x128x128xbf16>
    %336 = vector.shape_cast %335 : vector<1x128x128xbf16> to vector<128x128xbf16>
    %cst_264 = arith.constant dense<0.000000e+00> : vector<1x128xf32>
    %337 = tpu.matmul %334, %336, %cst_264 {dimension_numbers = #tpu.dot_dimension_numbers<[1], [0], [0], [1], [0, 0, 1, 1], [], []>} : vector<1x128xbf16>, vector<128x128xbf16>, vector<1x128xf32> -> vector<1x128xf32>
    %338 = arith.addf %333, %337 : vector<1x128xf32>
    %c0_265 = arith.constant 0 : index
    %c0_266 = arith.constant 0 : index
    %339 = vector.load %arg14[%c0_265, %c0_266] : memref<1x128xf32, #tpu.memory_space<vmem>>, vector<1x128xf32>
    %340 = arith.addf %338, %339 : vector<1x128xf32>
    %c0_267 = arith.constant 0 : index
    %c0_268 = arith.constant 0 : index
    %341 = vector.load %arg15[%c0_267, %c0_268] : memref<2x128xf32, #tpu.memory_space<vmem>>, vector<1x128xf32>
    tpu.vector_store %arg15[%c0_267, %c0_268], %340 {strides = array<i32>} : memref<2x128xf32, #tpu.memory_space<vmem>>, vector<1x128xf32>,
    %cst_269 = arith.constant 0.000000e+00 : f32
    %342 = vector.broadcast %cst_269 : f32 to vector<1x128xf32>
    %c52 = arith.constant 52 : index
    %c0_270 = arith.constant 0 : index
    %343 = vector.load %arg16[%c52, %c0_270] : memref<96x128xbf16, #tpu.memory_space<vmem>>, vector<1x128xbf16>
    %c0_271 = arith.constant 0 : index
    %c0_272 = arith.constant 0 : index
    %c0_273 = arith.constant 0 : index
    %344 = vector.load %arg13[%c0_271, %c0_272, %c0_273] : memref<12x128x128xbf16, #tpu.memory_space<vmem>>, vector<1x128x128xbf16>
    %345 = vector.shape_cast %344 : vector<1x128x128xbf16> to vector<128x128xbf16>
    %cst_274 = arith.constant dense<0.000000e+00> : vector<1x128xf32>
    %346 = tpu.matmul %343, %345, %cst_274 {dimension_numbers = #tpu.dot_dimension_numbers<[1], [0], [0], [1], [0, 0, 1, 1], [], []>} : vector<1x128xbf16>, vector<128x128xbf16>, vector<1x128xf32> -> vector<1x128xf32>
    %347 = arith.addf %342, %346 : vector<1x128xf32>
    %c53 = arith.constant 53 : index
    %c0_275 = arith.constant 0 : index
    %348 = vector.load %arg16[%c53, %c0_275] : memref<96x128xbf16, #tpu.memory_space<vmem>>, vector<1x128xbf16>
    %c1_276 = arith.constant 1 : index
    %c0_277 = arith.constant 0 : index
    %c0_278 = arith.constant 0 : index
    %349 = vector.load %arg13[%c1_276, %c0_277, %c0_278] : memref<12x128x128xbf16, #tpu.memory_space<vmem>>, vector<1x128x128xbf16>
    %350 = vector.shape_cast %349 : vector<1x128x128xbf16> to vector<128x128xbf16>
    %cst_279 = arith.constant dense<0.000000e+00> : vector<1x128xf32>
    %351 = tpu.matmul %348, %350, %cst_279 {dimension_numbers = #tpu.dot_dimension_numbers<[1], [0], [0], [1], [0, 0, 1, 1], [], []>} : vector<1x128xbf16>, vector<128x128xbf16>, vector<1x128xf32> -> vector<1x128xf32>
    %352 = arith.addf %347, %351 : vector<1x128xf32>
    %c54 = arith.constant 54 : index
    %c0_280 = arith.constant 0 : index
    %353 = vector.load %arg16[%c54, %c0_280] : memref<96x128xbf16, #tpu.memory_space<vmem>>, vector<1x128xbf16>
    %c2_281 = arith.constant 2 : index
    %c0_282 = arith.constant 0 : index
    %c0_283 = arith.constant 0 : index
    %354 = vector.load %arg13[%c2_281, %c0_282, %c0_283] : memref<12x128x128xbf16, #tpu.memory_space<vmem>>, vector<1x128x128xbf16>
    %355 = vector.shape_cast %354 : vector<1x128x128xbf16> to vector<128x128xbf16>
    %cst_284 = arith.constant dense<0.000000e+00> : vector<1x128xf32>
    %356 = tpu.matmul %353, %355, %cst_284 {dimension_numbers = #tpu.dot_dimension_numbers<[1], [0], [0], [1], [0, 0, 1, 1], [], []>} : vector<1x128xbf16>, vector<128x128xbf16>, vector<1x128xf32> -> vector<1x128xf32>
    %357 = arith.addf %352, %356 : vector<1x128xf32>
    %c57 = arith.constant 57 : index
    %c0_285 = arith.constant 0 : index
    %358 = vector.load %arg16[%c57, %c0_285] : memref<96x128xbf16, #tpu.memory_space<vmem>>, vector<1x128xbf16>
    %c3_286 = arith.constant 3 : index
    %c0_287 = arith.constant 0 : index
    %c0_288 = arith.constant 0 : index
    %359 = vector.load %arg13[%c3_286, %c0_287, %c0_288] : memref<12x128x128xbf16, #tpu.memory_space<vmem>>, vector<1x128x128xbf16>
    %360 = vector.shape_cast %359 : vector<1x128x128xbf16> to vector<128x128xbf16>
    %cst_289 = arith.constant dense<0.000000e+00> : vector<1x128xf32>
    %361 = tpu.matmul %358, %360, %cst_289 {dimension_numbers = #tpu.dot_dimension_numbers<[1], [0], [0], [1], [0, 0, 1, 1], [], []>} : vector<1x128xbf16>, vector<128x128xbf16>, vector<1x128xf32> -> vector<1x128xf32>
    %362 = arith.addf %357, %361 : vector<1x128xf32>
    %c58 = arith.constant 58 : index
    %c0_290 = arith.constant 0 : index
    %363 = vector.load %arg16[%c58, %c0_290] : memref<96x128xbf16, #tpu.memory_space<vmem>>, vector<1x128xbf16>
    %c4_291 = arith.constant 4 : index
    %c0_292 = arith.constant 0 : index
    %c0_293 = arith.constant 0 : index
    %364 = vector.load %arg13[%c4_291, %c0_292, %c0_293] : memref<12x128x128xbf16, #tpu.memory_space<vmem>>, vector<1x128x128xbf16>
    %365 = vector.shape_cast %364 : vector<1x128x128xbf16> to vector<128x128xbf16>
    %cst_294 = arith.constant dense<0.000000e+00> : vector<1x128xf32>
    %366 = tpu.matmul %363, %365, %cst_294 {dimension_numbers = #tpu.dot_dimension_numbers<[1], [0], [0], [1], [0, 0, 1, 1], [], []>} : vector<1x128xbf16>, vector<128x128xbf16>, vector<1x128xf32> -> vector<1x128xf32>
    %367 = arith.addf %362, %366 : vector<1x128xf32>
    %c59 = arith.constant 59 : index
    %c0_295 = arith.constant 0 : index
    %368 = vector.load %arg16[%c59, %c0_295] : memref<96x128xbf16, #tpu.memory_space<vmem>>, vector<1x128xbf16>
    %c5_296 = arith.constant 5 : index
    %c0_297 = arith.constant 0 : index
    %c0_298 = arith.constant 0 : index
    %369 = vector.load %arg13[%c5_296, %c0_297, %c0_298] : memref<12x128x128xbf16, #tpu.memory_space<vmem>>, vector<1x128x128xbf16>
    %370 = vector.shape_cast %369 : vector<1x128x128xbf16> to vector<128x128xbf16>
    %cst_299 = arith.constant dense<0.000000e+00> : vector<1x128xf32>
    %371 = tpu.matmul %368, %370, %cst_299 {dimension_numbers = #tpu.dot_dimension_numbers<[1], [0], [0], [1], [0, 0, 1, 1], [], []>} : vector<1x128xbf16>, vector<128x128xbf16>, vector<1x128xf32> -> vector<1x128xf32>
    %372 = arith.addf %367, %371 : vector<1x128xf32>
    %c62 = arith.constant 62 : index
    %c0_300 = arith.constant 0 : index
    %373 = vector.load %arg16[%c62, %c0_300] : memref<96x128xbf16, #tpu.memory_space<vmem>>, vector<1x128xbf16>
    %c6_301 = arith.constant 6 : index
    %c0_302 = arith.constant 0 : index
    %c0_303 = arith.constant 0 : index
    %374 = vector.load %arg13[%c6_301, %c0_302, %c0_303] : memref<12x128x128xbf16, #tpu.memory_space<vmem>>, vector<1x128x128xbf16>
    %375 = vector.shape_cast %374 : vector<1x128x128xbf16> to vector<128x128xbf16>
    %cst_304 = arith.constant dense<0.000000e+00> : vector<1x128xf32>
    %376 = tpu.matmul %373, %375, %cst_304 {dimension_numbers = #tpu.dot_dimension_numbers<[1], [0], [0], [1], [0, 0, 1, 1], [], []>} : vector<1x128xbf16>, vector<128x128xbf16>, vector<1x128xf32> -> vector<1x128xf32>
    %377 = arith.addf %372, %376 : vector<1x128xf32>
    %c63 = arith.constant 63 : index
    %c0_305 = arith.constant 0 : index
    %378 = vector.load %arg16[%c63, %c0_305] : memref<96x128xbf16, #tpu.memory_space<vmem>>, vector<1x128xbf16>
    %c7_306 = arith.constant 7 : index
    %c0_307 = arith.constant 0 : index
    %c0_308 = arith.constant 0 : index
    %379 = vector.load %arg13[%c7_306, %c0_307, %c0_308] : memref<12x128x128xbf16, #tpu.memory_space<vmem>>, vector<1x128x128xbf16>
    %380 = vector.shape_cast %379 : vector<1x128x128xbf16> to vector<128x128xbf16>
    %cst_309 = arith.constant dense<0.000000e+00> : vector<1x128xf32>
    %381 = tpu.matmul %378, %380, %cst_309 {dimension_numbers = #tpu.dot_dimension_numbers<[1], [0], [0], [1], [0, 0, 1, 1], [], []>} : vector<1x128xbf16>, vector<128x128xbf16>, vector<1x128xf32> -> vector<1x128xf32>
    %382 = arith.addf %377, %381 : vector<1x128xf32>
    %c64 = arith.constant 64 : index
    %c0_310 = arith.constant 0 : index
    %383 = vector.load %arg16[%c64, %c0_310] : memref<96x128xbf16, #tpu.memory_space<vmem>>, vector<1x128xbf16>
    %c8_311 = arith.constant 8 : index
    %c0_312 = arith.constant 0 : index
    %c0_313 = arith.constant 0 : index
    %384 = vector.load %arg13[%c8_311, %c0_312, %c0_313] : memref<12x128x128xbf16, #tpu.memory_space<vmem>>, vector<1x128x128xbf16>
    %385 = vector.shape_cast %384 : vector<1x128x128xbf16> to vector<128x128xbf16>
    %cst_314 = arith.constant dense<0.000000e+00> : vector<1x128xf32>
    %386 = tpu.matmul %383, %385, %cst_314 {dimension_numbers = #tpu.dot_dimension_numbers<[1], [0], [0], [1], [0, 0, 1, 1], [], []>} : vector<1x128xbf16>, vector<128x128xbf16>, vector<1x128xf32> -> vector<1x128xf32>
    %387 = arith.addf %382, %386 : vector<1x128xf32>
    %c67 = arith.constant 67 : index
    %c0_315 = arith.constant 0 : index
    %388 = vector.load %arg16[%c67, %c0_315] : memref<96x128xbf16, #tpu.memory_space<vmem>>, vector<1x128xbf16>
    %c9_316 = arith.constant 9 : index
    %c0_317 = arith.constant 0 : index
    %c0_318 = arith.constant 0 : index
    %389 = vector.load %arg13[%c9_316, %c0_317, %c0_318] : memref<12x128x128xbf16, #tpu.memory_space<vmem>>, vector<1x128x128xbf16>
    %390 = vector.shape_cast %389 : vector<1x128x128xbf16> to vector<128x128xbf16>
    %cst_319 = arith.constant dense<0.000000e+00> : vector<1x128xf32>
    %391 = tpu.matmul %388, %390, %cst_319 {dimension_numbers = #tpu.dot_dimension_numbers<[1], [0], [0], [1], [0, 0, 1, 1], [], []>} : vector<1x128xbf16>, vector<128x128xbf16>, vector<1x128xf32> -> vector<1x128xf32>
    %392 = arith.addf %387, %391 : vector<1x128xf32>
    %c68 = arith.constant 68 : index
    %c0_320 = arith.constant 0 : index
    %393 = vector.load %arg16[%c68, %c0_320] : memref<96x128xbf16, #tpu.memory_space<vmem>>, vector<1x128xbf16>
    %c10_321 = arith.constant 10 : index
    %c0_322 = arith.constant 0 : index
    %c0_323 = arith.constant 0 : index
    %394 = vector.load %arg13[%c10_321, %c0_322, %c0_323] : memref<12x128x128xbf16, #tpu.memory_space<vmem>>, vector<1x128x128xbf16>
    %395 = vector.shape_cast %394 : vector<1x128x128xbf16> to vector<128x128xbf16>
    %cst_324 = arith.constant dense<0.000000e+00> : vector<1x128xf32>
    %396 = tpu.matmul %393, %395, %cst_324 {dimension_numbers = #tpu.dot_dimension_numbers<[1], [0], [0], [1], [0, 0, 1, 1], [], []>} : vector<1x128xbf16>, vector<128x128xbf16>, vector<1x128xf32> -> vector<1x128xf32>
    %397 = arith.addf %392, %396 : vector<1x128xf32>
    %c69 = arith.constant 69 : index
    %c0_325 = arith.constant 0 : index
    %398 = vector.load %arg16[%c69, %c0_325] : memref<96x128xbf16, #tpu.memory_space<vmem>>, vector<1x128xbf16>
    %c11_326 = arith.constant 11 : index
    %c0_327 = arith.constant 0 : index
    %c0_328 = arith.constant 0 : index
    %399 = vector.load %arg13[%c11_326, %c0_327, %c0_328] : memref<12x128x128xbf16, #tpu.memory_space<vmem>>, vector<1x128x128xbf16>
    %400 = vector.shape_cast %399 : vector<1x128x128xbf16> to vector<128x128xbf16>
    %cst_329 = arith.constant dense<0.000000e+00> : vector<1x128xf32>
    %401 = tpu.matmul %398, %400, %cst_329 {dimension_numbers = #tpu.dot_dimension_numbers<[1], [0], [0], [1], [0, 0, 1, 1], [], []>} : vector<1x128xbf16>, vector<128x128xbf16>, vector<1x128xf32> -> vector<1x128xf32>
    %402 = arith.addf %397, %401 : vector<1x128xf32>
    %c0_330 = arith.constant 0 : index
    %c0_331 = arith.constant 0 : index
    %403 = vector.load %arg14[%c0_330, %c0_331] : memref<1x128xf32, #tpu.memory_space<vmem>>, vector<1x128xf32>
    %404 = arith.addf %402, %403 : vector<1x128xf32>
    %c1_332 = arith.constant 1 : index
    %c0_333 = arith.constant 0 : index
    %405 = vector.load %arg15[%c1_332, %c0_333] : memref<2x128xf32, #tpu.memory_space<vmem>>, vector<1x128xf32>
    tpu.vector_store %arg15[%c1_332, %c0_333], %404 {strides = array<i32>} : memref<2x128xf32, #tpu.memory_space<vmem>>, vector<1x128xf32>,
    return
  }
}

</mosaic_0001>

<llo_original>
// kernel: discriminator_forward.1
$region0: #{discriminator_forward.1}
  #allocation0 [shape = 'u32[]', space=smem, size = 0x4, offset = 0x4, fixed_abs, tag = 'smem constant byte address 0x4 - core index']
  #allocation1 [shape = 'u32[144,128]{1,0:T(1,128)}', space=vmem, size = 0x12000, scoped, tag = 'internal scratch']
  #allocation2 [shape = 'bf16[96,128]{1,0:T(16,128)(2,1)}', space=vmem, size = 0x6000, scoped, tag = 'scratch operand']
  %s0 = inlined_call_operand.vmem [shape: bf16[96,128], index: 0, kind: input, shape index: {}]
  %s1 = inlined_call_operand.hbm [shape: bf16[9,128,128], index: 1, kind: input, shape index: {}]
  %s2 = inlined_call_operand.vmem [shape: f32[1,128], index: 2, kind: input, shape index: {}]
  %s3 = inlined_call_operand.vmem [shape: f32[1,128], index: 3, kind: input, shape index: {}]
  %s4 = inlined_call_operand.vmem [shape: f32[1,128], index: 4, kind: input, shape index: {}]
  %s5 = inlined_call_operand.hbm [shape: bf16[9,128,128], index: 5, kind: input, shape index: {}]
  %s6 = inlined_call_operand.vmem [shape: f32[1,128], index: 6, kind: input, shape index: {}]
  %s7 = inlined_call_operand.vmem [shape: f32[1,128], index: 7, kind: input, shape index: {}]
  %s8 = inlined_call_operand.vmem [shape: f32[1,128], index: 8, kind: input, shape index: {}]
  %s9 = inlined_call_operand.hbm [shape: bf16[9,128,128], index: 9, kind: input, shape index: {}]
  %s10 = inlined_call_operand.vmem [shape: f32[1,128], index: 10, kind: input, shape index: {}]
  %s11 = inlined_call_operand.vmem [shape: f32[1,128], index: 11, kind: input, shape index: {}]
  %s12 = inlined_call_operand.vmem [shape: f32[1,128], index: 12, kind: input, shape index: {}]
  %s13 = inlined_call_operand.hbm [shape: bf16[12,128,128], index: 13, kind: input, shape index: {}]
  %s14 = inlined_call_operand.vmem [shape: f32[1,128], index: 14, kind: input, shape index: {}]
  %s15 = inlined_call_operand.hbm [shape: f32[2,128], index: 15, kind: output, shape index: {}]
  %s16 = sld [smem:[#allocation0]]
  $region86: #{discriminator_forward.1} parent=0
    _
  %s18 = ssub.s32 1, %s16
  %s19 = scalar_select 0, %s18, %s16
  $region1: #{discriminator_forward.1} parent=0
    #allocation3 [shape = 'u8[294912]{0}', space=vmem, size = 0x48000, scoped, tag = 'input window, operand 1, single buffered']
    #allocation4 [shape = 's32[1]{0}', space=sflag, size = 0x4, scoped, tag = 'scoped memory for discriminator_forward.1']
    #allocation5 [shape = 's32[1]{0}', space=sflag, size = 0x4, scoped, tag = 'scoped memory for discriminator_forward.1']
    #allocation6 [shape = 'u8[294912]{0}', space=vmem, size = 0x48000, scoped, tag = 'input window, operand 5, single buffered']
    #allocation7 [shape = 's32[1]{0}', space=sflag, size = 0x4, scoped, tag = 'scoped memory for discriminator_forward.1']
    #allocation8 [shape = 'u8[294912]{0}', space=vmem, size = 0x48000, scoped, tag = 'input window, operand 9, single buffered']
    #allocation9 [shape = 'u8[393216]{0}', space=vmem, size = 0x60000, scoped, tag = 'input window, operand 13, single buffered']
    #allocation10 [shape = 's32[1]{0}', space=sflag, size = 0x4, scoped, tag = 'scoped memory for discriminator_forward.1']
    #allocation11 [shape = 'u8[1024]{0}', space=vmem, size = 0x400, scoped, tag = 'output window, operand 0, single buffered']
    %20 = vsyncpa [#allocation4], 0
    %21 = vsyncpa [#allocation7], 0
    %22 = vsyncpa [#allocation10], 0
    %23 = vsyncpa [#allocation5], 0
    // Predicated region
    $region2: #{discriminator_forward.1} parent=1 // pred_check
      _
    $region3: #{discriminator_forward.1} parent=1 // pred_check_branch
      %25 = sbr.rel (0) target = $region5
    $region4: #{discriminator_forward.1} parent=1 // pred_region
      _
    $region5: #{discriminator_forward.1} parent=1 // pred_fallthru
      _
    // Predicated region
    $region6: #{discriminator_forward.1} parent=1 // pred_check
      _
    $region7: #{discriminator_forward.1} parent=1 // pred_check_branch
      %27 = sbr.rel (0) target = $region9
    $region8: #{discriminator_forward.1} parent=1 // pred_region
      %s29 = ssub.s32 9216, 9216
      %30 = vsyncadd [#allocation4], %s29
      %s31 = sshll.u32 [#allocation3], 4
      %s32 = int_to_ptr.vmem [resolvable:$true] %s31
      %37 = dma.hbm_to_vmem [thread:$0]  %s1, 9216, %s32, [#allocation4], 64, 64, 4
    $region9: #{discriminator_forward.1} parent=1 // pred_fallthru
      _
    // Predicated region
    $region10: #{discriminator_forward.1} parent=1 // pred_check
      _
    $region11: #{discriminator_forward.1} parent=1 // pred_check_branch
      %39 = sbr.rel (0) target = $region13
    $region12: #{discriminator_forward.1} parent=1 // pred_region
      _
    $region13: #{discriminator_forward.1} parent=1 // pred_fallthru
      _
    // Predicated region
    $region14: #{discriminator_forward.1} parent=1 // pred_check
      _
    $region15: #{discriminator_forward.1} parent=1 // pred_check_branch
      %41 = sbr.rel (0) target = $region17
    $region16: #{discriminator_forward.1} parent=1 // pred_region
      _
    $region17: #{discriminator_forward.1} parent=1 // pred_fallthru
      _
    // Predicated region
    $region18: #{discriminator_forward.1} parent=1 // pred_check
      _
    $region19: #{discriminator_forward.1} parent=1 // pred_check_branch
      %43 = sbr.rel (0) target = $region21
    $region20: #{discriminator_forward.1} parent=1 // pred_region
      _
    $region21: #{discriminator_forward.1} parent=1 // pred_fallthru
      _
    // Predicated region
    $region22: #{discriminator_forward.1} parent=1 // pred_check
      _
    $region23: #{discriminator_forward.1} parent=1 // pred_check_branch
      %45 = sbr.rel (0) target = $region25
    $region24: #{discriminator_forward.1} parent=1 // pred_region
      %s47 = ssub.s32 9216, 9216
      %48 = vsyncadd [#allocation7], %s47
      %s49 = sshll.u32 [#allocation6], 4
      %s50 = int_to_ptr.vmem [resolvable:$true] %s49
      %55 = dma.hbm_to_vmem [thread:$0]  %s5, 9216, %s50, [#allocation7], 64, 64, 4
    $region25: #{discriminator_forward.1} parent=1 // pred_fallthru
      _
    // Predicated region
    $region26: #{discriminator_forward.1} parent=1 // pred_check
      _
    $region27: #{discriminator_forward.1} parent=1 // pred_check_branch
      %57 = sbr.rel (0) target = $region29
    $region28: #{discriminator_forward.1} parent=1 // pred_region
      _
    $region29: #{discriminator_forward.1} parent=1 // pred_fallthru
      _
    // Predicated region
    $region30: #{discriminator_forward.1} parent=1 // pred_check
      _
    $region31: #{discriminator_forward.1} parent=1 // pred_check_branch
      %59 = sbr.rel (0) target = $region33
    $region32: #{discriminator_forward.1} parent=1 // pred_region
      _
    $region33: #{discriminator_forward.1} parent=1 // pred_fallthru
      _
    // Predicated region
    $region34: #{discriminator_forward.1} parent=1 // pred_check
      _
    $region35: #{discriminator_forward.1} parent=1 // pred_check_branch
      %61 = sbr.rel (0) target = $region37
    $region36: #{discriminator_forward.1} parent=1 // pred_region
      _
    $region37: #{discriminator_forward.1} parent=1 // pred_fallthru
      _
    // Predicated region
    $region38: #{discriminator_forward.1} parent=1 // pred_check
      _
    $region39: #{discriminator_forward.1} parent=1 // pred_check_branch
      %63 = sbr.rel (0) target = $region41
    $region40: #{discriminator_forward.1} parent=1 // pred_region
      %s65 = ssub.s32 9216, 9216
      %66 = vsyncadd [#allocation7], %s65
      %s67 = sshll.u32 [#allocation8], 4
      %s68 = int_to_ptr.vmem [resolvable:$true] %s67
      %73 = dma.hbm_to_vmem [thread:$0]  %s9, 9216, %s68, [#allocation7], 64, 64, 4
    $region41: #{discriminator_forward.1} parent=1 // pred_fallthru
      _
    // Predicated region
    $region42: #{discriminator_forward.1} parent=1 // pred_check
      _
    $region43: #{discriminator_forward.1} parent=1 // pred_check_branch
      %75 = sbr.rel (0) target = $region45
    $region44: #{discriminator_forward.1} parent=1 // pred_region
      _
    $region45: #{discriminator_forward.1} parent=1 // pred_fallthru
      _
    // Predicated region
    $region46: #{discriminator_forward.1} parent=1 // pred_check
      _
    $region47: #{discriminator_forward.1} parent=1 // pred_check_branch
      %77 = sbr.rel (0) target = $region49
    $region48: #{discriminator_forward.1} parent=1 // pred_region
      _
    $region49: #{discriminator_forward.1} parent=1 // pred_fallthru
      _
    // Predicated region
    $region50: #{discriminator_forward.1} parent=1 // pred_check
      _
    $region51: #{discriminator_forward.1} parent=1 // pred_check_branch
      %79 = sbr.rel (0) target = $region53
    $region52: #{discriminator_forward.1} parent=1 // pred_region
      _
    $region53: #{discriminator_forward.1} parent=1 // pred_fallthru
      _
    // Predicated region
    $region54: #{discriminator_forward.1} parent=1 // pred_check
      _
    $region55: #{discriminator_forward.1} parent=1 // pred_check_branch
      %81 = sbr.rel (0) target = $region57
    $region56: #{discriminator_forward.1} parent=1 // pred_region
      %s83 = ssub.s32 12288, 12288
      %84 = vsyncadd [#allocation10], %s83
      %s85 = sshll.u32 [#allocation9], 4
      %s86 = int_to_ptr.vmem [resolvable:$true] %s85
      %91 = dma.hbm_to_vmem [thread:$0]  %s13, 12288, %s86, [#allocation10], 64, 64, 4
    $region57: #{discriminator_forward.1} parent=1 // pred_fallthru
      _
    // Predicated region
    $region58: #{discriminator_forward.1} parent=1 // pred_check
      _
    $region59: #{discriminator_forward.1} parent=1 // pred_check_branch
      %93 = sbr.rel (0) target = $region61
    $region60: #{discriminator_forward.1} parent=1 // pred_region
      _
    $region61: #{discriminator_forward.1} parent=1 // pred_fallthru
      _
    // Predicated region
    $region62: #{discriminator_forward.1} parent=1 // pred_check
      _
    $region63: #{discriminator_forward.1} parent=1 // pred_check_branch
      %95 = sbr.rel (0) target = $region65
    $region64: #{discriminator_forward.1} parent=1 // pred_region
      %96 = dma.done [#allocation4], 9216
    $region65: #{discriminator_forward.1} parent=1 // pred_fallthru
      _
    // Predicated region
    $region66: #{discriminator_forward.1} parent=1 // pred_check
      _
    $region67: #{discriminator_forward.1} parent=1 // pred_check_branch
      %98 = sbr.rel (0) target = $region69
    $region68: #{discriminator_forward.1} parent=1 // pred_region
      %99 = dma.done [#allocation7], 9216
    $region69: #{discriminator_forward.1} parent=1 // pred_fallthru
      _
    // Predicated region
    $region70: #{discriminator_forward.1} parent=1 // pred_check
      _
    $region71: #{discriminator_forward.1} parent=1 // pred_check_branch
      %101 = sbr.rel (0) target = $region73
    $region72: #{discriminator_forward.1} parent=1 // pred_region
      %102 = dma.done [#allocation7], 9216
    $region73: #{discriminator_forward.1} parent=1 // pred_fallthru
      _
    // Predicated region
    $region74: #{discriminator_forward.1} parent=1 // pred_check
      _
    $region75: #{discriminator_forward.1} parent=1 // pred_check_branch
      %104 = sbr.rel (0) target = $region77
    $region76: #{discriminator_forward.1} parent=1 // pred_region
      %105 = dma.done [#allocation10], 12288
    $region77: #{discriminator_forward.1} parent=1 // pred_fallthru
      _
    %107 = vst [vmem:[#allocation2] sm:$0xff] 0
    %108 = vst [vmem:[#allocation2 + $0x28] sm:$0xff] 0
    %v109 = vlaneseq
    %v110 = vshrl.u32 %v109, 7
    %v111 = vadd.s32 %v110, 8
    %v112 = vadd.s32 %v110, 16
    %v113 = vadd.s32 %v110, 24
    %v114 = vadd.s32 %v110, 32
    %v115 = vadd.s32 %v110, 40
    %v116 = vadd.s32 %v110, 48
    %v117 = vadd.s32 %v110, 56
    %v118 = vcvt.s32.f32 %v110
    %v119 = vcvt.s32.f32 %v111
    %v120 = vcvt.s32.f32 %v112
    %v121 = vcvt.s32.f32 %v113
    %v122 = vcvt.s32.f32 %v114
    %v123 = vcvt.s32.f32 %v115
    %v124 = vcvt.s32.f32 %v116
    %v125 = vcvt.s32.f32 %v117
    %v126 = vmul.f32 %v118, 0.2
    %v127 = vmul.f32 %v119, 0.2
    %v128 = vmul.f32 %v120, 0.2
    %v129 = vmul.f32 %v121, 0.2
    %v130 = vmul.f32 %v122, 0.2
    %v131 = vmul.f32 %v123, 0.2
    %v132 = vmul.f32 %v124, 0.2
    %v133 = vmul.f32 %v125, 0.2
    %v134 = vadd.f32 %v126, 0.05
    %v135 = vadd.f32 %v127, 0.05
    %v136 = vadd.f32 %v128, 0.05
    %v137 = vadd.f32 %v129, 0.05
    %v138 = vadd.f32 %v130, 0.05
    %v139 = vadd.f32 %v131, 0.05
    %v140 = vadd.f32 %v132, 0.05
    %v141 = vadd.f32 %v133, 0.05
    %v142 = vfloor.f32 %v134
    %v143 = vfloor.f32 %v135
    %v144 = vfloor.f32 %v136
    %v145 = vfloor.f32 %v137
    %v146 = vfloor.f32 %v138
    %v147 = vfloor.f32 %v139
    %v148 = vfloor.f32 %v140
    %v149 = vfloor.f32 %v141
    %v150 = vmul.f32 %v142, 5.0
    %v151 = vmul.f32 %v143, 5.0
    %v152 = vmul.f32 %v144, 5.0
    %v153 = vmul.f32 %v145, 5.0
    %v154 = vmul.f32 %v146, 5.0
    %v155 = vmul.f32 %v147, 5.0
    %v156 = vmul.f32 %v148, 5.0
    %v157 = vmul.f32 %v149, 5.0
    %v158 = vsub.f32 %v118, %v150
    %v159 = vsub.f32 %v119, %v151
    %v160 = vsub.f32 %v120, %v152
    %v161 = vsub.f32 %v121, %v153
    %v162 = vsub.f32 %v122, %v154
    %v163 = vsub.f32 %v123, %v155
    %v164 = vsub.f32 %v124, %v156
    %v165 = vsub.f32 %v125, %v157
    %v166 = vmul.f32 %v142, 0.16666667
    %v167 = vmul.f32 %v143, 0.16666667
    %v168 = vmul.f32 %v144, 0.16666667
    %v169 = vmul.f32 %v145, 0.16666667
    %v170 = vmul.f32 %v146, 0.16666667
    %v171 = vmul.f32 %v147, 0.16666667
    %v172 = vmul.f32 %v148, 0.16666667
    %v173 = vmul.f32 %v149, 0.16666667
    %v174 = vadd.f32 %v166, 0.05
    %v175 = vadd.f32 %v167, 0.05
    %v176 = vadd.f32 %v168, 0.05
    %v177 = vadd.f32 %v169, 0.05
    %v178 = vadd.f32 %v170, 0.05
    %v179 = vadd.f32 %v171, 0.05
    %v180 = vadd.f32 %v172, 0.05
    %v181 = vadd.f32 %v173, 0.05
    %v182 = vfloor.f32 %v174
    %v183 = vfloor.f32 %v175
    %v184 = vfloor.f32 %v176
    %v185 = vfloor.f32 %v177
    %v186 = vfloor.f32 %v178
    %v187 = vfloor.f32 %v179
    %v188 = vfloor.f32 %v180
    %v189 = vfloor.f32 %v181
    %v190 = vmul.f32 %v182, 6.0
    %v191 = vmul.f32 %v183, 6.0
    %v192 = vmul.f32 %v184, 6.0
    %v193 = vmul.f32 %v185, 6.0
    %v194 = vmul.f32 %v186, 6.0
    %v195 = vmul.f32 %v187, 6.0
    %v196 = vmul.f32 %v188, 6.0
    %v197 = vmul.f32 %v189, 6.0
    %v198 = vsub.f32 %v142, %v190
    %v199 = vsub.f32 %v143, %v191
    %v200 = vsub.f32 %v144, %v192
    %v201 = vsub.f32 %v145, %v193
    %v202 = vsub.f32 %v146, %v194
    %v203 = vsub.f32 %v147, %v195
    %v204 = vsub.f32 %v148, %v196
    %v205 = vsub.f32 %v149, %v197
    %vm206 = vcmp.lt.f32.partialorder %v118, 60.0
    %vm207 = vcmp.lt.f32.partialorder %v119, 60.0
    %vm208 = vcmp.lt.f32.partialorder %v120, 60.0
    %vm209 = vcmp.lt.f32.partialorder %v121, 60.0
    %vm210 = vcmp.lt.f32.partialorder %v122, 60.0
    %vm211 = vcmp.lt.f32.partialorder %v123, 60.0
    %vm212 = vcmp.lt.f32.partialorder %v124, 60.0
    %vm213 = vcmp.lt.f32.partialorder %v125, 60.0
    %vm214 = vcmp.gt.f32.partialorder %v198, 0.5
    %vm215 = vcmp.gt.f32.partialorder %v199, 0.5
    %vm216 = vcmp.gt.f32.partialorder %v200, 0.5
    %vm217 = vcmp.gt.f32.partialorder %v201, 0.5
    %vm218 = vcmp.gt.f32.partialorder %v202, 0.5
    %vm219 = vcmp.gt.f32.partialorder %v203, 0.5
    %vm220 = vcmp.gt.f32.partialorder %v204, 0.5
    %vm221 = vcmp.gt.f32.partialorder %v205, 0.5
    %vm222 = vmand %vm206, %vm214
    %vm223 = vmand %vm207, %vm215
    %vm224 = vmand %vm208, %vm216
    %vm225 = vmand %vm209, %vm217
    %vm226 = vmand %vm210, %vm218
    %vm227 = vmand %vm211, %vm219
    %vm228 = vmand %vm212, %vm220
    %vm229 = vmand %vm213, %vm221
    %vm230 = vcmp.lt.f32.partialorder %v198, 4.5
    %vm231 = vcmp.lt.f32.partialorder %v199, 4.5
    %vm232 = vcmp.lt.f32.partialorder %v200, 4.5
    %vm233 = vcmp.lt.f32.partialorder %v201, 4.5
    %vm234 = vcmp.lt.f32.partialorder %v202, 4.5
    %vm235 = vcmp.lt.f32.partialorder %v203, 4.5
    %vm236 = vcmp.lt.f32.partialorder %v204, 4.5
    %vm237 = vcmp.lt.f32.partialorder %v205, 4.5
    %vm238 = vmand %vm222, %vm230
    %vm239 = vmand %vm223, %vm231
    %vm240 = vmand %vm224, %vm232
    %vm241 = vmand %vm225, %vm233
    %vm242 = vmand %vm226, %vm234
    %vm243 = vmand %vm227, %vm235
    %vm244 = vmand %vm228, %vm236
    %vm245 = vmand %vm229, %vm237
    %vm246 = vcmp.gt.f32.partialorder %v158, 0.5
    %vm247 = vcmp.gt.f32.partialorder %v159, 0.5
    %vm248 = vcmp.gt.f32.partialorder %v160, 0.5
    %vm249 = vcmp.gt.f32.partialorder %v161, 0.5
    %vm250 = vcmp.gt.f32.partialorder %v162, 0.5
    %vm251 = vcmp.gt.f32.partialorder %v163, 0.5
    %vm252 = vcmp.gt.f32.partialorder %v164, 0.5
    %vm253 = vcmp.gt.f32.partialorder %v165, 0.5
    %vm254 = vmand %vm238, %vm246
    %vm255 = vmand %vm239, %vm247
    %vm256 = vmand %vm240, %vm248
    %vm257 = vmand %vm241, %vm249
    %vm258 = vmand %vm242, %vm250
    %vm259 = vmand %vm243, %vm251
    %vm260 = vmand %vm244, %vm252
    %vm261 = vmand %vm245, %vm253
    %vm262 = vcmp.lt.f32.partialorder %v158, 3.5
    %vm263 = vcmp.lt.f32.partialorder %v159, 3.5
    %vm264 = vcmp.lt.f32.partialorder %v160, 3.5
    %vm265 = vcmp.lt.f32.partialorder %v161, 3.5
    %vm266 = vcmp.lt.f32.partialorder %v162, 3.5
    %vm267 = vcmp.lt.f32.partialorder %v163, 3.5
    %vm268 = vcmp.lt.f32.partialorder %v164, 3.5
    %vm269 = vcmp.lt.f32.partialorder %v165, 3.5
    %vm270 = vmand %vm254, %vm262
    %vm271 = vmand %vm255, %vm263
    %vm272 = vmand %vm256, %vm264
    %vm273 = vmand %vm257, %vm265
    %vm274 = vmand %vm258, %vm266
    %vm275 = vmand %vm259, %vm267
    %vm276 = vmand %vm260, %vm268
    %vm277 = vmand %vm261, %vm269
    %v278 = vsel %vm270, 1, 0
    %v279 = vsel %vm271, 1, 0
    %v280 = vsel %vm272, 1, 0
    %v281 = vsel %vm273, 1, 0
    %v282 = vsel %vm274, 1, 0
    %v283 = vsel %vm275, 1, 0
    %v284 = vsel %vm276, 1, 0
    %v285 = vsel %vm277, 1, 0
    %v286 = vcvt.s32.f32 %v278
    %v287 = vcvt.s32.f32 %v279
    %v288 = vcvt.s32.f32 %v280
    %v289 = vcvt.s32.f32 %v281
    %v290 = vcvt.s32.f32 %v282
    %v291 = vcvt.s32.f32 %v283
    %v292 = vcvt.s32.f32 %v284
    %v293 = vcvt.s32.f32 %v285
    %v294 = vld [vmem:[%s0 + $0x4] sm:$0xe]
    %v295 = vld [vmem:[%s0 + $0x8] sm:$0xf]
    %v296 = vld [vmem:[%s0 + $0xc] sm:$0xf]
    %v297 = vld [vmem:[%s0 + $0x10] sm:$0xf]
    %v298 = vld [vmem:[%s0 + $0x14] sm:$0xf]
    %v299 = vld [vmem:[%s0 + $0x18] sm:$0xf]
    %v300 = vld [vmem:[%s0 + $0x1c] sm:$0xf]
    %v301 = vld [vmem:[%s0 + $0x20] sm:$0xf]
    %v302 = vld [vmem:[%s0 + $0x24] sm:$0x1]
    %v303 = vld [vmem:[#allocation3] sm:$0xf]
    %v304 = vld [vmem:[#allocation3 + $0x4] sm:$0xf]
    %v305 = vld [vmem:[#allocation3 + $0x8] sm:$0xf]
    %v306 = vld [vmem:[#allocation3 + $0xc] sm:$0xf]
    %v307 = vld [vmem:[#allocation3 + $0x10] sm:$0xf]
    %v308 = vld [vmem:[#allocation3 + $0x14] sm:$0xf]
    %v309 = vld [vmem:[#allocation3 + $0x18] sm:$0xf]
    %v310 = vld [vmem:[#allocation3 + $0x1c] sm:$0xf]
    %v311 = vld [vmem:[#allocation3 + $0x20] sm:$0xf]
    %v312 = vld [vmem:[#allocation3 + $0x24] sm:$0xf]
    %v313 = vld [vmem:[#allocation3 + $0x28] sm:$0xf]
    %v314 = vld [vmem:[#allocation3 + $0x2c] sm:$0xf]
    %v315 = vld [vmem:[#allocation3 + $0x30] sm:$0xf]
    %v316 = vld [vmem:[#allocation3 + $0x34] sm:$0xf]
    %v317 = vld [vmem:[#allocation3 + $0x38] sm:$0xf]
    %v318 = vld [vmem:[#allocation3 + $0x3c] sm:$0xf]
    %v319 = vld [vmem:[%s0 + $0x24] sm:$0x3]
    %s320 = scalar_lea.vmem [#allocation3], 64
    %v321 = vld [vmem:[%s320] sm:$0xf]
    %v322 = vld [vmem:[%s320 + $0x4] sm:$0xf]
    %v323 = vld [vmem:[%s320 + $0x8] sm:$0xf]
    %v324 = vld [vmem:[%s320 + $0xc] sm:$0xf]
    %v325 = vld [vmem:[%s320 + $0x10] sm:$0xf]
    %v326 = vld [vmem:[%s320 + $0x14] sm:$0xf]
    %v327 = vld [vmem:[%s320 + $0x18] sm:$0xf]
    %v328 = vld [vmem:[%s320 + $0x1c] sm:$0xf]
    %v329 = vld [vmem:[%s320 + $0x20] sm:$0xf]
    %v330 = vld [vmem:[%s320 + $0x24] sm:$0xf]
    %v331 = vld [vmem:[%s320 + $0x28] sm:$0xf]
    %v332 = vld [vmem:[%s320 + $0x2c] sm:$0xf]
    %v333 = vld [vmem:[%s320 + $0x30] sm:$0xf]
    %v334 = vld [vmem:[%s320 + $0x34] sm:$0xf]
    %v335 = vld [vmem:[%s320 + $0x38] sm:$0xf]
    %v336 = vld [vmem:[%s320 + $0x3c] sm:$0xf]
    %v346 = vunpack.c.l.b16 %v294
    %v347 = vunpack.c.l.b16 %v295
    %v348 = vunpack.c.l.b16 %v296
    %v349 = vunpack.c.l.b16 %v297
    %v350 = vunpack.c.l.b16 %v298
    %v351 = vunpack.c.l.b16 %v299
    %v352 = vunpack.c.l.b16 %v300
    %v353 = vunpack.c.l.b16 %v301
    %v354 = vunpack.c.l.b16 %v319
    %v355 = vpack.c.b16 %v347, %v346
    %v356 = vpack.c.b16 %v349, %v348
    %v357 = vpack.c.b16 %v351, %v350
    %v358 = vpack.c.b16 %v353, %v352
    %v359 = vpack.c.b16 %v354, %v354
    %vm360 = vsmask.f32 6400
    %v362 = vshrl.u32 %v355, 16
    %v364 = vrot.slane %v362, 1
    %v365 = vshll.u32 %v355, 16
    %v367 = vrot.slane %v365, 2
    %v368 = vor.u32 %v364, %v367
    %v370 = vshrl.u32 %v356, 16
    %v372 = vrot.slane %v370, 1
    %v373 = vshll.u32 %v356, 16
    %v375 = vrot.slane %v373, 2
    %v376 = vor.u32 %v372, %v375
    %v377 = vsel %vm360, %v368, %v376
    %v379 = vshrl.u32 %v357, 16
    %v381 = vrot.slane %v379, 1
    %v382 = vshll.u32 %v357, 16
    %v384 = vrot.slane %v382, 2
    %v385 = vor.u32 %v381, %v384
    %v386 = vsel %vm360, %v376, %v385
    %v388 = vshrl.u32 %v358, 16
    %v390 = vrot.slane %v388, 1
    %v391 = vshll.u32 %v358, 16
    %v393 = vrot.slane %v391, 2
    %v394 = vor.u32 %v390, %v393
    %v395 = vsel %vm360, %v385, %v394
    %v397 = vshrl.u32 %v359, 16
    %v399 = vrot.slane %v397, 1
    %v400 = vshll.u32 %v359, 16
    %v402 = vrot.slane %v400, 2
    %v403 = vor.u32 %v399, %v402
    %v404 = vsel %vm360, %v394, %v403
    %v425 = vunpack.c.l.b16 %v321
    %v426 = vunpack.c.l.b16 %v322
    %v427 = vunpack.c.l.b16 %v323
    %v428 = vunpack.c.l.b16 %v324
    %v429 = vunpack.c.l.b16 %v325
    %v430 = vunpack.c.l.b16 %v326
    %v431 = vunpack.c.l.b16 %v327
    %v432 = vunpack.c.l.b16 %v328
    %v433 = vunpack.c.l.b16 %v329
    %v434 = vunpack.c.l.b16 %v330
    %v435 = vunpack.c.l.b16 %v331
    %v436 = vunpack.c.l.b16 %v332
    %v437 = vunpack.c.l.b16 %v333
    %v438 = vunpack.c.l.b16 %v334
    %v439 = vunpack.c.l.b16 %v335
    %v440 = vunpack.c.l.b16 %v336
    %v441 = vpack.c.b16 %v426, %v425
    %v442 = vpack.c.b16 %v428, %v427
    %v443 = vpack.c.b16 %v430, %v429
    %v444 = vpack.c.b16 %v432, %v431
    %v445 = vpack.c.b16 %v434, %v433
    %v446 = vpack.c.b16 %v436, %v435
    %v447 = vpack.c.b16 %v438, %v437
    %v448 = vpack.c.b16 %v440, %v439
    %457 = vmatprep.subr.bf16.mxu0 0
    %458 = vmatpush1.bf16.msra.mxu0 %v441
    %459 = vmatprep.subr.bf16.mxu0 0
    %460 = vmatpush1.bf16.msra.mxu0 %v442
    %461 = vmatprep.subr.bf16.mxu0 0
    %462 = vmatpush1.bf16.msra.mxu0 %v443
    %463 = vmatprep.subr.bf16.mxu0 0
    %464 = vmatpush1.bf16.msra.mxu0 %v444
    %465 = vmatprep.subr.bf16.mxu0 0
    %466 = vmatpush1.bf16.msra.mxu0 %v445
    %467 = vmatprep.subr.bf16.mxu0 0
    %468 = vmatpush1.bf16.msra.mxu0 %v446
    %469 = vmatprep.subr.bf16.mxu0 0
    %470 = vmatpush1.bf16.msra.mxu0 %v447
    %471 = vmatprep.subr.bf16.mxu0 0
    %472 = vmatpush1.bf16.msra.mxu0 %v448
    %473 = vmatprep.subr.bf16.mxu0 0
    %474 = vmatpush1.bf16.msra.mxu0 0
    %475 = vmatprep.subr.bf16.mxu0 0
    %476 = vmatpush1.bf16.msra.mxu0 0
    %477 = vmatprep.subr.bf16.mxu0 0
    %478 = vmatpush1.bf16.msra.mxu0 0
    %479 = vmatprep.subr.bf16.mxu0 0
    %480 = vmatpush1.bf16.msra.mxu0 0
    %481 = vmatprep.subr.bf16.mxu0 0
    %482 = vmatpush1.bf16.msra.mxu0 0
    %483 = vmatprep.subr.bf16.mxu0 0
    %484 = vmatpush1.bf16.msra.mxu0 0
    %485 = vmatprep.subr.bf16.mxu0 0
    %486 = vmatpush1.bf16.msra.mxu0 0
    %487 = vmatprep.subr.bf16.mxu0 0
    %488 = vmatpush1.bf16.msra.mxu0 0
    %489 = vmatprep.mubr.bf16.mxu0 0
    %490 = vmatmul.mubr.bf16.gmra.mrb[0].mxu0 %v377
    %v491 = vpop.f32.mrb[0].mxu0
    %v492 = vadd.f32 0.0, %v491
    %v493 = vpop.f32.mrb[0].mxu0
    %v494 = vpop.f32.mrb[0].mxu0
    %v495 = vadd.f32 0.0, %v494
    %v496 = vpop.f32.mrb[0].mxu0
    %497 = vmatprep.mubr.bf16.mxu0 0
    %498 = vmatmul.mubr.bf16.gmra.mrb[0].mxu0 %v386
    %v499 = vpop.f32.mrb[0].mxu0
    %v500 = vadd.f32 0.0, %v499
    %v501 = vpop.f32.mrb[0].mxu0
    %v502 = vpop.f32.mrb[0].mxu0
    %v503 = vadd.f32 0.0, %v502
    %v504 = vpop.f32.mrb[0].mxu0
    %505 = vmatprep.mubr.bf16.mxu0 0
    %506 = vmatmul.mubr.bf16.gmra.mrb[0].mxu0 %v395
    %v507 = vpop.f32.mrb[0].mxu0
    %v508 = vadd.f32 0.0, %v507
    %v509 = vpop.f32.mrb[0].mxu0
    %v510 = vpop.f32.mrb[0].mxu0
    %v511 = vadd.f32 0.0, %v510
    %v512 = vpop.f32.mrb[0].mxu0
    %513 = vmatprep.mubr.bf16.mxu0 0
    %514 = vmatmul.mubr.bf16.gmra.mrb[0].mxu0 %v404
    %v515 = vpop.f32.mrb[0].mxu0
    %v516 = vadd.f32 0.0, %v515
    %v517 = vpop.f32.mrb[0].mxu0
    %v518 = vpop.f32.mrb[0].mxu0
    %v519 = vadd.f32 0.0, %v518
    %v520 = vpop.f32.mrb[0].mxu0
    %521 = vdwg.mxu0
    %v523 = vunpack.c.l.b16 %v302
    %v524 = vpack.c.b16 %v523, %v523
    %vm525 = vcmask 1046528
    %v526 = vrot.slane %v355, 1
    %v527 = vrot.slane %v356, 1
    %v528 = vsel %vm525, %v526, %v527
    %v529 = vrot.slane %v357, 1
    %v530 = vsel %vm525, %v527, %v529
    %v531 = vrot.slane %v358, 1
    %v532 = vsel %vm525, %v529, %v531
    %v533 = vrot.slane %v524, 1
    %v534 = vsel %vm525, %v531, %v533
    %v555 = vunpack.c.l.b16 %v303
    %v556 = vunpack.c.l.b16 %v304
    %v557 = vunpack.c.l.b16 %v305
    %v558 = vunpack.c.l.b16 %v306
    %v559 = vunpack.c.l.b16 %v307
    %v560 = vunpack.c.l.b16 %v308
    %v561 = vunpack.c.l.b16 %v309
    %v562 = vunpack.c.l.b16 %v310
    %v563 = vunpack.c.l.b16 %v311
    %v564 = vunpack.c.l.b16 %v312
    %v565 = vunpack.c.l.b16 %v313
    %v566 = vunpack.c.l.b16 %v314
    %v567 = vunpack.c.l.b16 %v315
    %v568 = vunpack.c.l.b16 %v316
    %v569 = vunpack.c.l.b16 %v317
    %v570 = vunpack.c.l.b16 %v318
    %v571 = vpack.c.b16 %v556, %v555
    %v572 = vpack.c.b16 %v558, %v557
    %v573 = vpack.c.b16 %v560, %v559
    %v574 = vpack.c.b16 %v562, %v561
    %v575 = vpack.c.b16 %v564, %v563
    %v576 = vpack.c.b16 %v566, %v565
    %v577 = vpack.c.b16 %v568, %v567
    %v578 = vpack.c.b16 %v570, %v569
    %587 = vmatprep.subr.bf16.mxu0 0
    %588 = vmatpush1.bf16.msra.mxu0 %v571
    %589 = vmatprep.subr.bf16.mxu0 0
    %590 = vmatpush1.bf16.msra.mxu0 %v572
    %591 = vmatprep.subr.bf16.mxu0 0
    %592 = vmatpush1.bf16.msra.mxu0 %v573
    %593 = vmatprep.subr.bf16.mxu0 0
    %594 = vmatpush1.bf16.msra.mxu0 %v574
    %595 = vmatprep.subr.bf16.mxu0 0
    %596 = vmatpush1.bf16.msra.mxu0 %v575
    %597 = vmatprep.subr.bf16.mxu0 0
    %598 = vmatpush1.bf16.msra.mxu0 %v576
    %599 = vmatprep.subr.bf16.mxu0 0
    %600 = vmatpush1.bf16.msra.mxu0 %v577
    %601 = vmatprep.subr.bf16.mxu0 0
    %602 = vmatpush1.bf16.msra.mxu0 %v578
    %603 = vmatprep.subr.bf16.mxu0 0
    %604 = vmatpush1.bf16.msra.mxu0 0
    %605 = vmatprep.subr.bf16.mxu0 0
    %606 = vmatpush1.bf16.msra.mxu0 0
    %607 = vmatprep.subr.bf16.mxu0 0
    %608 = vmatpush1.bf16.msra.mxu0 0
    %609 = vmatprep.subr.bf16.mxu0 0
    %610 = vmatpush1.bf16.msra.mxu0 0
    %611 = vmatprep.subr.bf16.mxu0 0
    %612 = vmatpush1.bf16.msra.mxu0 0
    %613 = vmatprep.subr.bf16.mxu0 0
    %614 = vmatpush1.bf16.msra.mxu0 0
    %615 = vmatprep.subr.bf16.mxu0 0
    %616 = vmatpush1.bf16.msra.mxu0 0
    %617 = vmatprep.subr.bf16.mxu0 0
    %618 = vmatpush1.bf16.msra.mxu0 0
    %619 = vmatprep.mubr.bf16.mxu0 0
    %620 = vmatmul.mubr.bf16.gmra.mrb[0].mxu0 %v528
    %v621 = vpop.f32.mrb[0].mxu0
    %v622 = vadd.f32 %v492, %v621
    %v623 = vpop.f32.mrb[0].mxu0
    %v624 = vpop.f32.mrb[0].mxu0
    %v625 = vadd.f32 %v495, %v624
    %v626 = vpop.f32.mrb[0].mxu0
    %627 = vmatprep.mubr.bf16.mxu0 0
    %628 = vmatmul.mubr.bf16.gmra.mrb[0].mxu0 %v530
    %v629 = vpop.f32.mrb[0].mxu0
    %v630 = vadd.f32 %v500, %v629
    %v631 = vpop.f32.mrb[0].mxu0
    %v632 = vpop.f32.mrb[0].mxu0
    %v633 = vadd.f32 %v503, %v632
    %v634 = vpop.f32.mrb[0].mxu0
    %635 = vmatprep.mubr.bf16.mxu0 0
    %636 = vmatmul.mubr.bf16.gmra.mrb[0].mxu0 %v532
    %v637 = vpop.f32.mrb[0].mxu0
    %v638 = vadd.f32 %v508, %v637
    %v639 = vpop.f32.mrb[0].mxu0
    %v640 = vpop.f32.mrb[0].mxu0
    %v641 = vadd.f32 %v511, %v640
    %v642 = vpop.f32.mrb[0].mxu0
    %643 = vmatprep.mubr.bf16.mxu0 0
    %644 = vmatmul.mubr.bf16.gmra.mrb[0].mxu0 %v534
    %v645 = vpop.f32.mrb[0].mxu0
    %v646 = vadd.f32 %v516, %v645
    %v647 = vpop.f32.mrb[0].mxu0
    %v648 = vpop.f32.mrb[0].mxu0
    %v649 = vadd.f32 %v519, %v648
    %v650 = vpop.f32.mrb[0].mxu0
    %651 = vdwg.mxu0
    %v652 = vld [vmem:[%s0 + $0x4] sm:$0xc]
    %s653 = scalar_lea.vmem [#allocation3], 128
    %v654 = vld [vmem:[%s653] sm:$0xf]
    %v655 = vld [vmem:[%s653 + $0x4] sm:$0xf]
    %v656 = vld [vmem:[%s653 + $0x8] sm:$0xf]
    %v657 = vld [vmem:[%s653 + $0xc] sm:$0xf]
    %v658 = vld [vmem:[%s653 + $0x10] sm:$0xf]
    %v659 = vld [vmem:[%s653 + $0x14] sm:$0xf]
    %v660 = vld [vmem:[%s653 + $0x18] sm:$0xf]
    %v661 = vld [vmem:[%s653 + $0x1c] sm:$0xf]
    %v662 = vld [vmem:[%s653 + $0x20] sm:$0xf]
    %v663 = vld [vmem:[%s653 + $0x24] sm:$0xf]
    %v664 = vld [vmem:[%s653 + $0x28] sm:$0xf]
    %v665 = vld [vmem:[%s653 + $0x2c] sm:$0xf]
    %v666 = vld [vmem:[%s653 + $0x30] sm:$0xf]
    %v667 = vld [vmem:[%s653 + $0x34] sm:$0xf]
    %v668 = vld [vmem:[%s653 + $0x38] sm:$0xf]
    %v669 = vld [vmem:[%s653 + $0x3c] sm:$0xf]
    %v671 = vunpack.c.l.b16 %v652
    %v672 = vpack.c.b16 %v347, %v671
    %vm673 = vcmask 1045504
    %v674 = vrot.slane %v672, 2
    %v675 = vrot.slane %v356, 2
    %v676 = vsel %vm673, %v674, %v675
    %v677 = vrot.slane %v357, 2
    %v678 = vsel %vm673, %v675, %v677
    %v679 = vrot.slane %v358, 2
    %v680 = vsel %vm673, %v677, %v679
    %v681 = vrot.slane %v359, 2
    %v682 = vsel %vm673, %v679, %v681
    %v703 = vunpack.c.l.b16 %v654
    %v704 = vunpack.c.l.b16 %v655
    %v705 = vunpack.c.l.b16 %v656
    %v706 = vunpack.c.l.b16 %v657
    %v707 = vunpack.c.l.b16 %v658
    %v708 = vunpack.c.l.b16 %v659
    %v709 = vunpack.c.l.b16 %v660
    %v710 = vunpack.c.l.b16 %v661
    %v711 = vunpack.c.l.b16 %v662
    %v712 = vunpack.c.l.b16 %v663
    %v713 = vunpack.c.l.b16 %v664
    %v714 = vunpack.c.l.b16 %v665
    %v715 = vunpack.c.l.b16 %v666
    %v716 = vunpack.c.l.b16 %v667
    %v717 = vunpack.c.l.b16 %v668
    %v718 = vunpack.c.l.b16 %v669
    %v719 = vpack.c.b16 %v704, %v703
    %v720 = vpack.c.b16 %v706, %v705
    %v721 = vpack.c.b16 %v708, %v707
    %v722 = vpack.c.b16 %v710, %v709
    %v723 = vpack.c.b16 %v712, %v711
    %v724 = vpack.c.b16 %v714, %v713
    %v725 = vpack.c.b16 %v716, %v715
    %v726 = vpack.c.b16 %v718, %v717
    %735 = vmatprep.subr.bf16.mxu0 0
    %736 = vmatpush1.bf16.msra.mxu0 %v719
    %737 = vmatprep.subr.bf16.mxu0 0
    %738 = vmatpush1.bf16.msra.mxu0 %v720
    %739 = vmatprep.subr.bf16.mxu0 0
    %740 = vmatpush1.bf16.msra.mxu0 %v721
    %741 = vmatprep.subr.bf16.mxu0 0
    %742 = vmatpush1.bf16.msra.mxu0 %v722
    %743 = vmatprep.subr.bf16.mxu0 0
    %744 = vmatpush1.bf16.msra.mxu0 %v723
    %745 = vmatprep.subr.bf16.mxu0 0
    %746 = vmatpush1.bf16.msra.mxu0 %v724
    %747 = vmatprep.subr.bf16.mxu0 0
    %748 = vmatpush1.bf16.msra.mxu0 %v725
    %749 = vmatprep.subr.bf16.mxu0 0
    %750 = vmatpush1.bf16.msra.mxu0 %v726
    %751 = vmatprep.subr.bf16.mxu0 0
    %752 = vmatpush1.bf16.msra.mxu0 0
    %753 = vmatprep.subr.bf16.mxu0 0
    %754 = vmatpush1.bf16.msra.mxu0 0
    %755 = vmatprep.subr.bf16.mxu0 0
    %756 = vmatpush1.bf16.msra.mxu0 0
    %757 = vmatprep.subr.bf16.mxu0 0
    %758 = vmatpush1.bf16.msra.mxu0 0
    %759 = vmatprep.subr.bf16.mxu0 0
    %760 = vmatpush1.bf16.msra.mxu0 0
    %761 = vmatprep.subr.bf16.mxu0 0
    %762 = vmatpush1.bf16.msra.mxu0 0
    %763 = vmatprep.subr.bf16.mxu0 0
    %764 = vmatpush1.bf16.msra.mxu0 0
    %765 = vmatprep.subr.bf16.mxu0 0
    %766 = vmatpush1.bf16.msra.mxu0 0
    %767 = vmatprep.mubr.bf16.mxu0 0
    %768 = vmatmul.mubr.bf16.gmra.mrb[0].mxu0 %v676
    %v769 = vpop.f32.mrb[0].mxu0
    %v770 = vadd.f32 0.0, %v769
    %v771 = vpop.f32.mrb[0].mxu0
    %v772 = vpop.f32.mrb[0].mxu0
    %v773 = vadd.f32 0.0, %v772
    %v774 = vpop.f32.mrb[0].mxu0
    %775 = vmatprep.mubr.bf16.mxu0 0
    %776 = vmatmul.mubr.bf16.gmra.mrb[0].mxu0 %v678
    %v777 = vpop.f32.mrb[0].mxu0
    %v778 = vadd.f32 0.0, %v777
    %v779 = vpop.f32.mrb[0].mxu0
    %v780 = vpop.f32.mrb[0].mxu0
    %v781 = vadd.f32 0.0, %v780
    %v782 = vpop.f32.mrb[0].mxu0
    %783 = vmatprep.mubr.bf16.mxu0 0
    %784 = vmatmul.mubr.bf16.gmra.mrb[0].mxu0 %v680
    %v785 = vpop.f32.mrb[0].mxu0
    %v786 = vadd.f32 0.0, %v785
    %v787 = vpop.f32.mrb[0].mxu0
    %v788 = vpop.f32.mrb[0].mxu0
    %v789 = vadd.f32 0.0, %v788
    %v790 = vpop.f32.mrb[0].mxu0
    %791 = vmatprep.mubr.bf16.mxu0 0
    %792 = vmatmul.mubr.bf16.gmra.mrb[0].mxu0 %v682
    %v793 = vpop.f32.mrb[0].mxu0
    %v794 = vadd.f32 0.0, %v793
    %v795 = vpop.f32.mrb[0].mxu0
    %v796 = vpop.f32.mrb[0].mxu0
    %v797 = vadd.f32 0.0, %v796
    %v798 = vpop.f32.mrb[0].mxu0
    %799 = vdwg.mxu0
    %v800 = vadd.f32 %v622, %v770
    %v801 = vadd.f32 %v625, %v773
    %v802 = vadd.f32 %v630, %v778
    %v803 = vadd.f32 %v633, %v781
    %v804 = vadd.f32 %v638, %v786
    %v805 = vadd.f32 %v641, %v789
    %v806 = vadd.f32 %v646, %v794
    %v807 = vadd.f32 %v649, %v797
    %v808 = vld [vmem:[%s0 + $0x4] sm:$0x8]
    %v809 = vld [vmem:[%s0 + $0x24] sm:$0xf]
    %s810 = scalar_lea.vmem [#allocation3], 192
    %v811 = vld [vmem:[%s810] sm:$0xf]
    %v812 = vld [vmem:[%s810 + $0x4] sm:$0xf]
    %v813 = vld [vmem:[%s810 + $0x8] sm:$0xf]
    %v814 = vld [vmem:[%s810 + $0xc] sm:$0xf]
    %v815 = vld [vmem:[%s810 + $0x10] sm:$0xf]
    %v816 = vld [vmem:[%s810 + $0x14] sm:$0xf]
    %v817 = vld [vmem:[%s810 + $0x18] sm:$0xf]
    %v818 = vld [vmem:[%s810 + $0x1c] sm:$0xf]
    %v819 = vld [vmem:[%s810 + $0x20] sm:$0xf]
    %v820 = vld [vmem:[%s810 + $0x24] sm:$0xf]
    %v821 = vld [vmem:[%s810 + $0x28] sm:$0xf]
    %v822 = vld [vmem:[%s810 + $0x2c] sm:$0xf]
    %v823 = vld [vmem:[%s810 + $0x30] sm:$0xf]
    %v824 = vld [vmem:[%s810 + $0x34] sm:$0xf]
    %v825 = vld [vmem:[%s810 + $0x38] sm:$0xf]
    %v826 = vld [vmem:[%s810 + $0x3c] sm:$0xf]
    %v829 = vunpack.c.l.b16 %v808
    %v830 = vunpack.c.l.b16 %v809
    %v831 = vpack.c.b16 %v347, %v829
    %v832 = vpack.c.b16 %v830, %v830
    %vm833 = vsmask.f32 4352
    %v835 = vshrl.u32 %v831, 16
    %v837 = vrot.slane %v835, 3
    %v838 = vshll.u32 %v831, 16
    %v840 = vrot.slane %v838, 4
    %v841 = vor.u32 %v837, %v840
    %v842 = vrot.slane %v370, 3
    %v843 = vrot.slane %v373, 4
    %v844 = vor.u32 %v842, %v843
    %v845 = vsel %vm833, %v841, %v844
    %v846 = vrot.slane %v379, 3
    %v847 = vrot.slane %v382, 4
    %v848 = vor.u32 %v846, %v847
    %v849 = vsel %vm833, %v844, %v848
    %v850 = vrot.slane %v388, 3
    %v851 = vrot.slane %v391, 4
    %v852 = vor.u32 %v850, %v851
    %v853 = vsel %vm833, %v848, %v852
    %v855 = vshrl.u32 %v832, 16
    %v857 = vrot.slane %v855, 3
    %v858 = vshll.u32 %v832, 16
    %v860 = vrot.slane %v858, 4
    %v861 = vor.u32 %v857, %v860
    %v862 = vsel %vm833, %v852, %v861
    %v883 = vunpack.c.l.b16 %v811
    %v884 = vunpack.c.l.b16 %v812
    %v885 = vunpack.c.l.b16 %v813
    %v886 = vunpack.c.l.b16 %v814
    %v887 = vunpack.c.l.b16 %v815
    %v888 = vunpack.c.l.b16 %v816
    %v889 = vunpack.c.l.b16 %v817
    %v890 = vunpack.c.l.b16 %v818
    %v891 = vunpack.c.l.b16 %v819
    %v892 = vunpack.c.l.b16 %v820
    %v893 = vunpack.c.l.b16 %v821
    %v894 = vunpack.c.l.b16 %v822
    %v895 = vunpack.c.l.b16 %v823
    %v896 = vunpack.c.l.b16 %v824
    %v897 = vunpack.c.l.b16 %v825
    %v898 = vunpack.c.l.b16 %v826
    %v899 = vpack.c.b16 %v884, %v883
    %v900 = vpack.c.b16 %v886, %v885
    %v901 = vpack.c.b16 %v888, %v887
    %v902 = vpack.c.b16 %v890, %v889
    %v903 = vpack.c.b16 %v892, %v891
    %v904 = vpack.c.b16 %v894, %v893
    %v905 = vpack.c.b16 %v896, %v895
    %v906 = vpack.c.b16 %v898, %v897
    %915 = vmatprep.subr.bf16.mxu0 0
    %916 = vmatpush1.bf16.msra.mxu0 %v899
    %917 = vmatprep.subr.bf16.mxu0 0
    %918 = vmatpush1.bf16.msra.mxu0 %v900
    %919 = vmatprep.subr.bf16.mxu0 0
    %920 = vmatpush1.bf16.msra.mxu0 %v901
    %921 = vmatprep.subr.bf16.mxu0 0
    %922 = vmatpush1.bf16.msra.mxu0 %v902
    %923 = vmatprep.subr.bf16.mxu0 0
    %924 = vmatpush1.bf16.msra.mxu0 %v903
    %925 = vmatprep.subr.bf16.mxu0 0
    %926 = vmatpush1.bf16.msra.mxu0 %v904
    %927 = vmatprep.subr.bf16.mxu0 0
    %928 = vmatpush1.bf16.msra.mxu0 %v905
    %929 = vmatprep.subr.bf16.mxu0 0
    %930 = vmatpush1.bf16.msra.mxu0 %v906
    %931 = vmatprep.subr.bf16.mxu0 0
    %932 = vmatpush1.bf16.msra.mxu0 0
    %933 = vmatprep.subr.bf16.mxu0 0
    %934 = vmatpush1.bf16.msra.mxu0 0
    %935 = vmatprep.subr.bf16.mxu0 0
    %936 = vmatpush1.bf16.msra.mxu0 0
    %937 = vmatprep.subr.bf16.mxu0 0
    %938 = vmatpush1.bf16.msra.mxu0 0
    %939 = vmatprep.subr.bf16.mxu0 0
    %940 = vmatpush1.bf16.msra.mxu0 0
    %941 = vmatprep.subr.bf16.mxu0 0
    %942 = vmatpush1.bf16.msra.mxu0 0
    %943 = vmatprep.subr.bf16.mxu0 0
    %944 = vmatpush1.bf16.msra.mxu0 0
    %945 = vmatprep.subr.bf16.mxu0 0
    %946 = vmatpush1.bf16.msra.mxu0 0
    %947 = vmatprep.mubr.bf16.mxu0 0
    %948 = vmatmul.mubr.bf16.gmra.mrb[0].mxu0 %v845
    %v949 = vpop.f32.mrb[0].mxu0
    %v950 = vadd.f32 0.0, %v949
    %v951 = vpop.f32.mrb[0].mxu0
    %v952 = vpop.f32.mrb[0].mxu0
    %v953 = vadd.f32 0.0, %v952
    %v954 = vpop.f32.mrb[0].mxu0
    %955 = vmatprep.mubr.bf16.mxu0 0
    %956 = vmatmul.mubr.bf16.gmra.mrb[0].mxu0 %v849
    %v957 = vpop.f32.mrb[0].mxu0
    %v958 = vadd.f32 0.0, %v957
    %v959 = vpop.f32.mrb[0].mxu0
    %v960 = vpop.f32.mrb[0].mxu0
    %v961 = vadd.f32 0.0, %v960
    %v962 = vpop.f32.mrb[0].mxu0
    %963 = vmatprep.mubr.bf16.mxu0 0
    %964 = vmatmul.mubr.bf16.gmra.mrb[0].mxu0 %v853
    %v965 = vpop.f32.mrb[0].mxu0
    %v966 = vadd.f32 0.0, %v965
    %v967 = vpop.f32.mrb[0].mxu0
    %v968 = vpop.f32.mrb[0].mxu0
    %v969 = vadd.f32 0.0, %v968
    %v970 = vpop.f32.mrb[0].mxu0
    %971 = vmatprep.mubr.bf16.mxu0 0
    %972 = vmatmul.mubr.bf16.gmra.mrb[0].mxu0 %v862
    %v973 = vpop.f32.mrb[0].mxu0
    %v974 = vadd.f32 0.0, %v973
    %v975 = vpop.f32.mrb[0].mxu0
    %v976 = vpop.f32.mrb[0].mxu0
    %v977 = vadd.f32 0.0, %v976
    %v978 = vpop.f32.mrb[0].mxu0
    %979 = vdwg.mxu0
    %v980 = vadd.f32 %v800, %v950
    %v981 = vadd.f32 %v801, %v953
    %v982 = vadd.f32 %v802, %v958
    %v983 = vadd.f32 %v803, %v961
    %v984 = vadd.f32 %v804, %v966
    %v985 = vadd.f32 %v805, %v969
    %v986 = vadd.f32 %v806, %v974
    %v987 = vadd.f32 %v807, %v977
    %s988 = scalar_lea.vmem [#allocation3], 256
    %v989 = vld [vmem:[%s988] sm:$0xf]
    %v990 = vld [vmem:[%s988 + $0x4] sm:$0xf]
    %v991 = vld [vmem:[%s988 + $0x8] sm:$0xf]
    %v992 = vld [vmem:[%s988 + $0xc] sm:$0xf]
    %v993 = vld [vmem:[%s988 + $0x10] sm:$0xf]
    %v994 = vld [vmem:[%s988 + $0x14] sm:$0xf]
    %v995 = vld [vmem:[%s988 + $0x18] sm:$0xf]
    %v996 = vld [vmem:[%s988 + $0x1c] sm:$0xf]
    %v997 = vld [vmem:[%s988 + $0x20] sm:$0xf]
    %v998 = vld [vmem:[%s988 + $0x24] sm:$0xf]
    %v999 = vld [vmem:[%s988 + $0x28] sm:$0xf]
    %v1000 = vld [vmem:[%s988 + $0x2c] sm:$0xf]
    %v1001 = vld [vmem:[%s988 + $0x30] sm:$0xf]
    %v1002 = vld [vmem:[%s988 + $0x34] sm:$0xf]
    %v1003 = vld [vmem:[%s988 + $0x38] sm:$0xf]
    %v1004 = vld [vmem:[%s988 + $0x3c] sm:$0xf]
    %v1005 = vpack.c.b16 %v348, %v347
    %v1006 = vpack.c.b16 %v350, %v349
    %v1007 = vpack.c.b16 %v352, %v351
    %v1008 = vpack.c.b16 %v830, %v353
    %v1029 = vunpack.c.l.b16 %v989
    %v1030 = vunpack.c.l.b16 %v990
    %v1031 = vunpack.c.l.b16 %v991
    %v1032 = vunpack.c.l.b16 %v992
    %v1033 = vunpack.c.l.b16 %v993
    %v1034 = vunpack.c.l.b16 %v994
    %v1035 = vunpack.c.l.b16 %v995
    %v1036 = vunpack.c.l.b16 %v996
    %v1037 = vunpack.c.l.b16 %v997
    %v1038 = vunpack.c.l.b16 %v998
    %v1039 = vunpack.c.l.b16 %v999
    %v1040 = vunpack.c.l.b16 %v1000
    %v1041 = vunpack.c.l.b16 %v1001
    %v1042 = vunpack.c.l.b16 %v1002
    %v1043 = vunpack.c.l.b16 %v1003
    %v1044 = vunpack.c.l.b16 %v1004
    %v1045 = vpack.c.b16 %v1030, %v1029
    %v1046 = vpack.c.b16 %v1032, %v1031
    %v1047 = vpack.c.b16 %v1034, %v1033
    %v1048 = vpack.c.b16 %v1036, %v1035
    %v1049 = vpack.c.b16 %v1038, %v1037
    %v1050 = vpack.c.b16 %v1040, %v1039
    %v1051 = vpack.c.b16 %v1042, %v1041
    %v1052 = vpack.c.b16 %v1044, %v1043
    %1061 = vmatprep.subr.bf16.mxu0 0
    %1062 = vmatpush1.bf16.msra.mxu0 %v1045
    %1063 = vmatprep.subr.bf16.mxu0 0
    %1064 = vmatpush1.bf16.msra.mxu0 %v1046
    %1065 = vmatprep.subr.bf16.mxu0 0
    %1066 = vmatpush1.bf16.msra.mxu0 %v1047
    %1067 = vmatprep.subr.bf16.mxu0 0
    %1068 = vmatpush1.bf16.msra.mxu0 %v1048
    %1069 = vmatprep.subr.bf16.mxu0 0
    %1070 = vmatpush1.bf16.msra.mxu0 %v1049
    %1071 = vmatprep.subr.bf16.mxu0 0
    %1072 = vmatpush1.bf16.msra.mxu0 %v1050
    %1073 = vmatprep.subr.bf16.mxu0 0
    %1074 = vmatpush1.bf16.msra.mxu0 %v1051
    %1075 = vmatprep.subr.bf16.mxu0 0
    %1076 = vmatpush1.bf16.msra.mxu0 %v1052
    %1077 = vmatprep.subr.bf16.mxu0 0
    %1078 = vmatpush1.bf16.msra.mxu0 0
    %1079 = vmatprep.subr.bf16.mxu0 0
    %1080 = vmatpush1.bf16.msra.mxu0 0
    %1081 = vmatprep.subr.bf16.mxu0 0
    %1082 = vmatpush1.bf16.msra.mxu0 0
    %1083 = vmatprep.subr.bf16.mxu0 0
    %1084 = vmatpush1.bf16.msra.mxu0 0
    %1085 = vmatprep.subr.bf16.mxu0 0
    %1086 = vmatpush1.bf16.msra.mxu0 0
    %1087 = vmatprep.subr.bf16.mxu0 0
    %1088 = vmatpush1.bf16.msra.mxu0 0
    %1089 = vmatprep.subr.bf16.mxu0 0
    %1090 = vmatpush1.bf16.msra.mxu0 0
    %1091 = vmatprep.subr.bf16.mxu0 0
    %1092 = vmatpush1.bf16.msra.mxu0 0
    %1093 = vmatprep.mubr.bf16.mxu0 0
    %1094 = vmatmul.mubr.bf16.gmra.mrb[0].mxu0 %v1005
    %v1095 = vpop.f32.mrb[0].mxu0
    %v1096 = vadd.f32 0.0, %v1095
    %v1097 = vpop.f32.mrb[0].mxu0
    %v1098 = vpop.f32.mrb[0].mxu0
    %v1099 = vadd.f32 0.0, %v1098
    %v1100 = vpop.f32.mrb[0].mxu0
    %1101 = vmatprep.mubr.bf16.mxu0 0
    %1102 = vmatmul.mubr.bf16.gmra.mrb[0].mxu0 %v1006
    %v1103 = vpop.f32.mrb[0].mxu0
    %v1104 = vadd.f32 0.0, %v1103
    %v1105 = vpop.f32.mrb[0].mxu0
    %v1106 = vpop.f32.mrb[0].mxu0
    %v1107 = vadd.f32 0.0, %v1106
    %v1108 = vpop.f32.mrb[0].mxu0
    %1109 = vmatprep.mubr.bf16.mxu0 0
    %1110 = vmatmul.mubr.bf16.gmra.mrb[0].mxu0 %v1007
    %v1111 = vpop.f32.mrb[0].mxu0
    %v1112 = vadd.f32 0.0, %v1111
    %v1113 = vpop.f32.mrb[0].mxu0
    %v1114 = vpop.f32.mrb[0].mxu0
    %v1115 = vadd.f32 0.0, %v1114
    %v1116 = vpop.f32.mrb[0].mxu0
    %1117 = vmatprep.mubr.bf16.mxu0 0
    %1118 = vmatmul.mubr.bf16.gmra.mrb[0].mxu0 %v1008
    %v1119 = vpop.f32.mrb[0].mxu0
    %v1120 = vadd.f32 0.0, %v1119
    %v1121 = vpop.f32.mrb[0].mxu0
    %v1122 = vpop.f32.mrb[0].mxu0
    %v1123 = vadd.f32 0.0, %v1122
    %v1124 = vpop.f32.mrb[0].mxu0
    %1125 = vdwg.mxu0
    %v1126 = vadd.f32 %v980, %v1096
    %v1127 = vadd.f32 %v981, %v1099
    %v1128 = vadd.f32 %v982, %v1104
    %v1129 = vadd.f32 %v983, %v1107
    %v1130 = vadd.f32 %v984, %v1112
    %v1131 = vadd.f32 %v985, %v1115
    %v1132 = vadd.f32 %v986, %v1120
    %v1133 = vadd.f32 %v987, %v1123
    %v1134 = vld [vmem:[%s0 + $0x8] sm:$0xf]
    %v1135 = vld [vmem:[%s0 + $0xc] sm:$0xf]
    %v1136 = vld [vmem:[%s0 + $0x10] sm:$0xf]
    %v1137 = vld [vmem:[%s0 + $0x14] sm:$0xf]
    %v1138 = vld [vmem:[%s0 + $0x18] sm:$0xf]
    %v1139 = vld [vmem:[%s0 + $0x1c] sm:$0xf]
    %v1140 = vld [vmem:[%s0 + $0x20] sm:$0xf]
    %v1141 = vld [vmem:[%s0 + $0x24] sm:$0xf]
    %v1142 = vld [vmem:[%s0 + $0x28] sm:$0x1]
    %s1143 = scalar_lea.vmem [#allocation3], 320
    %v1144 = vld [vmem:[%s1143] sm:$0xf]
    %v1145 = vld [vmem:[%s1143 + $0x4] sm:$0xf]
    %v1146 = vld [vmem:[%s1143 + $0x8] sm:$0xf]
    %v1147 = vld [vmem:[%s1143 + $0xc] sm:$0xf]
    %v1148 = vld [vmem:[%s1143 + $0x10] sm:$0xf]
    %v1149 = vld [vmem:[%s1143 + $0x14] sm:$0xf]
    %v1150 = vld [vmem:[%s1143 + $0x18] sm:$0xf]
    %v1151 = vld [vmem:[%s1143 + $0x1c] sm:$0xf]
    %v1152 = vld [vmem:[%s1143 + $0x20] sm:$0xf]
    %v1153 = vld [vmem:[%s1143 + $0x24] sm:$0xf]
    %v1154 = vld [vmem:[%s1143 + $0x28] sm:$0xf]
    %v1155 = vld [vmem:[%s1143 + $0x2c] sm:$0xf]
    %v1156 = vld [vmem:[%s1143 + $0x30] sm:$0xf]
    %v1157 = vld [vmem:[%s1143 + $0x34] sm:$0xf]
    %v1158 = vld [vmem:[%s1143 + $0x38] sm:$0xf]
    %v1159 = vld [vmem:[%s1143 + $0x3c] sm:$0xf]
    %v1169 = vunpack.c.l.b16 %v1134
    %v1170 = vunpack.c.l.b16 %v1135
    %v1171 = vunpack.c.l.b16 %v1136
    %v1172 = vunpack.c.l.b16 %v1137
    %v1173 = vunpack.c.l.b16 %v1138
    %v1174 = vunpack.c.l.b16 %v1139
    %v1175 = vunpack.c.l.b16 %v1140
    %v1176 = vunpack.c.l.b16 %v1141
    %v1177 = vunpack.c.l.b16 %v1142
    %v1178 = vpack.c.b16 %v1170, %v1169
    %v1179 = vpack.c.b16 %v1172, %v1171
    %v1180 = vpack.c.b16 %v1174, %v1173
    %v1181 = vpack.c.b16 %v1176, %v1175
    %v1182 = vpack.c.b16 %v1177, %v1177
    %vm1183 = vsmask.f32 7424
    %v1185 = vshrl.u32 %v1178, 16
    %v1187 = vshll.u32 %v1178, 16
    %v1189 = vrot.slane %v1187, 1
    %v1190 = vor.u32 %v1185, %v1189
    %v1192 = vshll.u32 %v1179, 16
    %v1194 = vrot.slane %v1192, 1
    %v1195 = vsel %vm1183, %v1190, %v1194
    %v1196 = vshrl.u32 %v1179, 16
    %v1198 = vor.u32 %v1196, %v1194
    %v1200 = vshll.u32 %v1180, 16
    %v1202 = vrot.slane %v1200, 1
    %v1203 = vsel %vm1183, %v1198, %v1202
    %v1204 = vshrl.u32 %v1180, 16
    %v1206 = vor.u32 %v1204, %v1202
    %v1208 = vshll.u32 %v1181, 16
    %v1210 = vrot.slane %v1208, 1
    %v1211 = vsel %vm1183, %v1206, %v1210
    %v1212 = vshrl.u32 %v1181, 16
    %v1214 = vor.u32 %v1212, %v1210
    %v1216 = vshll.u32 %v1182, 16
    %v1218 = vrot.slane %v1216, 1
    %v1219 = vsel %vm1183, %v1214, %v1218
    %v1240 = vunpack.c.l.b16 %v1144
    %v1241 = vunpack.c.l.b16 %v1145
    %v1242 = vunpack.c.l.b16 %v1146
    %v1243 = vunpack.c.l.b16 %v1147
    %v1244 = vunpack.c.l.b16 %v1148
    %v1245 = vunpack.c.l.b16 %v1149
    %v1246 = vunpack.c.l.b16 %v1150
    %v1247 = vunpack.c.l.b16 %v1151
    %v1248 = vunpack.c.l.b16 %v1152
    %v1249 = vunpack.c.l.b16 %v1153
    %v1250 = vunpack.c.l.b16 %v1154
    %v1251 = vunpack.c.l.b16 %v1155
    %v1252 = vunpack.c.l.b16 %v1156
    %v1253 = vunpack.c.l.b16 %v1157
    %v1254 = vunpack.c.l.b16 %v1158
    %v1255 = vunpack.c.l.b16 %v1159
    %v1256 = vpack.c.b16 %v1241, %v1240
    %v1257 = vpack.c.b16 %v1243, %v1242
    %v1258 = vpack.c.b16 %v1245, %v1244
    %v1259 = vpack.c.b16 %v1247, %v1246
    %v1260 = vpack.c.b16 %v1249, %v1248
    %v1261 = vpack.c.b16 %v1251, %v1250
    %v1262 = vpack.c.b16 %v1253, %v1252
    %v1263 = vpack.c.b16 %v1255, %v1254
    %1272 = vmatprep.subr.bf16.mxu0 0
    %1273 = vmatpush1.bf16.msra.mxu0 %v1256
    %1274 = vmatprep.subr.bf16.mxu0 0
    %1275 = vmatpush1.bf16.msra.mxu0 %v1257
    %1276 = vmatprep.subr.bf16.mxu0 0
    %1277 = vmatpush1.bf16.msra.mxu0 %v1258
    %1278 = vmatprep.subr.bf16.mxu0 0
    %1279 = vmatpush1.bf16.msra.mxu0 %v1259
    %1280 = vmatprep.subr.bf16.mxu0 0
    %1281 = vmatpush1.bf16.msra.mxu0 %v1260
    %1282 = vmatprep.subr.bf16.mxu0 0
    %1283 = vmatpush1.bf16.msra.mxu0 %v1261
    %1284 = vmatprep.subr.bf16.mxu0 0
    %1285 = vmatpush1.bf16.msra.mxu0 %v1262
    %1286 = vmatprep.subr.bf16.mxu0 0
    %1287 = vmatpush1.bf16.msra.mxu0 %v1263
    %1288 = vmatprep.subr.bf16.mxu0 0
    %1289 = vmatpush1.bf16.msra.mxu0 0
    %1290 = vmatprep.subr.bf16.mxu0 0
    %1291 = vmatpush1.bf16.msra.mxu0 0
    %1292 = vmatprep.subr.bf16.mxu0 0
    %1293 = vmatpush1.bf16.msra.mxu0 0
    %1294 = vmatprep.subr.bf16.mxu0 0
    %1295 = vmatpush1.bf16.msra.mxu0 0
    %1296 = vmatprep.subr.bf16.mxu0 0
    %1297 = vmatpush1.bf16.msra.mxu0 0
    %1298 = vmatprep.subr.bf16.mxu0 0
    %1299 = vmatpush1.bf16.msra.mxu0 0
    %1300 = vmatprep.subr.bf16.mxu0 0
    %1301 = vmatpush1.bf16.msra.mxu0 0
    %1302 = vmatprep.subr.bf16.mxu0 0
    %1303 = vmatpush1.bf16.msra.mxu0 0
    %1304 = vmatprep.mubr.bf16.mxu0 0
    %1305 = vmatmul.mubr.bf16.gmra.mrb[0].mxu0 %v1195
    %v1306 = vpop.f32.mrb[0].mxu0
    %v1307 = vadd.f32 0.0, %v1306
    %v1308 = vpop.f32.mrb[0].mxu0
    %v1309 = vpop.f32.mrb[0].mxu0
    %v1310 = vadd.f32 0.0, %v1309
    %v1311 = vpop.f32.mrb[0].mxu0
    %1312 = vmatprep.mubr.bf16.mxu0 0
    %1313 = vmatmul.mubr.bf16.gmra.mrb[0].mxu0 %v1203
    %v1314 = vpop.f32.mrb[0].mxu0
    %v1315 = vadd.f32 0.0, %v1314
    %v1316 = vpop.f32.mrb[0].mxu0
    %v1317 = vpop.f32.mrb[0].mxu0
    %v1318 = vadd.f32 0.0, %v1317
    %v1319 = vpop.f32.mrb[0].mxu0
    %1320 = vmatprep.mubr.bf16.mxu0 0
    %1321 = vmatmul.mubr.bf16.gmra.mrb[0].mxu0 %v1211
    %v1322 = vpop.f32.mrb[0].mxu0
    %v1323 = vadd.f32 0.0, %v1322
    %v1324 = vpop.f32.mrb[0].mxu0
    %v1325 = vpop.f32.mrb[0].mxu0
    %v1326 = vadd.f32 0.0, %v1325
    %v1327 = vpop.f32.mrb[0].mxu0
    %1328 = vmatprep.mubr.bf16.mxu0 0
    %1329 = vmatmul.mubr.bf16.gmra.mrb[0].mxu0 %v1219
    %v1330 = vpop.f32.mrb[0].mxu0
    %v1331 = vadd.f32 0.0, %v1330
    %v1332 = vpop.f32.mrb[0].mxu0
    %v1333 = vpop.f32.mrb[0].mxu0
    %v1334 = vadd.f32 0.0, %v1333
    %v1335 = vpop.f32.mrb[0].mxu0
    %1336 = vdwg.mxu0
    %v1337 = vadd.f32 %v1126, %v1307
    %v1338 = vadd.f32 %v1127, %v1310
    %v1339 = vadd.f32 %v1128, %v1315
    %v1340 = vadd.f32 %v1129, %v1318
    %v1341 = vadd.f32 %v1130, %v1323
    %v1342 = vadd.f32 %v1131, %v1326
    %v1343 = vadd.f32 %v1132, %v1331
    %v1344 = vadd.f32 %v1133, %v1334
    %v1345 = vld [vmem:[%s0 + $0x8] sm:$0xc]
    %v1346 = vld [vmem:[%s0 + $0x28] sm:$0x3]
    %s1347 = scalar_lea.vmem [#allocation3], 384
    %v1348 = vld [vmem:[%s1347] sm:$0xf]
    %v1349 = vld [vmem:[%s1347 + $0x4] sm:$0xf]
    %v1350 = vld [vmem:[%s1347 + $0x8] sm:$0xf]
    %v1351 = vld [vmem:[%s1347 + $0xc] sm:$0xf]
    %v1352 = vld [vmem:[%s1347 + $0x10] sm:$0xf]
    %v1353 = vld [vmem:[%s1347 + $0x14] sm:$0xf]
    %v1354 = vld [vmem:[%s1347 + $0x18] sm:$0xf]
    %v1355 = vld [vmem:[%s1347 + $0x1c] sm:$0xf]
    %v1356 = vld [vmem:[%s1347 + $0x20] sm:$0xf]
    %v1357 = vld [vmem:[%s1347 + $0x24] sm:$0xf]
    %v1358 = vld [vmem:[%s1347 + $0x28] sm:$0xf]
    %v1359 = vld [vmem:[%s1347 + $0x2c] sm:$0xf]
    %v1360 = vld [vmem:[%s1347 + $0x30] sm:$0xf]
    %v1361 = vld [vmem:[%s1347 + $0x34] sm:$0xf]
    %v1362 = vld [vmem:[%s1347 + $0x38] sm:$0xf]
    %v1363 = vld [vmem:[%s1347 + $0x3c] sm:$0xf]
    %v1366 = vunpack.c.l.b16 %v1345
    %v1367 = vunpack.c.l.b16 %v1346
    %v1368 = vpack.c.b16 %v1170, %v1366
    %v1369 = vpack.c.b16 %v1367, %v1367
    %v1370 = vrot.slane %v1368, 2
    %v1371 = vrot.slane %v1179, 2
    %v1372 = vsel %vm673, %v1370, %v1371
    %v1373 = vrot.slane %v1180, 2
    %v1374 = vsel %vm673, %v1371, %v1373
    %v1375 = vrot.slane %v1181, 2
    %v1376 = vsel %vm673, %v1373, %v1375
    %v1377 = vrot.slane %v1369, 2
    %v1378 = vsel %vm673, %v1375, %v1377
    %v1399 = vunpack.c.l.b16 %v1348
    %v1400 = vunpack.c.l.b16 %v1349
    %v1401 = vunpack.c.l.b16 %v1350
    %v1402 = vunpack.c.l.b16 %v1351
    %v1403 = vunpack.c.l.b16 %v1352
    %v1404 = vunpack.c.l.b16 %v1353
    %v1405 = vunpack.c.l.b16 %v1354
    %v1406 = vunpack.c.l.b16 %v1355
    %v1407 = vunpack.c.l.b16 %v1356
    %v1408 = vunpack.c.l.b16 %v1357
    %v1409 = vunpack.c.l.b16 %v1358
    %v1410 = vunpack.c.l.b16 %v1359
    %v1411 = vunpack.c.l.b16 %v1360
    %v1412 = vunpack.c.l.b16 %v1361
    %v1413 = vunpack.c.l.b16 %v1362
    %v1414 = vunpack.c.l.b16 %v1363
    %v1415 = vpack.c.b16 %v1400, %v1399
    %v1416 = vpack.c.b16 %v1402, %v1401
    %v1417 = vpack.c.b16 %v1404, %v1403
    %v1418 = vpack.c.b16 %v1406, %v1405
    %v1419 = vpack.c.b16 %v1408, %v1407
    %v1420 = vpack.c.b16 %v1410, %v1409
    %v1421 = vpack.c.b16 %v1412, %v1411
    %v1422 = vpack.c.b16 %v1414, %v1413
    %1431 = vmatprep.subr.bf16.mxu0 0
    %1432 = vmatpush1.bf16.msra.mxu0 %v1415
    %1433 = vmatprep.subr.bf16.mxu0 0
    %1434 = vmatpush1.bf16.msra.mxu0 %v1416
    %1435 = vmatprep.subr.bf16.mxu0 0
    %1436 = vmatpush1.bf16.msra.mxu0 %v1417
    %1437 = vmatprep.subr.bf16.mxu0 0
    %1438 = vmatpush1.bf16.msra.mxu0 %v1418
    %1439 = vmatprep.subr.bf16.mxu0 0
    %1440 = vmatpush1.bf16.msra.mxu0 %v1419
    %1441 = vmatprep.subr.bf16.mxu0 0
    %1442 = vmatpush1.bf16.msra.mxu0 %v1420
    %1443 = vmatprep.subr.bf16.mxu0 0
    %1444 = vmatpush1.bf16.msra.mxu0 %v1421
    %1445 = vmatprep.subr.bf16.mxu0 0
    %1446 = vmatpush1.bf16.msra.mxu0 %v1422
    %1447 = vmatprep.subr.bf16.mxu0 0
    %1448 = vmatpush1.bf16.msra.mxu0 0
    %1449 = vmatprep.subr.bf16.mxu0 0
    %1450 = vmatpush1.bf16.msra.mxu0 0
    %1451 = vmatprep.subr.bf16.mxu0 0
    %1452 = vmatpush1.bf16.msra.mxu0 0
    %1453 = vmatprep.subr.bf16.mxu0 0
    %1454 = vmatpush1.bf16.msra.mxu0 0
    %1455 = vmatprep.subr.bf16.mxu0 0
    %1456 = vmatpush1.bf16.msra.mxu0 0
    %1457 = vmatprep.subr.bf16.mxu0 0
    %1458 = vmatpush1.bf16.msra.mxu0 0
    %1459 = vmatprep.subr.bf16.mxu0 0
    %1460 = vmatpush1.bf16.msra.mxu0 0
    %1461 = vmatprep.subr.bf16.mxu0 0
    %1462 = vmatpush1.bf16.msra.mxu0 0
    %1463 = vmatprep.mubr.bf16.mxu0 0
    %1464 = vmatmul.mubr.bf16.gmra.mrb[0].mxu0 %v1372
    %v1465 = vpop.f32.mrb[0].mxu0
    %v1466 = vadd.f32 0.0, %v1465
    %v1467 = vpop.f32.mrb[0].mxu0
    %v1468 = vpop.f32.mrb[0].mxu0
    %v1469 = vadd.f32 0.0, %v1468
    %v1470 = vpop.f32.mrb[0].mxu0
    %1471 = vmatprep.mubr.bf16.mxu0 0
    %1472 = vmatmul.mubr.bf16.gmra.mrb[0].mxu0 %v1374
    %v1473 = vpop.f32.mrb[0].mxu0
    %v1474 = vadd.f32 0.0, %v1473
    %v1475 = vpop.f32.mrb[0].mxu0
    %v1476 = vpop.f32.mrb[0].mxu0
    %v1477 = vadd.f32 0.0, %v1476
    %v1478 = vpop.f32.mrb[0].mxu0
    %1479 = vmatprep.mubr.bf16.mxu0 0
    %1480 = vmatmul.mubr.bf16.gmra.mrb[0].mxu0 %v1376
    %v1481 = vpop.f32.mrb[0].mxu0
    %v1482 = vadd.f32 0.0, %v1481
    %v1483 = vpop.f32.mrb[0].mxu0
    %v1484 = vpop.f32.mrb[0].mxu0
    %v1485 = vadd.f32 0.0, %v1484
    %v1486 = vpop.f32.mrb[0].mxu0
    %1487 = vmatprep.mubr.bf16.mxu0 0
    %1488 = vmatmul.mubr.bf16.gmra.mrb[0].mxu0 %v1378
    %v1489 = vpop.f32.mrb[0].mxu0
    %v1490 = vadd.f32 0.0, %v1489
    %v1491 = vpop.f32.mrb[0].mxu0
    %v1492 = vpop.f32.mrb[0].mxu0
    %v1493 = vadd.f32 0.0, %v1492
    %v1494 = vpop.f32.mrb[0].mxu0
    %1495 = vdwg.mxu0
    %v1496 = vadd.f32 %v1337, %v1466
    %v1497 = vadd.f32 %v1338, %v1469
    %v1498 = vadd.f32 %v1339, %v1474
    %v1499 = vadd.f32 %v1340, %v1477
    %v1500 = vadd.f32 %v1341, %v1482
    %v1501 = vadd.f32 %v1342, %v1485
    %v1502 = vadd.f32 %v1343, %v1490
    %v1503 = vadd.f32 %v1344, %v1493
    %v1504 = vld [vmem:[%s0 + $0x28] sm:$0x7]
    %s1505 = scalar_lea.vmem [#allocation3], 448
    %v1506 = vld [vmem:[%s1505] sm:$0xf]
    %v1507 = vld [vmem:[%s1505 + $0x4] sm:$0xf]
    %v1508 = vld [vmem:[%s1505 + $0x8] sm:$0xf]
    %v1509 = vld [vmem:[%s1505 + $0xc] sm:$0xf]
    %v1510 = vld [vmem:[%s1505 + $0x10] sm:$0xf]
    %v1511 = vld [vmem:[%s1505 + $0x14] sm:$0xf]
    %v1512 = vld [vmem:[%s1505 + $0x18] sm:$0xf]
    %v1513 = vld [vmem:[%s1505 + $0x1c] sm:$0xf]
    %v1514 = vld [vmem:[%s1505 + $0x20] sm:$0xf]
    %v1515 = vld [vmem:[%s1505 + $0x24] sm:$0xf]
    %v1516 = vld [vmem:[%s1505 + $0x28] sm:$0xf]
    %v1517 = vld [vmem:[%s1505 + $0x2c] sm:$0xf]
    %v1518 = vld [vmem:[%s1505 + $0x30] sm:$0xf]
    %v1519 = vld [vmem:[%s1505 + $0x34] sm:$0xf]
    %v1520 = vld [vmem:[%s1505 + $0x38] sm:$0xf]
    %v1521 = vld [vmem:[%s1505 + $0x3c] sm:$0xf]
    %v1523 = vunpack.c.l.b16 %v1504
    %v1524 = vpack.c.b16 %v1523, %v1523
    %vm1525 = vsmask.f32 5376
    %v1527 = vshrl.u32 %v1368, 16
    %v1529 = vrot.slane %v1527, 2
    %v1530 = vshll.u32 %v1368, 16
    %v1532 = vrot.slane %v1530, 3
    %v1533 = vor.u32 %v1529, %v1532
    %v1534 = vrot.slane %v1196, 2
    %v1535 = vrot.slane %v1192, 3
    %v1536 = vor.u32 %v1534, %v1535
    %v1537 = vsel %vm1525, %v1533, %v1536
    %v1538 = vrot.slane %v1204, 2
    %v1539 = vrot.slane %v1200, 3
    %v1540 = vor.u32 %v1538, %v1539
    %v1541 = vsel %vm1525, %v1536, %v1540
    %v1542 = vrot.slane %v1212, 2
    %v1543 = vrot.slane %v1208, 3
    %v1544 = vor.u32 %v1542, %v1543
    %v1545 = vsel %vm1525, %v1540, %v1544
    %v1547 = vshrl.u32 %v1524, 16
    %v1549 = vrot.slane %v1547, 2
    %v1550 = vshll.u32 %v1524, 16
    %v1552 = vrot.slane %v1550, 3
    %v1553 = vor.u32 %v1549, %v1552
    %v1554 = vsel %vm1525, %v1544, %v1553
    %v1575 = vunpack.c.l.b16 %v1506
    %v1576 = vunpack.c.l.b16 %v1507
    %v1577 = vunpack.c.l.b16 %v1508
    %v1578 = vunpack.c.l.b16 %v1509
    %v1579 = vunpack.c.l.b16 %v1510
    %v1580 = vunpack.c.l.b16 %v1511
    %v1581 = vunpack.c.l.b16 %v1512
    %v1582 = vunpack.c.l.b16 %v1513
    %v1583 = vunpack.c.l.b16 %v1514
    %v1584 = vunpack.c.l.b16 %v1515
    %v1585 = vunpack.c.l.b16 %v1516
    %v1586 = vunpack.c.l.b16 %v1517
    %v1587 = vunpack.c.l.b16 %v1518
    %v1588 = vunpack.c.l.b16 %v1519
    %v1589 = vunpack.c.l.b16 %v1520
    %v1590 = vunpack.c.l.b16 %v1521
    %v1591 = vpack.c.b16 %v1576, %v1575
    %v1592 = vpack.c.b16 %v1578, %v1577
    %v1593 = vpack.c.b16 %v1580, %v1579
    %v1594 = vpack.c.b16 %v1582, %v1581
    %v1595 = vpack.c.b16 %v1584, %v1583
    %v1596 = vpack.c.b16 %v1586, %v1585
    %v1597 = vpack.c.b16 %v1588, %v1587
    %v1598 = vpack.c.b16 %v1590, %v1589
    %1607 = vmatprep.subr.bf16.mxu0 0
    %1608 = vmatpush1.bf16.msra.mxu0 %v1591
    %1609 = vmatprep.subr.bf16.mxu0 0
    %1610 = vmatpush1.bf16.msra.mxu0 %v1592
    %1611 = vmatprep.subr.bf16.mxu0 0
    %1612 = vmatpush1.bf16.msra.mxu0 %v1593
    %1613 = vmatprep.subr.bf16.mxu0 0
    %1614 = vmatpush1.bf16.msra.mxu0 %v1594
    %1615 = vmatprep.subr.bf16.mxu0 0
    %1616 = vmatpush1.bf16.msra.mxu0 %v1595
    %1617 = vmatprep.subr.bf16.mxu0 0
    %1618 = vmatpush1.bf16.msra.mxu0 %v1596
    %1619 = vmatprep.subr.bf16.mxu0 0
    %1620 = vmatpush1.bf16.msra.mxu0 %v1597
    %1621 = vmatprep.subr.bf16.mxu0 0
    %1622 = vmatpush1.bf16.msra.mxu0 %v1598
    %1623 = vmatprep.subr.bf16.mxu0 0
    %1624 = vmatpush1.bf16.msra.mxu0 0
    %1625 = vmatprep.subr.bf16.mxu0 0
    %1626 = vmatpush1.bf16.msra.mxu0 0
    %1627 = vmatprep.subr.bf16.mxu0 0
    %1628 = vmatpush1.bf16.msra.mxu0 0
    %1629 = vmatprep.subr.bf16.mxu0 0
    %1630 = vmatpush1.bf16.msra.mxu0 0
    %1631 = vmatprep.subr.bf16.mxu0 0
    %1632 = vmatpush1.bf16.msra.mxu0 0
    %1633 = vmatprep.subr.bf16.mxu0 0
    %1634 = vmatpush1.bf16.msra.mxu0 0
    %1635 = vmatprep.subr.bf16.mxu0 0
    %1636 = vmatpush1.bf16.msra.mxu0 0
    %1637 = vmatprep.subr.bf16.mxu0 0
    %1638 = vmatpush1.bf16.msra.mxu0 0
    %1639 = vmatprep.mubr.bf16.mxu0 0
    %1640 = vmatmul.mubr.bf16.gmra.mrb[0].mxu0 %v1537
    %v1641 = vpop.f32.mrb[0].mxu0
    %v1642 = vadd.f32 0.0, %v1641
    %v1643 = vpop.f32.mrb[0].mxu0
    %v1644 = vpop.f32.mrb[0].mxu0
    %v1645 = vadd.f32 0.0, %v1644
    %v1646 = vpop.f32.mrb[0].mxu0
    %1647 = vmatprep.mubr.bf16.mxu0 0
    %1648 = vmatmul.mubr.bf16.gmra.mrb[0].mxu0 %v1541
    %v1649 = vpop.f32.mrb[0].mxu0
    %v1650 = vadd.f32 0.0, %v1649
    %v1651 = vpop.f32.mrb[0].mxu0
    %v1652 = vpop.f32.mrb[0].mxu0
    %v1653 = vadd.f32 0.0, %v1652
    %v1654 = vpop.f32.mrb[0].mxu0
    %1655 = vmatprep.mubr.bf16.mxu0 0
    %1656 = vmatmul.mubr.bf16.gmra.mrb[0].mxu0 %v1545
    %v1657 = vpop.f32.mrb[0].mxu0
    %v1658 = vadd.f32 0.0, %v1657
    %v1659 = vpop.f32.mrb[0].mxu0
    %v1660 = vpop.f32.mrb[0].mxu0
    %v1661 = vadd.f32 0.0, %v1660
    %v1662 = vpop.f32.mrb[0].mxu0
    %1663 = vmatprep.mubr.bf16.mxu0 0
    %1664 = vmatmul.mubr.bf16.gmra.mrb[0].mxu0 %v1554
    %v1665 = vpop.f32.mrb[0].mxu0
    %v1666 = vadd.f32 0.0, %v1665
    %v1667 = vpop.f32.mrb[0].mxu0
    %v1668 = vpop.f32.mrb[0].mxu0
    %v1669 = vadd.f32 0.0, %v1668
    %v1670 = vpop.f32.mrb[0].mxu0
    %1671 = vdwg.mxu0
    %v1672 = vadd.f32 %v1496, %v1642
    %v1673 = vadd.f32 %v1497, %v1645
    %v1674 = vadd.f32 %v1498, %v1650
    %v1675 = vadd.f32 %v1499, %v1653
    %v1676 = vadd.f32 %v1500, %v1658
    %v1677 = vadd.f32 %v1501, %v1661
    %v1678 = vadd.f32 %v1502, %v1666
    %v1679 = vadd.f32 %v1503, %v1669
    %v1680 = vld [vmem:[%s0 + $0x8] sm:$0x8]
    %s1681 = scalar_lea.vmem [#allocation3], 512
    %v1682 = vld [vmem:[%s1681] sm:$0xf]
    %v1683 = vld [vmem:[%s1681 + $0x4] sm:$0xf]
    %v1684 = vld [vmem:[%s1681 + $0x8] sm:$0xf]
    %v1685 = vld [vmem:[%s1681 + $0xc] sm:$0xf]
    %v1686 = vld [vmem:[%s1681 + $0x10] sm:$0xf]
    %v1687 = vld [vmem:[%s1681 + $0x14] sm:$0xf]
    %v1688 = vld [vmem:[%s1681 + $0x18] sm:$0xf]
    %v1689 = vld [vmem:[%s1681 + $0x1c] sm:$0xf]
    %v1690 = vld [vmem:[%s1681 + $0x20] sm:$0xf]
    %v1691 = vld [vmem:[%s1681 + $0x24] sm:$0xf]
    %v1692 = vld [vmem:[%s1681 + $0x28] sm:$0xf]
    %v1693 = vld [vmem:[%s1681 + $0x2c] sm:$0xf]
    %v1694 = vld [vmem:[%s1681 + $0x30] sm:$0xf]
    %v1695 = vld [vmem:[%s1681 + $0x34] sm:$0xf]
    %v1696 = vld [vmem:[%s1681 + $0x38] sm:$0xf]
    %v1697 = vld [vmem:[%s1681 + $0x3c] sm:$0xf]
    %v1699 = vunpack.c.l.b16 %v1680
    %v1700 = vpack.c.b16 %v1170, %v1699
    %vm1701 = vcmask 1044480
    %v1702 = vrot.slane %v1700, 3
    %v1703 = vrot.slane %v1179, 3
    %v1704 = vsel %vm1701, %v1702, %v1703
    %v1705 = vrot.slane %v1180, 3
    %v1706 = vsel %vm1701, %v1703, %v1705
    %v1707 = vrot.slane %v1181, 3
    %v1708 = vsel %vm1701, %v1705, %v1707
    %v1709 = vrot.slane %v1524, 3
    %v1710 = vsel %vm1701, %v1707, %v1709
    %v1731 = vunpack.c.l.b16 %v1682
    %v1732 = vunpack.c.l.b16 %v1683
    %v1733 = vunpack.c.l.b16 %v1684
    %v1734 = vunpack.c.l.b16 %v1685
    %v1735 = vunpack.c.l.b16 %v1686
    %v1736 = vunpack.c.l.b16 %v1687
    %v1737 = vunpack.c.l.b16 %v1688
    %v1738 = vunpack.c.l.b16 %v1689
    %v1739 = vunpack.c.l.b16 %v1690
    %v1740 = vunpack.c.l.b16 %v1691
    %v1741 = vunpack.c.l.b16 %v1692
    %v1742 = vunpack.c.l.b16 %v1693
    %v1743 = vunpack.c.l.b16 %v1694
    %v1744 = vunpack.c.l.b16 %v1695
    %v1745 = vunpack.c.l.b16 %v1696
    %v1746 = vunpack.c.l.b16 %v1697
    %v1747 = vpack.c.b16 %v1732, %v1731
    %v1748 = vpack.c.b16 %v1734, %v1733
    %v1749 = vpack.c.b16 %v1736, %v1735
    %v1750 = vpack.c.b16 %v1738, %v1737
    %v1751 = vpack.c.b16 %v1740, %v1739
    %v1752 = vpack.c.b16 %v1742, %v1741
    %v1753 = vpack.c.b16 %v1744, %v1743
    %v1754 = vpack.c.b16 %v1746, %v1745
    %1763 = vmatprep.subr.bf16.mxu0 0
    %1764 = vmatpush1.bf16.msra.mxu0 %v1747
    %1765 = vmatprep.subr.bf16.mxu0 0
    %1766 = vmatpush1.bf16.msra.mxu0 %v1748
    %1767 = vmatprep.subr.bf16.mxu0 0
    %1768 = vmatpush1.bf16.msra.mxu0 %v1749
    %1769 = vmatprep.subr.bf16.mxu0 0
    %1770 = vmatpush1.bf16.msra.mxu0 %v1750
    %1771 = vmatprep.subr.bf16.mxu0 0
    %1772 = vmatpush1.bf16.msra.mxu0 %v1751
    %1773 = vmatprep.subr.bf16.mxu0 0
    %1774 = vmatpush1.bf16.msra.mxu0 %v1752
    %1775 = vmatprep.subr.bf16.mxu0 0
    %1776 = vmatpush1.bf16.msra.mxu0 %v1753
    %1777 = vmatprep.subr.bf16.mxu0 0
    %1778 = vmatpush1.bf16.msra.mxu0 %v1754
    %1779 = vmatprep.subr.bf16.mxu0 0
    %1780 = vmatpush1.bf16.msra.mxu0 0
    %1781 = vmatprep.subr.bf16.mxu0 0
    %1782 = vmatpush1.bf16.msra.mxu0 0
    %1783 = vmatprep.subr.bf16.mxu0 0
    %1784 = vmatpush1.bf16.msra.mxu0 0
    %1785 = vmatprep.subr.bf16.mxu0 0
    %1786 = vmatpush1.bf16.msra.mxu0 0
    %1787 = vmatprep.subr.bf16.mxu0 0
    %1788 = vmatpush1.bf16.msra.mxu0 0
    %1789 = vmatprep.subr.bf16.mxu0 0
    %1790 = vmatpush1.bf16.msra.mxu0 0
    %1791 = vmatprep.subr.bf16.mxu0 0
    %1792 = vmatpush1.bf16.msra.mxu0 0
    %1793 = vmatprep.subr.bf16.mxu0 0
    %1794 = vmatpush1.bf16.msra.mxu0 0
    %1795 = vmatprep.mubr.bf16.mxu0 0
    %1796 = vmatmul.mubr.bf16.gmra.mrb[0].mxu0 %v1704
    %v1797 = vpop.f32.mrb[0].mxu0
    %v1798 = vadd.f32 0.0, %v1797
    %v1799 = vpop.f32.mrb[0].mxu0
    %v1800 = vpop.f32.mrb[0].mxu0
    %v1801 = vadd.f32 0.0, %v1800
    %v1802 = vpop.f32.mrb[0].mxu0
    %1803 = vmatprep.mubr.bf16.mxu0 0
    %1804 = vmatmul.mubr.bf16.gmra.mrb[0].mxu0 %v1706
    %v1805 = vpop.f32.mrb[0].mxu0
    %v1806 = vadd.f32 0.0, %v1805
    %v1807 = vpop.f32.mrb[0].mxu0
    %v1808 = vpop.f32.mrb[0].mxu0
    %v1809 = vadd.f32 0.0, %v1808
    %v1810 = vpop.f32.mrb[0].mxu0
    %1811 = vmatprep.mubr.bf16.mxu0 0
    %1812 = vmatmul.mubr.bf16.gmra.mrb[0].mxu0 %v1708
    %v1813 = vpop.f32.mrb[0].mxu0
    %v1814 = vadd.f32 0.0, %v1813
    %v1815 = vpop.f32.mrb[0].mxu0
    %v1816 = vpop.f32.mrb[0].mxu0
    %v1817 = vadd.f32 0.0, %v1816
    %v1818 = vpop.f32.mrb[0].mxu0
    %1819 = vmatprep.mubr.bf16.mxu0 0
    %1820 = vmatmul.mubr.bf16.gmra.mrb[0].mxu0 %v1710
    %v1821 = vpop.f32.mrb[0].mxu0
    %v1822 = vadd.f32 0.0, %v1821
    %v1823 = vpop.f32.mrb[0].mxu0
    %v1824 = vpop.f32.mrb[0].mxu0
    %v1825 = vadd.f32 0.0, %v1824
    %v1826 = vpop.f32.mrb[0].mxu0
    %1827 = vdwg.mxu0
    %v1828 = vadd.f32 %v1672, %v1798
    %v1829 = vadd.f32 %v1673, %v1801
    %v1830 = vadd.f32 %v1674, %v1806
    %v1831 = vadd.f32 %v1675, %v1809
    %v1832 = vadd.f32 %v1676, %v1814
    %v1833 = vadd.f32 %v1677, %v1817
    %v1834 = vadd.f32 %v1678, %v1822
    %v1835 = vadd.f32 %v1679, %v1825
    %v1836 = vld [vmem:[%s2] sm:$0x1]
    %v1838 = vlaneseq
    %v1839 = vshrl.u32 %v1838, 7
    %v1840 = vsub.s32 0, %v1839
    %v1841 = vrot.slane %v1836, %v1840
    %v1843 = vadd.f32 %v1828, %v1841
    %v1844 = vadd.f32 %v1829, %v1841
    %v1845 = vadd.f32 %v1830, %v1841
    %v1846 = vadd.f32 %v1831, %v1841
    %v1847 = vadd.f32 %v1832, %v1841
    %v1848 = vadd.f32 %v1833, %v1841
    %v1849 = vadd.f32 %v1834, %v1841
    %v1850 = vadd.f32 %v1835, %v1841
    %v1851 = vmax.f32 %v1843, 0.0
    %v1852 = vmax.f32 %v1844, 0.0
    %v1853 = vmax.f32 %v1845, 0.0
    %v1854 = vmax.f32 %v1846, 0.0
    %v1855 = vmax.f32 %v1847, 0.0
    %v1856 = vmax.f32 %v1848, 0.0
    %v1857 = vmax.f32 %v1849, 0.0
    %v1858 = vmax.f32 %v1850, 0.0
    %v1859 = vmul.f32 %v1851, %v286
    %v1860 = vmul.f32 %v1852, %v287
    %v1861 = vmul.f32 %v1853, %v288
    %v1862 = vmul.f32 %v1854, %v289
    %v1863 = vmul.f32 %v1855, %v290
    %v1864 = vmul.f32 %v1856, %v291
    %v1865 = vmul.f32 %v1857, %v292
    %v1866 = vmul.f32 %v1858, %v293
    %v1867 = vadd.f32 %v1859, %v1860
    %v1868 = vadd.f32 %v1867, %v1861
    %v1869 = vadd.f32 %v1868, %v1862
    %v1870 = vadd.f32 %v1869, %v1863
    %v1871 = vadd.f32 %v1870, %v1864
    %v1872 = vadd.f32 %v1871, %v1865
    %v1873 = vadd.f32 %v1872, %v1866
    %v1874 = vrot.slane %v1873, 4
    %v1875 = vadd.f32 %v1873, %v1874
    %v1876 = vrot.slane %v1875, 2
    %v1877 = vadd.f32 %v1875, %v1876
    %v1878 = vrot.slane %v1877, 1
    %v1879 = vadd.f32 %v1877, %v1878
    %v1880 = vmul.f32 %v1879, 0.041666668
    %v1881 = vsub.f32 %v1859, %v1880
    %v1882 = vsub.f32 %v1860, %v1880
    %v1883 = vsub.f32 %v1861, %v1880
    %v1884 = vsub.f32 %v1862, %v1880
    %v1885 = vsub.f32 %v1863, %v1880
    %v1886 = vsub.f32 %v1864, %v1880
    %v1887 = vsub.f32 %v1865, %v1880
    %v1888 = vsub.f32 %v1866, %v1880
    %v1889 = vmul.f32 %v1881, %v286
    %v1890 = vmul.f32 %v1882, %v287
    %v1891 = vmul.f32 %v1883, %v288
    %v1892 = vmul.f32 %v1884, %v289
    %v1893 = vmul.f32 %v1885, %v290
    %v1894 = vmul.f32 %v1886, %v291
    %v1895 = vmul.f32 %v1887, %v292
    %v1896 = vmul.f32 %v1888, %v293
    %v1897 = vmul.f32 %v1889, %v1889
    %v1898 = vmul.f32 %v1890, %v1890
    %v1899 = vmul.f32 %v1891, %v1891
    %v1900 = vmul.f32 %v1892, %v1892
    %v1901 = vmul.f32 %v1893, %v1893
    %v1902 = vmul.f32 %v1894, %v1894
    %v1903 = vmul.f32 %v1895, %v1895
    %v1904 = vmul.f32 %v1896, %v1896
    %v1905 = vadd.f32 %v1897, %v1898
    %v1906 = vadd.f32 %v1905, %v1899
    %v1907 = vadd.f32 %v1906, %v1900
    %v1908 = vadd.f32 %v1907, %v1901
    %v1909 = vadd.f32 %v1908, %v1902
    %v1910 = vadd.f32 %v1909, %v1903
    %v1911 = vadd.f32 %v1910, %v1904
    %v1912 = vrot.slane %v1911, 4
    %v1913 = vadd.f32 %v1911, %v1912
    %v1914 = vrot.slane %v1913, 2
    %v1915 = vadd.f32 %v1913, %v1914
    %v1916 = vrot.slane %v1915, 1
    %v1917 = vadd.f32 %v1915, %v1916
    %v1918 = vmul.f32 %v1917, 0.041666668
    %v1919 = vld [vmem:[%s3] sm:$0x1]
    %v1920 = vadd.f32 %v1918, 1e-05
    %v1921 = vrsqrt.pop %v1920
    %v1922 = vmul.f32 %v1919, %v1921
    %v1924 = vlaneseq
    %v1925 = vshrl.u32 %v1924, 7
    %v1926 = vsub.s32 0, %v1925
    %v1927 = vrot.slane %v1922, %v1926
    %v1929 = vmul.f32 %v1889, %v1927
    %v1930 = vmul.f32 %v1890, %v1927
    %v1931 = vmul.f32 %v1891, %v1927
    %v1932 = vmul.f32 %v1892, %v1927
    %v1933 = vmul.f32 %v1893, %v1927
    %v1934 = vmul.f32 %v1894, %v1927
    %v1935 = vmul.f32 %v1895, %v1927
    %v1936 = vmul.f32 %v1896, %v1927
    %v1937 = vld [vmem:[%s4] sm:$0x1]
    %v1939 = vlaneseq
    %v1940 = vshrl.u32 %v1939, 7
    %v1941 = vsub.s32 0, %v1940
    %v1942 = vrot.slane %v1937, %v1941
    %v1944 = vadd.f32 %v1929, %v1942
    %v1945 = vadd.f32 %v1930, %v1942
    %v1946 = vadd.f32 %v1931, %v1942
    %v1947 = vadd.f32 %v1932, %v1942
    %v1948 = vadd.f32 %v1933, %v1942
    %v1949 = vadd.f32 %v1934, %v1942
    %v1950 = vadd.f32 %v1935, %v1942
    %v1951 = vadd.f32 %v1936, %v1942
    %v1952 = vmul.f32 %v1944, %v286
    %v1953 = vmul.f32 %v1945, %v287
    %v1954 = vmul.f32 %v1946, %v288
    %v1955 = vmul.f32 %v1947, %v289
    %v1956 = vmul.f32 %v1948, %v290
    %v1957 = vmul.f32 %v1949, %v291
    %v1958 = vmul.f32 %v1950, %v292
    %v1959 = vmul.f32 %v1951, %v293
    %v1960 = vpack.c.bf16 %v1953, %v1952
    %v1961 = vpack.c.bf16 %v1955, %v1954
    %v1962 = vpack.c.bf16 %v1957, %v1956
    %v1963 = vpack.c.bf16 %v1959, %v1958
    %1964 = vst [vmem:[#allocation2 + $0x8] sm:$0xff] %v1960
    %1965 = vst [vmem:[#allocation2 + $0x10] sm:$0xff] %v1961
    %1966 = vst [vmem:[#allocation2 + $0x18] sm:$0xff] %v1962
    %1967 = vst [vmem:[#allocation2 + $0x20] sm:$0xff] %v1963
    %v1968 = vld [vmem:[#allocation2] sm:$0xe0]
    %v1969 = vld [vmem:[#allocation2 + $0x8] sm:$0xff]
    %v1970 = vld [vmem:[#allocation2 + $0x10] sm:$0xff]
    %v1971 = vld [vmem:[#allocation2 + $0x18] sm:$0xff]
    %v1972 = vld [vmem:[#allocation2 + $0x20] sm:$0x1f]
    %v1973 = vld [vmem:[#allocation6] sm:$0xf]
    %v1974 = vld [vmem:[#allocation6 + $0x4] sm:$0xf]
    %v1975 = vld [vmem:[#allocation6 + $0x8] sm:$0xf]
    %v1976 = vld [vmem:[#allocation6 + $0xc] sm:$0xf]
    %v1977 = vld [vmem:[#allocation6 + $0x10] sm:$0xf]
    %v1978 = vld [vmem:[#allocation6 + $0x14] sm:$0xf]
    %v1979 = vld [vmem:[#allocation6 + $0x18] sm:$0xf]
    %v1980 = vld [vmem:[#allocation6 + $0x1c] sm:$0xf]
    %v1981 = vld [vmem:[#allocation6 + $0x20] sm:$0xf]
    %v1982 = vld [vmem:[#allocation6 + $0x24] sm:$0xf]
    %v1983 = vld [vmem:[#allocation6 + $0x28] sm:$0xf]
    %v1984 = vld [vmem:[#allocation6 + $0x2c] sm:$0xf]
    %v1985 = vld [vmem:[#allocation6 + $0x30] sm:$0xf]
    %v1986 = vld [vmem:[#allocation6 + $0x34] sm:$0xf]
    %v1987 = vld [vmem:[#allocation6 + $0x38] sm:$0xf]
    %v1988 = vld [vmem:[#allocation6 + $0x3c] sm:$0xf]
    %v1989 = vld [vmem:[#allocation2 + $0x20] sm:$0x3f]
    %s1990 = scalar_lea.vmem [#allocation6], 64
    %v1991 = vld [vmem:[%s1990] sm:$0xf]
    %v1992 = vld [vmem:[%s1990 + $0x4] sm:$0xf]
    %v1993 = vld [vmem:[%s1990 + $0x8] sm:$0xf]
    %v1994 = vld [vmem:[%s1990 + $0xc] sm:$0xf]
    %v1995 = vld [vmem:[%s1990 + $0x10] sm:$0xf]
    %v1996 = vld [vmem:[%s1990 + $0x14] sm:$0xf]
    %v1997 = vld [vmem:[%s1990 + $0x18] sm:$0xf]
    %v1998 = vld [vmem:[%s1990 + $0x1c] sm:$0xf]
    %v1999 = vld [vmem:[%s1990 + $0x20] sm:$0xf]
    %v2000 = vld [vmem:[%s1990 + $0x24] sm:$0xf]
    %v2001 = vld [vmem:[%s1990 + $0x28] sm:$0xf]
    %v2002 = vld [vmem:[%s1990 + $0x2c] sm:$0xf]
    %v2003 = vld [vmem:[%s1990 + $0x30] sm:$0xf]
    %v2004 = vld [vmem:[%s1990 + $0x34] sm:$0xf]
    %v2005 = vld [vmem:[%s1990 + $0x38] sm:$0xf]
    %v2006 = vld [vmem:[%s1990 + $0x3c] sm:$0xf]
    %vm2007 = vsmask.f32 2304
    %v2009 = vshrl.u32 %v1968, 16
    %v2011 = vrot.slane %v2009, 5
    %v2012 = vshll.u32 %v1968, 16
    %v2014 = vrot.slane %v2012, 6
    %v2015 = vor.u32 %v2011, %v2014
    %v2017 = vshrl.u32 %v1969, 16
    %v2019 = vrot.slane %v2017, 5
    %v2020 = vshll.u32 %v1969, 16
    %v2022 = vrot.slane %v2020, 6
    %v2023 = vor.u32 %v2019, %v2022
    %v2024 = vsel %vm2007, %v2015, %v2023
    %v2026 = vshrl.u32 %v1970, 16
    %v2028 = vrot.slane %v2026, 5
    %v2029 = vshll.u32 %v1970, 16
    %v2031 = vrot.slane %v2029, 6
    %v2032 = vor.u32 %v2028, %v2031
    %v2033 = vsel %vm2007, %v2023, %v2032
    %v2035 = vshrl.u32 %v1971, 16
    %v2037 = vrot.slane %v2035, 5
    %v2038 = vshll.u32 %v1971, 16
    %v2040 = vrot.slane %v2038, 6
    %v2041 = vor.u32 %v2037, %v2040
    %v2042 = vsel %vm2007, %v2032, %v2041
    %v2044 = vshrl.u32 %v1989, 16
    %v2046 = vrot.slane %v2044, 5
    %v2047 = vshll.u32 %v1989, 16
    %v2049 = vrot.slane %v2047, 6
    %v2050 = vor.u32 %v2046, %v2049
    %v2051 = vsel %vm2007, %v2041, %v2050
    %v2072 = vunpack.c.l.b16 %v1991
    %v2073 = vunpack.c.l.b16 %v1992
    %v2074 = vunpack.c.l.b16 %v1993
    %v2075 = vunpack.c.l.b16 %v1994
    %v2076 = vunpack.c.l.b16 %v1995
    %v2077 = vunpack.c.l.b16 %v1996
    %v2078 = vunpack.c.l.b16 %v1997
    %v2079 = vunpack.c.l.b16 %v1998
    %v2080 = vunpack.c.l.b16 %v1999
    %v2081 = vunpack.c.l.b16 %v2000
    %v2082 = vunpack.c.l.b16 %v2001
    %v2083 = vunpack.c.l.b16 %v2002
    %v2084 = vunpack.c.l.b16 %v2003
    %v2085 = vunpack.c.l.b16 %v2004
    %v2086 = vunpack.c.l.b16 %v2005
    %v2087 = vunpack.c.l.b16 %v2006
    %v2088 = vpack.c.b16 %v2073, %v2072
    %v2089 = vpack.c.b16 %v2075, %v2074
    %v2090 = vpack.c.b16 %v2077, %v2076
    %v2091 = vpack.c.b16 %v2079, %v2078
    %v2092 = vpack.c.b16 %v2081, %v2080
    %v2093 = vpack.c.b16 %v2083, %v2082
    %v2094 = vpack.c.b16 %v2085, %v2084
    %v2095 = vpack.c.b16 %v2087, %v2086
    %2104 = vmatprep.subr.bf16.mxu0 0
    %2105 = vmatpush1.bf16.msra.mxu0 %v2088
    %2106 = vmatprep.subr.bf16.mxu0 0
    %2107 = vmatpush1.bf16.msra.mxu0 %v2089
    %2108 = vmatprep.subr.bf16.mxu0 0
    %2109 = vmatpush1.bf16.msra.mxu0 %v2090
    %2110 = vmatprep.subr.bf16.mxu0 0
    %2111 = vmatpush1.bf16.msra.mxu0 %v2091
    %2112 = vmatprep.subr.bf16.mxu0 0
    %2113 = vmatpush1.bf16.msra.mxu0 %v2092
    %2114 = vmatprep.subr.bf16.mxu0 0
    %2115 = vmatpush1.bf16.msra.mxu0 %v2093
    %2116 = vmatprep.subr.bf16.mxu0 0
    %2117 = vmatpush1.bf16.msra.mxu0 %v2094
    %2118 = vmatprep.subr.bf16.mxu0 0
    %2119 = vmatpush1.bf16.msra.mxu0 %v2095
    %2120 = vmatprep.subr.bf16.mxu0 0
    %2121 = vmatpush1.bf16.msra.mxu0 0
    %2122 = vmatprep.subr.bf16.mxu0 0
    %2123 = vmatpush1.bf16.msra.mxu0 0
    %2124 = vmatprep.subr.bf16.mxu0 0
    %2125 = vmatpush1.bf16.msra.mxu0 0
    %2126 = vmatprep.subr.bf16.mxu0 0
    %2127 = vmatpush1.bf16.msra.mxu0 0
    %2128 = vmatprep.subr.bf16.mxu0 0
    %2129 = vmatpush1.bf16.msra.mxu0 0
    %2130 = vmatprep.subr.bf16.mxu0 0
    %2131 = vmatpush1.bf16.msra.mxu0 0
    %2132 = vmatprep.subr.bf16.mxu0 0
    %2133 = vmatpush1.bf16.msra.mxu0 0
    %2134 = vmatprep.subr.bf16.mxu0 0
    %2135 = vmatpush1.bf16.msra.mxu0 0
    %2136 = vmatprep.mubr.bf16.mxu0 0
    %2137 = vmatmul.mubr.bf16.gmra.mrb[0].mxu0 %v2024
    %v2138 = vpop.f32.mrb[0].mxu0
    %v2139 = vadd.f32 0.0, %v2138
    %v2140 = vpop.f32.mrb[0].mxu0
    %v2141 = vpop.f32.mrb[0].mxu0
    %v2142 = vadd.f32 0.0, %v2141
    %v2143 = vpop.f32.mrb[0].mxu0
    %2144 = vmatprep.mubr.bf16.mxu0 0
    %2145 = vmatmul.mubr.bf16.gmra.mrb[0].mxu0 %v2033
    %v2146 = vpop.f32.mrb[0].mxu0
    %v2147 = vadd.f32 0.0, %v2146
    %v2148 = vpop.f32.mrb[0].mxu0
    %v2149 = vpop.f32.mrb[0].mxu0
    %v2150 = vadd.f32 0.0, %v2149
    %v2151 = vpop.f32.mrb[0].mxu0
    %2152 = vmatprep.mubr.bf16.mxu0 0
    %2153 = vmatmul.mubr.bf16.gmra.mrb[0].mxu0 %v2042
    %v2154 = vpop.f32.mrb[0].mxu0
    %v2155 = vadd.f32 0.0, %v2154
    %v2156 = vpop.f32.mrb[0].mxu0
    %v2157 = vpop.f32.mrb[0].mxu0
    %v2158 = vadd.f32 0.0, %v2157
    %v2159 = vpop.f32.mrb[0].mxu0
    %2160 = vmatprep.mubr.bf16.mxu0 0
    %2161 = vmatmul.mubr.bf16.gmra.mrb[0].mxu0 %v2051
    %v2162 = vpop.f32.mrb[0].mxu0
    %v2163 = vadd.f32 0.0, %v2162
    %v2164 = vpop.f32.mrb[0].mxu0
    %v2165 = vpop.f32.mrb[0].mxu0
    %v2166 = vadd.f32 0.0, %v2165
    %v2167 = vpop.f32.mrb[0].mxu0
    %2168 = vdwg.mxu0
    %vm2174 = vcmask 1042432
    %v2175 = vrot.slane %v1968, 5
    %v2176 = vrot.slane %v1969, 5
    %v2177 = vsel %vm2174, %v2175, %v2176
    %v2178 = vrot.slane %v1970, 5
    %v2179 = vsel %vm2174, %v2176, %v2178
    %v2180 = vrot.slane %v1971, 5
    %v2181 = vsel %vm2174, %v2178, %v2180
    %v2182 = vrot.slane %v1972, 5
    %v2183 = vsel %vm2174, %v2180, %v2182
    %v2204 = vunpack.c.l.b16 %v1973
    %v2205 = vunpack.c.l.b16 %v1974
    %v2206 = vunpack.c.l.b16 %v1975
    %v2207 = vunpack.c.l.b16 %v1976
    %v2208 = vunpack.c.l.b16 %v1977
    %v2209 = vunpack.c.l.b16 %v1978
    %v2210 = vunpack.c.l.b16 %v1979
    %v2211 = vunpack.c.l.b16 %v1980
    %v2212 = vunpack.c.l.b16 %v1981
    %v2213 = vunpack.c.l.b16 %v1982
    %v2214 = vunpack.c.l.b16 %v1983
    %v2215 = vunpack.c.l.b16 %v1984
    %v2216 = vunpack.c.l.b16 %v1985
    %v2217 = vunpack.c.l.b16 %v1986
    %v2218 = vunpack.c.l.b16 %v1987
    %v2219 = vunpack.c.l.b16 %v1988
    %v2220 = vpack.c.b16 %v2205, %v2204
    %v2221 = vpack.c.b16 %v2207, %v2206
    %v2222 = vpack.c.b16 %v2209, %v2208
    %v2223 = vpack.c.b16 %v2211, %v2210
    %v2224 = vpack.c.b16 %v2213, %v2212
    %v2225 = vpack.c.b16 %v2215, %v2214
    %v2226 = vpack.c.b16 %v2217, %v2216
    %v2227 = vpack.c.b16 %v2219, %v2218
    %2236 = vmatprep.subr.bf16.mxu0 0
    %2237 = vmatpush1.bf16.msra.mxu0 %v2220
    %2238 = vmatprep.subr.bf16.mxu0 0
    %2239 = vmatpush1.bf16.msra.mxu0 %v2221
    %2240 = vmatprep.subr.bf16.mxu0 0
    %2241 = vmatpush1.bf16.msra.mxu0 %v2222
    %2242 = vmatprep.subr.bf16.mxu0 0
    %2243 = vmatpush1.bf16.msra.mxu0 %v2223
    %2244 = vmatprep.subr.bf16.mxu0 0
    %2245 = vmatpush1.bf16.msra.mxu0 %v2224
    %2246 = vmatprep.subr.bf16.mxu0 0
    %2247 = vmatpush1.bf16.msra.mxu0 %v2225
    %2248 = vmatprep.subr.bf16.mxu0 0
    %2249 = vmatpush1.bf16.msra.mxu0 %v2226
    %2250 = vmatprep.subr.bf16.mxu0 0
    %2251 = vmatpush1.bf16.msra.mxu0 %v2227
    %2252 = vmatprep.subr.bf16.mxu0 0
    %2253 = vmatpush1.bf16.msra.mxu0 0
    %2254 = vmatprep.subr.bf16.mxu0 0
    %2255 = vmatpush1.bf16.msra.mxu0 0
    %2256 = vmatprep.subr.bf16.mxu0 0
    %2257 = vmatpush1.bf16.msra.mxu0 0
    %2258 = vmatprep.subr.bf16.mxu0 0
    %2259 = vmatpush1.bf16.msra.mxu0 0
    %2260 = vmatprep.subr.bf16.mxu0 0
    %2261 = vmatpush1.bf16.msra.mxu0 0
    %2262 = vmatprep.subr.bf16.mxu0 0
    %2263 = vmatpush1.bf16.msra.mxu0 0
    %2264 = vmatprep.subr.bf16.mxu0 0
    %2265 = vmatpush1.bf16.msra.mxu0 0
    %2266 = vmatprep.subr.bf16.mxu0 0
    %2267 = vmatpush1.bf16.msra.mxu0 0
    %2268 = vmatprep.mubr.bf16.mxu0 0
    %2269 = vmatmul.mubr.bf16.gmra.mrb[0].mxu0 %v2177
    %v2270 = vpop.f32.mrb[0].mxu0
    %v2271 = vadd.f32 %v2139, %v2270
    %v2272 = vpop.f32.mrb[0].mxu0
    %v2273 = vpop.f32.mrb[0].mxu0
    %v2274 = vadd.f32 %v2142, %v2273
    %v2275 = vpop.f32.mrb[0].mxu0
    %2276 = vmatprep.mubr.bf16.mxu0 0
    %2277 = vmatmul.mubr.bf16.gmra.mrb[0].mxu0 %v2179
    %v2278 = vpop.f32.mrb[0].mxu0
    %v2279 = vadd.f32 %v2147, %v2278
    %v2280 = vpop.f32.mrb[0].mxu0
    %v2281 = vpop.f32.mrb[0].mxu0
    %v2282 = vadd.f32 %v2150, %v2281
    %v2283 = vpop.f32.mrb[0].mxu0
    %2284 = vmatprep.mubr.bf16.mxu0 0
    %2285 = vmatmul.mubr.bf16.gmra.mrb[0].mxu0 %v2181
    %v2286 = vpop.f32.mrb[0].mxu0
    %v2287 = vadd.f32 %v2155, %v2286
    %v2288 = vpop.f32.mrb[0].mxu0
    %v2289 = vpop.f32.mrb[0].mxu0
    %v2290 = vadd.f32 %v2158, %v2289
    %v2291 = vpop.f32.mrb[0].mxu0
    %2292 = vmatprep.mubr.bf16.mxu0 0
    %2293 = vmatmul.mubr.bf16.gmra.mrb[0].mxu0 %v2183
    %v2294 = vpop.f32.mrb[0].mxu0
    %v2295 = vadd.f32 %v2163, %v2294
    %v2296 = vpop.f32.mrb[0].mxu0
    %v2297 = vpop.f32.mrb[0].mxu0
    %v2298 = vadd.f32 %v2166, %v2297
    %v2299 = vpop.f32.mrb[0].mxu0
    %2300 = vdwg.mxu0
    %v2301 = vld [vmem:[#allocation2] sm:$0xc0]
    %s2302 = scalar_lea.vmem [#allocation6], 128
    %v2303 = vld [vmem:[%s2302] sm:$0xf]
    %v2304 = vld [vmem:[%s2302 + $0x4] sm:$0xf]
    %v2305 = vld [vmem:[%s2302 + $0x8] sm:$0xf]
    %v2306 = vld [vmem:[%s2302 + $0xc] sm:$0xf]
    %v2307 = vld [vmem:[%s2302 + $0x10] sm:$0xf]
    %v2308 = vld [vmem:[%s2302 + $0x14] sm:$0xf]
    %v2309 = vld [vmem:[%s2302 + $0x18] sm:$0xf]
    %v2310 = vld [vmem:[%s2302 + $0x1c] sm:$0xf]
    %v2311 = vld [vmem:[%s2302 + $0x20] sm:$0xf]
    %v2312 = vld [vmem:[%s2302 + $0x24] sm:$0xf]
    %v2313 = vld [vmem:[%s2302 + $0x28] sm:$0xf]
    %v2314 = vld [vmem:[%s2302 + $0x2c] sm:$0xf]
    %v2315 = vld [vmem:[%s2302 + $0x30] sm:$0xf]
    %v2316 = vld [vmem:[%s2302 + $0x34] sm:$0xf]
    %v2317 = vld [vmem:[%s2302 + $0x38] sm:$0xf]
    %v2318 = vld [vmem:[%s2302 + $0x3c] sm:$0xf]
    %vm2321 = vcmask 1041408
    %v2322 = vrot.slane %v2301, 6
    %v2323 = vrot.slane %v1969, 6
    %v2324 = vsel %vm2321, %v2322, %v2323
    %v2325 = vrot.slane %v1970, 6
    %v2326 = vsel %vm2321, %v2323, %v2325
    %v2327 = vrot.slane %v1971, 6
    %v2328 = vsel %vm2321, %v2325, %v2327
    %v2329 = vrot.slane %v1989, 6
    %v2330 = vsel %vm2321, %v2327, %v2329
    %v2351 = vunpack.c.l.b16 %v2303
    %v2352 = vunpack.c.l.b16 %v2304
    %v2353 = vunpack.c.l.b16 %v2305
    %v2354 = vunpack.c.l.b16 %v2306
    %v2355 = vunpack.c.l.b16 %v2307
    %v2356 = vunpack.c.l.b16 %v2308
    %v2357 = vunpack.c.l.b16 %v2309
    %v2358 = vunpack.c.l.b16 %v2310
    %v2359 = vunpack.c.l.b16 %v2311
    %v2360 = vunpack.c.l.b16 %v2312
    %v2361 = vunpack.c.l.b16 %v2313
    %v2362 = vunpack.c.l.b16 %v2314
    %v2363 = vunpack.c.l.b16 %v2315
    %v2364 = vunpack.c.l.b16 %v2316
    %v2365 = vunpack.c.l.b16 %v2317
    %v2366 = vunpack.c.l.b16 %v2318
    %v2367 = vpack.c.b16 %v2352, %v2351
    %v2368 = vpack.c.b16 %v2354, %v2353
    %v2369 = vpack.c.b16 %v2356, %v2355
    %v2370 = vpack.c.b16 %v2358, %v2357
    %v2371 = vpack.c.b16 %v2360, %v2359
    %v2372 = vpack.c.b16 %v2362, %v2361
    %v2373 = vpack.c.b16 %v2364, %v2363
    %v2374 = vpack.c.b16 %v2366, %v2365
    %2383 = vmatprep.subr.bf16.mxu0 0
    %2384 = vmatpush1.bf16.msra.mxu0 %v2367
    %2385 = vmatprep.subr.bf16.mxu0 0
    %2386 = vmatpush1.bf16.msra.mxu0 %v2368
    %2387 = vmatprep.subr.bf16.mxu0 0
    %2388 = vmatpush1.bf16.msra.mxu0 %v2369
    %2389 = vmatprep.subr.bf16.mxu0 0
    %2390 = vmatpush1.bf16.msra.mxu0 %v2370
    %2391 = vmatprep.subr.bf16.mxu0 0
    %2392 = vmatpush1.bf16.msra.mxu0 %v2371
    %2393 = vmatprep.subr.bf16.mxu0 0
    %2394 = vmatpush1.bf16.msra.mxu0 %v2372
    %2395 = vmatprep.subr.bf16.mxu0 0
    %2396 = vmatpush1.bf16.msra.mxu0 %v2373
    %2397 = vmatprep.subr.bf16.mxu0 0
    %2398 = vmatpush1.bf16.msra.mxu0 %v2374
    %2399 = vmatprep.subr.bf16.mxu0 0
    %2400 = vmatpush1.bf16.msra.mxu0 0
    %2401 = vmatprep.subr.bf16.mxu0 0
    %2402 = vmatpush1.bf16.msra.mxu0 0
    %2403 = vmatprep.subr.bf16.mxu0 0
    %2404 = vmatpush1.bf16.msra.mxu0 0
    %2405 = vmatprep.subr.bf16.mxu0 0
    %2406 = vmatpush1.bf16.msra.mxu0 0
    %2407 = vmatprep.subr.bf16.mxu0 0
    %2408 = vmatpush1.bf16.msra.mxu0 0
    %2409 = vmatprep.subr.bf16.mxu0 0
    %2410 = vmatpush1.bf16.msra.mxu0 0
    %2411 = vmatprep.subr.bf16.mxu0 0
    %2412 = vmatpush1.bf16.msra.mxu0 0
    %2413 = vmatprep.subr.bf16.mxu0 0
    %2414 = vmatpush1.bf16.msra.mxu0 0
    %2415 = vmatprep.mubr.bf16.mxu0 0
    %2416 = vmatmul.mubr.bf16.gmra.mrb[0].mxu0 %v2324
    %v2417 = vpop.f32.mrb[0].mxu0
    %v2418 = vadd.f32 0.0, %v2417
    %v2419 = vpop.f32.mrb[0].mxu0
    %v2420 = vpop.f32.mrb[0].mxu0
    %v2421 = vadd.f32 0.0, %v2420
    %v2422 = vpop.f32.mrb[0].mxu0
    %2423 = vmatprep.mubr.bf16.mxu0 0
    %2424 = vmatmul.mubr.bf16.gmra.mrb[0].mxu0 %v2326
    %v2425 = vpop.f32.mrb[0].mxu0
    %v2426 = vadd.f32 0.0, %v2425
    %v2427 = vpop.f32.mrb[0].mxu0
    %v2428 = vpop.f32.mrb[0].mxu0
    %v2429 = vadd.f32 0.0, %v2428
    %v2430 = vpop.f32.mrb[0].mxu0
    %2431 = vmatprep.mubr.bf16.mxu0 0
    %2432 = vmatmul.mubr.bf16.gmra.mrb[0].mxu0 %v2328
    %v2433 = vpop.f32.mrb[0].mxu0
    %v2434 = vadd.f32 0.0, %v2433
    %v2435 = vpop.f32.mrb[0].mxu0
    %v2436 = vpop.f32.mrb[0].mxu0
    %v2437 = vadd.f32 0.0, %v2436
    %v2438 = vpop.f32.mrb[0].mxu0
    %2439 = vmatprep.mubr.bf16.mxu0 0
    %2440 = vmatmul.mubr.bf16.gmra.mrb[0].mxu0 %v2330
    %v2441 = vpop.f32.mrb[0].mxu0
    %v2442 = vadd.f32 0.0, %v2441
    %v2443 = vpop.f32.mrb[0].mxu0
    %v2444 = vpop.f32.mrb[0].mxu0
    %v2445 = vadd.f32 0.0, %v2444
    %v2446 = vpop.f32.mrb[0].mxu0
    %2447 = vdwg.mxu0
    %v2448 = vadd.f32 %v2271, %v2418
    %v2449 = vadd.f32 %v2274, %v2421
    %v2450 = vadd.f32 %v2279, %v2426
    %v2451 = vadd.f32 %v2282, %v2429
    %v2452 = vadd.f32 %v2287, %v2434
    %v2453 = vadd.f32 %v2290, %v2437
    %v2454 = vadd.f32 %v2295, %v2442
    %v2455 = vadd.f32 %v2298, %v2445
    %v2456 = vld [vmem:[#allocation2] sm:$0x80]
    %v2457 = vld [vmem:[#allocation2 + $0x20] sm:$0xff]
    %s2458 = scalar_lea.vmem [#allocation6], 192
    %v2459 = vld [vmem:[%s2458] sm:$0xf]
    %v2460 = vld [vmem:[%s2458 + $0x4] sm:$0xf]
    %v2461 = vld [vmem:[%s2458 + $0x8] sm:$0xf]
    %v2462 = vld [vmem:[%s2458 + $0xc] sm:$0xf]
    %v2463 = vld [vmem:[%s2458 + $0x10] sm:$0xf]
    %v2464 = vld [vmem:[%s2458 + $0x14] sm:$0xf]
    %v2465 = vld [vmem:[%s2458 + $0x18] sm:$0xf]
    %v2466 = vld [vmem:[%s2458 + $0x1c] sm:$0xf]
    %v2467 = vld [vmem:[%s2458 + $0x20] sm:$0xf]
    %v2468 = vld [vmem:[%s2458 + $0x24] sm:$0xf]
    %v2469 = vld [vmem:[%s2458 + $0x28] sm:$0xf]
    %v2470 = vld [vmem:[%s2458 + $0x2c] sm:$0xf]
    %v2471 = vld [vmem:[%s2458 + $0x30] sm:$0xf]
    %v2472 = vld [vmem:[%s2458 + $0x34] sm:$0xf]
    %v2473 = vld [vmem:[%s2458 + $0x38] sm:$0xf]
    %v2474 = vld [vmem:[%s2458 + $0x3c] sm:$0xf]
    %vm2475 = vsmask.f32 256
    %v2477 = vshrl.u32 %v2456, 16
    %v2479 = vrot.slane %v2477, 7
    %v2480 = vrot.slane %v2017, 7
    %v2481 = vor.u32 %v2480, %v2020
    %v2482 = vsel %vm2475, %v2479, %v2481
    %v2483 = vrot.slane %v2026, 7
    %v2484 = vor.u32 %v2483, %v2029
    %v2485 = vsel %vm2475, %v2480, %v2484
    %v2486 = vrot.slane %v2035, 7
    %v2487 = vor.u32 %v2486, %v2038
    %v2488 = vsel %vm2475, %v2483, %v2487
    %v2490 = vshrl.u32 %v2457, 16
    %v2492 = vrot.slane %v2490, 7
    %v2493 = vshll.u32 %v2457, 16
    %v2495 = vor.u32 %v2492, %v2493
    %v2496 = vsel %vm2475, %v2486, %v2495
    %v2517 = vunpack.c.l.b16 %v2459
    %v2518 = vunpack.c.l.b16 %v2460
    %v2519 = vunpack.c.l.b16 %v2461
    %v2520 = vunpack.c.l.b16 %v2462
    %v2521 = vunpack.c.l.b16 %v2463
    %v2522 = vunpack.c.l.b16 %v2464
    %v2523 = vunpack.c.l.b16 %v2465
    %v2524 = vunpack.c.l.b16 %v2466
    %v2525 = vunpack.c.l.b16 %v2467
    %v2526 = vunpack.c.l.b16 %v2468
    %v2527 = vunpack.c.l.b16 %v2469
    %v2528 = vunpack.c.l.b16 %v2470
    %v2529 = vunpack.c.l.b16 %v2471
    %v2530 = vunpack.c.l.b16 %v2472
    %v2531 = vunpack.c.l.b16 %v2473
    %v2532 = vunpack.c.l.b16 %v2474
    %v2533 = vpack.c.b16 %v2518, %v2517
    %v2534 = vpack.c.b16 %v2520, %v2519
    %v2535 = vpack.c.b16 %v2522, %v2521
    %v2536 = vpack.c.b16 %v2524, %v2523
    %v2537 = vpack.c.b16 %v2526, %v2525
    %v2538 = vpack.c.b16 %v2528, %v2527
    %v2539 = vpack.c.b16 %v2530, %v2529
    %v2540 = vpack.c.b16 %v2532, %v2531
    %2549 = vmatprep.subr.bf16.mxu0 0
    %2550 = vmatpush1.bf16.msra.mxu0 %v2533
    %2551 = vmatprep.subr.bf16.mxu0 0
    %2552 = vmatpush1.bf16.msra.mxu0 %v2534
    %2553 = vmatprep.subr.bf16.mxu0 0
    %2554 = vmatpush1.bf16.msra.mxu0 %v2535
    %2555 = vmatprep.subr.bf16.mxu0 0
    %2556 = vmatpush1.bf16.msra.mxu0 %v2536
    %2557 = vmatprep.subr.bf16.mxu0 0
    %2558 = vmatpush1.bf16.msra.mxu0 %v2537
    %2559 = vmatprep.subr.bf16.mxu0 0
    %2560 = vmatpush1.bf16.msra.mxu0 %v2538
    %2561 = vmatprep.subr.bf16.mxu0 0
    %2562 = vmatpush1.bf16.msra.mxu0 %v2539
    %2563 = vmatprep.subr.bf16.mxu0 0
    %2564 = vmatpush1.bf16.msra.mxu0 %v2540
    %2565 = vmatprep.subr.bf16.mxu0 0
    %2566 = vmatpush1.bf16.msra.mxu0 0
    %2567 = vmatprep.subr.bf16.mxu0 0
    %2568 = vmatpush1.bf16.msra.mxu0 0
    %2569 = vmatprep.subr.bf16.mxu0 0
    %2570 = vmatpush1.bf16.msra.mxu0 0
    %2571 = vmatprep.subr.bf16.mxu0 0
    %2572 = vmatpush1.bf16.msra.mxu0 0
    %2573 = vmatprep.subr.bf16.mxu0 0
    %2574 = vmatpush1.bf16.msra.mxu0 0
    %2575 = vmatprep.subr.bf16.mxu0 0
    %2576 = vmatpush1.bf16.msra.mxu0 0
    %2577 = vmatprep.subr.bf16.mxu0 0
    %2578 = vmatpush1.bf16.msra.mxu0 0
    %2579 = vmatprep.subr.bf16.mxu0 0
    %2580 = vmatpush1.bf16.msra.mxu0 0
    %2581 = vmatprep.mubr.bf16.mxu0 0
    %2582 = vmatmul.mubr.bf16.gmra.mrb[0].mxu0 %v2482
    %v2583 = vpop.f32.mrb[0].mxu0
    %v2584 = vadd.f32 0.0, %v2583
    %v2585 = vpop.f32.mrb[0].mxu0
    %v2586 = vpop.f32.mrb[0].mxu0
    %v2587 = vadd.f32 0.0, %v2586
    %v2588 = vpop.f32.mrb[0].mxu0
    %2589 = vmatprep.mubr.bf16.mxu0 0
    %2590 = vmatmul.mubr.bf16.gmra.mrb[0].mxu0 %v2485
    %v2591 = vpop.f32.mrb[0].mxu0
    %v2592 = vadd.f32 0.0, %v2591
    %v2593 = vpop.f32.mrb[0].mxu0
    %v2594 = vpop.f32.mrb[0].mxu0
    %v2595 = vadd.f32 0.0, %v2594
    %v2596 = vpop.f32.mrb[0].mxu0
    %2597 = vmatprep.mubr.bf16.mxu0 0
    %2598 = vmatmul.mubr.bf16.gmra.mrb[0].mxu0 %v2488
    %v2599 = vpop.f32.mrb[0].mxu0
    %v2600 = vadd.f32 0.0, %v2599
    %v2601 = vpop.f32.mrb[0].mxu0
    %v2602 = vpop.f32.mrb[0].mxu0
    %v2603 = vadd.f32 0.0, %v2602
    %v2604 = vpop.f32.mrb[0].mxu0
    %2605 = vmatprep.mubr.bf16.mxu0 0
    %2606 = vmatmul.mubr.bf16.gmra.mrb[0].mxu0 %v2496
    %v2607 = vpop.f32.mrb[0].mxu0
    %v2608 = vadd.f32 0.0, %v2607
    %v2609 = vpop.f32.mrb[0].mxu0
    %v2610 = vpop.f32.mrb[0].mxu0
    %v2611 = vadd.f32 0.0, %v2610
    %v2612 = vpop.f32.mrb[0].mxu0
    %2613 = vdwg.mxu0
    %v2614 = vadd.f32 %v2448, %v2584
    %v2615 = vadd.f32 %v2449, %v2587
    %v2616 = vadd.f32 %v2450, %v2592
    %v2617 = vadd.f32 %v2451, %v2595
    %v2618 = vadd.f32 %v2452, %v2600
    %v2619 = vadd.f32 %v2453, %v2603
    %v2620 = vadd.f32 %v2454, %v2608
    %v2621 = vadd.f32 %v2455, %v2611
    %s2622 = scalar_lea.vmem [#allocation6], 256
    %v2623 = vld [vmem:[%s2622] sm:$0xf]
    %v2624 = vld [vmem:[%s2622 + $0x4] sm:$0xf]
    %v2625 = vld [vmem:[%s2622 + $0x8] sm:$0xf]
    %v2626 = vld [vmem:[%s2622 + $0xc] sm:$0xf]
    %v2627 = vld [vmem:[%s2622 + $0x10] sm:$0xf]
    %v2628 = vld [vmem:[%s2622 + $0x14] sm:$0xf]
    %v2629 = vld [vmem:[%s2622 + $0x18] sm:$0xf]
    %v2630 = vld [vmem:[%s2622 + $0x1c] sm:$0xf]
    %v2631 = vld [vmem:[%s2622 + $0x20] sm:$0xf]
    %v2632 = vld [vmem:[%s2622 + $0x24] sm:$0xf]
    %v2633 = vld [vmem:[%s2622 + $0x28] sm:$0xf]
    %v2634 = vld [vmem:[%s2622 + $0x2c] sm:$0xf]
    %v2635 = vld [vmem:[%s2622 + $0x30] sm:$0xf]
    %v2636 = vld [vmem:[%s2622 + $0x34] sm:$0xf]
    %v2637 = vld [vmem:[%s2622 + $0x38] sm:$0xf]
    %v2638 = vld [vmem:[%s2622 + $0x3c] sm:$0xf]
    %v2655 = vunpack.c.l.b16 %v2623
    %v2656 = vunpack.c.l.b16 %v2624
    %v2657 = vunpack.c.l.b16 %v2625
    %v2658 = vunpack.c.l.b16 %v2626
    %v2659 = vunpack.c.l.b16 %v2627
    %v2660 = vunpack.c.l.b16 %v2628
    %v2661 = vunpack.c.l.b16 %v2629
    %v2662 = vunpack.c.l.b16 %v2630
    %v2663 = vunpack.c.l.b16 %v2631
    %v2664 = vunpack.c.l.b16 %v2632
    %v2665 = vunpack.c.l.b16 %v2633
    %v2666 = vunpack.c.l.b16 %v2634
    %v2667 = vunpack.c.l.b16 %v2635
    %v2668 = vunpack.c.l.b16 %v2636
    %v2669 = vunpack.c.l.b16 %v2637
    %v2670 = vunpack.c.l.b16 %v2638
    %v2671 = vpack.c.b16 %v2656, %v2655
    %v2672 = vpack.c.b16 %v2658, %v2657
    %v2673 = vpack.c.b16 %v2660, %v2659
    %v2674 = vpack.c.b16 %v2662, %v2661
    %v2675 = vpack.c.b16 %v2664, %v2663
    %v2676 = vpack.c.b16 %v2666, %v2665
    %v2677 = vpack.c.b16 %v2668, %v2667
    %v2678 = vpack.c.b16 %v2670, %v2669
    %2687 = vmatprep.subr.bf16.mxu0 0
    %2688 = vmatpush1.bf16.msra.mxu0 %v2671
    %2689 = vmatprep.subr.bf16.mxu0 0
    %2690 = vmatpush1.bf16.msra.mxu0 %v2672
    %2691 = vmatprep.subr.bf16.mxu0 0
    %2692 = vmatpush1.bf16.msra.mxu0 %v2673
    %2693 = vmatprep.subr.bf16.mxu0 0
    %2694 = vmatpush1.bf16.msra.mxu0 %v2674
    %2695 = vmatprep.subr.bf16.mxu0 0
    %2696 = vmatpush1.bf16.msra.mxu0 %v2675
    %2697 = vmatprep.subr.bf16.mxu0 0
    %2698 = vmatpush1.bf16.msra.mxu0 %v2676
    %2699 = vmatprep.subr.bf16.mxu0 0
    %2700 = vmatpush1.bf16.msra.mxu0 %v2677
    %2701 = vmatprep.subr.bf16.mxu0 0
    %2702 = vmatpush1.bf16.msra.mxu0 %v2678
    %2703 = vmatprep.subr.bf16.mxu0 0
    %2704 = vmatpush1.bf16.msra.mxu0 0
    %2705 = vmatprep.subr.bf16.mxu0 0
    %2706 = vmatpush1.bf16.msra.mxu0 0
    %2707 = vmatprep.subr.bf16.mxu0 0
    %2708 = vmatpush1.bf16.msra.mxu0 0
    %2709 = vmatprep.subr.bf16.mxu0 0
    %2710 = vmatpush1.bf16.msra.mxu0 0
    %2711 = vmatprep.subr.bf16.mxu0 0
    %2712 = vmatpush1.bf16.msra.mxu0 0
    %2713 = vmatprep.subr.bf16.mxu0 0
    %2714 = vmatpush1.bf16.msra.mxu0 0
    %2715 = vmatprep.subr.bf16.mxu0 0
    %2716 = vmatpush1.bf16.msra.mxu0 0
    %2717 = vmatprep.subr.bf16.mxu0 0
    %2718 = vmatpush1.bf16.msra.mxu0 0
    %2719 = vmatprep.mubr.bf16.mxu0 0
    %2720 = vmatmul.mubr.bf16.gmra.mrb[0].mxu0 %v1969
    %v2721 = vpop.f32.mrb[0].mxu0
    %v2722 = vadd.f32 0.0, %v2721
    %v2723 = vpop.f32.mrb[0].mxu0
    %v2724 = vpop.f32.mrb[0].mxu0
    %v2725 = vadd.f32 0.0, %v2724
    %v2726 = vpop.f32.mrb[0].mxu0
    %2727 = vmatprep.mubr.bf16.mxu0 0
    %2728 = vmatmul.mubr.bf16.gmra.mrb[0].mxu0 %v1970
    %v2729 = vpop.f32.mrb[0].mxu0
    %v2730 = vadd.f32 0.0, %v2729
    %v2731 = vpop.f32.mrb[0].mxu0
    %v2732 = vpop.f32.mrb[0].mxu0
    %v2733 = vadd.f32 0.0, %v2732
    %v2734 = vpop.f32.mrb[0].mxu0
    %2735 = vmatprep.mubr.bf16.mxu0 0
    %2736 = vmatmul.mubr.bf16.gmra.mrb[0].mxu0 %v1971
    %v2737 = vpop.f32.mrb[0].mxu0
    %v2738 = vadd.f32 0.0, %v2737
    %v2739 = vpop.f32.mrb[0].mxu0
    %v2740 = vpop.f32.mrb[0].mxu0
    %v2741 = vadd.f32 0.0, %v2740
    %v2742 = vpop.f32.mrb[0].mxu0
    %2743 = vmatprep.mubr.bf16.mxu0 0
    %2744 = vmatmul.mubr.bf16.gmra.mrb[0].mxu0 %v2457
    %v2745 = vpop.f32.mrb[0].mxu0
    %v2746 = vadd.f32 0.0, %v2745
    %v2747 = vpop.f32.mrb[0].mxu0
    %v2748 = vpop.f32.mrb[0].mxu0
    %v2749 = vadd.f32 0.0, %v2748
    %v2750 = vpop.f32.mrb[0].mxu0
    %2751 = vdwg.mxu0
    %v2752 = vadd.f32 %v2614, %v2722
    %v2753 = vadd.f32 %v2615, %v2725
    %v2754 = vadd.f32 %v2616, %v2730
    %v2755 = vadd.f32 %v2617, %v2733
    %v2756 = vadd.f32 %v2618, %v2738
    %v2757 = vadd.f32 %v2619, %v2741
    %v2758 = vadd.f32 %v2620, %v2746
    %v2759 = vadd.f32 %v2621, %v2749
    %v2760 = vld [vmem:[#allocation2 + $0x8] sm:$0xff]
    %v2761 = vld [vmem:[#allocation2 + $0x10] sm:$0xff]
    %v2762 = vld [vmem:[#allocation2 + $0x18] sm:$0xff]
    %v2763 = vld [vmem:[#allocation2 + $0x20] sm:$0xff]
    %v2764 = vld [vmem:[#allocation2 + $0x28] sm:$0x1]
    %s2765 = scalar_lea.vmem [#allocation6], 320
    %v2766 = vld [vmem:[%s2765] sm:$0xf]
    %v2767 = vld [vmem:[%s2765 + $0x4] sm:$0xf]
    %v2768 = vld [vmem:[%s2765 + $0x8] sm:$0xf]
    %v2769 = vld [vmem:[%s2765 + $0xc] sm:$0xf]
    %v2770 = vld [vmem:[%s2765 + $0x10] sm:$0xf]
    %v2771 = vld [vmem:[%s2765 + $0x14] sm:$0xf]
    %v2772 = vld [vmem:[%s2765 + $0x18] sm:$0xf]
    %v2773 = vld [vmem:[%s2765 + $0x1c] sm:$0xf]
    %v2774 = vld [vmem:[%s2765 + $0x20] sm:$0xf]
    %v2775 = vld [vmem:[%s2765 + $0x24] sm:$0xf]
    %v2776 = vld [vmem:[%s2765 + $0x28] sm:$0xf]
    %v2777 = vld [vmem:[%s2765 + $0x2c] sm:$0xf]
    %v2778 = vld [vmem:[%s2765 + $0x30] sm:$0xf]
    %v2779 = vld [vmem:[%s2765 + $0x34] sm:$0xf]
    %v2780 = vld [vmem:[%s2765 + $0x38] sm:$0xf]
    %v2781 = vld [vmem:[%s2765 + $0x3c] sm:$0xf]
    %v2783 = vshrl.u32 %v2760, 16
    %v2785 = vshll.u32 %v2760, 16
    %v2787 = vrot.slane %v2785, 1
    %v2788 = vor.u32 %v2783, %v2787
    %v2790 = vshll.u32 %v2761, 16
    %v2792 = vrot.slane %v2790, 1
    %v2793 = vsel %vm1183, %v2788, %v2792
    %v2794 = vshrl.u32 %v2761, 16
    %v2796 = vor.u32 %v2794, %v2792
    %v2798 = vshll.u32 %v2762, 16
    %v2800 = vrot.slane %v2798, 1
    %v2801 = vsel %vm1183, %v2796, %v2800
    %v2802 = vshrl.u32 %v2762, 16
    %v2804 = vor.u32 %v2802, %v2800
    %v2806 = vshll.u32 %v2763, 16
    %v2808 = vrot.slane %v2806, 1
    %v2809 = vsel %vm1183, %v2804, %v2808
    %v2810 = vshrl.u32 %v2763, 16
    %v2812 = vor.u32 %v2810, %v2808
    %v2814 = vshll.u32 %v2764, 16
    %v2816 = vrot.slane %v2814, 1
    %v2817 = vsel %vm1183, %v2812, %v2816
    %v2838 = vunpack.c.l.b16 %v2766
    %v2839 = vunpack.c.l.b16 %v2767
    %v2840 = vunpack.c.l.b16 %v2768
    %v2841 = vunpack.c.l.b16 %v2769
    %v2842 = vunpack.c.l.b16 %v2770
    %v2843 = vunpack.c.l.b16 %v2771
    %v2844 = vunpack.c.l.b16 %v2772
    %v2845 = vunpack.c.l.b16 %v2773
    %v2846 = vunpack.c.l.b16 %v2774
    %v2847 = vunpack.c.l.b16 %v2775
    %v2848 = vunpack.c.l.b16 %v2776
    %v2849 = vunpack.c.l.b16 %v2777
    %v2850 = vunpack.c.l.b16 %v2778
    %v2851 = vunpack.c.l.b16 %v2779
    %v2852 = vunpack.c.l.b16 %v2780
    %v2853 = vunpack.c.l.b16 %v2781
    %v2854 = vpack.c.b16 %v2839, %v2838
    %v2855 = vpack.c.b16 %v2841, %v2840
    %v2856 = vpack.c.b16 %v2843, %v2842
    %v2857 = vpack.c.b16 %v2845, %v2844
    %v2858 = vpack.c.b16 %v2847, %v2846
    %v2859 = vpack.c.b16 %v2849, %v2848
    %v2860 = vpack.c.b16 %v2851, %v2850
    %v2861 = vpack.c.b16 %v2853, %v2852
    %2870 = vmatprep.subr.bf16.mxu0 0
    %2871 = vmatpush1.bf16.msra.mxu0 %v2854
    %2872 = vmatprep.subr.bf16.mxu0 0
    %2873 = vmatpush1.bf16.msra.mxu0 %v2855
    %2874 = vmatprep.subr.bf16.mxu0 0
    %2875 = vmatpush1.bf16.msra.mxu0 %v2856
    %2876 = vmatprep.subr.bf16.mxu0 0
    %2877 = vmatpush1.bf16.msra.mxu0 %v2857
    %2878 = vmatprep.subr.bf16.mxu0 0
    %2879 = vmatpush1.bf16.msra.mxu0 %v2858
    %2880 = vmatprep.subr.bf16.mxu0 0
    %2881 = vmatpush1.bf16.msra.mxu0 %v2859
    %2882 = vmatprep.subr.bf16.mxu0 0
    %2883 = vmatpush1.bf16.msra.mxu0 %v2860
    %2884 = vmatprep.subr.bf16.mxu0 0
    %2885 = vmatpush1.bf16.msra.mxu0 %v2861
    %2886 = vmatprep.subr.bf16.mxu0 0
    %2887 = vmatpush1.bf16.msra.mxu0 0
    %2888 = vmatprep.subr.bf16.mxu0 0
    %2889 = vmatpush1.bf16.msra.mxu0 0
    %2890 = vmatprep.subr.bf16.mxu0 0
    %2891 = vmatpush1.bf16.msra.mxu0 0
    %2892 = vmatprep.subr.bf16.mxu0 0
    %2893 = vmatpush1.bf16.msra.mxu0 0
    %2894 = vmatprep.subr.bf16.mxu0 0
    %2895 = vmatpush1.bf16.msra.mxu0 0
    %2896 = vmatprep.subr.bf16.mxu0 0
    %2897 = vmatpush1.bf16.msra.mxu0 0
    %2898 = vmatprep.subr.bf16.mxu0 0
    %2899 = vmatpush1.bf16.msra.mxu0 0
    %2900 = vmatprep.subr.bf16.mxu0 0
    %2901 = vmatpush1.bf16.msra.mxu0 0
    %2902 = vmatprep.mubr.bf16.mxu0 0
    %2903 = vmatmul.mubr.bf16.gmra.mrb[0].mxu0 %v2793
    %v2904 = vpop.f32.mrb[0].mxu0
    %v2905 = vadd.f32 0.0, %v2904
    %v2906 = vpop.f32.mrb[0].mxu0
    %v2907 = vpop.f32.mrb[0].mxu0
    %v2908 = vadd.f32 0.0, %v2907
    %v2909 = vpop.f32.mrb[0].mxu0
    %2910 = vmatprep.mubr.bf16.mxu0 0
    %2911 = vmatmul.mubr.bf16.gmra.mrb[0].mxu0 %v2801
    %v2912 = vpop.f32.mrb[0].mxu0
    %v2913 = vadd.f32 0.0, %v2912
    %v2914 = vpop.f32.mrb[0].mxu0
    %v2915 = vpop.f32.mrb[0].mxu0
    %v2916 = vadd.f32 0.0, %v2915
    %v2917 = vpop.f32.mrb[0].mxu0
    %2918 = vmatprep.mubr.bf16.mxu0 0
    %2919 = vmatmul.mubr.bf16.gmra.mrb[0].mxu0 %v2809
    %v2920 = vpop.f32.mrb[0].mxu0
    %v2921 = vadd.f32 0.0, %v2920
    %v2922 = vpop.f32.mrb[0].mxu0
    %v2923 = vpop.f32.mrb[0].mxu0
    %v2924 = vadd.f32 0.0, %v2923
    %v2925 = vpop.f32.mrb[0].mxu0
    %2926 = vmatprep.mubr.bf16.mxu0 0
    %2927 = vmatmul.mubr.bf16.gmra.mrb[0].mxu0 %v2817
    %v2928 = vpop.f32.mrb[0].mxu0
    %v2929 = vadd.f32 0.0, %v2928
    %v2930 = vpop.f32.mrb[0].mxu0
    %v2931 = vpop.f32.mrb[0].mxu0
    %v2932 = vadd.f32 0.0, %v2931
    %v2933 = vpop.f32.mrb[0].mxu0
    %2934 = vdwg.mxu0
    %v2935 = vadd.f32 %v2752, %v2905
    %v2936 = vadd.f32 %v2753, %v2908
    %v2937 = vadd.f32 %v2754, %v2913
    %v2938 = vadd.f32 %v2755, %v2916
    %v2939 = vadd.f32 %v2756, %v2921
    %v2940 = vadd.f32 %v2757, %v2924
    %v2941 = vadd.f32 %v2758, %v2929
    %v2942 = vadd.f32 %v2759, %v2932
    %v2943 = vld [vmem:[#allocation2 + $0x8] sm:$0xfc]
    %v2944 = vld [vmem:[#allocation2 + $0x28] sm:$0x3]
    %s2945 = scalar_lea.vmem [#allocation6], 384
    %v2946 = vld [vmem:[%s2945] sm:$0xf]
    %v2947 = vld [vmem:[%s2945 + $0x4] sm:$0xf]
    %v2948 = vld [vmem:[%s2945 + $0x8] sm:$0xf]
    %v2949 = vld [vmem:[%s2945 + $0xc] sm:$0xf]
    %v2950 = vld [vmem:[%s2945 + $0x10] sm:$0xf]
    %v2951 = vld [vmem:[%s2945 + $0x14] sm:$0xf]
    %v2952 = vld [vmem:[%s2945 + $0x18] sm:$0xf]
    %v2953 = vld [vmem:[%s2945 + $0x1c] sm:$0xf]
    %v2954 = vld [vmem:[%s2945 + $0x20] sm:$0xf]
    %v2955 = vld [vmem:[%s2945 + $0x24] sm:$0xf]
    %v2956 = vld [vmem:[%s2945 + $0x28] sm:$0xf]
    %v2957 = vld [vmem:[%s2945 + $0x2c] sm:$0xf]
    %v2958 = vld [vmem:[%s2945 + $0x30] sm:$0xf]
    %v2959 = vld [vmem:[%s2945 + $0x34] sm:$0xf]
    %v2960 = vld [vmem:[%s2945 + $0x38] sm:$0xf]
    %v2961 = vld [vmem:[%s2945 + $0x3c] sm:$0xf]
    %v2967 = vrot.slane %v2943, 2
    %v2968 = vrot.slane %v2761, 2
    %v2969 = vsel %vm673, %v2967, %v2968
    %v2970 = vrot.slane %v2762, 2
    %v2971 = vsel %vm673, %v2968, %v2970
    %v2972 = vrot.slane %v2763, 2
    %v2973 = vsel %vm673, %v2970, %v2972
    %v2974 = vrot.slane %v2944, 2
    %v2975 = vsel %vm673, %v2972, %v2974
    %v2996 = vunpack.c.l.b16 %v2946
    %v2997 = vunpack.c.l.b16 %v2947
    %v2998 = vunpack.c.l.b16 %v2948
    %v2999 = vunpack.c.l.b16 %v2949
    %v3000 = vunpack.c.l.b16 %v2950
    %v3001 = vunpack.c.l.b16 %v2951
    %v3002 = vunpack.c.l.b16 %v2952
    %v3003 = vunpack.c.l.b16 %v2953
    %v3004 = vunpack.c.l.b16 %v2954
    %v3005 = vunpack.c.l.b16 %v2955
    %v3006 = vunpack.c.l.b16 %v2956
    %v3007 = vunpack.c.l.b16 %v2957
    %v3008 = vunpack.c.l.b16 %v2958
    %v3009 = vunpack.c.l.b16 %v2959
    %v3010 = vunpack.c.l.b16 %v2960
    %v3011 = vunpack.c.l.b16 %v2961
    %v3012 = vpack.c.b16 %v2997, %v2996
    %v3013 = vpack.c.b16 %v2999, %v2998
    %v3014 = vpack.c.b16 %v3001, %v3000
    %v3015 = vpack.c.b16 %v3003, %v3002
    %v3016 = vpack.c.b16 %v3005, %v3004
    %v3017 = vpack.c.b16 %v3007, %v3006
    %v3018 = vpack.c.b16 %v3009, %v3008
    %v3019 = vpack.c.b16 %v3011, %v3010
    %3028 = vmatprep.subr.bf16.mxu0 0
    %3029 = vmatpush1.bf16.msra.mxu0 %v3012
    %3030 = vmatprep.subr.bf16.mxu0 0
    %3031 = vmatpush1.bf16.msra.mxu0 %v3013
    %3032 = vmatprep.subr.bf16.mxu0 0
    %3033 = vmatpush1.bf16.msra.mxu0 %v3014
    %3034 = vmatprep.subr.bf16.mxu0 0
    %3035 = vmatpush1.bf16.msra.mxu0 %v3015
    %3036 = vmatprep.subr.bf16.mxu0 0
    %3037 = vmatpush1.bf16.msra.mxu0 %v3016
    %3038 = vmatprep.subr.bf16.mxu0 0
    %3039 = vmatpush1.bf16.msra.mxu0 %v3017
    %3040 = vmatprep.subr.bf16.mxu0 0
    %3041 = vmatpush1.bf16.msra.mxu0 %v3018
    %3042 = vmatprep.subr.bf16.mxu0 0
    %3043 = vmatpush1.bf16.msra.mxu0 %v3019
    %3044 = vmatprep.subr.bf16.mxu0 0
    %3045 = vmatpush1.bf16.msra.mxu0 0
    %3046 = vmatprep.subr.bf16.mxu0 0
    %3047 = vmatpush1.bf16.msra.mxu0 0
    %3048 = vmatprep.subr.bf16.mxu0 0
    %3049 = vmatpush1.bf16.msra.mxu0 0
    %3050 = vmatprep.subr.bf16.mxu0 0
    %3051 = vmatpush1.bf16.msra.mxu0 0
    %3052 = vmatprep.subr.bf16.mxu0 0
    %3053 = vmatpush1.bf16.msra.mxu0 0
    %3054 = vmatprep.subr.bf16.mxu0 0
    %3055 = vmatpush1.bf16.msra.mxu0 0
    %3056 = vmatprep.subr.bf16.mxu0 0
    %3057 = vmatpush1.bf16.msra.mxu0 0
    %3058 = vmatprep.subr.bf16.mxu0 0
    %3059 = vmatpush1.bf16.msra.mxu0 0
    %3060 = vmatprep.mubr.bf16.mxu0 0
    %3061 = vmatmul.mubr.bf16.gmra.mrb[0].mxu0 %v2969
    %v3062 = vpop.f32.mrb[0].mxu0
    %v3063 = vadd.f32 0.0, %v3062
    %v3064 = vpop.f32.mrb[0].mxu0
    %v3065 = vpop.f32.mrb[0].mxu0
    %v3066 = vadd.f32 0.0, %v3065
    %v3067 = vpop.f32.mrb[0].mxu0
    %3068 = vmatprep.mubr.bf16.mxu0 0
    %3069 = vmatmul.mubr.bf16.gmra.mrb[0].mxu0 %v2971
    %v3070 = vpop.f32.mrb[0].mxu0
    %v3071 = vadd.f32 0.0, %v3070
    %v3072 = vpop.f32.mrb[0].mxu0
    %v3073 = vpop.f32.mrb[0].mxu0
    %v3074 = vadd.f32 0.0, %v3073
    %v3075 = vpop.f32.mrb[0].mxu0
    %3076 = vmatprep.mubr.bf16.mxu0 0
    %3077 = vmatmul.mubr.bf16.gmra.mrb[0].mxu0 %v2973
    %v3078 = vpop.f32.mrb[0].mxu0
    %v3079 = vadd.f32 0.0, %v3078
    %v3080 = vpop.f32.mrb[0].mxu0
    %v3081 = vpop.f32.mrb[0].mxu0
    %v3082 = vadd.f32 0.0, %v3081
    %v3083 = vpop.f32.mrb[0].mxu0
    %3084 = vmatprep.mubr.bf16.mxu0 0
    %3085 = vmatmul.mubr.bf16.gmra.mrb[0].mxu0 %v2975
    %v3086 = vpop.f32.mrb[0].mxu0
    %v3087 = vadd.f32 0.0, %v3086
    %v3088 = vpop.f32.mrb[0].mxu0
    %v3089 = vpop.f32.mrb[0].mxu0
    %v3090 = vadd.f32 0.0, %v3089
    %v3091 = vpop.f32.mrb[0].mxu0
    %3092 = vdwg.mxu0
    %v3093 = vadd.f32 %v2935, %v3063
    %v3094 = vadd.f32 %v2936, %v3066
    %v3095 = vadd.f32 %v2937, %v3071
    %v3096 = vadd.f32 %v2938, %v3074
    %v3097 = vadd.f32 %v2939, %v3079
    %v3098 = vadd.f32 %v2940, %v3082
    %v3099 = vadd.f32 %v2941, %v3087
    %v3100 = vadd.f32 %v2942, %v3090
    %v3101 = vld [vmem:[#allocation2 + $0x28] sm:$0x7]
    %s3102 = scalar_lea.vmem [#allocation6], 448
    %v3103 = vld [vmem:[%s3102] sm:$0xf]
    %v3104 = vld [vmem:[%s3102 + $0x4] sm:$0xf]
    %v3105 = vld [vmem:[%s3102 + $0x8] sm:$0xf]
    %v3106 = vld [vmem:[%s3102 + $0xc] sm:$0xf]
    %v3107 = vld [vmem:[%s3102 + $0x10] sm:$0xf]
    %v3108 = vld [vmem:[%s3102 + $0x14] sm:$0xf]
    %v3109 = vld [vmem:[%s3102 + $0x18] sm:$0xf]
    %v3110 = vld [vmem:[%s3102 + $0x1c] sm:$0xf]
    %v3111 = vld [vmem:[%s3102 + $0x20] sm:$0xf]
    %v3112 = vld [vmem:[%s3102 + $0x24] sm:$0xf]
    %v3113 = vld [vmem:[%s3102 + $0x28] sm:$0xf]
    %v3114 = vld [vmem:[%s3102 + $0x2c] sm:$0xf]
    %v3115 = vld [vmem:[%s3102 + $0x30] sm:$0xf]
    %v3116 = vld [vmem:[%s3102 + $0x34] sm:$0xf]
    %v3117 = vld [vmem:[%s3102 + $0x38] sm:$0xf]
    %v3118 = vld [vmem:[%s3102 + $0x3c] sm:$0xf]
    %v3120 = vshrl.u32 %v2943, 16
    %v3122 = vrot.slane %v3120, 2
    %v3123 = vshll.u32 %v2943, 16
    %v3125 = vrot.slane %v3123, 3
    %v3126 = vor.u32 %v3122, %v3125
    %v3127 = vrot.slane %v2794, 2
    %v3128 = vrot.slane %v2790, 3
    %v3129 = vor.u32 %v3127, %v3128
    %v3130 = vsel %vm1525, %v3126, %v3129
    %v3131 = vrot.slane %v2802, 2
    %v3132 = vrot.slane %v2798, 3
    %v3133 = vor.u32 %v3131, %v3132
    %v3134 = vsel %vm1525, %v3129, %v3133
    %v3135 = vrot.slane %v2810, 2
    %v3136 = vrot.slane %v2806, 3
    %v3137 = vor.u32 %v3135, %v3136
    %v3138 = vsel %vm1525, %v3133, %v3137
    %v3140 = vshrl.u32 %v3101, 16
    %v3142 = vrot.slane %v3140, 2
    %v3143 = vshll.u32 %v3101, 16
    %v3145 = vrot.slane %v3143, 3
    %v3146 = vor.u32 %v3142, %v3145
    %v3147 = vsel %vm1525, %v3137, %v3146
    %v3168 = vunpack.c.l.b16 %v3103
    %v3169 = vunpack.c.l.b16 %v3104
    %v3170 = vunpack.c.l.b16 %v3105
    %v3171 = vunpack.c.l.b16 %v3106
    %v3172 = vunpack.c.l.b16 %v3107
    %v3173 = vunpack.c.l.b16 %v3108
    %v3174 = vunpack.c.l.b16 %v3109
    %v3175 = vunpack.c.l.b16 %v3110
    %v3176 = vunpack.c.l.b16 %v3111
    %v3177 = vunpack.c.l.b16 %v3112
    %v3178 = vunpack.c.l.b16 %v3113
    %v3179 = vunpack.c.l.b16 %v3114
    %v3180 = vunpack.c.l.b16 %v3115
    %v3181 = vunpack.c.l.b16 %v3116
    %v3182 = vunpack.c.l.b16 %v3117
    %v3183 = vunpack.c.l.b16 %v3118
    %v3184 = vpack.c.b16 %v3169, %v3168
    %v3185 = vpack.c.b16 %v3171, %v3170
    %v3186 = vpack.c.b16 %v3173, %v3172
    %v3187 = vpack.c.b16 %v3175, %v3174
    %v3188 = vpack.c.b16 %v3177, %v3176
    %v3189 = vpack.c.b16 %v3179, %v3178
    %v3190 = vpack.c.b16 %v3181, %v3180
    %v3191 = vpack.c.b16 %v3183, %v3182
    %3200 = vmatprep.subr.bf16.mxu0 0
    %3201 = vmatpush1.bf16.msra.mxu0 %v3184
    %3202 = vmatprep.subr.bf16.mxu0 0
    %3203 = vmatpush1.bf16.msra.mxu0 %v3185
    %3204 = vmatprep.subr.bf16.mxu0 0
    %3205 = vmatpush1.bf16.msra.mxu0 %v3186
    %3206 = vmatprep.subr.bf16.mxu0 0
    %3207 = vmatpush1.bf16.msra.mxu0 %v3187
    %3208 = vmatprep.subr.bf16.mxu0 0
    %3209 = vmatpush1.bf16.msra.mxu0 %v3188
    %3210 = vmatprep.subr.bf16.mxu0 0
    %3211 = vmatpush1.bf16.msra.mxu0 %v3189
    %3212 = vmatprep.subr.bf16.mxu0 0
    %3213 = vmatpush1.bf16.msra.mxu0 %v3190
    %3214 = vmatprep.subr.bf16.mxu0 0
    %3215 = vmatpush1.bf16.msra.mxu0 %v3191
    %3216 = vmatprep.subr.bf16.mxu0 0
    %3217 = vmatpush1.bf16.msra.mxu0 0
    %3218 = vmatprep.subr.bf16.mxu0 0
    %3219 = vmatpush1.bf16.msra.mxu0 0
    %3220 = vmatprep.subr.bf16.mxu0 0
    %3221 = vmatpush1.bf16.msra.mxu0 0
    %3222 = vmatprep.subr.bf16.mxu0 0
    %3223 = vmatpush1.bf16.msra.mxu0 0
    %3224 = vmatprep.subr.bf16.mxu0 0
    %3225 = vmatpush1.bf16.msra.mxu0 0
    %3226 = vmatprep.subr.bf16.mxu0 0
    %3227 = vmatpush1.bf16.msra.mxu0 0
    %3228 = vmatprep.subr.bf16.mxu0 0
    %3229 = vmatpush1.bf16.msra.mxu0 0
    %3230 = vmatprep.subr.bf16.mxu0 0
    %3231 = vmatpush1.bf16.msra.mxu0 0
    %3232 = vmatprep.mubr.bf16.mxu0 0
    %3233 = vmatmul.mubr.bf16.gmra.mrb[0].mxu0 %v3130
    %v3234 = vpop.f32.mrb[0].mxu0
    %v3235 = vadd.f32 0.0, %v3234
    %v3236 = vpop.f32.mrb[0].mxu0
    %v3237 = vpop.f32.mrb[0].mxu0
    %v3238 = vadd.f32 0.0, %v3237
    %v3239 = vpop.f32.mrb[0].mxu0
    %3240 = vmatprep.mubr.bf16.mxu0 0
    %3241 = vmatmul.mubr.bf16.gmra.mrb[0].mxu0 %v3134
    %v3242 = vpop.f32.mrb[0].mxu0
    %v3243 = vadd.f32 0.0, %v3242
    %v3244 = vpop.f32.mrb[0].mxu0
    %v3245 = vpop.f32.mrb[0].mxu0
    %v3246 = vadd.f32 0.0, %v3245
    %v3247 = vpop.f32.mrb[0].mxu0
    %3248 = vmatprep.mubr.bf16.mxu0 0
    %3249 = vmatmul.mubr.bf16.gmra.mrb[0].mxu0 %v3138
    %v3250 = vpop.f32.mrb[0].mxu0
    %v3251 = vadd.f32 0.0, %v3250
    %v3252 = vpop.f32.mrb[0].mxu0
    %v3253 = vpop.f32.mrb[0].mxu0
    %v3254 = vadd.f32 0.0, %v3253
    %v3255 = vpop.f32.mrb[0].mxu0
    %3256 = vmatprep.mubr.bf16.mxu0 0
    %3257 = vmatmul.mubr.bf16.gmra.mrb[0].mxu0 %v3147
    %v3258 = vpop.f32.mrb[0].mxu0
    %v3259 = vadd.f32 0.0, %v3258
    %v3260 = vpop.f32.mrb[0].mxu0
    %v3261 = vpop.f32.mrb[0].mxu0
    %v3262 = vadd.f32 0.0, %v3261
    %v3263 = vpop.f32.mrb[0].mxu0
    %3264 = vdwg.mxu0
    %v3265 = vadd.f32 %v3093, %v3235
    %v3266 = vadd.f32 %v3094, %v3238
    %v3267 = vadd.f32 %v3095, %v3243
    %v3268 = vadd.f32 %v3096, %v3246
    %v3269 = vadd.f32 %v3097, %v3251
    %v3270 = vadd.f32 %v3098, %v3254
    %v3271 = vadd.f32 %v3099, %v3259
    %v3272 = vadd.f32 %v3100, %v3262
    %v3273 = vld [vmem:[#allocation2 + $0x8] sm:$0xf8]
    %s3274 = scalar_lea.vmem [#allocation6], 512
    %v3275 = vld [vmem:[%s3274] sm:$0xf]
    %v3276 = vld [vmem:[%s3274 + $0x4] sm:$0xf]
    %v3277 = vld [vmem:[%s3274 + $0x8] sm:$0xf]
    %v3278 = vld [vmem:[%s3274 + $0xc] sm:$0xf]
    %v3279 = vld [vmem:[%s3274 + $0x10] sm:$0xf]
    %v3280 = vld [vmem:[%s3274 + $0x14] sm:$0xf]
    %v3281 = vld [vmem:[%s3274 + $0x18] sm:$0xf]
    %v3282 = vld [vmem:[%s3274 + $0x1c] sm:$0xf]
    %v3283 = vld [vmem:[%s3274 + $0x20] sm:$0xf]
    %v3284 = vld [vmem:[%s3274 + $0x24] sm:$0xf]
    %v3285 = vld [vmem:[%s3274 + $0x28] sm:$0xf]
    %v3286 = vld [vmem:[%s3274 + $0x2c] sm:$0xf]
    %v3287 = vld [vmem:[%s3274 + $0x30] sm:$0xf]
    %v3288 = vld [vmem:[%s3274 + $0x34] sm:$0xf]
    %v3289 = vld [vmem:[%s3274 + $0x38] sm:$0xf]
    %v3290 = vld [vmem:[%s3274 + $0x3c] sm:$0xf]
    %v3293 = vrot.slane %v3273, 3
    %v3294 = vrot.slane %v2761, 3
    %v3295 = vsel %vm1701, %v3293, %v3294
    %v3296 = vrot.slane %v2762, 3
    %v3297 = vsel %vm1701, %v3294, %v3296
    %v3298 = vrot.slane %v2763, 3
    %v3299 = vsel %vm1701, %v3296, %v3298
    %v3300 = vrot.slane %v3101, 3
    %v3301 = vsel %vm1701, %v3298, %v3300
    %v3322 = vunpack.c.l.b16 %v3275
    %v3323 = vunpack.c.l.b16 %v3276
    %v3324 = vunpack.c.l.b16 %v3277
    %v3325 = vunpack.c.l.b16 %v3278
    %v3326 = vunpack.c.l.b16 %v3279
    %v3327 = vunpack.c.l.b16 %v3280
    %v3328 = vunpack.c.l.b16 %v3281
    %v3329 = vunpack.c.l.b16 %v3282
    %v3330 = vunpack.c.l.b16 %v3283
    %v3331 = vunpack.c.l.b16 %v3284
    %v3332 = vunpack.c.l.b16 %v3285
    %v3333 = vunpack.c.l.b16 %v3286
    %v3334 = vunpack.c.l.b16 %v3287
    %v3335 = vunpack.c.l.b16 %v3288
    %v3336 = vunpack.c.l.b16 %v3289
    %v3337 = vunpack.c.l.b16 %v3290
    %v3338 = vpack.c.b16 %v3323, %v3322
    %v3339 = vpack.c.b16 %v3325, %v3324
    %v3340 = vpack.c.b16 %v3327, %v3326
    %v3341 = vpack.c.b16 %v3329, %v3328
    %v3342 = vpack.c.b16 %v3331, %v3330
    %v3343 = vpack.c.b16 %v3333, %v3332
    %v3344 = vpack.c.b16 %v3335, %v3334
    %v3345 = vpack.c.b16 %v3337, %v3336
    %3354 = vmatprep.subr.bf16.mxu0 0
    %3355 = vmatpush1.bf16.msra.mxu0 %v3338
    %3356 = vmatprep.subr.bf16.mxu0 0
    %3357 = vmatpush1.bf16.msra.mxu0 %v3339
    %3358 = vmatprep.subr.bf16.mxu0 0
    %3359 = vmatpush1.bf16.msra.mxu0 %v3340
    %3360 = vmatprep.subr.bf16.mxu0 0
    %3361 = vmatpush1.bf16.msra.mxu0 %v3341
    %3362 = vmatprep.subr.bf16.mxu0 0
    %3363 = vmatpush1.bf16.msra.mxu0 %v3342
    %3364 = vmatprep.subr.bf16.mxu0 0
    %3365 = vmatpush1.bf16.msra.mxu0 %v3343
    %3366 = vmatprep.subr.bf16.mxu0 0
    %3367 = vmatpush1.bf16.msra.mxu0 %v3344
    %3368 = vmatprep.subr.bf16.mxu0 0
    %3369 = vmatpush1.bf16.msra.mxu0 %v3345
    %3370 = vmatprep.subr.bf16.mxu0 0
    %3371 = vmatpush1.bf16.msra.mxu0 0
    %3372 = vmatprep.subr.bf16.mxu0 0
    %3373 = vmatpush1.bf16.msra.mxu0 0
    %3374 = vmatprep.subr.bf16.mxu0 0
    %3375 = vmatpush1.bf16.msra.mxu0 0
    %3376 = vmatprep.subr.bf16.mxu0 0
    %3377 = vmatpush1.bf16.msra.mxu0 0
    %3378 = vmatprep.subr.bf16.mxu0 0
    %3379 = vmatpush1.bf16.msra.mxu0 0
    %3380 = vmatprep.subr.bf16.mxu0 0
    %3381 = vmatpush1.bf16.msra.mxu0 0
    %3382 = vmatprep.subr.bf16.mxu0 0
    %3383 = vmatpush1.bf16.msra.mxu0 0
    %3384 = vmatprep.subr.bf16.mxu0 0
    %3385 = vmatpush1.bf16.msra.mxu0 0
    %3386 = vmatprep.mubr.bf16.mxu0 0
    %3387 = vmatmul.mubr.bf16.gmra.mrb[0].mxu0 %v3295
    %v3388 = vpop.f32.mrb[0].mxu0
    %v3389 = vadd.f32 0.0, %v3388
    %v3390 = vpop.f32.mrb[0].mxu0
    %v3391 = vpop.f32.mrb[0].mxu0
    %v3392 = vadd.f32 0.0, %v3391
    %v3393 = vpop.f32.mrb[0].mxu0
    %3394 = vmatprep.mubr.bf16.mxu0 0
    %3395 = vmatmul.mubr.bf16.gmra.mrb[0].mxu0 %v3297
    %v3396 = vpop.f32.mrb[0].mxu0
    %v3397 = vadd.f32 0.0, %v3396
    %v3398 = vpop.f32.mrb[0].mxu0
    %v3399 = vpop.f32.mrb[0].mxu0
    %v3400 = vadd.f32 0.0, %v3399
    %v3401 = vpop.f32.mrb[0].mxu0
    %3402 = vmatprep.mubr.bf16.mxu0 0
    %3403 = vmatmul.mubr.bf16.gmra.mrb[0].mxu0 %v3299
    %v3404 = vpop.f32.mrb[0].mxu0
    %v3405 = vadd.f32 0.0, %v3404
    %v3406 = vpop.f32.mrb[0].mxu0
    %v3407 = vpop.f32.mrb[0].mxu0
    %v3408 = vadd.f32 0.0, %v3407
    %v3409 = vpop.f32.mrb[0].mxu0
    %3410 = vmatprep.mubr.bf16.mxu0 0
    %3411 = vmatmul.mubr.bf16.gmra.mrb[0].mxu0 %v3301
    %v3412 = vpop.f32.mrb[0].mxu0
    %v3413 = vadd.f32 0.0, %v3412
    %v3414 = vpop.f32.mrb[0].mxu0
    %v3415 = vpop.f32.mrb[0].mxu0
    %v3416 = vadd.f32 0.0, %v3415
    %v3417 = vpop.f32.mrb[0].mxu0
    %3418 = vdwg.mxu0
    %v3419 = vadd.f32 %v3265, %v3389
    %v3420 = vadd.f32 %v3266, %v3392
    %v3421 = vadd.f32 %v3267, %v3397
    %v3422 = vadd.f32 %v3268, %v3400
    %v3423 = vadd.f32 %v3269, %v3405
    %v3424 = vadd.f32 %v3270, %v3408
    %v3425 = vadd.f32 %v3271, %v3413
    %v3426 = vadd.f32 %v3272, %v3416
    %v3427 = vld [vmem:[%s6] sm:$0x1]
    %v3429 = vlaneseq
    %v3430 = vshrl.u32 %v3429, 7
    %v3431 = vsub.s32 0, %v3430
    %v3432 = vrot.slane %v3427, %v3431
    %v3434 = vadd.f32 %v3419, %v3432
    %v3435 = vadd.f32 %v3420, %v3432
    %v3436 = vadd.f32 %v3421, %v3432
    %v3437 = vadd.f32 %v3422, %v3432
    %v3438 = vadd.f32 %v3423, %v3432
    %v3439 = vadd.f32 %v3424, %v3432
    %v3440 = vadd.f32 %v3425, %v3432
    %v3441 = vadd.f32 %v3426, %v3432
    %v3442 = vmax.f32 %v3434, 0.0
    %v3443 = vmax.f32 %v3435, 0.0
    %v3444 = vmax.f32 %v3436, 0.0
    %v3445 = vmax.f32 %v3437, 0.0
    %v3446 = vmax.f32 %v3438, 0.0
    %v3447 = vmax.f32 %v3439, 0.0
    %v3448 = vmax.f32 %v3440, 0.0
    %v3449 = vmax.f32 %v3441, 0.0
    %v3450 = vmul.f32 %v3442, %v286
    %v3451 = vmul.f32 %v3443, %v287
    %v3452 = vmul.f32 %v3444, %v288
    %v3453 = vmul.f32 %v3445, %v289
    %v3454 = vmul.f32 %v3446, %v290
    %v3455 = vmul.f32 %v3447, %v291
    %v3456 = vmul.f32 %v3448, %v292
    %v3457 = vmul.f32 %v3449, %v293
    %v3458 = vadd.f32 %v3450, %v3451
    %v3459 = vadd.f32 %v3458, %v3452
    %v3460 = vadd.f32 %v3459, %v3453
    %v3461 = vadd.f32 %v3460, %v3454
    %v3462 = vadd.f32 %v3461, %v3455
    %v3463 = vadd.f32 %v3462, %v3456
    %v3464 = vadd.f32 %v3463, %v3457
    %v3465 = vrot.slane %v3464, 4
    %v3466 = vadd.f32 %v3464, %v3465
    %v3467 = vrot.slane %v3466, 2
    %v3468 = vadd.f32 %v3466, %v3467
    %v3469 = vrot.slane %v3468, 1
    %v3470 = vadd.f32 %v3468, %v3469
    %v3471 = vmul.f32 %v3470, 0.041666668
    %v3472 = vsub.f32 %v3450, %v3471
    %v3473 = vsub.f32 %v3451, %v3471
    %v3474 = vsub.f32 %v3452, %v3471
    %v3475 = vsub.f32 %v3453, %v3471
    %v3476 = vsub.f32 %v3454, %v3471
    %v3477 = vsub.f32 %v3455, %v3471
    %v3478 = vsub.f32 %v3456, %v3471
    %v3479 = vsub.f32 %v3457, %v3471
    %v3480 = vmul.f32 %v3472, %v286
    %v3481 = vmul.f32 %v3473, %v287
    %v3482 = vmul.f32 %v3474, %v288
    %v3483 = vmul.f32 %v3475, %v289
    %v3484 = vmul.f32 %v3476, %v290
    %v3485 = vmul.f32 %v3477, %v291
    %v3486 = vmul.f32 %v3478, %v292
    %v3487 = vmul.f32 %v3479, %v293
    %v3488 = vmul.f32 %v3480, %v3480
    %v3489 = vmul.f32 %v3481, %v3481
    %v3490 = vmul.f32 %v3482, %v3482
    %v3491 = vmul.f32 %v3483, %v3483
    %v3492 = vmul.f32 %v3484, %v3484
    %v3493 = vmul.f32 %v3485, %v3485
    %v3494 = vmul.f32 %v3486, %v3486
    %v3495 = vmul.f32 %v3487, %v3487
    %v3496 = vadd.f32 %v3488, %v3489
    %v3497 = vadd.f32 %v3496, %v3490
    %v3498 = vadd.f32 %v3497, %v3491
    %v3499 = vadd.f32 %v3498, %v3492
    %v3500 = vadd.f32 %v3499, %v3493
    %v3501 = vadd.f32 %v3500, %v3494
    %v3502 = vadd.f32 %v3501, %v3495
    %v3503 = vrot.slane %v3502, 4
    %v3504 = vadd.f32 %v3502, %v3503
    %v3505 = vrot.slane %v3504, 2
    %v3506 = vadd.f32 %v3504, %v3505
    %v3507 = vrot.slane %v3506, 1
    %v3508 = vadd.f32 %v3506, %v3507
    %v3509 = vmul.f32 %v3508, 0.041666668
    %v3510 = vld [vmem:[%s7] sm:$0x1]
    %v3511 = vadd.f32 %v3509, 1e-05
    %v3512 = vrsqrt.pop %v3511
    %v3513 = vmul.f32 %v3510, %v3512
    %v3515 = vlaneseq
    %v3516 = vshrl.u32 %v3515, 7
    %v3517 = vsub.s32 0, %v3516
    %v3518 = vrot.slane %v3513, %v3517
    %v3520 = vmul.f32 %v3480, %v3518
    %v3521 = vmul.f32 %v3481, %v3518
    %v3522 = vmul.f32 %v3482, %v3518
    %v3523 = vmul.f32 %v3483, %v3518
    %v3524 = vmul.f32 %v3484, %v3518
    %v3525 = vmul.f32 %v3485, %v3518
    %v3526 = vmul.f32 %v3486, %v3518
    %v3527 = vmul.f32 %v3487, %v3518
    %v3528 = vld [vmem:[%s8] sm:$0x1]
    %v3530 = vlaneseq
    %v3531 = vshrl.u32 %v3530, 7
    %v3532 = vsub.s32 0, %v3531
    %v3533 = vrot.slane %v3528, %v3532
    %v3535 = vadd.f32 %v3520, %v3533
    %v3536 = vadd.f32 %v3521, %v3533
    %v3537 = vadd.f32 %v3522, %v3533
    %v3538 = vadd.f32 %v3523, %v3533
    %v3539 = vadd.f32 %v3524, %v3533
    %v3540 = vadd.f32 %v3525, %v3533
    %v3541 = vadd.f32 %v3526, %v3533
    %v3542 = vadd.f32 %v3527, %v3533
    %v3543 = vmul.f32 %v3535, %v286
    %v3544 = vmul.f32 %v3536, %v287
    %v3545 = vmul.f32 %v3537, %v288
    %v3546 = vmul.f32 %v3538, %v289
    %v3547 = vmul.f32 %v3539, %v290
    %v3548 = vmul.f32 %v3540, %v291
    %v3549 = vmul.f32 %v3541, %v292
    %v3550 = vmul.f32 %v3542, %v293
    %v3551 = vpack.c.bf16 %v3544, %v3543
    %v3552 = vpack.c.bf16 %v3546, %v3545
    %v3553 = vpack.c.bf16 %v3548, %v3547
    %v3554 = vpack.c.bf16 %v3550, %v3549
    %3555 = vst [vmem:[#allocation2 + $0x8] sm:$0xff] %v3551
    %3556 = vst [vmem:[#allocation2 + $0x10] sm:$0xff] %v3552
    %3557 = vst [vmem:[#allocation2 + $0x18] sm:$0xff] %v3553
    %3558 = vst [vmem:[#allocation2 + $0x20] sm:$0xff] %v3554
    %v3559 = vld [vmem:[#allocation2] sm:$0xe0]
    %v3560 = vld [vmem:[#allocation2 + $0x8] sm:$0xff]
    %v3561 = vld [vmem:[#allocation2 + $0x10] sm:$0xff]
    %v3562 = vld [vmem:[#allocation2 + $0x18] sm:$0xff]
    %v3563 = vld [vmem:[#allocation2 + $0x20] sm:$0x1f]
    %v3564 = vld [vmem:[#allocation8] sm:$0xf]
    %v3565 = vld [vmem:[#allocation8 + $0x4] sm:$0xf]
    %v3566 = vld [vmem:[#allocation8 + $0x8] sm:$0xf]
    %v3567 = vld [vmem:[#allocation8 + $0xc] sm:$0xf]
    %v3568 = vld [vmem:[#allocation8 + $0x10] sm:$0xf]
    %v3569 = vld [vmem:[#allocation8 + $0x14] sm:$0xf]
    %v3570 = vld [vmem:[#allocation8 + $0x18] sm:$0xf]
    %v3571 = vld [vmem:[#allocation8 + $0x1c] sm:$0xf]
    %v3572 = vld [vmem:[#allocation8 + $0x20] sm:$0xf]
    %v3573 = vld [vmem:[#allocation8 + $0x24] sm:$0xf]
    %v3574 = vld [vmem:[#allocation8 + $0x28] sm:$0xf]
    %v3575 = vld [vmem:[#allocation8 + $0x2c] sm:$0xf]
    %v3576 = vld [vmem:[#allocation8 + $0x30] sm:$0xf]
    %v3577 = vld [vmem:[#allocation8 + $0x34] sm:$0xf]
    %v3578 = vld [vmem:[#allocation8 + $0x38] sm:$0xf]
    %v3579 = vld [vmem:[#allocation8 + $0x3c] sm:$0xf]
    %v3580 = vld [vmem:[#allocation2 + $0x20] sm:$0x3f]
    %s3581 = scalar_lea.vmem [#allocation8], 64
    %v3582 = vld [vmem:[%s3581] sm:$0xf]
    %v3583 = vld [vmem:[%s3581 + $0x4] sm:$0xf]
    %v3584 = vld [vmem:[%s3581 + $0x8] sm:$0xf]
    %v3585 = vld [vmem:[%s3581 + $0xc] sm:$0xf]
    %v3586 = vld [vmem:[%s3581 + $0x10] sm:$0xf]
    %v3587 = vld [vmem:[%s3581 + $0x14] sm:$0xf]
    %v3588 = vld [vmem:[%s3581 + $0x18] sm:$0xf]
    %v3589 = vld [vmem:[%s3581 + $0x1c] sm:$0xf]
    %v3590 = vld [vmem:[%s3581 + $0x20] sm:$0xf]
    %v3591 = vld [vmem:[%s3581 + $0x24] sm:$0xf]
    %v3592 = vld [vmem:[%s3581 + $0x28] sm:$0xf]
    %v3593 = vld [vmem:[%s3581 + $0x2c] sm:$0xf]
    %v3594 = vld [vmem:[%s3581 + $0x30] sm:$0xf]
    %v3595 = vld [vmem:[%s3581 + $0x34] sm:$0xf]
    %v3596 = vld [vmem:[%s3581 + $0x38] sm:$0xf]
    %v3597 = vld [vmem:[%s3581 + $0x3c] sm:$0xf]
    %v3599 = vshrl.u32 %v3559, 16
    %v3601 = vrot.slane %v3599, 5
    %v3602 = vshll.u32 %v3559, 16
    %v3604 = vrot.slane %v3602, 6
    %v3605 = vor.u32 %v3601, %v3604
    %v3607 = vshrl.u32 %v3560, 16
    %v3609 = vrot.slane %v3607, 5
    %v3610 = vshll.u32 %v3560, 16
    %v3612 = vrot.slane %v3610, 6
    %v3613 = vor.u32 %v3609, %v3612
    %v3614 = vsel %vm2007, %v3605, %v3613
    %v3616 = vshrl.u32 %v3561, 16
    %v3618 = vrot.slane %v3616, 5
    %v3619 = vshll.u32 %v3561, 16
    %v3621 = vrot.slane %v3619, 6
    %v3622 = vor.u32 %v3618, %v3621
    %v3623 = vsel %vm2007, %v3613, %v3622
    %v3625 = vshrl.u32 %v3562, 16
    %v3627 = vrot.slane %v3625, 5
    %v3628 = vshll.u32 %v3562, 16
    %v3630 = vrot.slane %v3628, 6
    %v3631 = vor.u32 %v3627, %v3630
    %v3632 = vsel %vm2007, %v3622, %v3631
    %v3634 = vshrl.u32 %v3580, 16
    %v3636 = vrot.slane %v3634, 5
    %v3637 = vshll.u32 %v3580, 16
    %v3639 = vrot.slane %v3637, 6
    %v3640 = vor.u32 %v3636, %v3639
    %v3641 = vsel %vm2007, %v3631, %v3640
    %v3662 = vunpack.c.l.b16 %v3582
    %v3663 = vunpack.c.l.b16 %v3583
    %v3664 = vunpack.c.l.b16 %v3584
    %v3665 = vunpack.c.l.b16 %v3585
    %v3666 = vunpack.c.l.b16 %v3586
    %v3667 = vunpack.c.l.b16 %v3587
    %v3668 = vunpack.c.l.b16 %v3588
    %v3669 = vunpack.c.l.b16 %v3589
    %v3670 = vunpack.c.l.b16 %v3590
    %v3671 = vunpack.c.l.b16 %v3591
    %v3672 = vunpack.c.l.b16 %v3592
    %v3673 = vunpack.c.l.b16 %v3593
    %v3674 = vunpack.c.l.b16 %v3594
    %v3675 = vunpack.c.l.b16 %v3595
    %v3676 = vunpack.c.l.b16 %v3596
    %v3677 = vunpack.c.l.b16 %v3597
    %v3678 = vpack.c.b16 %v3663, %v3662
    %v3679 = vpack.c.b16 %v3665, %v3664
    %v3680 = vpack.c.b16 %v3667, %v3666
    %v3681 = vpack.c.b16 %v3669, %v3668
    %v3682 = vpack.c.b16 %v3671, %v3670
    %v3683 = vpack.c.b16 %v3673, %v3672
    %v3684 = vpack.c.b16 %v3675, %v3674
    %v3685 = vpack.c.b16 %v3677, %v3676
    %3694 = vmatprep.subr.bf16.mxu0 0
    %3695 = vmatpush1.bf16.msra.mxu0 %v3678
    %3696 = vmatprep.subr.bf16.mxu0 0
    %3697 = vmatpush1.bf16.msra.mxu0 %v3679
    %3698 = vmatprep.subr.bf16.mxu0 0
    %3699 = vmatpush1.bf16.msra.mxu0 %v3680
    %3700 = vmatprep.subr.bf16.mxu0 0
    %3701 = vmatpush1.bf16.msra.mxu0 %v3681
    %3702 = vmatprep.subr.bf16.mxu0 0
    %3703 = vmatpush1.bf16.msra.mxu0 %v3682
    %3704 = vmatprep.subr.bf16.mxu0 0
    %3705 = vmatpush1.bf16.msra.mxu0 %v3683
    %3706 = vmatprep.subr.bf16.mxu0 0
    %3707 = vmatpush1.bf16.msra.mxu0 %v3684
    %3708 = vmatprep.subr.bf16.mxu0 0
    %3709 = vmatpush1.bf16.msra.mxu0 %v3685
    %3710 = vmatprep.subr.bf16.mxu0 0
    %3711 = vmatpush1.bf16.msra.mxu0 0
    %3712 = vmatprep.subr.bf16.mxu0 0
    %3713 = vmatpush1.bf16.msra.mxu0 0
    %3714 = vmatprep.subr.bf16.mxu0 0
    %3715 = vmatpush1.bf16.msra.mxu0 0
    %3716 = vmatprep.subr.bf16.mxu0 0
    %3717 = vmatpush1.bf16.msra.mxu0 0
    %3718 = vmatprep.subr.bf16.mxu0 0
    %3719 = vmatpush1.bf16.msra.mxu0 0
    %3720 = vmatprep.subr.bf16.mxu0 0
    %3721 = vmatpush1.bf16.msra.mxu0 0
    %3722 = vmatprep.subr.bf16.mxu0 0
    %3723 = vmatpush1.bf16.msra.mxu0 0
    %3724 = vmatprep.subr.bf16.mxu0 0
    %3725 = vmatpush1.bf16.msra.mxu0 0
    %3726 = vmatprep.mubr.bf16.mxu0 0
    %3727 = vmatmul.mubr.bf16.gmra.mrb[0].mxu0 %v3614
    %v3728 = vpop.f32.mrb[0].mxu0
    %v3729 = vadd.f32 0.0, %v3728
    %v3730 = vpop.f32.mrb[0].mxu0
    %v3731 = vpop.f32.mrb[0].mxu0
    %v3732 = vadd.f32 0.0, %v3731
    %v3733 = vpop.f32.mrb[0].mxu0
    %3734 = vmatprep.mubr.bf16.mxu0 0
    %3735 = vmatmul.mubr.bf16.gmra.mrb[0].mxu0 %v3623
    %v3736 = vpop.f32.mrb[0].mxu0
    %v3737 = vadd.f32 0.0, %v3736
    %v3738 = vpop.f32.mrb[0].mxu0
    %v3739 = vpop.f32.mrb[0].mxu0
    %v3740 = vadd.f32 0.0, %v3739
    %v3741 = vpop.f32.mrb[0].mxu0
    %3742 = vmatprep.mubr.bf16.mxu0 0
    %3743 = vmatmul.mubr.bf16.gmra.mrb[0].mxu0 %v3632
    %v3744 = vpop.f32.mrb[0].mxu0
    %v3745 = vadd.f32 0.0, %v3744
    %v3746 = vpop.f32.mrb[0].mxu0
    %v3747 = vpop.f32.mrb[0].mxu0
    %v3748 = vadd.f32 0.0, %v3747
    %v3749 = vpop.f32.mrb[0].mxu0
    %3750 = vmatprep.mubr.bf16.mxu0 0
    %3751 = vmatmul.mubr.bf16.gmra.mrb[0].mxu0 %v3641
    %v3752 = vpop.f32.mrb[0].mxu0
    %v3753 = vadd.f32 0.0, %v3752
    %v3754 = vpop.f32.mrb[0].mxu0
    %v3755 = vpop.f32.mrb[0].mxu0
    %v3756 = vadd.f32 0.0, %v3755
    %v3757 = vpop.f32.mrb[0].mxu0
    %3758 = vdwg.mxu0
    %v3764 = vrot.slane %v3559, 5
    %v3765 = vrot.slane %v3560, 5
    %v3766 = vsel %vm2174, %v3764, %v3765
    %v3767 = vrot.slane %v3561, 5
    %v3768 = vsel %vm2174, %v3765, %v3767
    %v3769 = vrot.slane %v3562, 5
    %v3770 = vsel %vm2174, %v3767, %v3769
    %v3771 = vrot.slane %v3563, 5
    %v3772 = vsel %vm2174, %v3769, %v3771
    %v3793 = vunpack.c.l.b16 %v3564
    %v3794 = vunpack.c.l.b16 %v3565
    %v3795 = vunpack.c.l.b16 %v3566
    %v3796 = vunpack.c.l.b16 %v3567
    %v3797 = vunpack.c.l.b16 %v3568
    %v3798 = vunpack.c.l.b16 %v3569
    %v3799 = vunpack.c.l.b16 %v3570
    %v3800 = vunpack.c.l.b16 %v3571
    %v3801 = vunpack.c.l.b16 %v3572
    %v3802 = vunpack.c.l.b16 %v3573
    %v3803 = vunpack.c.l.b16 %v3574
    %v3804 = vunpack.c.l.b16 %v3575
    %v3805 = vunpack.c.l.b16 %v3576
    %v3806 = vunpack.c.l.b16 %v3577
    %v3807 = vunpack.c.l.b16 %v3578
    %v3808 = vunpack.c.l.b16 %v3579
    %v3809 = vpack.c.b16 %v3794, %v3793
    %v3810 = vpack.c.b16 %v3796, %v3795
    %v3811 = vpack.c.b16 %v3798, %v3797
    %v3812 = vpack.c.b16 %v3800, %v3799
    %v3813 = vpack.c.b16 %v3802, %v3801
    %v3814 = vpack.c.b16 %v3804, %v3803
    %v3815 = vpack.c.b16 %v3806, %v3805
    %v3816 = vpack.c.b16 %v3808, %v3807
    %3825 = vmatprep.subr.bf16.mxu0 0
    %3826 = vmatpush1.bf16.msra.mxu0 %v3809
    %3827 = vmatprep.subr.bf16.mxu0 0
    %3828 = vmatpush1.bf16.msra.mxu0 %v3810
    %3829 = vmatprep.subr.bf16.mxu0 0
    %3830 = vmatpush1.bf16.msra.mxu0 %v3811
    %3831 = vmatprep.subr.bf16.mxu0 0
    %3832 = vmatpush1.bf16.msra.mxu0 %v3812
    %3833 = vmatprep.subr.bf16.mxu0 0
    %3834 = vmatpush1.bf16.msra.mxu0 %v3813
    %3835 = vmatprep.subr.bf16.mxu0 0
    %3836 = vmatpush1.bf16.msra.mxu0 %v3814
    %3837 = vmatprep.subr.bf16.mxu0 0
    %3838 = vmatpush1.bf16.msra.mxu0 %v3815
    %3839 = vmatprep.subr.bf16.mxu0 0
    %3840 = vmatpush1.bf16.msra.mxu0 %v3816
    %3841 = vmatprep.subr.bf16.mxu0 0
    %3842 = vmatpush1.bf16.msra.mxu0 0
    %3843 = vmatprep.subr.bf16.mxu0 0
    %3844 = vmatpush1.bf16.msra.mxu0 0
    %3845 = vmatprep.subr.bf16.mxu0 0
    %3846 = vmatpush1.bf16.msra.mxu0 0
    %3847 = vmatprep.subr.bf16.mxu0 0
    %3848 = vmatpush1.bf16.msra.mxu0 0
    %3849 = vmatprep.subr.bf16.mxu0 0
    %3850 = vmatpush1.bf16.msra.mxu0 0
    %3851 = vmatprep.subr.bf16.mxu0 0
    %3852 = vmatpush1.bf16.msra.mxu0 0
    %3853 = vmatprep.subr.bf16.mxu0 0
    %3854 = vmatpush1.bf16.msra.mxu0 0
    %3855 = vmatprep.subr.bf16.mxu0 0
    %3856 = vmatpush1.bf16.msra.mxu0 0
    %3857 = vmatprep.mubr.bf16.mxu0 0
    %3858 = vmatmul.mubr.bf16.gmra.mrb[0].mxu0 %v3766
    %v3859 = vpop.f32.mrb[0].mxu0
    %v3860 = vadd.f32 %v3729, %v3859
    %v3861 = vpop.f32.mrb[0].mxu0
    %v3862 = vpop.f32.mrb[0].mxu0
    %v3863 = vadd.f32 %v3732, %v3862
    %v3864 = vpop.f32.mrb[0].mxu0
    %3865 = vmatprep.mubr.bf16.mxu0 0
    %3866 = vmatmul.mubr.bf16.gmra.mrb[0].mxu0 %v3768
    %v3867 = vpop.f32.mrb[0].mxu0
    %v3868 = vadd.f32 %v3737, %v3867
    %v3869 = vpop.f32.mrb[0].mxu0
    %v3870 = vpop.f32.mrb[0].mxu0
    %v3871 = vadd.f32 %v3740, %v3870
    %v3872 = vpop.f32.mrb[0].mxu0
    %3873 = vmatprep.mubr.bf16.mxu0 0
    %3874 = vmatmul.mubr.bf16.gmra.mrb[0].mxu0 %v3770
    %v3875 = vpop.f32.mrb[0].mxu0
    %v3876 = vadd.f32 %v3745, %v3875
    %v3877 = vpop.f32.mrb[0].mxu0
    %v3878 = vpop.f32.mrb[0].mxu0
    %v3879 = vadd.f32 %v3748, %v3878
    %v3880 = vpop.f32.mrb[0].mxu0
    %3881 = vmatprep.mubr.bf16.mxu0 0
    %3882 = vmatmul.mubr.bf16.gmra.mrb[0].mxu0 %v3772
    %v3883 = vpop.f32.mrb[0].mxu0
    %v3884 = vadd.f32 %v3753, %v3883
    %v3885 = vpop.f32.mrb[0].mxu0
    %v3886 = vpop.f32.mrb[0].mxu0
    %v3887 = vadd.f32 %v3756, %v3886
    %v3888 = vpop.f32.mrb[0].mxu0
    %3889 = vdwg.mxu0
    %v3890 = vld [vmem:[#allocation2] sm:$0xc0]
    %s3891 = scalar_lea.vmem [#allocation8], 128
    %v3892 = vld [vmem:[%s3891] sm:$0xf]
    %v3893 = vld [vmem:[%s3891 + $0x4] sm:$0xf]
    %v3894 = vld [vmem:[%s3891 + $0x8] sm:$0xf]
    %v3895 = vld [vmem:[%s3891 + $0xc] sm:$0xf]
    %v3896 = vld [vmem:[%s3891 + $0x10] sm:$0xf]
    %v3897 = vld [vmem:[%s3891 + $0x14] sm:$0xf]
    %v3898 = vld [vmem:[%s3891 + $0x18] sm:$0xf]
    %v3899 = vld [vmem:[%s3891 + $0x1c] sm:$0xf]
    %v3900 = vld [vmem:[%s3891 + $0x20] sm:$0xf]
    %v3901 = vld [vmem:[%s3891 + $0x24] sm:$0xf]
    %v3902 = vld [vmem:[%s3891 + $0x28] sm:$0xf]
    %v3903 = vld [vmem:[%s3891 + $0x2c] sm:$0xf]
    %v3904 = vld [vmem:[%s3891 + $0x30] sm:$0xf]
    %v3905 = vld [vmem:[%s3891 + $0x34] sm:$0xf]
    %v3906 = vld [vmem:[%s3891 + $0x38] sm:$0xf]
    %v3907 = vld [vmem:[%s3891 + $0x3c] sm:$0xf]
    %v3910 = vrot.slane %v3890, 6
    %v3911 = vrot.slane %v3560, 6
    %v3912 = vsel %vm2321, %v3910, %v3911
    %v3913 = vrot.slane %v3561, 6
    %v3914 = vsel %vm2321, %v3911, %v3913
    %v3915 = vrot.slane %v3562, 6
    %v3916 = vsel %vm2321, %v3913, %v3915
    %v3917 = vrot.slane %v3580, 6
    %v3918 = vsel %vm2321, %v3915, %v3917
    %v3939 = vunpack.c.l.b16 %v3892
    %v3940 = vunpack.c.l.b16 %v3893
    %v3941 = vunpack.c.l.b16 %v3894
    %v3942 = vunpack.c.l.b16 %v3895
    %v3943 = vunpack.c.l.b16 %v3896
    %v3944 = vunpack.c.l.b16 %v3897
    %v3945 = vunpack.c.l.b16 %v3898
    %v3946 = vunpack.c.l.b16 %v3899
    %v3947 = vunpack.c.l.b16 %v3900
    %v3948 = vunpack.c.l.b16 %v3901
    %v3949 = vunpack.c.l.b16 %v3902
    %v3950 = vunpack.c.l.b16 %v3903
    %v3951 = vunpack.c.l.b16 %v3904
    %v3952 = vunpack.c.l.b16 %v3905
    %v3953 = vunpack.c.l.b16 %v3906
    %v3954 = vunpack.c.l.b16 %v3907
    %v3955 = vpack.c.b16 %v3940, %v3939
    %v3956 = vpack.c.b16 %v3942, %v3941
    %v3957 = vpack.c.b16 %v3944, %v3943
    %v3958 = vpack.c.b16 %v3946, %v3945
    %v3959 = vpack.c.b16 %v3948, %v3947
    %v3960 = vpack.c.b16 %v3950, %v3949
    %v3961 = vpack.c.b16 %v3952, %v3951
    %v3962 = vpack.c.b16 %v3954, %v3953
    %3971 = vmatprep.subr.bf16.mxu0 0
    %3972 = vmatpush1.bf16.msra.mxu0 %v3955
    %3973 = vmatprep.subr.bf16.mxu0 0
    %3974 = vmatpush1.bf16.msra.mxu0 %v3956
    %3975 = vmatprep.subr.bf16.mxu0 0
    %3976 = vmatpush1.bf16.msra.mxu0 %v3957
    %3977 = vmatprep.subr.bf16.mxu0 0
    %3978 = vmatpush1.bf16.msra.mxu0 %v3958
    %3979 = vmatprep.subr.bf16.mxu0 0
    %3980 = vmatpush1.bf16.msra.mxu0 %v3959
    %3981 = vmatprep.subr.bf16.mxu0 0
    %3982 = vmatpush1.bf16.msra.mxu0 %v3960
    %3983 = vmatprep.subr.bf16.mxu0 0
    %3984 = vmatpush1.bf16.msra.mxu0 %v3961
    %3985 = vmatprep.subr.bf16.mxu0 0
    %3986 = vmatpush1.bf16.msra.mxu0 %v3962
    %3987 = vmatprep.subr.bf16.mxu0 0
    %3988 = vmatpush1.bf16.msra.mxu0 0
    %3989 = vmatprep.subr.bf16.mxu0 0
    %3990 = vmatpush1.bf16.msra.mxu0 0
    %3991 = vmatprep.subr.bf16.mxu0 0
    %3992 = vmatpush1.bf16.msra.mxu0 0
    %3993 = vmatprep.subr.bf16.mxu0 0
    %3994 = vmatpush1.bf16.msra.mxu0 0
    %3995 = vmatprep.subr.bf16.mxu0 0
    %3996 = vmatpush1.bf16.msra.mxu0 0
    %3997 = vmatprep.subr.bf16.mxu0 0
    %3998 = vmatpush1.bf16.msra.mxu0 0
    %3999 = vmatprep.subr.bf16.mxu0 0
    %4000 = vmatpush1.bf16.msra.mxu0 0
    %4001 = vmatprep.subr.bf16.mxu0 0
    %4002 = vmatpush1.bf16.msra.mxu0 0
    %4003 = vmatprep.mubr.bf16.mxu0 0
    %4004 = vmatmul.mubr.bf16.gmra.mrb[0].mxu0 %v3912
    %v4005 = vpop.f32.mrb[0].mxu0
    %v4006 = vadd.f32 0.0, %v4005
    %v4007 = vpop.f32.mrb[0].mxu0
    %v4008 = vpop.f32.mrb[0].mxu0
    %v4009 = vadd.f32 0.0, %v4008
    %v4010 = vpop.f32.mrb[0].mxu0
    %4011 = vmatprep.mubr.bf16.mxu0 0
    %4012 = vmatmul.mubr.bf16.gmra.mrb[0].mxu0 %v3914
    %v4013 = vpop.f32.mrb[0].mxu0
    %v4014 = vadd.f32 0.0, %v4013
    %v4015 = vpop.f32.mrb[0].mxu0
    %v4016 = vpop.f32.mrb[0].mxu0
    %v4017 = vadd.f32 0.0, %v4016
    %v4018 = vpop.f32.mrb[0].mxu0
    %4019 = vmatprep.mubr.bf16.mxu0 0
    %4020 = vmatmul.mubr.bf16.gmra.mrb[0].mxu0 %v3916
    %v4021 = vpop.f32.mrb[0].mxu0
    %v4022 = vadd.f32 0.0, %v4021
    %v4023 = vpop.f32.mrb[0].mxu0
    %v4024 = vpop.f32.mrb[0].mxu0
    %v4025 = vadd.f32 0.0, %v4024
    %v4026 = vpop.f32.mrb[0].mxu0
    %4027 = vmatprep.mubr.bf16.mxu0 0
    %4028 = vmatmul.mubr.bf16.gmra.mrb[0].mxu0 %v3918
    %v4029 = vpop.f32.mrb[0].mxu0
    %v4030 = vadd.f32 0.0, %v4029
    %v4031 = vpop.f32.mrb[0].mxu0
    %v4032 = vpop.f32.mrb[0].mxu0
    %v4033 = vadd.f32 0.0, %v4032
    %v4034 = vpop.f32.mrb[0].mxu0
    %4035 = vdwg.mxu0
    %v4036 = vadd.f32 %v3860, %v4006
    %v4037 = vadd.f32 %v3863, %v4009
    %v4038 = vadd.f32 %v3868, %v4014
    %v4039 = vadd.f32 %v3871, %v4017
    %v4040 = vadd.f32 %v3876, %v4022
    %v4041 = vadd.f32 %v3879, %v4025
    %v4042 = vadd.f32 %v3884, %v4030
    %v4043 = vadd.f32 %v3887, %v4033
    %v4044 = vld [vmem:[#allocation2] sm:$0x80]
    %v4045 = vld [vmem:[#allocation2 + $0x20] sm:$0xff]
    %s4046 = scalar_lea.vmem [#allocation8], 192
    %v4047 = vld [vmem:[%s4046] sm:$0xf]
    %v4048 = vld [vmem:[%s4046 + $0x4] sm:$0xf]
    %v4049 = vld [vmem:[%s4046 + $0x8] sm:$0xf]
    %v4050 = vld [vmem:[%s4046 + $0xc] sm:$0xf]
    %v4051 = vld [vmem:[%s4046 + $0x10] sm:$0xf]
    %v4052 = vld [vmem:[%s4046 + $0x14] sm:$0xf]
    %v4053 = vld [vmem:[%s4046 + $0x18] sm:$0xf]
    %v4054 = vld [vmem:[%s4046 + $0x1c] sm:$0xf]
    %v4055 = vld [vmem:[%s4046 + $0x20] sm:$0xf]
    %v4056 = vld [vmem:[%s4046 + $0x24] sm:$0xf]
    %v4057 = vld [vmem:[%s4046 + $0x28] sm:$0xf]
    %v4058 = vld [vmem:[%s4046 + $0x2c] sm:$0xf]
    %v4059 = vld [vmem:[%s4046 + $0x30] sm:$0xf]
    %v4060 = vld [vmem:[%s4046 + $0x34] sm:$0xf]
    %v4061 = vld [vmem:[%s4046 + $0x38] sm:$0xf]
    %v4062 = vld [vmem:[%s4046 + $0x3c] sm:$0xf]
    %v4064 = vshrl.u32 %v4044, 16
    %v4066 = vrot.slane %v4064, 7
    %v4067 = vrot.slane %v3607, 7
    %v4068 = vor.u32 %v4067, %v3610
    %v4069 = vsel %vm2475, %v4066, %v4068
    %v4070 = vrot.slane %v3616, 7
    %v4071 = vor.u32 %v4070, %v3619
    %v4072 = vsel %vm2475, %v4067, %v4071
    %v4073 = vrot.slane %v3625, 7
    %v4074 = vor.u32 %v4073, %v3628
    %v4075 = vsel %vm2475, %v4070, %v4074
    %v4077 = vshrl.u32 %v4045, 16
    %v4079 = vrot.slane %v4077, 7
    %v4080 = vshll.u32 %v4045, 16
    %v4082 = vor.u32 %v4079, %v4080
    %v4083 = vsel %vm2475, %v4073, %v4082
    %v4104 = vunpack.c.l.b16 %v4047
    %v4105 = vunpack.c.l.b16 %v4048
    %v4106 = vunpack.c.l.b16 %v4049
    %v4107 = vunpack.c.l.b16 %v4050
    %v4108 = vunpack.c.l.b16 %v4051
    %v4109 = vunpack.c.l.b16 %v4052
    %v4110 = vunpack.c.l.b16 %v4053
    %v4111 = vunpack.c.l.b16 %v4054
    %v4112 = vunpack.c.l.b16 %v4055
    %v4113 = vunpack.c.l.b16 %v4056
    %v4114 = vunpack.c.l.b16 %v4057
    %v4115 = vunpack.c.l.b16 %v4058
    %v4116 = vunpack.c.l.b16 %v4059
    %v4117 = vunpack.c.l.b16 %v4060
    %v4118 = vunpack.c.l.b16 %v4061
    %v4119 = vunpack.c.l.b16 %v4062
    %v4120 = vpack.c.b16 %v4105, %v4104
    %v4121 = vpack.c.b16 %v4107, %v4106
    %v4122 = vpack.c.b16 %v4109, %v4108
    %v4123 = vpack.c.b16 %v4111, %v4110
    %v4124 = vpack.c.b16 %v4113, %v4112
    %v4125 = vpack.c.b16 %v4115, %v4114
    %v4126 = vpack.c.b16 %v4117, %v4116
    %v4127 = vpack.c.b16 %v4119, %v4118
    %4136 = vmatprep.subr.bf16.mxu0 0
    %4137 = vmatpush1.bf16.msra.mxu0 %v4120
    %4138 = vmatprep.subr.bf16.mxu0 0
    %4139 = vmatpush1.bf16.msra.mxu0 %v4121
    %4140 = vmatprep.subr.bf16.mxu0 0
    %4141 = vmatpush1.bf16.msra.mxu0 %v4122
    %4142 = vmatprep.subr.bf16.mxu0 0
    %4143 = vmatpush1.bf16.msra.mxu0 %v4123
    %4144 = vmatprep.subr.bf16.mxu0 0
    %4145 = vmatpush1.bf16.msra.mxu0 %v4124
    %4146 = vmatprep.subr.bf16.mxu0 0
    %4147 = vmatpush1.bf16.msra.mxu0 %v4125
    %4148 = vmatprep.subr.bf16.mxu0 0
    %4149 = vmatpush1.bf16.msra.mxu0 %v4126
    %4150 = vmatprep.subr.bf16.mxu0 0
    %4151 = vmatpush1.bf16.msra.mxu0 %v4127
    %4152 = vmatprep.subr.bf16.mxu0 0
    %4153 = vmatpush1.bf16.msra.mxu0 0
    %4154 = vmatprep.subr.bf16.mxu0 0
    %4155 = vmatpush1.bf16.msra.mxu0 0
    %4156 = vmatprep.subr.bf16.mxu0 0
    %4157 = vmatpush1.bf16.msra.mxu0 0
    %4158 = vmatprep.subr.bf16.mxu0 0
    %4159 = vmatpush1.bf16.msra.mxu0 0
    %4160 = vmatprep.subr.bf16.mxu0 0
    %4161 = vmatpush1.bf16.msra.mxu0 0
    %4162 = vmatprep.subr.bf16.mxu0 0
    %4163 = vmatpush1.bf16.msra.mxu0 0
    %4164 = vmatprep.subr.bf16.mxu0 0
    %4165 = vmatpush1.bf16.msra.mxu0 0
    %4166 = vmatprep.subr.bf16.mxu0 0
    %4167 = vmatpush1.bf16.msra.mxu0 0
    %4168 = vmatprep.mubr.bf16.mxu0 0
    %4169 = vmatmul.mubr.bf16.gmra.mrb[0].mxu0 %v4069
    %v4170 = vpop.f32.mrb[0].mxu0
    %v4171 = vadd.f32 0.0, %v4170
    %v4172 = vpop.f32.mrb[0].mxu0
    %v4173 = vpop.f32.mrb[0].mxu0
    %v4174 = vadd.f32 0.0, %v4173
    %v4175 = vpop.f32.mrb[0].mxu0
    %4176 = vmatprep.mubr.bf16.mxu0 0
    %4177 = vmatmul.mubr.bf16.gmra.mrb[0].mxu0 %v4072
    %v4178 = vpop.f32.mrb[0].mxu0
    %v4179 = vadd.f32 0.0, %v4178
    %v4180 = vpop.f32.mrb[0].mxu0
    %v4181 = vpop.f32.mrb[0].mxu0
    %v4182 = vadd.f32 0.0, %v4181
    %v4183 = vpop.f32.mrb[0].mxu0
    %4184 = vmatprep.mubr.bf16.mxu0 0
    %4185 = vmatmul.mubr.bf16.gmra.mrb[0].mxu0 %v4075
    %v4186 = vpop.f32.mrb[0].mxu0
    %v4187 = vadd.f32 0.0, %v4186
    %v4188 = vpop.f32.mrb[0].mxu0
    %v4189 = vpop.f32.mrb[0].mxu0
    %v4190 = vadd.f32 0.0, %v4189
    %v4191 = vpop.f32.mrb[0].mxu0
    %4192 = vmatprep.mubr.bf16.mxu0 0
    %4193 = vmatmul.mubr.bf16.gmra.mrb[0].mxu0 %v4083
    %v4194 = vpop.f32.mrb[0].mxu0
    %v4195 = vadd.f32 0.0, %v4194
    %v4196 = vpop.f32.mrb[0].mxu0
    %v4197 = vpop.f32.mrb[0].mxu0
    %v4198 = vadd.f32 0.0, %v4197
    %v4199 = vpop.f32.mrb[0].mxu0
    %4200 = vdwg.mxu0
    %v4201 = vadd.f32 %v4036, %v4171
    %v4202 = vadd.f32 %v4037, %v4174
    %v4203 = vadd.f32 %v4038, %v4179
    %v4204 = vadd.f32 %v4039, %v4182
    %v4205 = vadd.f32 %v4040, %v4187
    %v4206 = vadd.f32 %v4041, %v4190
    %v4207 = vadd.f32 %v4042, %v4195
    %v4208 = vadd.f32 %v4043, %v4198
    %s4209 = scalar_lea.vmem [#allocation8], 256
    %v4210 = vld [vmem:[%s4209] sm:$0xf]
    %v4211 = vld [vmem:[%s4209 + $0x4] sm:$0xf]
    %v4212 = vld [vmem:[%s4209 + $0x8] sm:$0xf]
    %v4213 = vld [vmem:[%s4209 + $0xc] sm:$0xf]
    %v4214 = vld [vmem:[%s4209 + $0x10] sm:$0xf]
    %v4215 = vld [vmem:[%s4209 + $0x14] sm:$0xf]
    %v4216 = vld [vmem:[%s4209 + $0x18] sm:$0xf]
    %v4217 = vld [vmem:[%s4209 + $0x1c] sm:$0xf]
    %v4218 = vld [vmem:[%s4209 + $0x20] sm:$0xf]
    %v4219 = vld [vmem:[%s4209 + $0x24] sm:$0xf]
    %v4220 = vld [vmem:[%s4209 + $0x28] sm:$0xf]
    %v4221 = vld [vmem:[%s4209 + $0x2c] sm:$0xf]
    %v4222 = vld [vmem:[%s4209 + $0x30] sm:$0xf]
    %v4223 = vld [vmem:[%s4209 + $0x34] sm:$0xf]
    %v4224 = vld [vmem:[%s4209 + $0x38] sm:$0xf]
    %v4225 = vld [vmem:[%s4209 + $0x3c] sm:$0xf]
    %v4242 = vunpack.c.l.b16 %v4210
    %v4243 = vunpack.c.l.b16 %v4211
    %v4244 = vunpack.c.l.b16 %v4212
    %v4245 = vunpack.c.l.b16 %v4213
    %v4246 = vunpack.c.l.b16 %v4214
    %v4247 = vunpack.c.l.b16 %v4215
    %v4248 = vunpack.c.l.b16 %v4216
    %v4249 = vunpack.c.l.b16 %v4217
    %v4250 = vunpack.c.l.b16 %v4218
    %v4251 = vunpack.c.l.b16 %v4219
    %v4252 = vunpack.c.l.b16 %v4220
    %v4253 = vunpack.c.l.b16 %v4221
    %v4254 = vunpack.c.l.b16 %v4222
    %v4255 = vunpack.c.l.b16 %v4223
    %v4256 = vunpack.c.l.b16 %v4224
    %v4257 = vunpack.c.l.b16 %v4225
    %v4258 = vpack.c.b16 %v4243, %v4242
    %v4259 = vpack.c.b16 %v4245, %v4244
    %v4260 = vpack.c.b16 %v4247, %v4246
    %v4261 = vpack.c.b16 %v4249, %v4248
    %v4262 = vpack.c.b16 %v4251, %v4250
    %v4263 = vpack.c.b16 %v4253, %v4252
    %v4264 = vpack.c.b16 %v4255, %v4254
    %v4265 = vpack.c.b16 %v4257, %v4256
    %4274 = vmatprep.subr.bf16.mxu0 0
    %4275 = vmatpush1.bf16.msra.mxu0 %v4258
    %4276 = vmatprep.subr.bf16.mxu0 0
    %4277 = vmatpush1.bf16.msra.mxu0 %v4259
    %4278 = vmatprep.subr.bf16.mxu0 0
    %4279 = vmatpush1.bf16.msra.mxu0 %v4260
    %4280 = vmatprep.subr.bf16.mxu0 0
    %4281 = vmatpush1.bf16.msra.mxu0 %v4261
    %4282 = vmatprep.subr.bf16.mxu0 0
    %4283 = vmatpush1.bf16.msra.mxu0 %v4262
    %4284 = vmatprep.subr.bf16.mxu0 0
    %4285 = vmatpush1.bf16.msra.mxu0 %v4263
    %4286 = vmatprep.subr.bf16.mxu0 0
    %4287 = vmatpush1.bf16.msra.mxu0 %v4264
    %4288 = vmatprep.subr.bf16.mxu0 0
    %4289 = vmatpush1.bf16.msra.mxu0 %v4265
    %4290 = vmatprep.subr.bf16.mxu0 0
    %4291 = vmatpush1.bf16.msra.mxu0 0
    %4292 = vmatprep.subr.bf16.mxu0 0
    %4293 = vmatpush1.bf16.msra.mxu0 0
    %4294 = vmatprep.subr.bf16.mxu0 0
    %4295 = vmatpush1.bf16.msra.mxu0 0
    %4296 = vmatprep.subr.bf16.mxu0 0
    %4297 = vmatpush1.bf16.msra.mxu0 0
    %4298 = vmatprep.subr.bf16.mxu0 0
    %4299 = vmatpush1.bf16.msra.mxu0 0
    %4300 = vmatprep.subr.bf16.mxu0 0
    %4301 = vmatpush1.bf16.msra.mxu0 0
    %4302 = vmatprep.subr.bf16.mxu0 0
    %4303 = vmatpush1.bf16.msra.mxu0 0
    %4304 = vmatprep.subr.bf16.mxu0 0
    %4305 = vmatpush1.bf16.msra.mxu0 0
    %4306 = vmatprep.mubr.bf16.mxu0 0
    %4307 = vmatmul.mubr.bf16.gmra.mrb[0].mxu0 %v3560
    %v4308 = vpop.f32.mrb[0].mxu0
    %v4309 = vadd.f32 0.0, %v4308
    %v4310 = vpop.f32.mrb[0].mxu0
    %v4311 = vpop.f32.mrb[0].mxu0
    %v4312 = vadd.f32 0.0, %v4311
    %v4313 = vpop.f32.mrb[0].mxu0
    %4314 = vmatprep.mubr.bf16.mxu0 0
    %4315 = vmatmul.mubr.bf16.gmra.mrb[0].mxu0 %v3561
    %v4316 = vpop.f32.mrb[0].mxu0
    %v4317 = vadd.f32 0.0, %v4316
    %v4318 = vpop.f32.mrb[0].mxu0
    %v4319 = vpop.f32.mrb[0].mxu0
    %v4320 = vadd.f32 0.0, %v4319
    %v4321 = vpop.f32.mrb[0].mxu0
    %4322 = vmatprep.mubr.bf16.mxu0 0
    %4323 = vmatmul.mubr.bf16.gmra.mrb[0].mxu0 %v3562
    %v4324 = vpop.f32.mrb[0].mxu0
    %v4325 = vadd.f32 0.0, %v4324
    %v4326 = vpop.f32.mrb[0].mxu0
    %v4327 = vpop.f32.mrb[0].mxu0
    %v4328 = vadd.f32 0.0, %v4327
    %v4329 = vpop.f32.mrb[0].mxu0
    %4330 = vmatprep.mubr.bf16.mxu0 0
    %4331 = vmatmul.mubr.bf16.gmra.mrb[0].mxu0 %v4045
    %v4332 = vpop.f32.mrb[0].mxu0
    %v4333 = vadd.f32 0.0, %v4332
    %v4334 = vpop.f32.mrb[0].mxu0
    %v4335 = vpop.f32.mrb[0].mxu0
    %v4336 = vadd.f32 0.0, %v4335
    %v4337 = vpop.f32.mrb[0].mxu0
    %4338 = vdwg.mxu0
    %v4339 = vadd.f32 %v4201, %v4309
    %v4340 = vadd.f32 %v4202, %v4312
    %v4341 = vadd.f32 %v4203, %v4317
    %v4342 = vadd.f32 %v4204, %v4320
    %v4343 = vadd.f32 %v4205, %v4325
    %v4344 = vadd.f32 %v4206, %v4328
    %v4345 = vadd.f32 %v4207, %v4333
    %v4346 = vadd.f32 %v4208, %v4336
    %v4347 = vld [vmem:[#allocation2 + $0x8] sm:$0xff]
    %v4348 = vld [vmem:[#allocation2 + $0x10] sm:$0xff]
    %v4349 = vld [vmem:[#allocation2 + $0x18] sm:$0xff]
    %v4350 = vld [vmem:[#allocation2 + $0x20] sm:$0xff]
    %v4351 = vld [vmem:[#allocation2 + $0x28] sm:$0x1]
    %s4352 = scalar_lea.vmem [#allocation8], 320
    %v4353 = vld [vmem:[%s4352] sm:$0xf]
    %v4354 = vld [vmem:[%s4352 + $0x4] sm:$0xf]
    %v4355 = vld [vmem:[%s4352 + $0x8] sm:$0xf]
    %v4356 = vld [vmem:[%s4352 + $0xc] sm:$0xf]
    %v4357 = vld [vmem:[%s4352 + $0x10] sm:$0xf]
    %v4358 = vld [vmem:[%s4352 + $0x14] sm:$0xf]
    %v4359 = vld [vmem:[%s4352 + $0x18] sm:$0xf]
    %v4360 = vld [vmem:[%s4352 + $0x1c] sm:$0xf]
    %v4361 = vld [vmem:[%s4352 + $0x20] sm:$0xf]
    %v4362 = vld [vmem:[%s4352 + $0x24] sm:$0xf]
    %v4363 = vld [vmem:[%s4352 + $0x28] sm:$0xf]
    %v4364 = vld [vmem:[%s4352 + $0x2c] sm:$0xf]
    %v4365 = vld [vmem:[%s4352 + $0x30] sm:$0xf]
    %v4366 = vld [vmem:[%s4352 + $0x34] sm:$0xf]
    %v4367 = vld [vmem:[%s4352 + $0x38] sm:$0xf]
    %v4368 = vld [vmem:[%s4352 + $0x3c] sm:$0xf]
    %v4370 = vshrl.u32 %v4347, 16
    %v4372 = vshll.u32 %v4347, 16
    %v4374 = vrot.slane %v4372, 1
    %v4375 = vor.u32 %v4370, %v4374
    %v4377 = vshll.u32 %v4348, 16
    %v4379 = vrot.slane %v4377, 1
    %v4380 = vsel %vm1183, %v4375, %v4379
    %v4381 = vshrl.u32 %v4348, 16
    %v4383 = vor.u32 %v4381, %v4379
    %v4385 = vshll.u32 %v4349, 16
    %v4387 = vrot.slane %v4385, 1
    %v4388 = vsel %vm1183, %v4383, %v4387
    %v4389 = vshrl.u32 %v4349, 16
    %v4391 = vor.u32 %v4389, %v4387
    %v4393 = vshll.u32 %v4350, 16
    %v4395 = vrot.slane %v4393, 1
    %v4396 = vsel %vm1183, %v4391, %v4395
    %v4397 = vshrl.u32 %v4350, 16
    %v4399 = vor.u32 %v4397, %v4395
    %v4401 = vshll.u32 %v4351, 16
    %v4403 = vrot.slane %v4401, 1
    %v4404 = vsel %vm1183, %v4399, %v4403
    %v4425 = vunpack.c.l.b16 %v4353
    %v4426 = vunpack.c.l.b16 %v4354
    %v4427 = vunpack.c.l.b16 %v4355
    %v4428 = vunpack.c.l.b16 %v4356
    %v4429 = vunpack.c.l.b16 %v4357
    %v4430 = vunpack.c.l.b16 %v4358
    %v4431 = vunpack.c.l.b16 %v4359
    %v4432 = vunpack.c.l.b16 %v4360
    %v4433 = vunpack.c.l.b16 %v4361
    %v4434 = vunpack.c.l.b16 %v4362
    %v4435 = vunpack.c.l.b16 %v4363
    %v4436 = vunpack.c.l.b16 %v4364
    %v4437 = vunpack.c.l.b16 %v4365
    %v4438 = vunpack.c.l.b16 %v4366
    %v4439 = vunpack.c.l.b16 %v4367
    %v4440 = vunpack.c.l.b16 %v4368
    %v4441 = vpack.c.b16 %v4426, %v4425
    %v4442 = vpack.c.b16 %v4428, %v4427
    %v4443 = vpack.c.b16 %v4430, %v4429
    %v4444 = vpack.c.b16 %v4432, %v4431
    %v4445 = vpack.c.b16 %v4434, %v4433
    %v4446 = vpack.c.b16 %v4436, %v4435
    %v4447 = vpack.c.b16 %v4438, %v4437
    %v4448 = vpack.c.b16 %v4440, %v4439
    %4457 = vmatprep.subr.bf16.mxu0 0
    %4458 = vmatpush1.bf16.msra.mxu0 %v4441
    %4459 = vmatprep.subr.bf16.mxu0 0
    %4460 = vmatpush1.bf16.msra.mxu0 %v4442
    %4461 = vmatprep.subr.bf16.mxu0 0
    %4462 = vmatpush1.bf16.msra.mxu0 %v4443
    %4463 = vmatprep.subr.bf16.mxu0 0
    %4464 = vmatpush1.bf16.msra.mxu0 %v4444
    %4465 = vmatprep.subr.bf16.mxu0 0
    %4466 = vmatpush1.bf16.msra.mxu0 %v4445
    %4467 = vmatprep.subr.bf16.mxu0 0
    %4468 = vmatpush1.bf16.msra.mxu0 %v4446
    %4469 = vmatprep.subr.bf16.mxu0 0
    %4470 = vmatpush1.bf16.msra.mxu0 %v4447
    %4471 = vmatprep.subr.bf16.mxu0 0
    %4472 = vmatpush1.bf16.msra.mxu0 %v4448
    %4473 = vmatprep.subr.bf16.mxu0 0
    %4474 = vmatpush1.bf16.msra.mxu0 0
    %4475 = vmatprep.subr.bf16.mxu0 0
    %4476 = vmatpush1.bf16.msra.mxu0 0
    %4477 = vmatprep.subr.bf16.mxu0 0
    %4478 = vmatpush1.bf16.msra.mxu0 0
    %4479 = vmatprep.subr.bf16.mxu0 0
    %4480 = vmatpush1.bf16.msra.mxu0 0
    %4481 = vmatprep.subr.bf16.mxu0 0
    %4482 = vmatpush1.bf16.msra.mxu0 0
    %4483 = vmatprep.subr.bf16.mxu0 0
    %4484 = vmatpush1.bf16.msra.mxu0 0
    %4485 = vmatprep.subr.bf16.mxu0 0
    %4486 = vmatpush1.bf16.msra.mxu0 0
    %4487 = vmatprep.subr.bf16.mxu0 0
    %4488 = vmatpush1.bf16.msra.mxu0 0
    %4489 = vmatprep.mubr.bf16.mxu0 0
    %4490 = vmatmul.mubr.bf16.gmra.mrb[0].mxu0 %v4380
    %v4491 = vpop.f32.mrb[0].mxu0
    %v4492 = vadd.f32 0.0, %v4491
    %v4493 = vpop.f32.mrb[0].mxu0
    %v4494 = vpop.f32.mrb[0].mxu0
    %v4495 = vadd.f32 0.0, %v4494
    %v4496 = vpop.f32.mrb[0].mxu0
    %4497 = vmatprep.mubr.bf16.mxu0 0
    %4498 = vmatmul.mubr.bf16.gmra.mrb[0].mxu0 %v4388
    %v4499 = vpop.f32.mrb[0].mxu0
    %v4500 = vadd.f32 0.0, %v4499
    %v4501 = vpop.f32.mrb[0].mxu0
    %v4502 = vpop.f32.mrb[0].mxu0
    %v4503 = vadd.f32 0.0, %v4502
    %v4504 = vpop.f32.mrb[0].mxu0
    %4505 = vmatprep.mubr.bf16.mxu0 0
    %4506 = vmatmul.mubr.bf16.gmra.mrb[0].mxu0 %v4396
    %v4507 = vpop.f32.mrb[0].mxu0
    %v4508 = vadd.f32 0.0, %v4507
    %v4509 = vpop.f32.mrb[0].mxu0
    %v4510 = vpop.f32.mrb[0].mxu0
    %v4511 = vadd.f32 0.0, %v4510
    %v4512 = vpop.f32.mrb[0].mxu0
    %4513 = vmatprep.mubr.bf16.mxu0 0
    %4514 = vmatmul.mubr.bf16.gmra.mrb[0].mxu0 %v4404
    %v4515 = vpop.f32.mrb[0].mxu0
    %v4516 = vadd.f32 0.0, %v4515
    %v4517 = vpop.f32.mrb[0].mxu0
    %v4518 = vpop.f32.mrb[0].mxu0
    %v4519 = vadd.f32 0.0, %v4518
    %v4520 = vpop.f32.mrb[0].mxu0
    %4521 = vdwg.mxu0
    %v4522 = vadd.f32 %v4339, %v4492
    %v4523 = vadd.f32 %v4340, %v4495
    %v4524 = vadd.f32 %v4341, %v4500
    %v4525 = vadd.f32 %v4342, %v4503
    %v4526 = vadd.f32 %v4343, %v4508
    %v4527 = vadd.f32 %v4344, %v4511
    %v4528 = vadd.f32 %v4345, %v4516
    %v4529 = vadd.f32 %v4346, %v4519
    %v4530 = vld [vmem:[#allocation2 + $0x8] sm:$0xfc]
    %v4531 = vld [vmem:[#allocation2 + $0x28] sm:$0x3]
    %s4532 = scalar_lea.vmem [#allocation8], 384
    %v4533 = vld [vmem:[%s4532] sm:$0xf]
    %v4534 = vld [vmem:[%s4532 + $0x4] sm:$0xf]
    %v4535 = vld [vmem:[%s4532 + $0x8] sm:$0xf]
    %v4536 = vld [vmem:[%s4532 + $0xc] sm:$0xf]
    %v4537 = vld [vmem:[%s4532 + $0x10] sm:$0xf]
    %v4538 = vld [vmem:[%s4532 + $0x14] sm:$0xf]
    %v4539 = vld [vmem:[%s4532 + $0x18] sm:$0xf]
    %v4540 = vld [vmem:[%s4532 + $0x1c] sm:$0xf]
    %v4541 = vld [vmem:[%s4532 + $0x20] sm:$0xf]
    %v4542 = vld [vmem:[%s4532 + $0x24] sm:$0xf]
    %v4543 = vld [vmem:[%s4532 + $0x28] sm:$0xf]
    %v4544 = vld [vmem:[%s4532 + $0x2c] sm:$0xf]
    %v4545 = vld [vmem:[%s4532 + $0x30] sm:$0xf]
    %v4546 = vld [vmem:[%s4532 + $0x34] sm:$0xf]
    %v4547 = vld [vmem:[%s4532 + $0x38] sm:$0xf]
    %v4548 = vld [vmem:[%s4532 + $0x3c] sm:$0xf]
    %v4554 = vrot.slane %v4530, 2
    %v4555 = vrot.slane %v4348, 2
    %v4556 = vsel %vm673, %v4554, %v4555
    %v4557 = vrot.slane %v4349, 2
    %v4558 = vsel %vm673, %v4555, %v4557
    %v4559 = vrot.slane %v4350, 2
    %v4560 = vsel %vm673, %v4557, %v4559
    %v4561 = vrot.slane %v4531, 2
    %v4562 = vsel %vm673, %v4559, %v4561
    %v4583 = vunpack.c.l.b16 %v4533
    %v4584 = vunpack.c.l.b16 %v4534
    %v4585 = vunpack.c.l.b16 %v4535
    %v4586 = vunpack.c.l.b16 %v4536
    %v4587 = vunpack.c.l.b16 %v4537
    %v4588 = vunpack.c.l.b16 %v4538
    %v4589 = vunpack.c.l.b16 %v4539
    %v4590 = vunpack.c.l.b16 %v4540
    %v4591 = vunpack.c.l.b16 %v4541
    %v4592 = vunpack.c.l.b16 %v4542
    %v4593 = vunpack.c.l.b16 %v4543
    %v4594 = vunpack.c.l.b16 %v4544
    %v4595 = vunpack.c.l.b16 %v4545
    %v4596 = vunpack.c.l.b16 %v4546
    %v4597 = vunpack.c.l.b16 %v4547
    %v4598 = vunpack.c.l.b16 %v4548
    %v4599 = vpack.c.b16 %v4584, %v4583
    %v4600 = vpack.c.b16 %v4586, %v4585
    %v4601 = vpack.c.b16 %v4588, %v4587
    %v4602 = vpack.c.b16 %v4590, %v4589
    %v4603 = vpack.c.b16 %v4592, %v4591
    %v4604 = vpack.c.b16 %v4594, %v4593
    %v4605 = vpack.c.b16 %v4596, %v4595
    %v4606 = vpack.c.b16 %v4598, %v4597
    %4615 = vmatprep.subr.bf16.mxu0 0
    %4616 = vmatpush1.bf16.msra.mxu0 %v4599
    %4617 = vmatprep.subr.bf16.mxu0 0
    %4618 = vmatpush1.bf16.msra.mxu0 %v4600
    %4619 = vmatprep.subr.bf16.mxu0 0
    %4620 = vmatpush1.bf16.msra.mxu0 %v4601
    %4621 = vmatprep.subr.bf16.mxu0 0
    %4622 = vmatpush1.bf16.msra.mxu0 %v4602
    %4623 = vmatprep.subr.bf16.mxu0 0
    %4624 = vmatpush1.bf16.msra.mxu0 %v4603
    %4625 = vmatprep.subr.bf16.mxu0 0
    %4626 = vmatpush1.bf16.msra.mxu0 %v4604
    %4627 = vmatprep.subr.bf16.mxu0 0
    %4628 = vmatpush1.bf16.msra.mxu0 %v4605
    %4629 = vmatprep.subr.bf16.mxu0 0
    %4630 = vmatpush1.bf16.msra.mxu0 %v4606
    %4631 = vmatprep.subr.bf16.mxu0 0
    %4632 = vmatpush1.bf16.msra.mxu0 0
    %4633 = vmatprep.subr.bf16.mxu0 0
    %4634 = vmatpush1.bf16.msra.mxu0 0
    %4635 = vmatprep.subr.bf16.mxu0 0
    %4636 = vmatpush1.bf16.msra.mxu0 0
    %4637 = vmatprep.subr.bf16.mxu0 0
    %4638 = vmatpush1.bf16.msra.mxu0 0
    %4639 = vmatprep.subr.bf16.mxu0 0
    %4640 = vmatpush1.bf16.msra.mxu0 0
    %4641 = vmatprep.subr.bf16.mxu0 0
    %4642 = vmatpush1.bf16.msra.mxu0 0
    %4643 = vmatprep.subr.bf16.mxu0 0
    %4644 = vmatpush1.bf16.msra.mxu0 0
    %4645 = vmatprep.subr.bf16.mxu0 0
    %4646 = vmatpush1.bf16.msra.mxu0 0
    %4647 = vmatprep.mubr.bf16.mxu0 0
    %4648 = vmatmul.mubr.bf16.gmra.mrb[0].mxu0 %v4556
    %v4649 = vpop.f32.mrb[0].mxu0
    %v4650 = vadd.f32 0.0, %v4649
    %v4651 = vpop.f32.mrb[0].mxu0
    %v4652 = vpop.f32.mrb[0].mxu0
    %v4653 = vadd.f32 0.0, %v4652
    %v4654 = vpop.f32.mrb[0].mxu0
    %4655 = vmatprep.mubr.bf16.mxu0 0
    %4656 = vmatmul.mubr.bf16.gmra.mrb[0].mxu0 %v4558
    %v4657 = vpop.f32.mrb[0].mxu0
    %v4658 = vadd.f32 0.0, %v4657
    %v4659 = vpop.f32.mrb[0].mxu0
    %v4660 = vpop.f32.mrb[0].mxu0
    %v4661 = vadd.f32 0.0, %v4660
    %v4662 = vpop.f32.mrb[0].mxu0
    %4663 = vmatprep.mubr.bf16.mxu0 0
    %4664 = vmatmul.mubr.bf16.gmra.mrb[0].mxu0 %v4560
    %v4665 = vpop.f32.mrb[0].mxu0
    %v4666 = vadd.f32 0.0, %v4665
    %v4667 = vpop.f32.mrb[0].mxu0
    %v4668 = vpop.f32.mrb[0].mxu0
    %v4669 = vadd.f32 0.0, %v4668
    %v4670 = vpop.f32.mrb[0].mxu0
    %4671 = vmatprep.mubr.bf16.mxu0 0
    %4672 = vmatmul.mubr.bf16.gmra.mrb[0].mxu0 %v4562
    %v4673 = vpop.f32.mrb[0].mxu0
    %v4674 = vadd.f32 0.0, %v4673
    %v4675 = vpop.f32.mrb[0].mxu0
    %v4676 = vpop.f32.mrb[0].mxu0
    %v4677 = vadd.f32 0.0, %v4676
    %v4678 = vpop.f32.mrb[0].mxu0
    %4679 = vdwg.mxu0
    %v4680 = vadd.f32 %v4522, %v4650
    %v4681 = vadd.f32 %v4523, %v4653
    %v4682 = vadd.f32 %v4524, %v4658
    %v4683 = vadd.f32 %v4525, %v4661
    %v4684 = vadd.f32 %v4526, %v4666
    %v4685 = vadd.f32 %v4527, %v4669
    %v4686 = vadd.f32 %v4528, %v4674
    %v4687 = vadd.f32 %v4529, %v4677
    %v4688 = vld [vmem:[#allocation2 + $0x28] sm:$0x7]
    %s4689 = scalar_lea.vmem [#allocation8], 448
    %v4690 = vld [vmem:[%s4689] sm:$0xf]
    %v4691 = vld [vmem:[%s4689 + $0x4] sm:$0xf]
    %v4692 = vld [vmem:[%s4689 + $0x8] sm:$0xf]
    %v4693 = vld [vmem:[%s4689 + $0xc] sm:$0xf]
    %v4694 = vld [vmem:[%s4689 + $0x10] sm:$0xf]
    %v4695 = vld [vmem:[%s4689 + $0x14] sm:$0xf]
    %v4696 = vld [vmem:[%s4689 + $0x18] sm:$0xf]
    %v4697 = vld [vmem:[%s4689 + $0x1c] sm:$0xf]
    %v4698 = vld [vmem:[%s4689 + $0x20] sm:$0xf]
    %v4699 = vld [vmem:[%s4689 + $0x24] sm:$0xf]
    %v4700 = vld [vmem:[%s4689 + $0x28] sm:$0xf]
    %v4701 = vld [vmem:[%s4689 + $0x2c] sm:$0xf]
    %v4702 = vld [vmem:[%s4689 + $0x30] sm:$0xf]
    %v4703 = vld [vmem:[%s4689 + $0x34] sm:$0xf]
    %v4704 = vld [vmem:[%s4689 + $0x38] sm:$0xf]
    %v4705 = vld [vmem:[%s4689 + $0x3c] sm:$0xf]
    %v4707 = vshrl.u32 %v4530, 16
    %v4709 = vrot.slane %v4707, 2
    %v4710 = vshll.u32 %v4530, 16
    %v4712 = vrot.slane %v4710, 3
    %v4713 = vor.u32 %v4709, %v4712
    %v4714 = vrot.slane %v4381, 2
    %v4715 = vrot.slane %v4377, 3
    %v4716 = vor.u32 %v4714, %v4715
    %v4717 = vsel %vm1525, %v4713, %v4716
    %v4718 = vrot.slane %v4389, 2
    %v4719 = vrot.slane %v4385, 3
    %v4720 = vor.u32 %v4718, %v4719
    %v4721 = vsel %vm1525, %v4716, %v4720
    %v4722 = vrot.slane %v4397, 2
    %v4723 = vrot.slane %v4393, 3
    %v4724 = vor.u32 %v4722, %v4723
    %v4725 = vsel %vm1525, %v4720, %v4724
    %v4727 = vshrl.u32 %v4688, 16
    %v4729 = vrot.slane %v4727, 2
    %v4730 = vshll.u32 %v4688, 16
    %v4732 = vrot.slane %v4730, 3
    %v4733 = vor.u32 %v4729, %v4732
    %v4734 = vsel %vm1525, %v4724, %v4733
    %v4755 = vunpack.c.l.b16 %v4690
    %v4756 = vunpack.c.l.b16 %v4691
    %v4757 = vunpack.c.l.b16 %v4692
    %v4758 = vunpack.c.l.b16 %v4693
    %v4759 = vunpack.c.l.b16 %v4694
    %v4760 = vunpack.c.l.b16 %v4695
    %v4761 = vunpack.c.l.b16 %v4696
    %v4762 = vunpack.c.l.b16 %v4697
    %v4763 = vunpack.c.l.b16 %v4698
    %v4764 = vunpack.c.l.b16 %v4699
    %v4765 = vunpack.c.l.b16 %v4700
    %v4766 = vunpack.c.l.b16 %v4701
    %v4767 = vunpack.c.l.b16 %v4702
    %v4768 = vunpack.c.l.b16 %v4703
    %v4769 = vunpack.c.l.b16 %v4704
    %v4770 = vunpack.c.l.b16 %v4705
    %v4771 = vpack.c.b16 %v4756, %v4755
    %v4772 = vpack.c.b16 %v4758, %v4757
    %v4773 = vpack.c.b16 %v4760, %v4759
    %v4774 = vpack.c.b16 %v4762, %v4761
    %v4775 = vpack.c.b16 %v4764, %v4763
    %v4776 = vpack.c.b16 %v4766, %v4765
    %v4777 = vpack.c.b16 %v4768, %v4767
    %v4778 = vpack.c.b16 %v4770, %v4769
    %4787 = vmatprep.subr.bf16.mxu0 0
    %4788 = vmatpush1.bf16.msra.mxu0 %v4771
    %4789 = vmatprep.subr.bf16.mxu0 0
    %4790 = vmatpush1.bf16.msra.mxu0 %v4772
    %4791 = vmatprep.subr.bf16.mxu0 0
    %4792 = vmatpush1.bf16.msra.mxu0 %v4773
    %4793 = vmatprep.subr.bf16.mxu0 0
    %4794 = vmatpush1.bf16.msra.mxu0 %v4774
    %4795 = vmatprep.subr.bf16.mxu0 0
    %4796 = vmatpush1.bf16.msra.mxu0 %v4775
    %4797 = vmatprep.subr.bf16.mxu0 0
    %4798 = vmatpush1.bf16.msra.mxu0 %v4776
    %4799 = vmatprep.subr.bf16.mxu0 0
    %4800 = vmatpush1.bf16.msra.mxu0 %v4777
    %4801 = vmatprep.subr.bf16.mxu0 0
    %4802 = vmatpush1.bf16.msra.mxu0 %v4778
    %4803 = vmatprep.subr.bf16.mxu0 0
    %4804 = vmatpush1.bf16.msra.mxu0 0
    %4805 = vmatprep.subr.bf16.mxu0 0
    %4806 = vmatpush1.bf16.msra.mxu0 0
    %4807 = vmatprep.subr.bf16.mxu0 0
    %4808 = vmatpush1.bf16.msra.mxu0 0
    %4809 = vmatprep.subr.bf16.mxu0 0
    %4810 = vmatpush1.bf16.msra.mxu0 0
    %4811 = vmatprep.subr.bf16.mxu0 0
    %4812 = vmatpush1.bf16.msra.mxu0 0
    %4813 = vmatprep.subr.bf16.mxu0 0
    %4814 = vmatpush1.bf16.msra.mxu0 0
    %4815 = vmatprep.subr.bf16.mxu0 0
    %4816 = vmatpush1.bf16.msra.mxu0 0
    %4817 = vmatprep.subr.bf16.mxu0 0
    %4818 = vmatpush1.bf16.msra.mxu0 0
    %4819 = vmatprep.mubr.bf16.mxu0 0
    %4820 = vmatmul.mubr.bf16.gmra.mrb[0].mxu0 %v4717
    %v4821 = vpop.f32.mrb[0].mxu0
    %v4822 = vadd.f32 0.0, %v4821
    %v4823 = vpop.f32.mrb[0].mxu0
    %v4824 = vpop.f32.mrb[0].mxu0
    %v4825 = vadd.f32 0.0, %v4824
    %v4826 = vpop.f32.mrb[0].mxu0
    %4827 = vmatprep.mubr.bf16.mxu0 0
    %4828 = vmatmul.mubr.bf16.gmra.mrb[0].mxu0 %v4721
    %v4829 = vpop.f32.mrb[0].mxu0
    %v4830 = vadd.f32 0.0, %v4829
    %v4831 = vpop.f32.mrb[0].mxu0
    %v4832 = vpop.f32.mrb[0].mxu0
    %v4833 = vadd.f32 0.0, %v4832
    %v4834 = vpop.f32.mrb[0].mxu0
    %4835 = vmatprep.mubr.bf16.mxu0 0
    %4836 = vmatmul.mubr.bf16.gmra.mrb[0].mxu0 %v4725
    %v4837 = vpop.f32.mrb[0].mxu0
    %v4838 = vadd.f32 0.0, %v4837
    %v4839 = vpop.f32.mrb[0].mxu0
    %v4840 = vpop.f32.mrb[0].mxu0
    %v4841 = vadd.f32 0.0, %v4840
    %v4842 = vpop.f32.mrb[0].mxu0
    %4843 = vmatprep.mubr.bf16.mxu0 0
    %4844 = vmatmul.mubr.bf16.gmra.mrb[0].mxu0 %v4734
    %v4845 = vpop.f32.mrb[0].mxu0
    %v4846 = vadd.f32 0.0, %v4845
    %v4847 = vpop.f32.mrb[0].mxu0
    %v4848 = vpop.f32.mrb[0].mxu0
    %v4849 = vadd.f32 0.0, %v4848
    %v4850 = vpop.f32.mrb[0].mxu0
    %4851 = vdwg.mxu0
    %v4852 = vadd.f32 %v4680, %v4822
    %v4853 = vadd.f32 %v4681, %v4825
    %v4854 = vadd.f32 %v4682, %v4830
    %v4855 = vadd.f32 %v4683, %v4833
    %v4856 = vadd.f32 %v4684, %v4838
    %v4857 = vadd.f32 %v4685, %v4841
    %v4858 = vadd.f32 %v4686, %v4846
    %v4859 = vadd.f32 %v4687, %v4849
    %v4860 = vld [vmem:[#allocation2 + $0x8] sm:$0xf8]
    %s4861 = scalar_lea.vmem [#allocation8], 512
    %v4862 = vld [vmem:[%s4861] sm:$0xf]
    %v4863 = vld [vmem:[%s4861 + $0x4] sm:$0xf]
    %v4864 = vld [vmem:[%s4861 + $0x8] sm:$0xf]
    %v4865 = vld [vmem:[%s4861 + $0xc] sm:$0xf]
    %v4866 = vld [vmem:[%s4861 + $0x10] sm:$0xf]
    %v4867 = vld [vmem:[%s4861 + $0x14] sm:$0xf]
    %v4868 = vld [vmem:[%s4861 + $0x18] sm:$0xf]
    %v4869 = vld [vmem:[%s4861 + $0x1c] sm:$0xf]
    %v4870 = vld [vmem:[%s4861 + $0x20] sm:$0xf]
    %v4871 = vld [vmem:[%s4861 + $0x24] sm:$0xf]
    %v4872 = vld [vmem:[%s4861 + $0x28] sm:$0xf]
    %v4873 = vld [vmem:[%s4861 + $0x2c] sm:$0xf]
    %v4874 = vld [vmem:[%s4861 + $0x30] sm:$0xf]
    %v4875 = vld [vmem:[%s4861 + $0x34] sm:$0xf]
    %v4876 = vld [vmem:[%s4861 + $0x38] sm:$0xf]
    %v4877 = vld [vmem:[%s4861 + $0x3c] sm:$0xf]
    %v4880 = vrot.slane %v4860, 3
    %v4881 = vrot.slane %v4348, 3
    %v4882 = vsel %vm1701, %v4880, %v4881
    %v4883 = vrot.slane %v4349, 3
    %v4884 = vsel %vm1701, %v4881, %v4883
    %v4885 = vrot.slane %v4350, 3
    %v4886 = vsel %vm1701, %v4883, %v4885
    %v4887 = vrot.slane %v4688, 3
    %v4888 = vsel %vm1701, %v4885, %v4887
    %v4909 = vunpack.c.l.b16 %v4862
    %v4910 = vunpack.c.l.b16 %v4863
    %v4911 = vunpack.c.l.b16 %v4864
    %v4912 = vunpack.c.l.b16 %v4865
    %v4913 = vunpack.c.l.b16 %v4866
    %v4914 = vunpack.c.l.b16 %v4867
    %v4915 = vunpack.c.l.b16 %v4868
    %v4916 = vunpack.c.l.b16 %v4869
    %v4917 = vunpack.c.l.b16 %v4870
    %v4918 = vunpack.c.l.b16 %v4871
    %v4919 = vunpack.c.l.b16 %v4872
    %v4920 = vunpack.c.l.b16 %v4873
    %v4921 = vunpack.c.l.b16 %v4874
    %v4922 = vunpack.c.l.b16 %v4875
    %v4923 = vunpack.c.l.b16 %v4876
    %v4924 = vunpack.c.l.b16 %v4877
    %v4925 = vpack.c.b16 %v4910, %v4909
    %v4926 = vpack.c.b16 %v4912, %v4911
    %v4927 = vpack.c.b16 %v4914, %v4913
    %v4928 = vpack.c.b16 %v4916, %v4915
    %v4929 = vpack.c.b16 %v4918, %v4917
    %v4930 = vpack.c.b16 %v4920, %v4919
    %v4931 = vpack.c.b16 %v4922, %v4921
    %v4932 = vpack.c.b16 %v4924, %v4923
    %4941 = vmatprep.subr.bf16.mxu0 0
    %4942 = vmatpush1.bf16.msra.mxu0 %v4925
    %4943 = vmatprep.subr.bf16.mxu0 0
    %4944 = vmatpush1.bf16.msra.mxu0 %v4926
    %4945 = vmatprep.subr.bf16.mxu0 0
    %4946 = vmatpush1.bf16.msra.mxu0 %v4927
    %4947 = vmatprep.subr.bf16.mxu0 0
    %4948 = vmatpush1.bf16.msra.mxu0 %v4928
    %4949 = vmatprep.subr.bf16.mxu0 0
    %4950 = vmatpush1.bf16.msra.mxu0 %v4929
    %4951 = vmatprep.subr.bf16.mxu0 0
    %4952 = vmatpush1.bf16.msra.mxu0 %v4930
    %4953 = vmatprep.subr.bf16.mxu0 0
    %4954 = vmatpush1.bf16.msra.mxu0 %v4931
    %4955 = vmatprep.subr.bf16.mxu0 0
    %4956 = vmatpush1.bf16.msra.mxu0 %v4932
    %4957 = vmatprep.subr.bf16.mxu0 0
    %4958 = vmatpush1.bf16.msra.mxu0 0
    %4959 = vmatprep.subr.bf16.mxu0 0
    %4960 = vmatpush1.bf16.msra.mxu0 0
    %4961 = vmatprep.subr.bf16.mxu0 0
    %4962 = vmatpush1.bf16.msra.mxu0 0
    %4963 = vmatprep.subr.bf16.mxu0 0
    %4964 = vmatpush1.bf16.msra.mxu0 0
    %4965 = vmatprep.subr.bf16.mxu0 0
    %4966 = vmatpush1.bf16.msra.mxu0 0
    %4967 = vmatprep.subr.bf16.mxu0 0
    %4968 = vmatpush1.bf16.msra.mxu0 0
    %4969 = vmatprep.subr.bf16.mxu0 0
    %4970 = vmatpush1.bf16.msra.mxu0 0
    %4971 = vmatprep.subr.bf16.mxu0 0
    %4972 = vmatpush1.bf16.msra.mxu0 0
    %4973 = vmatprep.mubr.bf16.mxu0 0
    %4974 = vmatmul.mubr.bf16.gmra.mrb[0].mxu0 %v4882
    %v4975 = vpop.f32.mrb[0].mxu0
    %v4976 = vadd.f32 0.0, %v4975
    %v4977 = vpop.f32.mrb[0].mxu0
    %v4978 = vpop.f32.mrb[0].mxu0
    %v4979 = vadd.f32 0.0, %v4978
    %v4980 = vpop.f32.mrb[0].mxu0
    %4981 = vmatprep.mubr.bf16.mxu0 0
    %4982 = vmatmul.mubr.bf16.gmra.mrb[0].mxu0 %v4884
    %v4983 = vpop.f32.mrb[0].mxu0
    %v4984 = vadd.f32 0.0, %v4983
    %v4985 = vpop.f32.mrb[0].mxu0
    %v4986 = vpop.f32.mrb[0].mxu0
    %v4987 = vadd.f32 0.0, %v4986
    %v4988 = vpop.f32.mrb[0].mxu0
    %4989 = vmatprep.mubr.bf16.mxu0 0
    %4990 = vmatmul.mubr.bf16.gmra.mrb[0].mxu0 %v4886
    %v4991 = vpop.f32.mrb[0].mxu0
    %v4992 = vadd.f32 0.0, %v4991
    %v4993 = vpop.f32.mrb[0].mxu0
    %v4994 = vpop.f32.mrb[0].mxu0
    %v4995 = vadd.f32 0.0, %v4994
    %v4996 = vpop.f32.mrb[0].mxu0
    %4997 = vmatprep.mubr.bf16.mxu0 0
    %4998 = vmatmul.mubr.bf16.gmra.mrb[0].mxu0 %v4888
    %v4999 = vpop.f32.mrb[0].mxu0
    %v5000 = vadd.f32 0.0, %v4999
    %v5001 = vpop.f32.mrb[0].mxu0
    %v5002 = vpop.f32.mrb[0].mxu0
    %v5003 = vadd.f32 0.0, %v5002
    %v5004 = vpop.f32.mrb[0].mxu0
    %5005 = vdwg.mxu0
    %v5006 = vadd.f32 %v4852, %v4976
    %v5007 = vadd.f32 %v4853, %v4979
    %v5008 = vadd.f32 %v4854, %v4984
    %v5009 = vadd.f32 %v4855, %v4987
    %v5010 = vadd.f32 %v4856, %v4992
    %v5011 = vadd.f32 %v4857, %v4995
    %v5012 = vadd.f32 %v4858, %v5000
    %v5013 = vadd.f32 %v4859, %v5003
    %v5014 = vld [vmem:[%s10] sm:$0x1]
    %v5016 = vlaneseq
    %v5017 = vshrl.u32 %v5016, 7
    %v5018 = vsub.s32 0, %v5017
    %v5019 = vrot.slane %v5014, %v5018
    %v5021 = vadd.f32 %v5006, %v5019
    %v5022 = vadd.f32 %v5007, %v5019
    %v5023 = vadd.f32 %v5008, %v5019
    %v5024 = vadd.f32 %v5009, %v5019
    %v5025 = vadd.f32 %v5010, %v5019
    %v5026 = vadd.f32 %v5011, %v5019
    %v5027 = vadd.f32 %v5012, %v5019
    %v5028 = vadd.f32 %v5013, %v5019
    %v5029 = vmax.f32 %v5021, 0.0
    %v5030 = vmax.f32 %v5022, 0.0
    %v5031 = vmax.f32 %v5023, 0.0
    %v5032 = vmax.f32 %v5024, 0.0
    %v5033 = vmax.f32 %v5025, 0.0
    %v5034 = vmax.f32 %v5026, 0.0
    %v5035 = vmax.f32 %v5027, 0.0
    %v5036 = vmax.f32 %v5028, 0.0
    %v5037 = vmul.f32 %v5029, %v286
    %v5038 = vmul.f32 %v5030, %v287
    %v5039 = vmul.f32 %v5031, %v288
    %v5040 = vmul.f32 %v5032, %v289
    %v5041 = vmul.f32 %v5033, %v290
    %v5042 = vmul.f32 %v5034, %v291
    %v5043 = vmul.f32 %v5035, %v292
    %v5044 = vmul.f32 %v5036, %v293
    %v5045 = vadd.f32 %v5037, %v5038
    %v5046 = vadd.f32 %v5045, %v5039
    %v5047 = vadd.f32 %v5046, %v5040
    %v5048 = vadd.f32 %v5047, %v5041
    %v5049 = vadd.f32 %v5048, %v5042
    %v5050 = vadd.f32 %v5049, %v5043
    %v5051 = vadd.f32 %v5050, %v5044
    %v5052 = vrot.slane %v5051, 4
    %v5053 = vadd.f32 %v5051, %v5052
    %v5054 = vrot.slane %v5053, 2
    %v5055 = vadd.f32 %v5053, %v5054
    %v5056 = vrot.slane %v5055, 1
    %v5057 = vadd.f32 %v5055, %v5056
    %v5058 = vmul.f32 %v5057, 0.041666668
    %v5059 = vsub.f32 %v5037, %v5058
    %v5060 = vsub.f32 %v5038, %v5058
    %v5061 = vsub.f32 %v5039, %v5058
    %v5062 = vsub.f32 %v5040, %v5058
    %v5063 = vsub.f32 %v5041, %v5058
    %v5064 = vsub.f32 %v5042, %v5058
    %v5065 = vsub.f32 %v5043, %v5058
    %v5066 = vsub.f32 %v5044, %v5058
    %v5067 = vmul.f32 %v5059, %v286
    %v5068 = vmul.f32 %v5060, %v287
    %v5069 = vmul.f32 %v5061, %v288
    %v5070 = vmul.f32 %v5062, %v289
    %v5071 = vmul.f32 %v5063, %v290
    %v5072 = vmul.f32 %v5064, %v291
    %v5073 = vmul.f32 %v5065, %v292
    %v5074 = vmul.f32 %v5066, %v293
    %v5075 = vmul.f32 %v5067, %v5067
    %v5076 = vmul.f32 %v5068, %v5068
    %v5077 = vmul.f32 %v5069, %v5069
    %v5078 = vmul.f32 %v5070, %v5070
    %v5079 = vmul.f32 %v5071, %v5071
    %v5080 = vmul.f32 %v5072, %v5072
    %v5081 = vmul.f32 %v5073, %v5073
    %v5082 = vmul.f32 %v5074, %v5074
    %v5083 = vadd.f32 %v5075, %v5076
    %v5084 = vadd.f32 %v5083, %v5077
    %v5085 = vadd.f32 %v5084, %v5078
    %v5086 = vadd.f32 %v5085, %v5079
    %v5087 = vadd.f32 %v5086, %v5080
    %v5088 = vadd.f32 %v5087, %v5081
    %v5089 = vadd.f32 %v5088, %v5082
    %v5090 = vrot.slane %v5089, 4
    %v5091 = vadd.f32 %v5089, %v5090
    %v5092 = vrot.slane %v5091, 2
    %v5093 = vadd.f32 %v5091, %v5092
    %v5094 = vrot.slane %v5093, 1
    %v5095 = vadd.f32 %v5093, %v5094
    %v5096 = vmul.f32 %v5095, 0.041666668
    %v5097 = vld [vmem:[%s11] sm:$0x1]
    %v5098 = vadd.f32 %v5096, 1e-05
    %v5099 = vrsqrt.pop %v5098
    %v5100 = vmul.f32 %v5097, %v5099
    %v5102 = vlaneseq
    %v5103 = vshrl.u32 %v5102, 7
    %v5104 = vsub.s32 0, %v5103
    %v5105 = vrot.slane %v5100, %v5104
    %v5107 = vmul.f32 %v5067, %v5105
    %v5108 = vmul.f32 %v5068, %v5105
    %v5109 = vmul.f32 %v5069, %v5105
    %v5110 = vmul.f32 %v5070, %v5105
    %v5111 = vmul.f32 %v5071, %v5105
    %v5112 = vmul.f32 %v5072, %v5105
    %v5113 = vmul.f32 %v5073, %v5105
    %v5114 = vmul.f32 %v5074, %v5105
    %v5115 = vld [vmem:[%s12] sm:$0x1]
    %v5117 = vlaneseq
    %v5118 = vshrl.u32 %v5117, 7
    %v5119 = vsub.s32 0, %v5118
    %v5120 = vrot.slane %v5115, %v5119
    %v5122 = vadd.f32 %v5107, %v5120
    %v5123 = vadd.f32 %v5108, %v5120
    %v5124 = vadd.f32 %v5109, %v5120
    %v5125 = vadd.f32 %v5110, %v5120
    %v5126 = vadd.f32 %v5111, %v5120
    %v5127 = vadd.f32 %v5112, %v5120
    %v5128 = vadd.f32 %v5113, %v5120
    %v5129 = vadd.f32 %v5114, %v5120
    %v5130 = vmul.f32 %v5122, %v286
    %v5131 = vmul.f32 %v5123, %v287
    %v5132 = vmul.f32 %v5124, %v288
    %v5133 = vmul.f32 %v5125, %v289
    %v5134 = vmul.f32 %v5126, %v290
    %v5135 = vmul.f32 %v5127, %v291
    %v5136 = vmul.f32 %v5128, %v292
    %v5137 = vmul.f32 %v5129, %v293
    %v5138 = vpack.c.bf16 %v5131, %v5130
    %v5139 = vpack.c.bf16 %v5133, %v5132
    %v5140 = vpack.c.bf16 %v5135, %v5134
    %v5141 = vpack.c.bf16 %v5137, %v5136
    %5142 = vst [vmem:[#allocation2 + $0x8] sm:$0xff] %v5138
    %5143 = vst [vmem:[#allocation2 + $0x10] sm:$0xff] %v5139
    %5144 = vst [vmem:[#allocation2 + $0x18] sm:$0xff] %v5140
    %5145 = vst [vmem:[#allocation2 + $0x20] sm:$0xff] %v5141
    %v5146 = vld [vmem:[#allocation2 + $0x8] sm:$0x8]
    %v5147 = vld [vmem:[#allocation9] sm:$0xf]
    %v5148 = vld [vmem:[#allocation9 + $0x4] sm:$0xf]
    %v5149 = vld [vmem:[#allocation9 + $0x8] sm:$0xf]
    %v5150 = vld [vmem:[#allocation9 + $0xc] sm:$0xf]
    %v5151 = vld [vmem:[#allocation9 + $0x10] sm:$0xf]
    %v5152 = vld [vmem:[#allocation9 + $0x14] sm:$0xf]
    %v5153 = vld [vmem:[#allocation9 + $0x18] sm:$0xf]
    %v5154 = vld [vmem:[#allocation9 + $0x1c] sm:$0xf]
    %v5155 = vld [vmem:[#allocation9 + $0x20] sm:$0xf]
    %v5156 = vld [vmem:[#allocation9 + $0x24] sm:$0xf]
    %v5157 = vld [vmem:[#allocation9 + $0x28] sm:$0xf]
    %v5158 = vld [vmem:[#allocation9 + $0x2c] sm:$0xf]
    %v5159 = vld [vmem:[#allocation9 + $0x30] sm:$0xf]
    %v5160 = vld [vmem:[#allocation9 + $0x34] sm:$0xf]
    %v5161 = vld [vmem:[#allocation9 + $0x38] sm:$0xf]
    %v5162 = vld [vmem:[#allocation9 + $0x3c] sm:$0xf]
    %s5163 = scalar_lea.vmem [#allocation9], 64
    %v5164 = vld [vmem:[%s5163] sm:$0xf]
    %v5165 = vld [vmem:[%s5163 + $0x4] sm:$0xf]
    %v5166 = vld [vmem:[%s5163 + $0x8] sm:$0xf]
    %v5167 = vld [vmem:[%s5163 + $0xc] sm:$0xf]
    %v5168 = vld [vmem:[%s5163 + $0x10] sm:$0xf]
    %v5169 = vld [vmem:[%s5163 + $0x14] sm:$0xf]
    %v5170 = vld [vmem:[%s5163 + $0x18] sm:$0xf]
    %v5171 = vld [vmem:[%s5163 + $0x1c] sm:$0xf]
    %v5172 = vld [vmem:[%s5163 + $0x20] sm:$0xf]
    %v5173 = vld [vmem:[%s5163 + $0x24] sm:$0xf]
    %v5174 = vld [vmem:[%s5163 + $0x28] sm:$0xf]
    %v5175 = vld [vmem:[%s5163 + $0x2c] sm:$0xf]
    %v5176 = vld [vmem:[%s5163 + $0x30] sm:$0xf]
    %v5177 = vld [vmem:[%s5163 + $0x34] sm:$0xf]
    %v5178 = vld [vmem:[%s5163 + $0x38] sm:$0xf]
    %v5179 = vld [vmem:[%s5163 + $0x3c] sm:$0xf]
    %v5181 = vshrl.u32 %v5146, 16
    %v5183 = vrot.slane %v5181, 3
    %v5201 = vunpack.c.l.b16 %v5164
    %v5202 = vunpack.c.l.b16 %v5165
    %v5203 = vunpack.c.l.b16 %v5166
    %v5204 = vunpack.c.l.b16 %v5167
    %v5205 = vunpack.c.l.b16 %v5168
    %v5206 = vunpack.c.l.b16 %v5169
    %v5207 = vunpack.c.l.b16 %v5170
    %v5208 = vunpack.c.l.b16 %v5171
    %v5209 = vunpack.c.l.b16 %v5172
    %v5210 = vunpack.c.l.b16 %v5173
    %v5211 = vunpack.c.l.b16 %v5174
    %v5212 = vunpack.c.l.b16 %v5175
    %v5213 = vunpack.c.l.b16 %v5176
    %v5214 = vunpack.c.l.b16 %v5177
    %v5215 = vunpack.c.l.b16 %v5178
    %v5216 = vunpack.c.l.b16 %v5179
    %v5217 = vpack.c.b16 %v5202, %v5201
    %v5218 = vpack.c.b16 %v5204, %v5203
    %v5219 = vpack.c.b16 %v5206, %v5205
    %v5220 = vpack.c.b16 %v5208, %v5207
    %v5221 = vpack.c.b16 %v5210, %v5209
    %v5222 = vpack.c.b16 %v5212, %v5211
    %v5223 = vpack.c.b16 %v5214, %v5213
    %v5224 = vpack.c.b16 %v5216, %v5215
    %5233 = vmatprep.subr.bf16.mxu0 0
    %5234 = vmatpush1.bf16.msra.mxu0 %v5217
    %5235 = vmatprep.subr.bf16.mxu0 0
    %5236 = vmatpush1.bf16.msra.mxu0 %v5218
    %5237 = vmatprep.subr.bf16.mxu0 0
    %5238 = vmatpush1.bf16.msra.mxu0 %v5219
    %5239 = vmatprep.subr.bf16.mxu0 0
    %5240 = vmatpush1.bf16.msra.mxu0 %v5220
    %5241 = vmatprep.subr.bf16.mxu0 0
    %5242 = vmatpush1.bf16.msra.mxu0 %v5221
    %5243 = vmatprep.subr.bf16.mxu0 0
    %5244 = vmatpush1.bf16.msra.mxu0 %v5222
    %5245 = vmatprep.subr.bf16.mxu0 0
    %5246 = vmatpush1.bf16.msra.mxu0 %v5223
    %5247 = vmatprep.subr.bf16.mxu0 0
    %5248 = vmatpush1.bf16.msra.mxu0 %v5224
    %5249 = vmatprep.subr.bf16.mxu0 0
    %5250 = vmatpush1.bf16.msra.mxu0 0
    %5251 = vmatprep.subr.bf16.mxu0 0
    %5252 = vmatpush1.bf16.msra.mxu0 0
    %5253 = vmatprep.subr.bf16.mxu0 0
    %5254 = vmatpush1.bf16.msra.mxu0 0
    %5255 = vmatprep.subr.bf16.mxu0 0
    %5256 = vmatpush1.bf16.msra.mxu0 0
    %5257 = vmatprep.subr.bf16.mxu0 0
    %5258 = vmatpush1.bf16.msra.mxu0 0
    %5259 = vmatprep.subr.bf16.mxu0 0
    %5260 = vmatpush1.bf16.msra.mxu0 0
    %5261 = vmatprep.subr.bf16.mxu0 0
    %5262 = vmatpush1.bf16.msra.mxu0 0
    %5263 = vmatprep.subr.bf16.mxu0 0
    %5264 = vmatpush1.bf16.msra.mxu0 0
    %5265 = vmatprep.mubr.bf16.mxu0 0
    %5266 = vmatmul.mubr.bf16.gmra.mrb[0].mxu0 %v5183
    %v5267 = vpop.f32.mrb[0].mxu0
    %v5268 = vadd.f32 0.0, %v5267
    %v5269 = vpop.f32.mrb[0].mxu0
    %v5270 = vpop.f32.mrb[0].mxu0
    %v5271 = vpop.f32.mrb[0].mxu0
    %5272 = vdwg.mxu0
    %v5274 = vrot.slane %v5146, 3
    %v5292 = vunpack.c.l.b16 %v5147
    %v5293 = vunpack.c.l.b16 %v5148
    %v5294 = vunpack.c.l.b16 %v5149
    %v5295 = vunpack.c.l.b16 %v5150
    %v5296 = vunpack.c.l.b16 %v5151
    %v5297 = vunpack.c.l.b16 %v5152
    %v5298 = vunpack.c.l.b16 %v5153
    %v5299 = vunpack.c.l.b16 %v5154
    %v5300 = vunpack.c.l.b16 %v5155
    %v5301 = vunpack.c.l.b16 %v5156
    %v5302 = vunpack.c.l.b16 %v5157
    %v5303 = vunpack.c.l.b16 %v5158
    %v5304 = vunpack.c.l.b16 %v5159
    %v5305 = vunpack.c.l.b16 %v5160
    %v5306 = vunpack.c.l.b16 %v5161
    %v5307 = vunpack.c.l.b16 %v5162
    %v5308 = vpack.c.b16 %v5293, %v5292
    %v5309 = vpack.c.b16 %v5295, %v5294
    %v5310 = vpack.c.b16 %v5297, %v5296
    %v5311 = vpack.c.b16 %v5299, %v5298
    %v5312 = vpack.c.b16 %v5301, %v5300
    %v5313 = vpack.c.b16 %v5303, %v5302
    %v5314 = vpack.c.b16 %v5305, %v5304
    %v5315 = vpack.c.b16 %v5307, %v5306
    %5324 = vmatprep.subr.bf16.mxu0 0
    %5325 = vmatpush1.bf16.msra.mxu0 %v5308
    %5326 = vmatprep.subr.bf16.mxu0 0
    %5327 = vmatpush1.bf16.msra.mxu0 %v5309
    %5328 = vmatprep.subr.bf16.mxu0 0
    %5329 = vmatpush1.bf16.msra.mxu0 %v5310
    %5330 = vmatprep.subr.bf16.mxu0 0
    %5331 = vmatpush1.bf16.msra.mxu0 %v5311
    %5332 = vmatprep.subr.bf16.mxu0 0
    %5333 = vmatpush1.bf16.msra.mxu0 %v5312
    %5334 = vmatprep.subr.bf16.mxu0 0
    %5335 = vmatpush1.bf16.msra.mxu0 %v5313
    %5336 = vmatprep.subr.bf16.mxu0 0
    %5337 = vmatpush1.bf16.msra.mxu0 %v5314
    %5338 = vmatprep.subr.bf16.mxu0 0
    %5339 = vmatpush1.bf16.msra.mxu0 %v5315
    %5340 = vmatprep.subr.bf16.mxu0 0
    %5341 = vmatpush1.bf16.msra.mxu0 0
    %5342 = vmatprep.subr.bf16.mxu0 0
    %5343 = vmatpush1.bf16.msra.mxu0 0
    %5344 = vmatprep.subr.bf16.mxu0 0
    %5345 = vmatpush1.bf16.msra.mxu0 0
    %5346 = vmatprep.subr.bf16.mxu0 0
    %5347 = vmatpush1.bf16.msra.mxu0 0
    %5348 = vmatprep.subr.bf16.mxu0 0
    %5349 = vmatpush1.bf16.msra.mxu0 0
    %5350 = vmatprep.subr.bf16.mxu0 0
    %5351 = vmatpush1.bf16.msra.mxu0 0
    %5352 = vmatprep.subr.bf16.mxu0 0
    %5353 = vmatpush1.bf16.msra.mxu0 0
    %5354 = vmatprep.subr.bf16.mxu0 0
    %5355 = vmatpush1.bf16.msra.mxu0 0
    %5356 = vmatprep.mubr.bf16.mxu0 0
    %5357 = vmatmul.mubr.bf16.gmra.mrb[0].mxu0 %v5274
    %v5358 = vpop.f32.mrb[0].mxu0
    %v5359 = vadd.f32 %v5268, %v5358
    %v5360 = vpop.f32.mrb[0].mxu0
    %v5361 = vpop.f32.mrb[0].mxu0
    %v5362 = vpop.f32.mrb[0].mxu0
    %5363 = vdwg.mxu0
    %v5364 = vld [vmem:[#allocation2 + $0x8] sm:$0x10]
    %s5365 = scalar_lea.vmem [#allocation9], 128
    %v5366 = vld [vmem:[%s5365] sm:$0xf]
    %v5367 = vld [vmem:[%s5365 + $0x4] sm:$0xf]
    %v5368 = vld [vmem:[%s5365 + $0x8] sm:$0xf]
    %v5369 = vld [vmem:[%s5365 + $0xc] sm:$0xf]
    %v5370 = vld [vmem:[%s5365 + $0x10] sm:$0xf]
    %v5371 = vld [vmem:[%s5365 + $0x14] sm:$0xf]
    %v5372 = vld [vmem:[%s5365 + $0x18] sm:$0xf]
    %v5373 = vld [vmem:[%s5365 + $0x1c] sm:$0xf]
    %v5374 = vld [vmem:[%s5365 + $0x20] sm:$0xf]
    %v5375 = vld [vmem:[%s5365 + $0x24] sm:$0xf]
    %v5376 = vld [vmem:[%s5365 + $0x28] sm:$0xf]
    %v5377 = vld [vmem:[%s5365 + $0x2c] sm:$0xf]
    %v5378 = vld [vmem:[%s5365 + $0x30] sm:$0xf]
    %v5379 = vld [vmem:[%s5365 + $0x34] sm:$0xf]
    %v5380 = vld [vmem:[%s5365 + $0x38] sm:$0xf]
    %v5381 = vld [vmem:[%s5365 + $0x3c] sm:$0xf]
    %v5383 = vrot.slane %v5364, 4
    %v5401 = vunpack.c.l.b16 %v5366
    %v5402 = vunpack.c.l.b16 %v5367
    %v5403 = vunpack.c.l.b16 %v5368
    %v5404 = vunpack.c.l.b16 %v5369
    %v5405 = vunpack.c.l.b16 %v5370
    %v5406 = vunpack.c.l.b16 %v5371
    %v5407 = vunpack.c.l.b16 %v5372
    %v5408 = vunpack.c.l.b16 %v5373
    %v5409 = vunpack.c.l.b16 %v5374
    %v5410 = vunpack.c.l.b16 %v5375
    %v5411 = vunpack.c.l.b16 %v5376
    %v5412 = vunpack.c.l.b16 %v5377
    %v5413 = vunpack.c.l.b16 %v5378
    %v5414 = vunpack.c.l.b16 %v5379
    %v5415 = vunpack.c.l.b16 %v5380
    %v5416 = vunpack.c.l.b16 %v5381
    %v5417 = vpack.c.b16 %v5402, %v5401
    %v5418 = vpack.c.b16 %v5404, %v5403
    %v5419 = vpack.c.b16 %v5406, %v5405
    %v5420 = vpack.c.b16 %v5408, %v5407
    %v5421 = vpack.c.b16 %v5410, %v5409
    %v5422 = vpack.c.b16 %v5412, %v5411
    %v5423 = vpack.c.b16 %v5414, %v5413
    %v5424 = vpack.c.b16 %v5416, %v5415
    %5433 = vmatprep.subr.bf16.mxu0 0
    %5434 = vmatpush1.bf16.msra.mxu0 %v5417
    %5435 = vmatprep.subr.bf16.mxu0 0
    %5436 = vmatpush1.bf16.msra.mxu0 %v5418
    %5437 = vmatprep.subr.bf16.mxu0 0
    %5438 = vmatpush1.bf16.msra.mxu0 %v5419
    %5439 = vmatprep.subr.bf16.mxu0 0
    %5440 = vmatpush1.bf16.msra.mxu0 %v5420
    %5441 = vmatprep.subr.bf16.mxu0 0
    %5442 = vmatpush1.bf16.msra.mxu0 %v5421
    %5443 = vmatprep.subr.bf16.mxu0 0
    %5444 = vmatpush1.bf16.msra.mxu0 %v5422
    %5445 = vmatprep.subr.bf16.mxu0 0
    %5446 = vmatpush1.bf16.msra.mxu0 %v5423
    %5447 = vmatprep.subr.bf16.mxu0 0
    %5448 = vmatpush1.bf16.msra.mxu0 %v5424
    %5449 = vmatprep.subr.bf16.mxu0 0
    %5450 = vmatpush1.bf16.msra.mxu0 0
    %5451 = vmatprep.subr.bf16.mxu0 0
    %5452 = vmatpush1.bf16.msra.mxu0 0
    %5453 = vmatprep.subr.bf16.mxu0 0
    %5454 = vmatpush1.bf16.msra.mxu0 0
    %5455 = vmatprep.subr.bf16.mxu0 0
    %5456 = vmatpush1.bf16.msra.mxu0 0
    %5457 = vmatprep.subr.bf16.mxu0 0
    %5458 = vmatpush1.bf16.msra.mxu0 0
    %5459 = vmatprep.subr.bf16.mxu0 0
    %5460 = vmatpush1.bf16.msra.mxu0 0
    %5461 = vmatprep.subr.bf16.mxu0 0
    %5462 = vmatpush1.bf16.msra.mxu0 0
    %5463 = vmatprep.subr.bf16.mxu0 0
    %5464 = vmatpush1.bf16.msra.mxu0 0
    %5465 = vmatprep.mubr.bf16.mxu0 0
    %5466 = vmatmul.mubr.bf16.gmra.mrb[0].mxu0 %v5383
    %v5467 = vpop.f32.mrb[0].mxu0
    %v5468 = vadd.f32 0.0, %v5467
    %v5469 = vpop.f32.mrb[0].mxu0
    %v5470 = vpop.f32.mrb[0].mxu0
    %v5471 = vpop.f32.mrb[0].mxu0
    %5472 = vdwg.mxu0
    %v5473 = vadd.f32 %v5359, %v5468
    %v5474 = vld [vmem:[#allocation2 + $0x8] sm:$0x20]
    %s5475 = scalar_lea.vmem [#allocation9], 192
    %v5476 = vld [vmem:[%s5475] sm:$0xf]
    %v5477 = vld [vmem:[%s5475 + $0x4] sm:$0xf]
    %v5478 = vld [vmem:[%s5475 + $0x8] sm:$0xf]
    %v5479 = vld [vmem:[%s5475 + $0xc] sm:$0xf]
    %v5480 = vld [vmem:[%s5475 + $0x10] sm:$0xf]
    %v5481 = vld [vmem:[%s5475 + $0x14] sm:$0xf]
    %v5482 = vld [vmem:[%s5475 + $0x18] sm:$0xf]
    %v5483 = vld [vmem:[%s5475 + $0x1c] sm:$0xf]
    %v5484 = vld [vmem:[%s5475 + $0x20] sm:$0xf]
    %v5485 = vld [vmem:[%s5475 + $0x24] sm:$0xf]
    %v5486 = vld [vmem:[%s5475 + $0x28] sm:$0xf]
    %v5487 = vld [vmem:[%s5475 + $0x2c] sm:$0xf]
    %v5488 = vld [vmem:[%s5475 + $0x30] sm:$0xf]
    %v5489 = vld [vmem:[%s5475 + $0x34] sm:$0xf]
    %v5490 = vld [vmem:[%s5475 + $0x38] sm:$0xf]
    %v5491 = vld [vmem:[%s5475 + $0x3c] sm:$0xf]
    %v5493 = vshrl.u32 %v5474, 16
    %v5495 = vrot.slane %v5493, 5
    %v5513 = vunpack.c.l.b16 %v5476
    %v5514 = vunpack.c.l.b16 %v5477
    %v5515 = vunpack.c.l.b16 %v5478
    %v5516 = vunpack.c.l.b16 %v5479
    %v5517 = vunpack.c.l.b16 %v5480
    %v5518 = vunpack.c.l.b16 %v5481
    %v5519 = vunpack.c.l.b16 %v5482
    %v5520 = vunpack.c.l.b16 %v5483
    %v5521 = vunpack.c.l.b16 %v5484
    %v5522 = vunpack.c.l.b16 %v5485
    %v5523 = vunpack.c.l.b16 %v5486
    %v5524 = vunpack.c.l.b16 %v5487
    %v5525 = vunpack.c.l.b16 %v5488
    %v5526 = vunpack.c.l.b16 %v5489
    %v5527 = vunpack.c.l.b16 %v5490
    %v5528 = vunpack.c.l.b16 %v5491
    %v5529 = vpack.c.b16 %v5514, %v5513
    %v5530 = vpack.c.b16 %v5516, %v5515
    %v5531 = vpack.c.b16 %v5518, %v5517
    %v5532 = vpack.c.b16 %v5520, %v5519
    %v5533 = vpack.c.b16 %v5522, %v5521
    %v5534 = vpack.c.b16 %v5524, %v5523
    %v5535 = vpack.c.b16 %v5526, %v5525
    %v5536 = vpack.c.b16 %v5528, %v5527
    %5545 = vmatprep.subr.bf16.mxu0 0
    %5546 = vmatpush1.bf16.msra.mxu0 %v5529
    %5547 = vmatprep.subr.bf16.mxu0 0
    %5548 = vmatpush1.bf16.msra.mxu0 %v5530
    %5549 = vmatprep.subr.bf16.mxu0 0
    %5550 = vmatpush1.bf16.msra.mxu0 %v5531
    %5551 = vmatprep.subr.bf16.mxu0 0
    %5552 = vmatpush1.bf16.msra.mxu0 %v5532
    %5553 = vmatprep.subr.bf16.mxu0 0
    %5554 = vmatpush1.bf16.msra.mxu0 %v5533
    %5555 = vmatprep.subr.bf16.mxu0 0
    %5556 = vmatpush1.bf16.msra.mxu0 %v5534
    %5557 = vmatprep.subr.bf16.mxu0 0
    %5558 = vmatpush1.bf16.msra.mxu0 %v5535
    %5559 = vmatprep.subr.bf16.mxu0 0
    %5560 = vmatpush1.bf16.msra.mxu0 %v5536
    %5561 = vmatprep.subr.bf16.mxu0 0
    %5562 = vmatpush1.bf16.msra.mxu0 0
    %5563 = vmatprep.subr.bf16.mxu0 0
    %5564 = vmatpush1.bf16.msra.mxu0 0
    %5565 = vmatprep.subr.bf16.mxu0 0
    %5566 = vmatpush1.bf16.msra.mxu0 0
    %5567 = vmatprep.subr.bf16.mxu0 0
    %5568 = vmatpush1.bf16.msra.mxu0 0
    %5569 = vmatprep.subr.bf16.mxu0 0
    %5570 = vmatpush1.bf16.msra.mxu0 0
    %5571 = vmatprep.subr.bf16.mxu0 0
    %5572 = vmatpush1.bf16.msra.mxu0 0
    %5573 = vmatprep.subr.bf16.mxu0 0
    %5574 = vmatpush1.bf16.msra.mxu0 0
    %5575 = vmatprep.subr.bf16.mxu0 0
    %5576 = vmatpush1.bf16.msra.mxu0 0
    %5577 = vmatprep.mubr.bf16.mxu0 0
    %5578 = vmatmul.mubr.bf16.gmra.mrb[0].mxu0 %v5495
    %v5579 = vpop.f32.mrb[0].mxu0
    %v5580 = vadd.f32 0.0, %v5579
    %v5581 = vpop.f32.mrb[0].mxu0
    %v5582 = vpop.f32.mrb[0].mxu0
    %v5583 = vpop.f32.mrb[0].mxu0
    %5584 = vdwg.mxu0
    %v5585 = vadd.f32 %v5473, %v5580
    %v5586 = vld [vmem:[#allocation2 + $0x8] sm:$0x40]
    %s5587 = scalar_lea.vmem [#allocation9], 256
    %v5588 = vld [vmem:[%s5587] sm:$0xf]
    %v5589 = vld [vmem:[%s5587 + $0x4] sm:$0xf]
    %v5590 = vld [vmem:[%s5587 + $0x8] sm:$0xf]
    %v5591 = vld [vmem:[%s5587 + $0xc] sm:$0xf]
    %v5592 = vld [vmem:[%s5587 + $0x10] sm:$0xf]
    %v5593 = vld [vmem:[%s5587 + $0x14] sm:$0xf]
    %v5594 = vld [vmem:[%s5587 + $0x18] sm:$0xf]
    %v5595 = vld [vmem:[%s5587 + $0x1c] sm:$0xf]
    %v5596 = vld [vmem:[%s5587 + $0x20] sm:$0xf]
    %v5597 = vld [vmem:[%s5587 + $0x24] sm:$0xf]
    %v5598 = vld [vmem:[%s5587 + $0x28] sm:$0xf]
    %v5599 = vld [vmem:[%s5587 + $0x2c] sm:$0xf]
    %v5600 = vld [vmem:[%s5587 + $0x30] sm:$0xf]
    %v5601 = vld [vmem:[%s5587 + $0x34] sm:$0xf]
    %v5602 = vld [vmem:[%s5587 + $0x38] sm:$0xf]
    %v5603 = vld [vmem:[%s5587 + $0x3c] sm:$0xf]
    %v5605 = vrot.slane %v5586, 6
    %v5623 = vunpack.c.l.b16 %v5588
    %v5624 = vunpack.c.l.b16 %v5589
    %v5625 = vunpack.c.l.b16 %v5590
    %v5626 = vunpack.c.l.b16 %v5591
    %v5627 = vunpack.c.l.b16 %v5592
    %v5628 = vunpack.c.l.b16 %v5593
    %v5629 = vunpack.c.l.b16 %v5594
    %v5630 = vunpack.c.l.b16 %v5595
    %v5631 = vunpack.c.l.b16 %v5596
    %v5632 = vunpack.c.l.b16 %v5597
    %v5633 = vunpack.c.l.b16 %v5598
    %v5634 = vunpack.c.l.b16 %v5599
    %v5635 = vunpack.c.l.b16 %v5600
    %v5636 = vunpack.c.l.b16 %v5601
    %v5637 = vunpack.c.l.b16 %v5602
    %v5638 = vunpack.c.l.b16 %v5603
    %v5639 = vpack.c.b16 %v5624, %v5623
    %v5640 = vpack.c.b16 %v5626, %v5625
    %v5641 = vpack.c.b16 %v5628, %v5627
    %v5642 = vpack.c.b16 %v5630, %v5629
    %v5643 = vpack.c.b16 %v5632, %v5631
    %v5644 = vpack.c.b16 %v5634, %v5633
    %v5645 = vpack.c.b16 %v5636, %v5635
    %v5646 = vpack.c.b16 %v5638, %v5637
    %5655 = vmatprep.subr.bf16.mxu0 0
    %5656 = vmatpush1.bf16.msra.mxu0 %v5639
    %5657 = vmatprep.subr.bf16.mxu0 0
    %5658 = vmatpush1.bf16.msra.mxu0 %v5640
    %5659 = vmatprep.subr.bf16.mxu0 0
    %5660 = vmatpush1.bf16.msra.mxu0 %v5641
    %5661 = vmatprep.subr.bf16.mxu0 0
    %5662 = vmatpush1.bf16.msra.mxu0 %v5642
    %5663 = vmatprep.subr.bf16.mxu0 0
    %5664 = vmatpush1.bf16.msra.mxu0 %v5643
    %5665 = vmatprep.subr.bf16.mxu0 0
    %5666 = vmatpush1.bf16.msra.mxu0 %v5644
    %5667 = vmatprep.subr.bf16.mxu0 0
    %5668 = vmatpush1.bf16.msra.mxu0 %v5645
    %5669 = vmatprep.subr.bf16.mxu0 0
    %5670 = vmatpush1.bf16.msra.mxu0 %v5646
    %5671 = vmatprep.subr.bf16.mxu0 0
    %5672 = vmatpush1.bf16.msra.mxu0 0
    %5673 = vmatprep.subr.bf16.mxu0 0
    %5674 = vmatpush1.bf16.msra.mxu0 0
    %5675 = vmatprep.subr.bf16.mxu0 0
    %5676 = vmatpush1.bf16.msra.mxu0 0
    %5677 = vmatprep.subr.bf16.mxu0 0
    %5678 = vmatpush1.bf16.msra.mxu0 0
    %5679 = vmatprep.subr.bf16.mxu0 0
    %5680 = vmatpush1.bf16.msra.mxu0 0
    %5681 = vmatprep.subr.bf16.mxu0 0
    %5682 = vmatpush1.bf16.msra.mxu0 0
    %5683 = vmatprep.subr.bf16.mxu0 0
    %5684 = vmatpush1.bf16.msra.mxu0 0
    %5685 = vmatprep.subr.bf16.mxu0 0
    %5686 = vmatpush1.bf16.msra.mxu0 0
    %5687 = vmatprep.mubr.bf16.mxu0 0
    %5688 = vmatmul.mubr.bf16.gmra.mrb[0].mxu0 %v5605
    %v5689 = vpop.f32.mrb[0].mxu0
    %v5690 = vadd.f32 0.0, %v5689
    %v5691 = vpop.f32.mrb[0].mxu0
    %v5692 = vpop.f32.mrb[0].mxu0
    %v5693 = vpop.f32.mrb[0].mxu0
    %5694 = vdwg.mxu0
    %v5695 = vadd.f32 %v5585, %v5690
    %s5696 = scalar_lea.vmem [#allocation9], 320
    %v5697 = vld [vmem:[%s5696] sm:$0xf]
    %v5698 = vld [vmem:[%s5696 + $0x4] sm:$0xf]
    %v5699 = vld [vmem:[%s5696 + $0x8] sm:$0xf]
    %v5700 = vld [vmem:[%s5696 + $0xc] sm:$0xf]
    %v5701 = vld [vmem:[%s5696 + $0x10] sm:$0xf]
    %v5702 = vld [vmem:[%s5696 + $0x14] sm:$0xf]
    %v5703 = vld [vmem:[%s5696 + $0x18] sm:$0xf]
    %v5704 = vld [vmem:[%s5696 + $0x1c] sm:$0xf]
    %v5705 = vld [vmem:[%s5696 + $0x20] sm:$0xf]
    %v5706 = vld [vmem:[%s5696 + $0x24] sm:$0xf]
    %v5707 = vld [vmem:[%s5696 + $0x28] sm:$0xf]
    %v5708 = vld [vmem:[%s5696 + $0x2c] sm:$0xf]
    %v5709 = vld [vmem:[%s5696 + $0x30] sm:$0xf]
    %v5710 = vld [vmem:[%s5696 + $0x34] sm:$0xf]
    %v5711 = vld [vmem:[%s5696 + $0x38] sm:$0xf]
    %v5712 = vld [vmem:[%s5696 + $0x3c] sm:$0xf]
    %v5714 = vshrl.u32 %v5586, 16
    %v5716 = vrot.slane %v5714, 6
    %v5734 = vunpack.c.l.b16 %v5697
    %v5735 = vunpack.c.l.b16 %v5698
    %v5736 = vunpack.c.l.b16 %v5699
    %v5737 = vunpack.c.l.b16 %v5700
    %v5738 = vunpack.c.l.b16 %v5701
    %v5739 = vunpack.c.l.b16 %v5702
    %v5740 = vunpack.c.l.b16 %v5703
    %v5741 = vunpack.c.l.b16 %v5704
    %v5742 = vunpack.c.l.b16 %v5705
    %v5743 = vunpack.c.l.b16 %v5706
    %v5744 = vunpack.c.l.b16 %v5707
    %v5745 = vunpack.c.l.b16 %v5708
    %v5746 = vunpack.c.l.b16 %v5709
    %v5747 = vunpack.c.l.b16 %v5710
    %v5748 = vunpack.c.l.b16 %v5711
    %v5749 = vunpack.c.l.b16 %v5712
    %v5750 = vpack.c.b16 %v5735, %v5734
    %v5751 = vpack.c.b16 %v5737, %v5736
    %v5752 = vpack.c.b16 %v5739, %v5738
    %v5753 = vpack.c.b16 %v5741, %v5740
    %v5754 = vpack.c.b16 %v5743, %v5742
    %v5755 = vpack.c.b16 %v5745, %v5744
    %v5756 = vpack.c.b16 %v5747, %v5746
    %v5757 = vpack.c.b16 %v5749, %v5748
    %5766 = vmatprep.subr.bf16.mxu0 0
    %5767 = vmatpush1.bf16.msra.mxu0 %v5750
    %5768 = vmatprep.subr.bf16.mxu0 0
    %5769 = vmatpush1.bf16.msra.mxu0 %v5751
    %5770 = vmatprep.subr.bf16.mxu0 0
    %5771 = vmatpush1.bf16.msra.mxu0 %v5752
    %5772 = vmatprep.subr.bf16.mxu0 0
    %5773 = vmatpush1.bf16.msra.mxu0 %v5753
    %5774 = vmatprep.subr.bf16.mxu0 0
    %5775 = vmatpush1.bf16.msra.mxu0 %v5754
    %5776 = vmatprep.subr.bf16.mxu0 0
    %5777 = vmatpush1.bf16.msra.mxu0 %v5755
    %5778 = vmatprep.subr.bf16.mxu0 0
    %5779 = vmatpush1.bf16.msra.mxu0 %v5756
    %5780 = vmatprep.subr.bf16.mxu0 0
    %5781 = vmatpush1.bf16.msra.mxu0 %v5757
    %5782 = vmatprep.subr.bf16.mxu0 0
    %5783 = vmatpush1.bf16.msra.mxu0 0
    %5784 = vmatprep.subr.bf16.mxu0 0
    %5785 = vmatpush1.bf16.msra.mxu0 0
    %5786 = vmatprep.subr.bf16.mxu0 0
    %5787 = vmatpush1.bf16.msra.mxu0 0
    %5788 = vmatprep.subr.bf16.mxu0 0
    %5789 = vmatpush1.bf16.msra.mxu0 0
    %5790 = vmatprep.subr.bf16.mxu0 0
    %5791 = vmatpush1.bf16.msra.mxu0 0
    %5792 = vmatprep.subr.bf16.mxu0 0
    %5793 = vmatpush1.bf16.msra.mxu0 0
    %5794 = vmatprep.subr.bf16.mxu0 0
    %5795 = vmatpush1.bf16.msra.mxu0 0
    %5796 = vmatprep.subr.bf16.mxu0 0
    %5797 = vmatpush1.bf16.msra.mxu0 0
    %5798 = vmatprep.mubr.bf16.mxu0 0
    %5799 = vmatmul.mubr.bf16.gmra.mrb[0].mxu0 %v5716
    %v5800 = vpop.f32.mrb[0].mxu0
    %v5801 = vadd.f32 0.0, %v5800
    %v5802 = vpop.f32.mrb[0].mxu0
    %v5803 = vpop.f32.mrb[0].mxu0
    %v5804 = vpop.f32.mrb[0].mxu0
    %5805 = vdwg.mxu0
    %v5806 = vadd.f32 %v5695, %v5801
    %v5807 = vld [vmem:[#allocation2 + $0x10] sm:$0x1]
    %s5808 = scalar_lea.vmem [#allocation9], 384
    %v5809 = vld [vmem:[%s5808] sm:$0xf]
    %v5810 = vld [vmem:[%s5808 + $0x4] sm:$0xf]
    %v5811 = vld [vmem:[%s5808 + $0x8] sm:$0xf]
    %v5812 = vld [vmem:[%s5808 + $0xc] sm:$0xf]
    %v5813 = vld [vmem:[%s5808 + $0x10] sm:$0xf]
    %v5814 = vld [vmem:[%s5808 + $0x14] sm:$0xf]
    %v5815 = vld [vmem:[%s5808 + $0x18] sm:$0xf]
    %v5816 = vld [vmem:[%s5808 + $0x1c] sm:$0xf]
    %v5817 = vld [vmem:[%s5808 + $0x20] sm:$0xf]
    %v5818 = vld [vmem:[%s5808 + $0x24] sm:$0xf]
    %v5819 = vld [vmem:[%s5808 + $0x28] sm:$0xf]
    %v5820 = vld [vmem:[%s5808 + $0x2c] sm:$0xf]
    %v5821 = vld [vmem:[%s5808 + $0x30] sm:$0xf]
    %v5822 = vld [vmem:[%s5808 + $0x34] sm:$0xf]
    %v5823 = vld [vmem:[%s5808 + $0x38] sm:$0xf]
    %v5824 = vld [vmem:[%s5808 + $0x3c] sm:$0xf]
    %v5841 = vunpack.c.l.b16 %v5809
    %v5842 = vunpack.c.l.b16 %v5810
    %v5843 = vunpack.c.l.b16 %v5811
    %v5844 = vunpack.c.l.b16 %v5812
    %v5845 = vunpack.c.l.b16 %v5813
    %v5846 = vunpack.c.l.b16 %v5814
    %v5847 = vunpack.c.l.b16 %v5815
    %v5848 = vunpack.c.l.b16 %v5816
    %v5849 = vunpack.c.l.b16 %v5817
    %v5850 = vunpack.c.l.b16 %v5818
    %v5851 = vunpack.c.l.b16 %v5819
    %v5852 = vunpack.c.l.b16 %v5820
    %v5853 = vunpack.c.l.b16 %v5821
    %v5854 = vunpack.c.l.b16 %v5822
    %v5855 = vunpack.c.l.b16 %v5823
    %v5856 = vunpack.c.l.b16 %v5824
    %v5857 = vpack.c.b16 %v5842, %v5841
    %v5858 = vpack.c.b16 %v5844, %v5843
    %v5859 = vpack.c.b16 %v5846, %v5845
    %v5860 = vpack.c.b16 %v5848, %v5847
    %v5861 = vpack.c.b16 %v5850, %v5849
    %v5862 = vpack.c.b16 %v5852, %v5851
    %v5863 = vpack.c.b16 %v5854, %v5853
    %v5864 = vpack.c.b16 %v5856, %v5855
    %5873 = vmatprep.subr.bf16.mxu0 0
    %5874 = vmatpush1.bf16.msra.mxu0 %v5857
    %5875 = vmatprep.subr.bf16.mxu0 0
    %5876 = vmatpush1.bf16.msra.mxu0 %v5858
    %5877 = vmatprep.subr.bf16.mxu0 0
    %5878 = vmatpush1.bf16.msra.mxu0 %v5859
    %5879 = vmatprep.subr.bf16.mxu0 0
    %5880 = vmatpush1.bf16.msra.mxu0 %v5860
    %5881 = vmatprep.subr.bf16.mxu0 0
    %5882 = vmatpush1.bf16.msra.mxu0 %v5861
    %5883 = vmatprep.subr.bf16.mxu0 0
    %5884 = vmatpush1.bf16.msra.mxu0 %v5862
    %5885 = vmatprep.subr.bf16.mxu0 0
    %5886 = vmatpush1.bf16.msra.mxu0 %v5863
    %5887 = vmatprep.subr.bf16.mxu0 0
    %5888 = vmatpush1.bf16.msra.mxu0 %v5864
    %5889 = vmatprep.subr.bf16.mxu0 0
    %5890 = vmatpush1.bf16.msra.mxu0 0
    %5891 = vmatprep.subr.bf16.mxu0 0
    %5892 = vmatpush1.bf16.msra.mxu0 0
    %5893 = vmatprep.subr.bf16.mxu0 0
    %5894 = vmatpush1.bf16.msra.mxu0 0
    %5895 = vmatprep.subr.bf16.mxu0 0
    %5896 = vmatpush1.bf16.msra.mxu0 0
    %5897 = vmatprep.subr.bf16.mxu0 0
    %5898 = vmatpush1.bf16.msra.mxu0 0
    %5899 = vmatprep.subr.bf16.mxu0 0
    %5900 = vmatpush1.bf16.msra.mxu0 0
    %5901 = vmatprep.subr.bf16.mxu0 0
    %5902 = vmatpush1.bf16.msra.mxu0 0
    %5903 = vmatprep.subr.bf16.mxu0 0
    %5904 = vmatpush1.bf16.msra.mxu0 0
    %5905 = vmatprep.mubr.bf16.mxu0 0
    %5906 = vmatmul.mubr.bf16.gmra.mrb[0].mxu0 %v5807
    %v5907 = vpop.f32.mrb[0].mxu0
    %v5908 = vadd.f32 0.0, %v5907
    %v5909 = vpop.f32.mrb[0].mxu0
    %v5910 = vpop.f32.mrb[0].mxu0
    %v5911 = vpop.f32.mrb[0].mxu0
    %5912 = vdwg.mxu0
    %v5913 = vadd.f32 %v5806, %v5908
    %s5914 = scalar_lea.vmem [#allocation9], 448
    %v5915 = vld [vmem:[%s5914] sm:$0xf]
    %v5916 = vld [vmem:[%s5914 + $0x4] sm:$0xf]
    %v5917 = vld [vmem:[%s5914 + $0x8] sm:$0xf]
    %v5918 = vld [vmem:[%s5914 + $0xc] sm:$0xf]
    %v5919 = vld [vmem:[%s5914 + $0x10] sm:$0xf]
    %v5920 = vld [vmem:[%s5914 + $0x14] sm:$0xf]
    %v5921 = vld [vmem:[%s5914 + $0x18] sm:$0xf]
    %v5922 = vld [vmem:[%s5914 + $0x1c] sm:$0xf]
    %v5923 = vld [vmem:[%s5914 + $0x20] sm:$0xf]
    %v5924 = vld [vmem:[%s5914 + $0x24] sm:$0xf]
    %v5925 = vld [vmem:[%s5914 + $0x28] sm:$0xf]
    %v5926 = vld [vmem:[%s5914 + $0x2c] sm:$0xf]
    %v5927 = vld [vmem:[%s5914 + $0x30] sm:$0xf]
    %v5928 = vld [vmem:[%s5914 + $0x34] sm:$0xf]
    %v5929 = vld [vmem:[%s5914 + $0x38] sm:$0xf]
    %v5930 = vld [vmem:[%s5914 + $0x3c] sm:$0xf]
    %v5932 = vshrl.u32 %v5807, 16
    %v5951 = vunpack.c.l.b16 %v5915
    %v5952 = vunpack.c.l.b16 %v5916
    %v5953 = vunpack.c.l.b16 %v5917
    %v5954 = vunpack.c.l.b16 %v5918
    %v5955 = vunpack.c.l.b16 %v5919
    %v5956 = vunpack.c.l.b16 %v5920
    %v5957 = vunpack.c.l.b16 %v5921
    %v5958 = vunpack.c.l.b16 %v5922
    %v5959 = vunpack.c.l.b16 %v5923
    %v5960 = vunpack.c.l.b16 %v5924
    %v5961 = vunpack.c.l.b16 %v5925
    %v5962 = vunpack.c.l.b16 %v5926
    %v5963 = vunpack.c.l.b16 %v5927
    %v5964 = vunpack.c.l.b16 %v5928
    %v5965 = vunpack.c.l.b16 %v5929
    %v5966 = vunpack.c.l.b16 %v5930
    %v5967 = vpack.c.b16 %v5952, %v5951
    %v5968 = vpack.c.b16 %v5954, %v5953
    %v5969 = vpack.c.b16 %v5956, %v5955
    %v5970 = vpack.c.b16 %v5958, %v5957
    %v5971 = vpack.c.b16 %v5960, %v5959
    %v5972 = vpack.c.b16 %v5962, %v5961
    %v5973 = vpack.c.b16 %v5964, %v5963
    %v5974 = vpack.c.b16 %v5966, %v5965
    %5983 = vmatprep.subr.bf16.mxu0 0
    %5984 = vmatpush1.bf16.msra.mxu0 %v5967
    %5985 = vmatprep.subr.bf16.mxu0 0
    %5986 = vmatpush1.bf16.msra.mxu0 %v5968
    %5987 = vmatprep.subr.bf16.mxu0 0
    %5988 = vmatpush1.bf16.msra.mxu0 %v5969
    %5989 = vmatprep.subr.bf16.mxu0 0
    %5990 = vmatpush1.bf16.msra.mxu0 %v5970
    %5991 = vmatprep.subr.bf16.mxu0 0
    %5992 = vmatpush1.bf16.msra.mxu0 %v5971
    %5993 = vmatprep.subr.bf16.mxu0 0
    %5994 = vmatpush1.bf16.msra.mxu0 %v5972
    %5995 = vmatprep.subr.bf16.mxu0 0
    %5996 = vmatpush1.bf16.msra.mxu0 %v5973
    %5997 = vmatprep.subr.bf16.mxu0 0
    %5998 = vmatpush1.bf16.msra.mxu0 %v5974
    %5999 = vmatprep.subr.bf16.mxu0 0
    %6000 = vmatpush1.bf16.msra.mxu0 0
    %6001 = vmatprep.subr.bf16.mxu0 0
    %6002 = vmatpush1.bf16.msra.mxu0 0
    %6003 = vmatprep.subr.bf16.mxu0 0
    %6004 = vmatpush1.bf16.msra.mxu0 0
    %6005 = vmatprep.subr.bf16.mxu0 0
    %6006 = vmatpush1.bf16.msra.mxu0 0
    %6007 = vmatprep.subr.bf16.mxu0 0
    %6008 = vmatpush1.bf16.msra.mxu0 0
    %6009 = vmatprep.subr.bf16.mxu0 0
    %6010 = vmatpush1.bf16.msra.mxu0 0
    %6011 = vmatprep.subr.bf16.mxu0 0
    %6012 = vmatpush1.bf16.msra.mxu0 0
    %6013 = vmatprep.subr.bf16.mxu0 0
    %6014 = vmatpush1.bf16.msra.mxu0 0
    %6015 = vmatprep.mubr.bf16.mxu0 0
    %6016 = vmatmul.mubr.bf16.gmra.mrb[0].mxu0 %v5932
    %v6017 = vpop.f32.mrb[0].mxu0
    %v6018 = vadd.f32 0.0, %v6017
    %v6019 = vpop.f32.mrb[0].mxu0
    %v6020 = vpop.f32.mrb[0].mxu0
    %v6021 = vpop.f32.mrb[0].mxu0
    %6022 = vdwg.mxu0
    %v6023 = vadd.f32 %v5913, %v6018
    %v6024 = vld [vmem:[#allocation2 + $0x10] sm:$0x2]
    %s6025 = scalar_lea.vmem [#allocation9], 512
    %v6026 = vld [vmem:[%s6025] sm:$0xf]
    %v6027 = vld [vmem:[%s6025 + $0x4] sm:$0xf]
    %v6028 = vld [vmem:[%s6025 + $0x8] sm:$0xf]
    %v6029 = vld [vmem:[%s6025 + $0xc] sm:$0xf]
    %v6030 = vld [vmem:[%s6025 + $0x10] sm:$0xf]
    %v6031 = vld [vmem:[%s6025 + $0x14] sm:$0xf]
    %v6032 = vld [vmem:[%s6025 + $0x18] sm:$0xf]
    %v6033 = vld [vmem:[%s6025 + $0x1c] sm:$0xf]
    %v6034 = vld [vmem:[%s6025 + $0x20] sm:$0xf]
    %v6035 = vld [vmem:[%s6025 + $0x24] sm:$0xf]
    %v6036 = vld [vmem:[%s6025 + $0x28] sm:$0xf]
    %v6037 = vld [vmem:[%s6025 + $0x2c] sm:$0xf]
    %v6038 = vld [vmem:[%s6025 + $0x30] sm:$0xf]
    %v6039 = vld [vmem:[%s6025 + $0x34] sm:$0xf]
    %v6040 = vld [vmem:[%s6025 + $0x38] sm:$0xf]
    %v6041 = vld [vmem:[%s6025 + $0x3c] sm:$0xf]
    %v6043 = vrot.slane %v6024, 1
    %v6061 = vunpack.c.l.b16 %v6026
    %v6062 = vunpack.c.l.b16 %v6027
    %v6063 = vunpack.c.l.b16 %v6028
    %v6064 = vunpack.c.l.b16 %v6029
    %v6065 = vunpack.c.l.b16 %v6030
    %v6066 = vunpack.c.l.b16 %v6031
    %v6067 = vunpack.c.l.b16 %v6032
    %v6068 = vunpack.c.l.b16 %v6033
    %v6069 = vunpack.c.l.b16 %v6034
    %v6070 = vunpack.c.l.b16 %v6035
    %v6071 = vunpack.c.l.b16 %v6036
    %v6072 = vunpack.c.l.b16 %v6037
    %v6073 = vunpack.c.l.b16 %v6038
    %v6074 = vunpack.c.l.b16 %v6039
    %v6075 = vunpack.c.l.b16 %v6040
    %v6076 = vunpack.c.l.b16 %v6041
    %v6077 = vpack.c.b16 %v6062, %v6061
    %v6078 = vpack.c.b16 %v6064, %v6063
    %v6079 = vpack.c.b16 %v6066, %v6065
    %v6080 = vpack.c.b16 %v6068, %v6067
    %v6081 = vpack.c.b16 %v6070, %v6069
    %v6082 = vpack.c.b16 %v6072, %v6071
    %v6083 = vpack.c.b16 %v6074, %v6073
    %v6084 = vpack.c.b16 %v6076, %v6075
    %6093 = vmatprep.subr.bf16.mxu0 0
    %6094 = vmatpush1.bf16.msra.mxu0 %v6077
    %6095 = vmatprep.subr.bf16.mxu0 0
    %6096 = vmatpush1.bf16.msra.mxu0 %v6078
    %6097 = vmatprep.subr.bf16.mxu0 0
    %6098 = vmatpush1.bf16.msra.mxu0 %v6079
    %6099 = vmatprep.subr.bf16.mxu0 0
    %6100 = vmatpush1.bf16.msra.mxu0 %v6080
    %6101 = vmatprep.subr.bf16.mxu0 0
    %6102 = vmatpush1.bf16.msra.mxu0 %v6081
    %6103 = vmatprep.subr.bf16.mxu0 0
    %6104 = vmatpush1.bf16.msra.mxu0 %v6082
    %6105 = vmatprep.subr.bf16.mxu0 0
    %6106 = vmatpush1.bf16.msra.mxu0 %v6083
    %6107 = vmatprep.subr.bf16.mxu0 0
    %6108 = vmatpush1.bf16.msra.mxu0 %v6084
    %6109 = vmatprep.subr.bf16.mxu0 0
    %6110 = vmatpush1.bf16.msra.mxu0 0
    %6111 = vmatprep.subr.bf16.mxu0 0
    %6112 = vmatpush1.bf16.msra.mxu0 0
    %6113 = vmatprep.subr.bf16.mxu0 0
    %6114 = vmatpush1.bf16.msra.mxu0 0
    %6115 = vmatprep.subr.bf16.mxu0 0
    %6116 = vmatpush1.bf16.msra.mxu0 0
    %6117 = vmatprep.subr.bf16.mxu0 0
    %6118 = vmatpush1.bf16.msra.mxu0 0
    %6119 = vmatprep.subr.bf16.mxu0 0
    %6120 = vmatpush1.bf16.msra.mxu0 0
    %6121 = vmatprep.subr.bf16.mxu0 0
    %6122 = vmatpush1.bf16.msra.mxu0 0
    %6123 = vmatprep.subr.bf16.mxu0 0
    %6124 = vmatpush1.bf16.msra.mxu0 0
    %6125 = vmatprep.mubr.bf16.mxu0 0
    %6126 = vmatmul.mubr.bf16.gmra.mrb[0].mxu0 %v6043
    %v6127 = vpop.f32.mrb[0].mxu0
    %v6128 = vadd.f32 0.0, %v6127
    %v6129 = vpop.f32.mrb[0].mxu0
    %v6130 = vpop.f32.mrb[0].mxu0
    %v6131 = vpop.f32.mrb[0].mxu0
    %6132 = vdwg.mxu0
    %v6133 = vadd.f32 %v6023, %v6128
    %v6134 = vld [vmem:[#allocation2 + $0x10] sm:$0x4]
    %s6135 = scalar_lea.vmem [#allocation9], 576
    %v6136 = vld [vmem:[%s6135] sm:$0xf]
    %v6137 = vld [vmem:[%s6135 + $0x4] sm:$0xf]
    %v6138 = vld [vmem:[%s6135 + $0x8] sm:$0xf]
    %v6139 = vld [vmem:[%s6135 + $0xc] sm:$0xf]
    %v6140 = vld [vmem:[%s6135 + $0x10] sm:$0xf]
    %v6141 = vld [vmem:[%s6135 + $0x14] sm:$0xf]
    %v6142 = vld [vmem:[%s6135 + $0x18] sm:$0xf]
    %v6143 = vld [vmem:[%s6135 + $0x1c] sm:$0xf]
    %v6144 = vld [vmem:[%s6135 + $0x20] sm:$0xf]
    %v6145 = vld [vmem:[%s6135 + $0x24] sm:$0xf]
    %v6146 = vld [vmem:[%s6135 + $0x28] sm:$0xf]
    %v6147 = vld [vmem:[%s6135 + $0x2c] sm:$0xf]
    %v6148 = vld [vmem:[%s6135 + $0x30] sm:$0xf]
    %v6149 = vld [vmem:[%s6135 + $0x34] sm:$0xf]
    %v6150 = vld [vmem:[%s6135 + $0x38] sm:$0xf]
    %v6151 = vld [vmem:[%s6135 + $0x3c] sm:$0xf]
    %v6153 = vshrl.u32 %v6134, 16
    %v6155 = vrot.slane %v6153, 2
    %v6173 = vunpack.c.l.b16 %v6136
    %v6174 = vunpack.c.l.b16 %v6137
    %v6175 = vunpack.c.l.b16 %v6138
    %v6176 = vunpack.c.l.b16 %v6139
    %v6177 = vunpack.c.l.b16 %v6140
    %v6178 = vunpack.c.l.b16 %v6141
    %v6179 = vunpack.c.l.b16 %v6142
    %v6180 = vunpack.c.l.b16 %v6143
    %v6181 = vunpack.c.l.b16 %v6144
    %v6182 = vunpack.c.l.b16 %v6145
    %v6183 = vunpack.c.l.b16 %v6146
    %v6184 = vunpack.c.l.b16 %v6147
    %v6185 = vunpack.c.l.b16 %v6148
    %v6186 = vunpack.c.l.b16 %v6149
    %v6187 = vunpack.c.l.b16 %v6150
    %v6188 = vunpack.c.l.b16 %v6151
    %v6189 = vpack.c.b16 %v6174, %v6173
    %v6190 = vpack.c.b16 %v6176, %v6175
    %v6191 = vpack.c.b16 %v6178, %v6177
    %v6192 = vpack.c.b16 %v6180, %v6179
    %v6193 = vpack.c.b16 %v6182, %v6181
    %v6194 = vpack.c.b16 %v6184, %v6183
    %v6195 = vpack.c.b16 %v6186, %v6185
    %v6196 = vpack.c.b16 %v6188, %v6187
    %6205 = vmatprep.subr.bf16.mxu0 0
    %6206 = vmatpush1.bf16.msra.mxu0 %v6189
    %6207 = vmatprep.subr.bf16.mxu0 0
    %6208 = vmatpush1.bf16.msra.mxu0 %v6190
    %6209 = vmatprep.subr.bf16.mxu0 0
    %6210 = vmatpush1.bf16.msra.mxu0 %v6191
    %6211 = vmatprep.subr.bf16.mxu0 0
    %6212 = vmatpush1.bf16.msra.mxu0 %v6192
    %6213 = vmatprep.subr.bf16.mxu0 0
    %6214 = vmatpush1.bf16.msra.mxu0 %v6193
    %6215 = vmatprep.subr.bf16.mxu0 0
    %6216 = vmatpush1.bf16.msra.mxu0 %v6194
    %6217 = vmatprep.subr.bf16.mxu0 0
    %6218 = vmatpush1.bf16.msra.mxu0 %v6195
    %6219 = vmatprep.subr.bf16.mxu0 0
    %6220 = vmatpush1.bf16.msra.mxu0 %v6196
    %6221 = vmatprep.subr.bf16.mxu0 0
    %6222 = vmatpush1.bf16.msra.mxu0 0
    %6223 = vmatprep.subr.bf16.mxu0 0
    %6224 = vmatpush1.bf16.msra.mxu0 0
    %6225 = vmatprep.subr.bf16.mxu0 0
    %6226 = vmatpush1.bf16.msra.mxu0 0
    %6227 = vmatprep.subr.bf16.mxu0 0
    %6228 = vmatpush1.bf16.msra.mxu0 0
    %6229 = vmatprep.subr.bf16.mxu0 0
    %6230 = vmatpush1.bf16.msra.mxu0 0
    %6231 = vmatprep.subr.bf16.mxu0 0
    %6232 = vmatpush1.bf16.msra.mxu0 0
    %6233 = vmatprep.subr.bf16.mxu0 0
    %6234 = vmatpush1.bf16.msra.mxu0 0
    %6235 = vmatprep.subr.bf16.mxu0 0
    %6236 = vmatpush1.bf16.msra.mxu0 0
    %6237 = vmatprep.mubr.bf16.mxu0 0
    %6238 = vmatmul.mubr.bf16.gmra.mrb[0].mxu0 %v6155
    %v6239 = vpop.f32.mrb[0].mxu0
    %v6240 = vadd.f32 0.0, %v6239
    %v6241 = vpop.f32.mrb[0].mxu0
    %v6242 = vpop.f32.mrb[0].mxu0
    %v6243 = vpop.f32.mrb[0].mxu0
    %6244 = vdwg.mxu0
    %v6245 = vadd.f32 %v6133, %v6240
    %v6246 = vld [vmem:[#allocation2 + $0x10] sm:$0x8]
    %s6247 = scalar_lea.vmem [#allocation9], 640
    %v6248 = vld [vmem:[%s6247] sm:$0xf]
    %v6249 = vld [vmem:[%s6247 + $0x4] sm:$0xf]
    %v6250 = vld [vmem:[%s6247 + $0x8] sm:$0xf]
    %v6251 = vld [vmem:[%s6247 + $0xc] sm:$0xf]
    %v6252 = vld [vmem:[%s6247 + $0x10] sm:$0xf]
    %v6253 = vld [vmem:[%s6247 + $0x14] sm:$0xf]
    %v6254 = vld [vmem:[%s6247 + $0x18] sm:$0xf]
    %v6255 = vld [vmem:[%s6247 + $0x1c] sm:$0xf]
    %v6256 = vld [vmem:[%s6247 + $0x20] sm:$0xf]
    %v6257 = vld [vmem:[%s6247 + $0x24] sm:$0xf]
    %v6258 = vld [vmem:[%s6247 + $0x28] sm:$0xf]
    %v6259 = vld [vmem:[%s6247 + $0x2c] sm:$0xf]
    %v6260 = vld [vmem:[%s6247 + $0x30] sm:$0xf]
    %v6261 = vld [vmem:[%s6247 + $0x34] sm:$0xf]
    %v6262 = vld [vmem:[%s6247 + $0x38] sm:$0xf]
    %v6263 = vld [vmem:[%s6247 + $0x3c] sm:$0xf]
    %v6265 = vrot.slane %v6246, 3
    %v6283 = vunpack.c.l.b16 %v6248
    %v6284 = vunpack.c.l.b16 %v6249
    %v6285 = vunpack.c.l.b16 %v6250
    %v6286 = vunpack.c.l.b16 %v6251
    %v6287 = vunpack.c.l.b16 %v6252
    %v6288 = vunpack.c.l.b16 %v6253
    %v6289 = vunpack.c.l.b16 %v6254
    %v6290 = vunpack.c.l.b16 %v6255
    %v6291 = vunpack.c.l.b16 %v6256
    %v6292 = vunpack.c.l.b16 %v6257
    %v6293 = vunpack.c.l.b16 %v6258
    %v6294 = vunpack.c.l.b16 %v6259
    %v6295 = vunpack.c.l.b16 %v6260
    %v6296 = vunpack.c.l.b16 %v6261
    %v6297 = vunpack.c.l.b16 %v6262
    %v6298 = vunpack.c.l.b16 %v6263
    %v6299 = vpack.c.b16 %v6284, %v6283
    %v6300 = vpack.c.b16 %v6286, %v6285
    %v6301 = vpack.c.b16 %v6288, %v6287
    %v6302 = vpack.c.b16 %v6290, %v6289
    %v6303 = vpack.c.b16 %v6292, %v6291
    %v6304 = vpack.c.b16 %v6294, %v6293
    %v6305 = vpack.c.b16 %v6296, %v6295
    %v6306 = vpack.c.b16 %v6298, %v6297
    %6315 = vmatprep.subr.bf16.mxu0 0
    %6316 = vmatpush1.bf16.msra.mxu0 %v6299
    %6317 = vmatprep.subr.bf16.mxu0 0
    %6318 = vmatpush1.bf16.msra.mxu0 %v6300
    %6319 = vmatprep.subr.bf16.mxu0 0
    %6320 = vmatpush1.bf16.msra.mxu0 %v6301
    %6321 = vmatprep.subr.bf16.mxu0 0
    %6322 = vmatpush1.bf16.msra.mxu0 %v6302
    %6323 = vmatprep.subr.bf16.mxu0 0
    %6324 = vmatpush1.bf16.msra.mxu0 %v6303
    %6325 = vmatprep.subr.bf16.mxu0 0
    %6326 = vmatpush1.bf16.msra.mxu0 %v6304
    %6327 = vmatprep.subr.bf16.mxu0 0
    %6328 = vmatpush1.bf16.msra.mxu0 %v6305
    %6329 = vmatprep.subr.bf16.mxu0 0
    %6330 = vmatpush1.bf16.msra.mxu0 %v6306
    %6331 = vmatprep.subr.bf16.mxu0 0
    %6332 = vmatpush1.bf16.msra.mxu0 0
    %6333 = vmatprep.subr.bf16.mxu0 0
    %6334 = vmatpush1.bf16.msra.mxu0 0
    %6335 = vmatprep.subr.bf16.mxu0 0
    %6336 = vmatpush1.bf16.msra.mxu0 0
    %6337 = vmatprep.subr.bf16.mxu0 0
    %6338 = vmatpush1.bf16.msra.mxu0 0
    %6339 = vmatprep.subr.bf16.mxu0 0
    %6340 = vmatpush1.bf16.msra.mxu0 0
    %6341 = vmatprep.subr.bf16.mxu0 0
    %6342 = vmatpush1.bf16.msra.mxu0 0
    %6343 = vmatprep.subr.bf16.mxu0 0
    %6344 = vmatpush1.bf16.msra.mxu0 0
    %6345 = vmatprep.subr.bf16.mxu0 0
    %6346 = vmatpush1.bf16.msra.mxu0 0
    %6347 = vmatprep.mubr.bf16.mxu0 0
    %6348 = vmatmul.mubr.bf16.gmra.mrb[0].mxu0 %v6265
    %v6349 = vpop.f32.mrb[0].mxu0
    %v6350 = vadd.f32 0.0, %v6349
    %v6351 = vpop.f32.mrb[0].mxu0
    %v6352 = vpop.f32.mrb[0].mxu0
    %v6353 = vpop.f32.mrb[0].mxu0
    %6354 = vdwg.mxu0
    %v6355 = vadd.f32 %v6245, %v6350
    %s6356 = scalar_lea.vmem [#allocation9], 704
    %v6357 = vld [vmem:[%s6356] sm:$0xf]
    %v6358 = vld [vmem:[%s6356 + $0x4] sm:$0xf]
    %v6359 = vld [vmem:[%s6356 + $0x8] sm:$0xf]
    %v6360 = vld [vmem:[%s6356 + $0xc] sm:$0xf]
    %v6361 = vld [vmem:[%s6356 + $0x10] sm:$0xf]
    %v6362 = vld [vmem:[%s6356 + $0x14] sm:$0xf]
    %v6363 = vld [vmem:[%s6356 + $0x18] sm:$0xf]
    %v6364 = vld [vmem:[%s6356 + $0x1c] sm:$0xf]
    %v6365 = vld [vmem:[%s6356 + $0x20] sm:$0xf]
    %v6366 = vld [vmem:[%s6356 + $0x24] sm:$0xf]
    %v6367 = vld [vmem:[%s6356 + $0x28] sm:$0xf]
    %v6368 = vld [vmem:[%s6356 + $0x2c] sm:$0xf]
    %v6369 = vld [vmem:[%s6356 + $0x30] sm:$0xf]
    %v6370 = vld [vmem:[%s6356 + $0x34] sm:$0xf]
    %v6371 = vld [vmem:[%s6356 + $0x38] sm:$0xf]
    %v6372 = vld [vmem:[%s6356 + $0x3c] sm:$0xf]
    %v6374 = vshrl.u32 %v6246, 16
    %v6376 = vrot.slane %v6374, 3
    %v6394 = vunpack.c.l.b16 %v6357
    %v6395 = vunpack.c.l.b16 %v6358
    %v6396 = vunpack.c.l.b16 %v6359
    %v6397 = vunpack.c.l.b16 %v6360
    %v6398 = vunpack.c.l.b16 %v6361
    %v6399 = vunpack.c.l.b16 %v6362
    %v6400 = vunpack.c.l.b16 %v6363
    %v6401 = vunpack.c.l.b16 %v6364
    %v6402 = vunpack.c.l.b16 %v6365
    %v6403 = vunpack.c.l.b16 %v6366
    %v6404 = vunpack.c.l.b16 %v6367
    %v6405 = vunpack.c.l.b16 %v6368
    %v6406 = vunpack.c.l.b16 %v6369
    %v6407 = vunpack.c.l.b16 %v6370
    %v6408 = vunpack.c.l.b16 %v6371
    %v6409 = vunpack.c.l.b16 %v6372
    %v6410 = vpack.c.b16 %v6395, %v6394
    %v6411 = vpack.c.b16 %v6397, %v6396
    %v6412 = vpack.c.b16 %v6399, %v6398
    %v6413 = vpack.c.b16 %v6401, %v6400
    %v6414 = vpack.c.b16 %v6403, %v6402
    %v6415 = vpack.c.b16 %v6405, %v6404
    %v6416 = vpack.c.b16 %v6407, %v6406
    %v6417 = vpack.c.b16 %v6409, %v6408
    %6426 = vmatprep.subr.bf16.mxu0 0
    %6427 = vmatpush1.bf16.msra.mxu0 %v6410
    %6428 = vmatprep.subr.bf16.mxu0 0
    %6429 = vmatpush1.bf16.msra.mxu0 %v6411
    %6430 = vmatprep.subr.bf16.mxu0 0
    %6431 = vmatpush1.bf16.msra.mxu0 %v6412
    %6432 = vmatprep.subr.bf16.mxu0 0
    %6433 = vmatpush1.bf16.msra.mxu0 %v6413
    %6434 = vmatprep.subr.bf16.mxu0 0
    %6435 = vmatpush1.bf16.msra.mxu0 %v6414
    %6436 = vmatprep.subr.bf16.mxu0 0
    %6437 = vmatpush1.bf16.msra.mxu0 %v6415
    %6438 = vmatprep.subr.bf16.mxu0 0
    %6439 = vmatpush1.bf16.msra.mxu0 %v6416
    %6440 = vmatprep.subr.bf16.mxu0 0
    %6441 = vmatpush1.bf16.msra.mxu0 %v6417
    %6442 = vmatprep.subr.bf16.mxu0 0
    %6443 = vmatpush1.bf16.msra.mxu0 0
    %6444 = vmatprep.subr.bf16.mxu0 0
    %6445 = vmatpush1.bf16.msra.mxu0 0
    %6446 = vmatprep.subr.bf16.mxu0 0
    %6447 = vmatpush1.bf16.msra.mxu0 0
    %6448 = vmatprep.subr.bf16.mxu0 0
    %6449 = vmatpush1.bf16.msra.mxu0 0
    %6450 = vmatprep.subr.bf16.mxu0 0
    %6451 = vmatpush1.bf16.msra.mxu0 0
    %6452 = vmatprep.subr.bf16.mxu0 0
    %6453 = vmatpush1.bf16.msra.mxu0 0
    %6454 = vmatprep.subr.bf16.mxu0 0
    %6455 = vmatpush1.bf16.msra.mxu0 0
    %6456 = vmatprep.subr.bf16.mxu0 0
    %6457 = vmatpush1.bf16.msra.mxu0 0
    %6458 = vmatprep.mubr.bf16.mxu0 0
    %6459 = vmatmul.mubr.bf16.gmra.mrb[0].mxu0 %v6376
    %v6460 = vpop.f32.mrb[0].mxu0
    %v6461 = vadd.f32 0.0, %v6460
    %v6462 = vpop.f32.mrb[0].mxu0
    %v6463 = vpop.f32.mrb[0].mxu0
    %v6464 = vpop.f32.mrb[0].mxu0
    %6465 = vdwg.mxu0
    %v6466 = vadd.f32 %v6355, %v6461
    %v6467 = vld [vmem:[%s14] sm:$0x1]
    %v6468 = vadd.f32 %v6466, %v6467
    %6469 = vst [vmem:[#allocation11] sm:$0x1] %v6468
    %v6470 = vld [vmem:[#allocation2 + $0x18] sm:$0x4]
    %v6471 = vld [vmem:[#allocation9] sm:$0xf]
    %v6472 = vld [vmem:[#allocation9 + $0x4] sm:$0xf]
    %v6473 = vld [vmem:[#allocation9 + $0x8] sm:$0xf]
    %v6474 = vld [vmem:[#allocation9 + $0xc] sm:$0xf]
    %v6475 = vld [vmem:[#allocation9 + $0x10] sm:$0xf]
    %v6476 = vld [vmem:[#allocation9 + $0x14] sm:$0xf]
    %v6477 = vld [vmem:[#allocation9 + $0x18] sm:$0xf]
    %v6478 = vld [vmem:[#allocation9 + $0x1c] sm:$0xf]
    %v6479 = vld [vmem:[#allocation9 + $0x20] sm:$0xf]
    %v6480 = vld [vmem:[#allocation9 + $0x24] sm:$0xf]
    %v6481 = vld [vmem:[#allocation9 + $0x28] sm:$0xf]
    %v6482 = vld [vmem:[#allocation9 + $0x2c] sm:$0xf]
    %v6483 = vld [vmem:[#allocation9 + $0x30] sm:$0xf]
    %v6484 = vld [vmem:[#allocation9 + $0x34] sm:$0xf]
    %v6485 = vld [vmem:[#allocation9 + $0x38] sm:$0xf]
    %v6486 = vld [vmem:[#allocation9 + $0x3c] sm:$0xf]
    %v6487 = vld [vmem:[%s5163] sm:$0xf]
    %v6488 = vld [vmem:[%s5163 + $0x4] sm:$0xf]
    %v6489 = vld [vmem:[%s5163 + $0x8] sm:$0xf]
    %v6490 = vld [vmem:[%s5163 + $0xc] sm:$0xf]
    %v6491 = vld [vmem:[%s5163 + $0x10] sm:$0xf]
    %v6492 = vld [vmem:[%s5163 + $0x14] sm:$0xf]
    %v6493 = vld [vmem:[%s5163 + $0x18] sm:$0xf]
    %v6494 = vld [vmem:[%s5163 + $0x1c] sm:$0xf]
    %v6495 = vld [vmem:[%s5163 + $0x20] sm:$0xf]
    %v6496 = vld [vmem:[%s5163 + $0x24] sm:$0xf]
    %v6497 = vld [vmem:[%s5163 + $0x28] sm:$0xf]
    %v6498 = vld [vmem:[%s5163 + $0x2c] sm:$0xf]
    %v6499 = vld [vmem:[%s5163 + $0x30] sm:$0xf]
    %v6500 = vld [vmem:[%s5163 + $0x34] sm:$0xf]
    %v6501 = vld [vmem:[%s5163 + $0x38] sm:$0xf]
    %v6502 = vld [vmem:[%s5163 + $0x3c] sm:$0xf]
    %v6504 = vshrl.u32 %v6470, 16
    %v6506 = vrot.slane %v6504, 2
    %v6524 = vunpack.c.l.b16 %v6487
    %v6525 = vunpack.c.l.b16 %v6488
    %v6526 = vunpack.c.l.b16 %v6489
    %v6527 = vunpack.c.l.b16 %v6490
    %v6528 = vunpack.c.l.b16 %v6491
    %v6529 = vunpack.c.l.b16 %v6492
    %v6530 = vunpack.c.l.b16 %v6493
    %v6531 = vunpack.c.l.b16 %v6494
    %v6532 = vunpack.c.l.b16 %v6495
    %v6533 = vunpack.c.l.b16 %v6496
    %v6534 = vunpack.c.l.b16 %v6497
    %v6535 = vunpack.c.l.b16 %v6498
    %v6536 = vunpack.c.l.b16 %v6499
    %v6537 = vunpack.c.l.b16 %v6500
    %v6538 = vunpack.c.l.b16 %v6501
    %v6539 = vunpack.c.l.b16 %v6502
    %v6540 = vpack.c.b16 %v6525, %v6524
    %v6541 = vpack.c.b16 %v6527, %v6526
    %v6542 = vpack.c.b16 %v6529, %v6528
    %v6543 = vpack.c.b16 %v6531, %v6530
    %v6544 = vpack.c.b16 %v6533, %v6532
    %v6545 = vpack.c.b16 %v6535, %v6534
    %v6546 = vpack.c.b16 %v6537, %v6536
    %v6547 = vpack.c.b16 %v6539, %v6538
    %6556 = vmatprep.subr.bf16.mxu0 0
    %6557 = vmatpush1.bf16.msra.mxu0 %v6540
    %6558 = vmatprep.subr.bf16.mxu0 0
    %6559 = vmatpush1.bf16.msra.mxu0 %v6541
    %6560 = vmatprep.subr.bf16.mxu0 0
    %6561 = vmatpush1.bf16.msra.mxu0 %v6542
    %6562 = vmatprep.subr.bf16.mxu0 0
    %6563 = vmatpush1.bf16.msra.mxu0 %v6543
    %6564 = vmatprep.subr.bf16.mxu0 0
    %6565 = vmatpush1.bf16.msra.mxu0 %v6544
    %6566 = vmatprep.subr.bf16.mxu0 0
    %6567 = vmatpush1.bf16.msra.mxu0 %v6545
    %6568 = vmatprep.subr.bf16.mxu0 0
    %6569 = vmatpush1.bf16.msra.mxu0 %v6546
    %6570 = vmatprep.subr.bf16.mxu0 0
    %6571 = vmatpush1.bf16.msra.mxu0 %v6547
    %6572 = vmatprep.subr.bf16.mxu0 0
    %6573 = vmatpush1.bf16.msra.mxu0 0
    %6574 = vmatprep.subr.bf16.mxu0 0
    %6575 = vmatpush1.bf16.msra.mxu0 0
    %6576 = vmatprep.subr.bf16.mxu0 0
    %6577 = vmatpush1.bf16.msra.mxu0 0
    %6578 = vmatprep.subr.bf16.mxu0 0
    %6579 = vmatpush1.bf16.msra.mxu0 0
    %6580 = vmatprep.subr.bf16.mxu0 0
    %6581 = vmatpush1.bf16.msra.mxu0 0
    %6582 = vmatprep.subr.bf16.mxu0 0
    %6583 = vmatpush1.bf16.msra.mxu0 0
    %6584 = vmatprep.subr.bf16.mxu0 0
    %6585 = vmatpush1.bf16.msra.mxu0 0
    %6586 = vmatprep.subr.bf16.mxu0 0
    %6587 = vmatpush1.bf16.msra.mxu0 0
    %6588 = vmatprep.mubr.bf16.mxu0 0
    %6589 = vmatmul.mubr.bf16.gmra.mrb[0].mxu0 %v6506
    %v6590 = vpop.f32.mrb[0].mxu0
    %v6591 = vadd.f32 0.0, %v6590
    %v6592 = vpop.f32.mrb[0].mxu0
    %v6593 = vpop.f32.mrb[0].mxu0
    %v6594 = vpop.f32.mrb[0].mxu0
    %6595 = vdwg.mxu0
    %v6597 = vrot.slane %v6470, 2
    %v6615 = vunpack.c.l.b16 %v6471
    %v6616 = vunpack.c.l.b16 %v6472
    %v6617 = vunpack.c.l.b16 %v6473
    %v6618 = vunpack.c.l.b16 %v6474
    %v6619 = vunpack.c.l.b16 %v6475
    %v6620 = vunpack.c.l.b16 %v6476
    %v6621 = vunpack.c.l.b16 %v6477
    %v6622 = vunpack.c.l.b16 %v6478
    %v6623 = vunpack.c.l.b16 %v6479
    %v6624 = vunpack.c.l.b16 %v6480
    %v6625 = vunpack.c.l.b16 %v6481
    %v6626 = vunpack.c.l.b16 %v6482
    %v6627 = vunpack.c.l.b16 %v6483
    %v6628 = vunpack.c.l.b16 %v6484
    %v6629 = vunpack.c.l.b16 %v6485
    %v6630 = vunpack.c.l.b16 %v6486
    %v6631 = vpack.c.b16 %v6616, %v6615
    %v6632 = vpack.c.b16 %v6618, %v6617
    %v6633 = vpack.c.b16 %v6620, %v6619
    %v6634 = vpack.c.b16 %v6622, %v6621
    %v6635 = vpack.c.b16 %v6624, %v6623
    %v6636 = vpack.c.b16 %v6626, %v6625
    %v6637 = vpack.c.b16 %v6628, %v6627
    %v6638 = vpack.c.b16 %v6630, %v6629
    %6647 = vmatprep.subr.bf16.mxu0 0
    %6648 = vmatpush1.bf16.msra.mxu0 %v6631
    %6649 = vmatprep.subr.bf16.mxu0 0
    %6650 = vmatpush1.bf16.msra.mxu0 %v6632
    %6651 = vmatprep.subr.bf16.mxu0 0
    %6652 = vmatpush1.bf16.msra.mxu0 %v6633
    %6653 = vmatprep.subr.bf16.mxu0 0
    %6654 = vmatpush1.bf16.msra.mxu0 %v6634
    %6655 = vmatprep.subr.bf16.mxu0 0
    %6656 = vmatpush1.bf16.msra.mxu0 %v6635
    %6657 = vmatprep.subr.bf16.mxu0 0
    %6658 = vmatpush1.bf16.msra.mxu0 %v6636
    %6659 = vmatprep.subr.bf16.mxu0 0
    %6660 = vmatpush1.bf16.msra.mxu0 %v6637
    %6661 = vmatprep.subr.bf16.mxu0 0
    %6662 = vmatpush1.bf16.msra.mxu0 %v6638
    %6663 = vmatprep.subr.bf16.mxu0 0
    %6664 = vmatpush1.bf16.msra.mxu0 0
    %6665 = vmatprep.subr.bf16.mxu0 0
    %6666 = vmatpush1.bf16.msra.mxu0 0
    %6667 = vmatprep.subr.bf16.mxu0 0
    %6668 = vmatpush1.bf16.msra.mxu0 0
    %6669 = vmatprep.subr.bf16.mxu0 0
    %6670 = vmatpush1.bf16.msra.mxu0 0
    %6671 = vmatprep.subr.bf16.mxu0 0
    %6672 = vmatpush1.bf16.msra.mxu0 0
    %6673 = vmatprep.subr.bf16.mxu0 0
    %6674 = vmatpush1.bf16.msra.mxu0 0
    %6675 = vmatprep.subr.bf16.mxu0 0
    %6676 = vmatpush1.bf16.msra.mxu0 0
    %6677 = vmatprep.subr.bf16.mxu0 0
    %6678 = vmatpush1.bf16.msra.mxu0 0
    %6679 = vmatprep.mubr.bf16.mxu0 0
    %6680 = vmatmul.mubr.bf16.gmra.mrb[0].mxu0 %v6597
    %v6681 = vpop.f32.mrb[0].mxu0
    %v6682 = vadd.f32 %v6591, %v6681
    %v6683 = vpop.f32.mrb[0].mxu0
    %v6684 = vpop.f32.mrb[0].mxu0
    %v6685 = vpop.f32.mrb[0].mxu0
    %6686 = vdwg.mxu0
    %v6687 = vld [vmem:[#allocation2 + $0x18] sm:$0x8]
    %v6688 = vld [vmem:[%s5365] sm:$0xf]
    %v6689 = vld [vmem:[%s5365 + $0x4] sm:$0xf]
    %v6690 = vld [vmem:[%s5365 + $0x8] sm:$0xf]
    %v6691 = vld [vmem:[%s5365 + $0xc] sm:$0xf]
    %v6692 = vld [vmem:[%s5365 + $0x10] sm:$0xf]
    %v6693 = vld [vmem:[%s5365 + $0x14] sm:$0xf]
    %v6694 = vld [vmem:[%s5365 + $0x18] sm:$0xf]
    %v6695 = vld [vmem:[%s5365 + $0x1c] sm:$0xf]
    %v6696 = vld [vmem:[%s5365 + $0x20] sm:$0xf]
    %v6697 = vld [vmem:[%s5365 + $0x24] sm:$0xf]
    %v6698 = vld [vmem:[%s5365 + $0x28] sm:$0xf]
    %v6699 = vld [vmem:[%s5365 + $0x2c] sm:$0xf]
    %v6700 = vld [vmem:[%s5365 + $0x30] sm:$0xf]
    %v6701 = vld [vmem:[%s5365 + $0x34] sm:$0xf]
    %v6702 = vld [vmem:[%s5365 + $0x38] sm:$0xf]
    %v6703 = vld [vmem:[%s5365 + $0x3c] sm:$0xf]
    %v6705 = vrot.slane %v6687, 3
    %v6723 = vunpack.c.l.b16 %v6688
    %v6724 = vunpack.c.l.b16 %v6689
    %v6725 = vunpack.c.l.b16 %v6690
    %v6726 = vunpack.c.l.b16 %v6691
    %v6727 = vunpack.c.l.b16 %v6692
    %v6728 = vunpack.c.l.b16 %v6693
    %v6729 = vunpack.c.l.b16 %v6694
    %v6730 = vunpack.c.l.b16 %v6695
    %v6731 = vunpack.c.l.b16 %v6696
    %v6732 = vunpack.c.l.b16 %v6697
    %v6733 = vunpack.c.l.b16 %v6698
    %v6734 = vunpack.c.l.b16 %v6699
    %v6735 = vunpack.c.l.b16 %v6700
    %v6736 = vunpack.c.l.b16 %v6701
    %v6737 = vunpack.c.l.b16 %v6702
    %v6738 = vunpack.c.l.b16 %v6703
    %v6739 = vpack.c.b16 %v6724, %v6723
    %v6740 = vpack.c.b16 %v6726, %v6725
    %v6741 = vpack.c.b16 %v6728, %v6727
    %v6742 = vpack.c.b16 %v6730, %v6729
    %v6743 = vpack.c.b16 %v6732, %v6731
    %v6744 = vpack.c.b16 %v6734, %v6733
    %v6745 = vpack.c.b16 %v6736, %v6735
    %v6746 = vpack.c.b16 %v6738, %v6737
    %6755 = vmatprep.subr.bf16.mxu0 0
    %6756 = vmatpush1.bf16.msra.mxu0 %v6739
    %6757 = vmatprep.subr.bf16.mxu0 0
    %6758 = vmatpush1.bf16.msra.mxu0 %v6740
    %6759 = vmatprep.subr.bf16.mxu0 0
    %6760 = vmatpush1.bf16.msra.mxu0 %v6741
    %6761 = vmatprep.subr.bf16.mxu0 0
    %6762 = vmatpush1.bf16.msra.mxu0 %v6742
    %6763 = vmatprep.subr.bf16.mxu0 0
    %6764 = vmatpush1.bf16.msra.mxu0 %v6743
    %6765 = vmatprep.subr.bf16.mxu0 0
    %6766 = vmatpush1.bf16.msra.mxu0 %v6744
    %6767 = vmatprep.subr.bf16.mxu0 0
    %6768 = vmatpush1.bf16.msra.mxu0 %v6745
    %6769 = vmatprep.subr.bf16.mxu0 0
    %6770 = vmatpush1.bf16.msra.mxu0 %v6746
    %6771 = vmatprep.subr.bf16.mxu0 0
    %6772 = vmatpush1.bf16.msra.mxu0 0
    %6773 = vmatprep.subr.bf16.mxu0 0
    %6774 = vmatpush1.bf16.msra.mxu0 0
    %6775 = vmatprep.subr.bf16.mxu0 0
    %6776 = vmatpush1.bf16.msra.mxu0 0
    %6777 = vmatprep.subr.bf16.mxu0 0
    %6778 = vmatpush1.bf16.msra.mxu0 0
    %6779 = vmatprep.subr.bf16.mxu0 0
    %6780 = vmatpush1.bf16.msra.mxu0 0
    %6781 = vmatprep.subr.bf16.mxu0 0
    %6782 = vmatpush1.bf16.msra.mxu0 0
    %6783 = vmatprep.subr.bf16.mxu0 0
    %6784 = vmatpush1.bf16.msra.mxu0 0
    %6785 = vmatprep.subr.bf16.mxu0 0
    %6786 = vmatpush1.bf16.msra.mxu0 0
    %6787 = vmatprep.mubr.bf16.mxu0 0
    %6788 = vmatmul.mubr.bf16.gmra.mrb[0].mxu0 %v6705
    %v6789 = vpop.f32.mrb[0].mxu0
    %v6790 = vadd.f32 0.0, %v6789
    %v6791 = vpop.f32.mrb[0].mxu0
    %v6792 = vpop.f32.mrb[0].mxu0
    %v6793 = vpop.f32.mrb[0].mxu0
    %6794 = vdwg.mxu0
    %v6795 = vadd.f32 %v6682, %v6790
    %v6796 = vld [vmem:[#allocation2 + $0x18] sm:$0x10]
    %v6797 = vld [vmem:[%s5475] sm:$0xf]
    %v6798 = vld [vmem:[%s5475 + $0x4] sm:$0xf]
    %v6799 = vld [vmem:[%s5475 + $0x8] sm:$0xf]
    %v6800 = vld [vmem:[%s5475 + $0xc] sm:$0xf]
    %v6801 = vld [vmem:[%s5475 + $0x10] sm:$0xf]
    %v6802 = vld [vmem:[%s5475 + $0x14] sm:$0xf]
    %v6803 = vld [vmem:[%s5475 + $0x18] sm:$0xf]
    %v6804 = vld [vmem:[%s5475 + $0x1c] sm:$0xf]
    %v6805 = vld [vmem:[%s5475 + $0x20] sm:$0xf]
    %v6806 = vld [vmem:[%s5475 + $0x24] sm:$0xf]
    %v6807 = vld [vmem:[%s5475 + $0x28] sm:$0xf]
    %v6808 = vld [vmem:[%s5475 + $0x2c] sm:$0xf]
    %v6809 = vld [vmem:[%s5475 + $0x30] sm:$0xf]
    %v6810 = vld [vmem:[%s5475 + $0x34] sm:$0xf]
    %v6811 = vld [vmem:[%s5475 + $0x38] sm:$0xf]
    %v6812 = vld [vmem:[%s5475 + $0x3c] sm:$0xf]
    %v6814 = vshrl.u32 %v6796, 16
    %v6816 = vrot.slane %v6814, 4
    %v6834 = vunpack.c.l.b16 %v6797
    %v6835 = vunpack.c.l.b16 %v6798
    %v6836 = vunpack.c.l.b16 %v6799
    %v6837 = vunpack.c.l.b16 %v6800
    %v6838 = vunpack.c.l.b16 %v6801
    %v6839 = vunpack.c.l.b16 %v6802
    %v6840 = vunpack.c.l.b16 %v6803
    %v6841 = vunpack.c.l.b16 %v6804
    %v6842 = vunpack.c.l.b16 %v6805
    %v6843 = vunpack.c.l.b16 %v6806
    %v6844 = vunpack.c.l.b16 %v6807
    %v6845 = vunpack.c.l.b16 %v6808
    %v6846 = vunpack.c.l.b16 %v6809
    %v6847 = vunpack.c.l.b16 %v6810
    %v6848 = vunpack.c.l.b16 %v6811
    %v6849 = vunpack.c.l.b16 %v6812
    %v6850 = vpack.c.b16 %v6835, %v6834
    %v6851 = vpack.c.b16 %v6837, %v6836
    %v6852 = vpack.c.b16 %v6839, %v6838
    %v6853 = vpack.c.b16 %v6841, %v6840
    %v6854 = vpack.c.b16 %v6843, %v6842
    %v6855 = vpack.c.b16 %v6845, %v6844
    %v6856 = vpack.c.b16 %v6847, %v6846
    %v6857 = vpack.c.b16 %v6849, %v6848
    %6866 = vmatprep.subr.bf16.mxu0 0
    %6867 = vmatpush1.bf16.msra.mxu0 %v6850
    %6868 = vmatprep.subr.bf16.mxu0 0
    %6869 = vmatpush1.bf16.msra.mxu0 %v6851
    %6870 = vmatprep.subr.bf16.mxu0 0
    %6871 = vmatpush1.bf16.msra.mxu0 %v6852
    %6872 = vmatprep.subr.bf16.mxu0 0
    %6873 = vmatpush1.bf16.msra.mxu0 %v6853
    %6874 = vmatprep.subr.bf16.mxu0 0
    %6875 = vmatpush1.bf16.msra.mxu0 %v6854
    %6876 = vmatprep.subr.bf16.mxu0 0
    %6877 = vmatpush1.bf16.msra.mxu0 %v6855
    %6878 = vmatprep.subr.bf16.mxu0 0
    %6879 = vmatpush1.bf16.msra.mxu0 %v6856
    %6880 = vmatprep.subr.bf16.mxu0 0
    %6881 = vmatpush1.bf16.msra.mxu0 %v6857
    %6882 = vmatprep.subr.bf16.mxu0 0
    %6883 = vmatpush1.bf16.msra.mxu0 0
    %6884 = vmatprep.subr.bf16.mxu0 0
    %6885 = vmatpush1.bf16.msra.mxu0 0
    %6886 = vmatprep.subr.bf16.mxu0 0
    %6887 = vmatpush1.bf16.msra.mxu0 0
    %6888 = vmatprep.subr.bf16.mxu0 0
    %6889 = vmatpush1.bf16.msra.mxu0 0
    %6890 = vmatprep.subr.bf16.mxu0 0
    %6891 = vmatpush1.bf16.msra.mxu0 0
    %6892 = vmatprep.subr.bf16.mxu0 0
    %6893 = vmatpush1.bf16.msra.mxu0 0
    %6894 = vmatprep.subr.bf16.mxu0 0
    %6895 = vmatpush1.bf16.msra.mxu0 0
    %6896 = vmatprep.subr.bf16.mxu0 0
    %6897 = vmatpush1.bf16.msra.mxu0 0
    %6898 = vmatprep.mubr.bf16.mxu0 0
    %6899 = vmatmul.mubr.bf16.gmra.mrb[0].mxu0 %v6816
    %v6900 = vpop.f32.mrb[0].mxu0
    %v6901 = vadd.f32 0.0, %v6900
    %v6902 = vpop.f32.mrb[0].mxu0
    %v6903 = vpop.f32.mrb[0].mxu0
    %v6904 = vpop.f32.mrb[0].mxu0
    %6905 = vdwg.mxu0
    %v6906 = vadd.f32 %v6795, %v6901
    %v6907 = vld [vmem:[#allocation2 + $0x18] sm:$0x20]
    %v6908 = vld [vmem:[%s5587] sm:$0xf]
    %v6909 = vld [vmem:[%s5587 + $0x4] sm:$0xf]
    %v6910 = vld [vmem:[%s5587 + $0x8] sm:$0xf]
    %v6911 = vld [vmem:[%s5587 + $0xc] sm:$0xf]
    %v6912 = vld [vmem:[%s5587 + $0x10] sm:$0xf]
    %v6913 = vld [vmem:[%s5587 + $0x14] sm:$0xf]
    %v6914 = vld [vmem:[%s5587 + $0x18] sm:$0xf]
    %v6915 = vld [vmem:[%s5587 + $0x1c] sm:$0xf]
    %v6916 = vld [vmem:[%s5587 + $0x20] sm:$0xf]
    %v6917 = vld [vmem:[%s5587 + $0x24] sm:$0xf]
    %v6918 = vld [vmem:[%s5587 + $0x28] sm:$0xf]
    %v6919 = vld [vmem:[%s5587 + $0x2c] sm:$0xf]
    %v6920 = vld [vmem:[%s5587 + $0x30] sm:$0xf]
    %v6921 = vld [vmem:[%s5587 + $0x34] sm:$0xf]
    %v6922 = vld [vmem:[%s5587 + $0x38] sm:$0xf]
    %v6923 = vld [vmem:[%s5587 + $0x3c] sm:$0xf]
    %v6925 = vrot.slane %v6907, 5
    %v6943 = vunpack.c.l.b16 %v6908
    %v6944 = vunpack.c.l.b16 %v6909
    %v6945 = vunpack.c.l.b16 %v6910
    %v6946 = vunpack.c.l.b16 %v6911
    %v6947 = vunpack.c.l.b16 %v6912
    %v6948 = vunpack.c.l.b16 %v6913
    %v6949 = vunpack.c.l.b16 %v6914
    %v6950 = vunpack.c.l.b16 %v6915
    %v6951 = vunpack.c.l.b16 %v6916
    %v6952 = vunpack.c.l.b16 %v6917
    %v6953 = vunpack.c.l.b16 %v6918
    %v6954 = vunpack.c.l.b16 %v6919
    %v6955 = vunpack.c.l.b16 %v6920
    %v6956 = vunpack.c.l.b16 %v6921
    %v6957 = vunpack.c.l.b16 %v6922
    %v6958 = vunpack.c.l.b16 %v6923
    %v6959 = vpack.c.b16 %v6944, %v6943
    %v6960 = vpack.c.b16 %v6946, %v6945
    %v6961 = vpack.c.b16 %v6948, %v6947
    %v6962 = vpack.c.b16 %v6950, %v6949
    %v6963 = vpack.c.b16 %v6952, %v6951
    %v6964 = vpack.c.b16 %v6954, %v6953
    %v6965 = vpack.c.b16 %v6956, %v6955
    %v6966 = vpack.c.b16 %v6958, %v6957
    %6975 = vmatprep.subr.bf16.mxu0 0
    %6976 = vmatpush1.bf16.msra.mxu0 %v6959
    %6977 = vmatprep.subr.bf16.mxu0 0
    %6978 = vmatpush1.bf16.msra.mxu0 %v6960
    %6979 = vmatprep.subr.bf16.mxu0 0
    %6980 = vmatpush1.bf16.msra.mxu0 %v6961
    %6981 = vmatprep.subr.bf16.mxu0 0
    %6982 = vmatpush1.bf16.msra.mxu0 %v6962
    %6983 = vmatprep.subr.bf16.mxu0 0
    %6984 = vmatpush1.bf16.msra.mxu0 %v6963
    %6985 = vmatprep.subr.bf16.mxu0 0
    %6986 = vmatpush1.bf16.msra.mxu0 %v6964
    %6987 = vmatprep.subr.bf16.mxu0 0
    %6988 = vmatpush1.bf16.msra.mxu0 %v6965
    %6989 = vmatprep.subr.bf16.mxu0 0
    %6990 = vmatpush1.bf16.msra.mxu0 %v6966
    %6991 = vmatprep.subr.bf16.mxu0 0
    %6992 = vmatpush1.bf16.msra.mxu0 0
    %6993 = vmatprep.subr.bf16.mxu0 0
    %6994 = vmatpush1.bf16.msra.mxu0 0
    %6995 = vmatprep.subr.bf16.mxu0 0
    %6996 = vmatpush1.bf16.msra.mxu0 0
    %6997 = vmatprep.subr.bf16.mxu0 0
    %6998 = vmatpush1.bf16.msra.mxu0 0
    %6999 = vmatprep.subr.bf16.mxu0 0
    %7000 = vmatpush1.bf16.msra.mxu0 0
    %7001 = vmatprep.subr.bf16.mxu0 0
    %7002 = vmatpush1.bf16.msra.mxu0 0
    %7003 = vmatprep.subr.bf16.mxu0 0
    %7004 = vmatpush1.bf16.msra.mxu0 0
    %7005 = vmatprep.subr.bf16.mxu0 0
    %7006 = vmatpush1.bf16.msra.mxu0 0
    %7007 = vmatprep.mubr.bf16.mxu0 0
    %7008 = vmatmul.mubr.bf16.gmra.mrb[0].mxu0 %v6925
    %v7009 = vpop.f32.mrb[0].mxu0
    %v7010 = vadd.f32 0.0, %v7009
    %v7011 = vpop.f32.mrb[0].mxu0
    %v7012 = vpop.f32.mrb[0].mxu0
    %v7013 = vpop.f32.mrb[0].mxu0
    %7014 = vdwg.mxu0
    %v7015 = vadd.f32 %v6906, %v7010
    %v7016 = vld [vmem:[%s5696] sm:$0xf]
    %v7017 = vld [vmem:[%s5696 + $0x4] sm:$0xf]
    %v7018 = vld [vmem:[%s5696 + $0x8] sm:$0xf]
    %v7019 = vld [vmem:[%s5696 + $0xc] sm:$0xf]
    %v7020 = vld [vmem:[%s5696 + $0x10] sm:$0xf]
    %v7021 = vld [vmem:[%s5696 + $0x14] sm:$0xf]
    %v7022 = vld [vmem:[%s5696 + $0x18] sm:$0xf]
    %v7023 = vld [vmem:[%s5696 + $0x1c] sm:$0xf]
    %v7024 = vld [vmem:[%s5696 + $0x20] sm:$0xf]
    %v7025 = vld [vmem:[%s5696 + $0x24] sm:$0xf]
    %v7026 = vld [vmem:[%s5696 + $0x28] sm:$0xf]
    %v7027 = vld [vmem:[%s5696 + $0x2c] sm:$0xf]
    %v7028 = vld [vmem:[%s5696 + $0x30] sm:$0xf]
    %v7029 = vld [vmem:[%s5696 + $0x34] sm:$0xf]
    %v7030 = vld [vmem:[%s5696 + $0x38] sm:$0xf]
    %v7031 = vld [vmem:[%s5696 + $0x3c] sm:$0xf]
    %v7033 = vshrl.u32 %v6907, 16
    %v7035 = vrot.slane %v7033, 5
    %v7053 = vunpack.c.l.b16 %v7016
    %v7054 = vunpack.c.l.b16 %v7017
    %v7055 = vunpack.c.l.b16 %v7018
    %v7056 = vunpack.c.l.b16 %v7019
    %v7057 = vunpack.c.l.b16 %v7020
    %v7058 = vunpack.c.l.b16 %v7021
    %v7059 = vunpack.c.l.b16 %v7022
    %v7060 = vunpack.c.l.b16 %v7023
    %v7061 = vunpack.c.l.b16 %v7024
    %v7062 = vunpack.c.l.b16 %v7025
    %v7063 = vunpack.c.l.b16 %v7026
    %v7064 = vunpack.c.l.b16 %v7027
    %v7065 = vunpack.c.l.b16 %v7028
    %v7066 = vunpack.c.l.b16 %v7029
    %v7067 = vunpack.c.l.b16 %v7030
    %v7068 = vunpack.c.l.b16 %v7031
    %v7069 = vpack.c.b16 %v7054, %v7053
    %v7070 = vpack.c.b16 %v7056, %v7055
    %v7071 = vpack.c.b16 %v7058, %v7057
    %v7072 = vpack.c.b16 %v7060, %v7059
    %v7073 = vpack.c.b16 %v7062, %v7061
    %v7074 = vpack.c.b16 %v7064, %v7063
    %v7075 = vpack.c.b16 %v7066, %v7065
    %v7076 = vpack.c.b16 %v7068, %v7067
    %7085 = vmatprep.subr.bf16.mxu0 0
    %7086 = vmatpush1.bf16.msra.mxu0 %v7069
    %7087 = vmatprep.subr.bf16.mxu0 0
    %7088 = vmatpush1.bf16.msra.mxu0 %v7070
    %7089 = vmatprep.subr.bf16.mxu0 0
    %7090 = vmatpush1.bf16.msra.mxu0 %v7071
    %7091 = vmatprep.subr.bf16.mxu0 0
    %7092 = vmatpush1.bf16.msra.mxu0 %v7072
    %7093 = vmatprep.subr.bf16.mxu0 0
    %7094 = vmatpush1.bf16.msra.mxu0 %v7073
    %7095 = vmatprep.subr.bf16.mxu0 0
    %7096 = vmatpush1.bf16.msra.mxu0 %v7074
    %7097 = vmatprep.subr.bf16.mxu0 0
    %7098 = vmatpush1.bf16.msra.mxu0 %v7075
    %7099 = vmatprep.subr.bf16.mxu0 0
    %7100 = vmatpush1.bf16.msra.mxu0 %v7076
    %7101 = vmatprep.subr.bf16.mxu0 0
    %7102 = vmatpush1.bf16.msra.mxu0 0
    %7103 = vmatprep.subr.bf16.mxu0 0
    %7104 = vmatpush1.bf16.msra.mxu0 0
    %7105 = vmatprep.subr.bf16.mxu0 0
    %7106 = vmatpush1.bf16.msra.mxu0 0
    %7107 = vmatprep.subr.bf16.mxu0 0
    %7108 = vmatpush1.bf16.msra.mxu0 0
    %7109 = vmatprep.subr.bf16.mxu0 0
    %7110 = vmatpush1.bf16.msra.mxu0 0
    %7111 = vmatprep.subr.bf16.mxu0 0
    %7112 = vmatpush1.bf16.msra.mxu0 0
    %7113 = vmatprep.subr.bf16.mxu0 0
    %7114 = vmatpush1.bf16.msra.mxu0 0
    %7115 = vmatprep.subr.bf16.mxu0 0
    %7116 = vmatpush1.bf16.msra.mxu0 0
    %7117 = vmatprep.mubr.bf16.mxu0 0
    %7118 = vmatmul.mubr.bf16.gmra.mrb[0].mxu0 %v7035
    %v7119 = vpop.f32.mrb[0].mxu0
    %v7120 = vadd.f32 0.0, %v7119
    %v7121 = vpop.f32.mrb[0].mxu0
    %v7122 = vpop.f32.mrb[0].mxu0
    %v7123 = vpop.f32.mrb[0].mxu0
    %7124 = vdwg.mxu0
    %v7125 = vadd.f32 %v7015, %v7120
    %v7126 = vld [vmem:[#allocation2 + $0x18] sm:$0x80]
    %v7127 = vld [vmem:[%s5808] sm:$0xf]
    %v7128 = vld [vmem:[%s5808 + $0x4] sm:$0xf]
    %v7129 = vld [vmem:[%s5808 + $0x8] sm:$0xf]
    %v7130 = vld [vmem:[%s5808 + $0xc] sm:$0xf]
    %v7131 = vld [vmem:[%s5808 + $0x10] sm:$0xf]
    %v7132 = vld [vmem:[%s5808 + $0x14] sm:$0xf]
    %v7133 = vld [vmem:[%s5808 + $0x18] sm:$0xf]
    %v7134 = vld [vmem:[%s5808 + $0x1c] sm:$0xf]
    %v7135 = vld [vmem:[%s5808 + $0x20] sm:$0xf]
    %v7136 = vld [vmem:[%s5808 + $0x24] sm:$0xf]
    %v7137 = vld [vmem:[%s5808 + $0x28] sm:$0xf]
    %v7138 = vld [vmem:[%s5808 + $0x2c] sm:$0xf]
    %v7139 = vld [vmem:[%s5808 + $0x30] sm:$0xf]
    %v7140 = vld [vmem:[%s5808 + $0x34] sm:$0xf]
    %v7141 = vld [vmem:[%s5808 + $0x38] sm:$0xf]
    %v7142 = vld [vmem:[%s5808 + $0x3c] sm:$0xf]
    %v7144 = vrot.slane %v7126, 7
    %v7162 = vunpack.c.l.b16 %v7127
    %v7163 = vunpack.c.l.b16 %v7128
    %v7164 = vunpack.c.l.b16 %v7129
    %v7165 = vunpack.c.l.b16 %v7130
    %v7166 = vunpack.c.l.b16 %v7131
    %v7167 = vunpack.c.l.b16 %v7132
    %v7168 = vunpack.c.l.b16 %v7133
    %v7169 = vunpack.c.l.b16 %v7134
    %v7170 = vunpack.c.l.b16 %v7135
    %v7171 = vunpack.c.l.b16 %v7136
    %v7172 = vunpack.c.l.b16 %v7137
    %v7173 = vunpack.c.l.b16 %v7138
    %v7174 = vunpack.c.l.b16 %v7139
    %v7175 = vunpack.c.l.b16 %v7140
    %v7176 = vunpack.c.l.b16 %v7141
    %v7177 = vunpack.c.l.b16 %v7142
    %v7178 = vpack.c.b16 %v7163, %v7162
    %v7179 = vpack.c.b16 %v7165, %v7164
    %v7180 = vpack.c.b16 %v7167, %v7166
    %v7181 = vpack.c.b16 %v7169, %v7168
    %v7182 = vpack.c.b16 %v7171, %v7170
    %v7183 = vpack.c.b16 %v7173, %v7172
    %v7184 = vpack.c.b16 %v7175, %v7174
    %v7185 = vpack.c.b16 %v7177, %v7176
    %7194 = vmatprep.subr.bf16.mxu0 0
    %7195 = vmatpush1.bf16.msra.mxu0 %v7178
    %7196 = vmatprep.subr.bf16.mxu0 0
    %7197 = vmatpush1.bf16.msra.mxu0 %v7179
    %7198 = vmatprep.subr.bf16.mxu0 0
    %7199 = vmatpush1.bf16.msra.mxu0 %v7180
    %7200 = vmatprep.subr.bf16.mxu0 0
    %7201 = vmatpush1.bf16.msra.mxu0 %v7181
    %7202 = vmatprep.subr.bf16.mxu0 0
    %7203 = vmatpush1.bf16.msra.mxu0 %v7182
    %7204 = vmatprep.subr.bf16.mxu0 0
    %7205 = vmatpush1.bf16.msra.mxu0 %v7183
    %7206 = vmatprep.subr.bf16.mxu0 0
    %7207 = vmatpush1.bf16.msra.mxu0 %v7184
    %7208 = vmatprep.subr.bf16.mxu0 0
    %7209 = vmatpush1.bf16.msra.mxu0 %v7185
    %7210 = vmatprep.subr.bf16.mxu0 0
    %7211 = vmatpush1.bf16.msra.mxu0 0
    %7212 = vmatprep.subr.bf16.mxu0 0
    %7213 = vmatpush1.bf16.msra.mxu0 0
    %7214 = vmatprep.subr.bf16.mxu0 0
    %7215 = vmatpush1.bf16.msra.mxu0 0
    %7216 = vmatprep.subr.bf16.mxu0 0
    %7217 = vmatpush1.bf16.msra.mxu0 0
    %7218 = vmatprep.subr.bf16.mxu0 0
    %7219 = vmatpush1.bf16.msra.mxu0 0
    %7220 = vmatprep.subr.bf16.mxu0 0
    %7221 = vmatpush1.bf16.msra.mxu0 0
    %7222 = vmatprep.subr.bf16.mxu0 0
    %7223 = vmatpush1.bf16.msra.mxu0 0
    %7224 = vmatprep.subr.bf16.mxu0 0
    %7225 = vmatpush1.bf16.msra.mxu0 0
    %7226 = vmatprep.mubr.bf16.mxu0 0
    %7227 = vmatmul.mubr.bf16.gmra.mrb[0].mxu0 %v7144
    %v7228 = vpop.f32.mrb[0].mxu0
    %v7229 = vadd.f32 0.0, %v7228
    %v7230 = vpop.f32.mrb[0].mxu0
    %v7231 = vpop.f32.mrb[0].mxu0
    %v7232 = vpop.f32.mrb[0].mxu0
    %7233 = vdwg.mxu0
    %v7234 = vadd.f32 %v7125, %v7229
    %v7235 = vld [vmem:[%s5914] sm:$0xf]
    %v7236 = vld [vmem:[%s5914 + $0x4] sm:$0xf]
    %v7237 = vld [vmem:[%s5914 + $0x8] sm:$0xf]
    %v7238 = vld [vmem:[%s5914 + $0xc] sm:$0xf]
    %v7239 = vld [vmem:[%s5914 + $0x10] sm:$0xf]
    %v7240 = vld [vmem:[%s5914 + $0x14] sm:$0xf]
    %v7241 = vld [vmem:[%s5914 + $0x18] sm:$0xf]
    %v7242 = vld [vmem:[%s5914 + $0x1c] sm:$0xf]
    %v7243 = vld [vmem:[%s5914 + $0x20] sm:$0xf]
    %v7244 = vld [vmem:[%s5914 + $0x24] sm:$0xf]
    %v7245 = vld [vmem:[%s5914 + $0x28] sm:$0xf]
    %v7246 = vld [vmem:[%s5914 + $0x2c] sm:$0xf]
    %v7247 = vld [vmem:[%s5914 + $0x30] sm:$0xf]
    %v7248 = vld [vmem:[%s5914 + $0x34] sm:$0xf]
    %v7249 = vld [vmem:[%s5914 + $0x38] sm:$0xf]
    %v7250 = vld [vmem:[%s5914 + $0x3c] sm:$0xf]
    %v7252 = vshrl.u32 %v7126, 16
    %v7254 = vrot.slane %v7252, 7
    %v7272 = vunpack.c.l.b16 %v7235
    %v7273 = vunpack.c.l.b16 %v7236
    %v7274 = vunpack.c.l.b16 %v7237
    %v7275 = vunpack.c.l.b16 %v7238
    %v7276 = vunpack.c.l.b16 %v7239
    %v7277 = vunpack.c.l.b16 %v7240
    %v7278 = vunpack.c.l.b16 %v7241
    %v7279 = vunpack.c.l.b16 %v7242
    %v7280 = vunpack.c.l.b16 %v7243
    %v7281 = vunpack.c.l.b16 %v7244
    %v7282 = vunpack.c.l.b16 %v7245
    %v7283 = vunpack.c.l.b16 %v7246
    %v7284 = vunpack.c.l.b16 %v7247
    %v7285 = vunpack.c.l.b16 %v7248
    %v7286 = vunpack.c.l.b16 %v7249
    %v7287 = vunpack.c.l.b16 %v7250
    %v7288 = vpack.c.b16 %v7273, %v7272
    %v7289 = vpack.c.b16 %v7275, %v7274
    %v7290 = vpack.c.b16 %v7277, %v7276
    %v7291 = vpack.c.b16 %v7279, %v7278
    %v7292 = vpack.c.b16 %v7281, %v7280
    %v7293 = vpack.c.b16 %v7283, %v7282
    %v7294 = vpack.c.b16 %v7285, %v7284
    %v7295 = vpack.c.b16 %v7287, %v7286
    %7304 = vmatprep.subr.bf16.mxu0 0
    %7305 = vmatpush1.bf16.msra.mxu0 %v7288
    %7306 = vmatprep.subr.bf16.mxu0 0
    %7307 = vmatpush1.bf16.msra.mxu0 %v7289
    %7308 = vmatprep.subr.bf16.mxu0 0
    %7309 = vmatpush1.bf16.msra.mxu0 %v7290
    %7310 = vmatprep.subr.bf16.mxu0 0
    %7311 = vmatpush1.bf16.msra.mxu0 %v7291
    %7312 = vmatprep.subr.bf16.mxu0 0
    %7313 = vmatpush1.bf16.msra.mxu0 %v7292
    %7314 = vmatprep.subr.bf16.mxu0 0
    %7315 = vmatpush1.bf16.msra.mxu0 %v7293
    %7316 = vmatprep.subr.bf16.mxu0 0
    %7317 = vmatpush1.bf16.msra.mxu0 %v7294
    %7318 = vmatprep.subr.bf16.mxu0 0
    %7319 = vmatpush1.bf16.msra.mxu0 %v7295
    %7320 = vmatprep.subr.bf16.mxu0 0
    %7321 = vmatpush1.bf16.msra.mxu0 0
    %7322 = vmatprep.subr.bf16.mxu0 0
    %7323 = vmatpush1.bf16.msra.mxu0 0
    %7324 = vmatprep.subr.bf16.mxu0 0
    %7325 = vmatpush1.bf16.msra.mxu0 0
    %7326 = vmatprep.subr.bf16.mxu0 0
    %7327 = vmatpush1.bf16.msra.mxu0 0
    %7328 = vmatprep.subr.bf16.mxu0 0
    %7329 = vmatpush1.bf16.msra.mxu0 0
    %7330 = vmatprep.subr.bf16.mxu0 0
    %7331 = vmatpush1.bf16.msra.mxu0 0
    %7332 = vmatprep.subr.bf16.mxu0 0
    %7333 = vmatpush1.bf16.msra.mxu0 0
    %7334 = vmatprep.subr.bf16.mxu0 0
    %7335 = vmatpush1.bf16.msra.mxu0 0
    %7336 = vmatprep.mubr.bf16.mxu0 0
    %7337 = vmatmul.mubr.bf16.gmra.mrb[0].mxu0 %v7254
    %v7338 = vpop.f32.mrb[0].mxu0
    %v7339 = vadd.f32 0.0, %v7338
    %v7340 = vpop.f32.mrb[0].mxu0
    %v7341 = vpop.f32.mrb[0].mxu0
    %v7342 = vpop.f32.mrb[0].mxu0
    %7343 = vdwg.mxu0
    %v7344 = vadd.f32 %v7234, %v7339
    %v7345 = vld [vmem:[#allocation2 + $0x20] sm:$0x1]
    %v7346 = vld [vmem:[%s6025] sm:$0xf]
    %v7347 = vld [vmem:[%s6025 + $0x4] sm:$0xf]
    %v7348 = vld [vmem:[%s6025 + $0x8] sm:$0xf]
    %v7349 = vld [vmem:[%s6025 + $0xc] sm:$0xf]
    %v7350 = vld [vmem:[%s6025 + $0x10] sm:$0xf]
    %v7351 = vld [vmem:[%s6025 + $0x14] sm:$0xf]
    %v7352 = vld [vmem:[%s6025 + $0x18] sm:$0xf]
    %v7353 = vld [vmem:[%s6025 + $0x1c] sm:$0xf]
    %v7354 = vld [vmem:[%s6025 + $0x20] sm:$0xf]
    %v7355 = vld [vmem:[%s6025 + $0x24] sm:$0xf]
    %v7356 = vld [vmem:[%s6025 + $0x28] sm:$0xf]
    %v7357 = vld [vmem:[%s6025 + $0x2c] sm:$0xf]
    %v7358 = vld [vmem:[%s6025 + $0x30] sm:$0xf]
    %v7359 = vld [vmem:[%s6025 + $0x34] sm:$0xf]
    %v7360 = vld [vmem:[%s6025 + $0x38] sm:$0xf]
    %v7361 = vld [vmem:[%s6025 + $0x3c] sm:$0xf]
    %v7378 = vunpack.c.l.b16 %v7346
    %v7379 = vunpack.c.l.b16 %v7347
    %v7380 = vunpack.c.l.b16 %v7348
    %v7381 = vunpack.c.l.b16 %v7349
    %v7382 = vunpack.c.l.b16 %v7350
    %v7383 = vunpack.c.l.b16 %v7351
    %v7384 = vunpack.c.l.b16 %v7352
    %v7385 = vunpack.c.l.b16 %v7353
    %v7386 = vunpack.c.l.b16 %v7354
    %v7387 = vunpack.c.l.b16 %v7355
    %v7388 = vunpack.c.l.b16 %v7356
    %v7389 = vunpack.c.l.b16 %v7357
    %v7390 = vunpack.c.l.b16 %v7358
    %v7391 = vunpack.c.l.b16 %v7359
    %v7392 = vunpack.c.l.b16 %v7360
    %v7393 = vunpack.c.l.b16 %v7361
    %v7394 = vpack.c.b16 %v7379, %v7378
    %v7395 = vpack.c.b16 %v7381, %v7380
    %v7396 = vpack.c.b16 %v7383, %v7382
    %v7397 = vpack.c.b16 %v7385, %v7384
    %v7398 = vpack.c.b16 %v7387, %v7386
    %v7399 = vpack.c.b16 %v7389, %v7388
    %v7400 = vpack.c.b16 %v7391, %v7390
    %v7401 = vpack.c.b16 %v7393, %v7392
    %7410 = vmatprep.subr.bf16.mxu0 0
    %7411 = vmatpush1.bf16.msra.mxu0 %v7394
    %7412 = vmatprep.subr.bf16.mxu0 0
    %7413 = vmatpush1.bf16.msra.mxu0 %v7395
    %7414 = vmatprep.subr.bf16.mxu0 0
    %7415 = vmatpush1.bf16.msra.mxu0 %v7396
    %7416 = vmatprep.subr.bf16.mxu0 0
    %7417 = vmatpush1.bf16.msra.mxu0 %v7397
    %7418 = vmatprep.subr.bf16.mxu0 0
    %7419 = vmatpush1.bf16.msra.mxu0 %v7398
    %7420 = vmatprep.subr.bf16.mxu0 0
    %7421 = vmatpush1.bf16.msra.mxu0 %v7399
    %7422 = vmatprep.subr.bf16.mxu0 0
    %7423 = vmatpush1.bf16.msra.mxu0 %v7400
    %7424 = vmatprep.subr.bf16.mxu0 0
    %7425 = vmatpush1.bf16.msra.mxu0 %v7401
    %7426 = vmatprep.subr.bf16.mxu0 0
    %7427 = vmatpush1.bf16.msra.mxu0 0
    %7428 = vmatprep.subr.bf16.mxu0 0
    %7429 = vmatpush1.bf16.msra.mxu0 0
    %7430 = vmatprep.subr.bf16.mxu0 0
    %7431 = vmatpush1.bf16.msra.mxu0 0
    %7432 = vmatprep.subr.bf16.mxu0 0
    %7433 = vmatpush1.bf16.msra.mxu0 0
    %7434 = vmatprep.subr.bf16.mxu0 0
    %7435 = vmatpush1.bf16.msra.mxu0 0
    %7436 = vmatprep.subr.bf16.mxu0 0
    %7437 = vmatpush1.bf16.msra.mxu0 0
    %7438 = vmatprep.subr.bf16.mxu0 0
    %7439 = vmatpush1.bf16.msra.mxu0 0
    %7440 = vmatprep.subr.bf16.mxu0 0
    %7441 = vmatpush1.bf16.msra.mxu0 0
    %7442 = vmatprep.mubr.bf16.mxu0 0
    %7443 = vmatmul.mubr.bf16.gmra.mrb[0].mxu0 %v7345
    %v7444 = vpop.f32.mrb[0].mxu0
    %v7445 = vadd.f32 0.0, %v7444
    %v7446 = vpop.f32.mrb[0].mxu0
    %v7447 = vpop.f32.mrb[0].mxu0
    %v7448 = vpop.f32.mrb[0].mxu0
    %7449 = vdwg.mxu0
    %v7450 = vadd.f32 %v7344, %v7445
    %v7451 = vld [vmem:[#allocation2 + $0x20] sm:$0x2]
    %v7452 = vld [vmem:[%s6135] sm:$0xf]
    %v7453 = vld [vmem:[%s6135 + $0x4] sm:$0xf]
    %v7454 = vld [vmem:[%s6135 + $0x8] sm:$0xf]
    %v7455 = vld [vmem:[%s6135 + $0xc] sm:$0xf]
    %v7456 = vld [vmem:[%s6135 + $0x10] sm:$0xf]
    %v7457 = vld [vmem:[%s6135 + $0x14] sm:$0xf]
    %v7458 = vld [vmem:[%s6135 + $0x18] sm:$0xf]
    %v7459 = vld [vmem:[%s6135 + $0x1c] sm:$0xf]
    %v7460 = vld [vmem:[%s6135 + $0x20] sm:$0xf]
    %v7461 = vld [vmem:[%s6135 + $0x24] sm:$0xf]
    %v7462 = vld [vmem:[%s6135 + $0x28] sm:$0xf]
    %v7463 = vld [vmem:[%s6135 + $0x2c] sm:$0xf]
    %v7464 = vld [vmem:[%s6135 + $0x30] sm:$0xf]
    %v7465 = vld [vmem:[%s6135 + $0x34] sm:$0xf]
    %v7466 = vld [vmem:[%s6135 + $0x38] sm:$0xf]
    %v7467 = vld [vmem:[%s6135 + $0x3c] sm:$0xf]
    %v7469 = vshrl.u32 %v7451, 16
    %v7471 = vrot.slane %v7469, 1
    %v7489 = vunpack.c.l.b16 %v7452
    %v7490 = vunpack.c.l.b16 %v7453
    %v7491 = vunpack.c.l.b16 %v7454
    %v7492 = vunpack.c.l.b16 %v7455
    %v7493 = vunpack.c.l.b16 %v7456
    %v7494 = vunpack.c.l.b16 %v7457
    %v7495 = vunpack.c.l.b16 %v7458
    %v7496 = vunpack.c.l.b16 %v7459
    %v7497 = vunpack.c.l.b16 %v7460
    %v7498 = vunpack.c.l.b16 %v7461
    %v7499 = vunpack.c.l.b16 %v7462
    %v7500 = vunpack.c.l.b16 %v7463
    %v7501 = vunpack.c.l.b16 %v7464
    %v7502 = vunpack.c.l.b16 %v7465
    %v7503 = vunpack.c.l.b16 %v7466
    %v7504 = vunpack.c.l.b16 %v7467
    %v7505 = vpack.c.b16 %v7490, %v7489
    %v7506 = vpack.c.b16 %v7492, %v7491
    %v7507 = vpack.c.b16 %v7494, %v7493
    %v7508 = vpack.c.b16 %v7496, %v7495
    %v7509 = vpack.c.b16 %v7498, %v7497
    %v7510 = vpack.c.b16 %v7500, %v7499
    %v7511 = vpack.c.b16 %v7502, %v7501
    %v7512 = vpack.c.b16 %v7504, %v7503
    %7521 = vmatprep.subr.bf16.mxu0 0
    %7522 = vmatpush1.bf16.msra.mxu0 %v7505
    %7523 = vmatprep.subr.bf16.mxu0 0
    %7524 = vmatpush1.bf16.msra.mxu0 %v7506
    %7525 = vmatprep.subr.bf16.mxu0 0
    %7526 = vmatpush1.bf16.msra.mxu0 %v7507
    %7527 = vmatprep.subr.bf16.mxu0 0
    %7528 = vmatpush1.bf16.msra.mxu0 %v7508
    %7529 = vmatprep.subr.bf16.mxu0 0
    %7530 = vmatpush1.bf16.msra.mxu0 %v7509
    %7531 = vmatprep.subr.bf16.mxu0 0
    %7532 = vmatpush1.bf16.msra.mxu0 %v7510
    %7533 = vmatprep.subr.bf16.mxu0 0
    %7534 = vmatpush1.bf16.msra.mxu0 %v7511
    %7535 = vmatprep.subr.bf16.mxu0 0
    %7536 = vmatpush1.bf16.msra.mxu0 %v7512
    %7537 = vmatprep.subr.bf16.mxu0 0
    %7538 = vmatpush1.bf16.msra.mxu0 0
    %7539 = vmatprep.subr.bf16.mxu0 0
    %7540 = vmatpush1.bf16.msra.mxu0 0
    %7541 = vmatprep.subr.bf16.mxu0 0
    %7542 = vmatpush1.bf16.msra.mxu0 0
    %7543 = vmatprep.subr.bf16.mxu0 0
    %7544 = vmatpush1.bf16.msra.mxu0 0
    %7545 = vmatprep.subr.bf16.mxu0 0
    %7546 = vmatpush1.bf16.msra.mxu0 0
    %7547 = vmatprep.subr.bf16.mxu0 0
    %7548 = vmatpush1.bf16.msra.mxu0 0
    %7549 = vmatprep.subr.bf16.mxu0 0
    %7550 = vmatpush1.bf16.msra.mxu0 0
    %7551 = vmatprep.subr.bf16.mxu0 0
    %7552 = vmatpush1.bf16.msra.mxu0 0
    %7553 = vmatprep.mubr.bf16.mxu0 0
    %7554 = vmatmul.mubr.bf16.gmra.mrb[0].mxu0 %v7471
    %v7555 = vpop.f32.mrb[0].mxu0
    %v7556 = vadd.f32 0.0, %v7555
    %v7557 = vpop.f32.mrb[0].mxu0
    %v7558 = vpop.f32.mrb[0].mxu0
    %v7559 = vpop.f32.mrb[0].mxu0
    %7560 = vdwg.mxu0
    %v7561 = vadd.f32 %v7450, %v7556
    %v7562 = vld [vmem:[#allocation2 + $0x20] sm:$0x4]
    %v7563 = vld [vmem:[%s6247] sm:$0xf]
    %v7564 = vld [vmem:[%s6247 + $0x4] sm:$0xf]
    %v7565 = vld [vmem:[%s6247 + $0x8] sm:$0xf]
    %v7566 = vld [vmem:[%s6247 + $0xc] sm:$0xf]
    %v7567 = vld [vmem:[%s6247 + $0x10] sm:$0xf]
    %v7568 = vld [vmem:[%s6247 + $0x14] sm:$0xf]
    %v7569 = vld [vmem:[%s6247 + $0x18] sm:$0xf]
    %v7570 = vld [vmem:[%s6247 + $0x1c] sm:$0xf]
    %v7571 = vld [vmem:[%s6247 + $0x20] sm:$0xf]
    %v7572 = vld [vmem:[%s6247 + $0x24] sm:$0xf]
    %v7573 = vld [vmem:[%s6247 + $0x28] sm:$0xf]
    %v7574 = vld [vmem:[%s6247 + $0x2c] sm:$0xf]
    %v7575 = vld [vmem:[%s6247 + $0x30] sm:$0xf]
    %v7576 = vld [vmem:[%s6247 + $0x34] sm:$0xf]
    %v7577 = vld [vmem:[%s6247 + $0x38] sm:$0xf]
    %v7578 = vld [vmem:[%s6247 + $0x3c] sm:$0xf]
    %v7580 = vrot.slane %v7562, 2
    %v7598 = vunpack.c.l.b16 %v7563
    %v7599 = vunpack.c.l.b16 %v7564
    %v7600 = vunpack.c.l.b16 %v7565
    %v7601 = vunpack.c.l.b16 %v7566
    %v7602 = vunpack.c.l.b16 %v7567
    %v7603 = vunpack.c.l.b16 %v7568
    %v7604 = vunpack.c.l.b16 %v7569
    %v7605 = vunpack.c.l.b16 %v7570
    %v7606 = vunpack.c.l.b16 %v7571
    %v7607 = vunpack.c.l.b16 %v7572
    %v7608 = vunpack.c.l.b16 %v7573
    %v7609 = vunpack.c.l.b16 %v7574
    %v7610 = vunpack.c.l.b16 %v7575
    %v7611 = vunpack.c.l.b16 %v7576
    %v7612 = vunpack.c.l.b16 %v7577
    %v7613 = vunpack.c.l.b16 %v7578
    %v7614 = vpack.c.b16 %v7599, %v7598
    %v7615 = vpack.c.b16 %v7601, %v7600
    %v7616 = vpack.c.b16 %v7603, %v7602
    %v7617 = vpack.c.b16 %v7605, %v7604
    %v7618 = vpack.c.b16 %v7607, %v7606
    %v7619 = vpack.c.b16 %v7609, %v7608
    %v7620 = vpack.c.b16 %v7611, %v7610
    %v7621 = vpack.c.b16 %v7613, %v7612
    %7630 = vmatprep.subr.bf16.mxu0 0
    %7631 = vmatpush1.bf16.msra.mxu0 %v7614
    %7632 = vmatprep.subr.bf16.mxu0 0
    %7633 = vmatpush1.bf16.msra.mxu0 %v7615
    %7634 = vmatprep.subr.bf16.mxu0 0
    %7635 = vmatpush1.bf16.msra.mxu0 %v7616
    %7636 = vmatprep.subr.bf16.mxu0 0
    %7637 = vmatpush1.bf16.msra.mxu0 %v7617
    %7638 = vmatprep.subr.bf16.mxu0 0
    %7639 = vmatpush1.bf16.msra.mxu0 %v7618
    %7640 = vmatprep.subr.bf16.mxu0 0
    %7641 = vmatpush1.bf16.msra.mxu0 %v7619
    %7642 = vmatprep.subr.bf16.mxu0 0
    %7643 = vmatpush1.bf16.msra.mxu0 %v7620
    %7644 = vmatprep.subr.bf16.mxu0 0
    %7645 = vmatpush1.bf16.msra.mxu0 %v7621
    %7646 = vmatprep.subr.bf16.mxu0 0
    %7647 = vmatpush1.bf16.msra.mxu0 0
    %7648 = vmatprep.subr.bf16.mxu0 0
    %7649 = vmatpush1.bf16.msra.mxu0 0
    %7650 = vmatprep.subr.bf16.mxu0 0
    %7651 = vmatpush1.bf16.msra.mxu0 0
    %7652 = vmatprep.subr.bf16.mxu0 0
    %7653 = vmatpush1.bf16.msra.mxu0 0
    %7654 = vmatprep.subr.bf16.mxu0 0
    %7655 = vmatpush1.bf16.msra.mxu0 0
    %7656 = vmatprep.subr.bf16.mxu0 0
    %7657 = vmatpush1.bf16.msra.mxu0 0
    %7658 = vmatprep.subr.bf16.mxu0 0
    %7659 = vmatpush1.bf16.msra.mxu0 0
    %7660 = vmatprep.subr.bf16.mxu0 0
    %7661 = vmatpush1.bf16.msra.mxu0 0
    %7662 = vmatprep.mubr.bf16.mxu0 0
    %7663 = vmatmul.mubr.bf16.gmra.mrb[0].mxu0 %v7580
    %v7664 = vpop.f32.mrb[0].mxu0
    %v7665 = vadd.f32 0.0, %v7664
    %v7666 = vpop.f32.mrb[0].mxu0
    %v7667 = vpop.f32.mrb[0].mxu0
    %v7668 = vpop.f32.mrb[0].mxu0
    %7669 = vdwg.mxu0
    %v7670 = vadd.f32 %v7561, %v7665
    %v7671 = vld [vmem:[%s6356] sm:$0xf]
    %v7672 = vld [vmem:[%s6356 + $0x4] sm:$0xf]
    %v7673 = vld [vmem:[%s6356 + $0x8] sm:$0xf]
    %v7674 = vld [vmem:[%s6356 + $0xc] sm:$0xf]
    %v7675 = vld [vmem:[%s6356 + $0x10] sm:$0xf]
    %v7676 = vld [vmem:[%s6356 + $0x14] sm:$0xf]
    %v7677 = vld [vmem:[%s6356 + $0x18] sm:$0xf]
    %v7678 = vld [vmem:[%s6356 + $0x1c] sm:$0xf]
    %v7679 = vld [vmem:[%s6356 + $0x20] sm:$0xf]
    %v7680 = vld [vmem:[%s6356 + $0x24] sm:$0xf]
    %v7681 = vld [vmem:[%s6356 + $0x28] sm:$0xf]
    %v7682 = vld [vmem:[%s6356 + $0x2c] sm:$0xf]
    %v7683 = vld [vmem:[%s6356 + $0x30] sm:$0xf]
    %v7684 = vld [vmem:[%s6356 + $0x34] sm:$0xf]
    %v7685 = vld [vmem:[%s6356 + $0x38] sm:$0xf]
    %v7686 = vld [vmem:[%s6356 + $0x3c] sm:$0xf]
    %v7688 = vshrl.u32 %v7562, 16
    %v7690 = vrot.slane %v7688, 2
    %v7708 = vunpack.c.l.b16 %v7671
    %v7709 = vunpack.c.l.b16 %v7672
    %v7710 = vunpack.c.l.b16 %v7673
    %v7711 = vunpack.c.l.b16 %v7674
    %v7712 = vunpack.c.l.b16 %v7675
    %v7713 = vunpack.c.l.b16 %v7676
    %v7714 = vunpack.c.l.b16 %v7677
    %v7715 = vunpack.c.l.b16 %v7678
    %v7716 = vunpack.c.l.b16 %v7679
    %v7717 = vunpack.c.l.b16 %v7680
    %v7718 = vunpack.c.l.b16 %v7681
    %v7719 = vunpack.c.l.b16 %v7682
    %v7720 = vunpack.c.l.b16 %v7683
    %v7721 = vunpack.c.l.b16 %v7684
    %v7722 = vunpack.c.l.b16 %v7685
    %v7723 = vunpack.c.l.b16 %v7686
    %v7724 = vpack.c.b16 %v7709, %v7708
    %v7725 = vpack.c.b16 %v7711, %v7710
    %v7726 = vpack.c.b16 %v7713, %v7712
    %v7727 = vpack.c.b16 %v7715, %v7714
    %v7728 = vpack.c.b16 %v7717, %v7716
    %v7729 = vpack.c.b16 %v7719, %v7718
    %v7730 = vpack.c.b16 %v7721, %v7720
    %v7731 = vpack.c.b16 %v7723, %v7722
    %7740 = vmatprep.subr.bf16.mxu0 0
    %7741 = vmatpush1.bf16.msra.mxu0 %v7724
    %7742 = vmatprep.subr.bf16.mxu0 0
    %7743 = vmatpush1.bf16.msra.mxu0 %v7725
    %7744 = vmatprep.subr.bf16.mxu0 0
    %7745 = vmatpush1.bf16.msra.mxu0 %v7726
    %7746 = vmatprep.subr.bf16.mxu0 0
    %7747 = vmatpush1.bf16.msra.mxu0 %v7727
    %7748 = vmatprep.subr.bf16.mxu0 0
    %7749 = vmatpush1.bf16.msra.mxu0 %v7728
    %7750 = vmatprep.subr.bf16.mxu0 0
    %7751 = vmatpush1.bf16.msra.mxu0 %v7729
    %7752 = vmatprep.subr.bf16.mxu0 0
    %7753 = vmatpush1.bf16.msra.mxu0 %v7730
    %7754 = vmatprep.subr.bf16.mxu0 0
    %7755 = vmatpush1.bf16.msra.mxu0 %v7731
    %7756 = vmatprep.subr.bf16.mxu0 0
    %7757 = vmatpush1.bf16.msra.mxu0 0
    %7758 = vmatprep.subr.bf16.mxu0 0
    %7759 = vmatpush1.bf16.msra.mxu0 0
    %7760 = vmatprep.subr.bf16.mxu0 0
    %7761 = vmatpush1.bf16.msra.mxu0 0
    %7762 = vmatprep.subr.bf16.mxu0 0
    %7763 = vmatpush1.bf16.msra.mxu0 0
    %7764 = vmatprep.subr.bf16.mxu0 0
    %7765 = vmatpush1.bf16.msra.mxu0 0
    %7766 = vmatprep.subr.bf16.mxu0 0
    %7767 = vmatpush1.bf16.msra.mxu0 0
    %7768 = vmatprep.subr.bf16.mxu0 0
    %7769 = vmatpush1.bf16.msra.mxu0 0
    %7770 = vmatprep.subr.bf16.mxu0 0
    %7771 = vmatpush1.bf16.msra.mxu0 0
    %7772 = vmatprep.mubr.bf16.mxu0 0
    %7773 = vmatmul.mubr.bf16.gmra.mrb[0].mxu0 %v7690
    %v7774 = vpop.f32.mrb[0].mxu0
    %v7775 = vadd.f32 0.0, %v7774
    %v7776 = vpop.f32.mrb[0].mxu0
    %v7777 = vpop.f32.mrb[0].mxu0
    %v7778 = vpop.f32.mrb[0].mxu0
    %7779 = vdwg.mxu0
    %v7780 = vadd.f32 %v7670, %v7775
    %v7781 = vld [vmem:[%s14] sm:$0x1]
    %v7782 = vadd.f32 %v7780, %v7781
    %7783 = vst [vmem:[#allocation11 + $0x1] sm:$0x1] %v7782
    // Predicated region
    $region78: #{discriminator_forward.1} parent=1 // pred_check
      _
    $region79: #{discriminator_forward.1} parent=1 // pred_check_branch
      %7785 = sbr.rel (0) target = $region81
    $region80: #{discriminator_forward.1} parent=1 // pred_region
      %s7787 = ssub.s32 32, 32
      %7788 = vsyncadd [#allocation5], %s7787
      %s7790 = sshll.u32 [#allocation11], 4
      %s7791 = int_to_ptr.vmem [resolvable:$true] %s7790
      %7793 = dma.vmem_to_hbm [thread:$0]  %s7791, 32, %s15, [#allocation5]
    $region81: #{discriminator_forward.1} parent=1 // pred_fallthru
      _
    // Predicated region
    $region82: #{discriminator_forward.1} parent=1 // pred_check
      _
    $region83: #{discriminator_forward.1} parent=1 // pred_check_branch
      %7795 = sbr.rel (0) target = $region85
    $region84: #{discriminator_forward.1} parent=1 // pred_region
      %7796 = dma.done [#allocation5], 32
    $region85: #{discriminator_forward.1} parent=1 // pred_fallthru
      _
    %7797 = vsyncpa [#allocation4], 1
    %7798 = vsyncpa [#allocation7], 1
    %7799 = vsyncpa [#allocation10], 1
    %7800 = vsyncpa [#allocation5], 1

</llo_original>
